<compile_context>
chip_gen: v5e
topology: v5e:2x2
jax: 0.10.0
libtpu: 0.0.40
codegen_flags: <defaults>
</compile_context>

<pallas_src>
import functools

import numpy as np

import jax
import jax.numpy as jnp
from jax.experimental import pallas as pl
from jax.experimental.pallas import tpu as pltpu


# ----------------------------------------------------------------------------
# Fused ensemble kernel: all models' 2-layer LSTM recurrences + FC heads +
# ensemble mean in one pallas_call.  Everything is resident in VMEM.
# ----------------------------------------------------------------------------
def _fused_ensemble_lstm_kernel(x_ref, len_ref,
                                wih0_ref, whh0_ref, b0_ref,
                                w1_ref, b1_ref,
                                wfc_ref, bfc_ref,
                                out_ref,
                                *, hp, seq_len, batch_p):
    Hp = hp
    Bp = batch_p
    lengths = len_ref[...]                                       # (Bp, 1) int32

    # Hoisted, time-invariant layer-0 input projection for ALL models at once:
    # one bf16 (T*Bp, Fp) x (Fp, 4*Hp) matmul with f32 accumulation (+ bias).
    gin = (jnp.dot(x_ref[...], wih0_ref[...],
                   preferred_element_type=jnp.float32)
           + b0_ref[...])                                        # (T*Bp, 4*Hp) f32

    whh0 = whh0_ref[...]                                         # (Hp,   4*Hp) bf16
    w1 = w1_ref[...]                                             # (2*Hp, 4*Hp) bf16
    b1 = b1_ref[...]                                             # (1,    4*Hp) f32

    def gates_to_state(gates, c_prev):
        # PyTorch gate order [i, f, g, o]; each slab is Hp wide -> lane-aligned.
        i = jax.nn.sigmoid(gates[:, 0 * Hp:1 * Hp])
        f = jax.nn.sigmoid(gates[:, 1 * Hp:2 * Hp])
        g = jnp.tanh(gates[:, 2 * Hp:3 * Hp])
        o = jax.nn.sigmoid(gates[:, 3 * Hp:4 * Hp])
        c_new = f * c_prev + i * g
        h_new = o * jnp.tanh(c_new)
        return h_new, c_new

    zeros = jnp.zeros((Bp, Hp), jnp.float32)
    h0, c0, h1, c1 = zeros, zeros, zeros, zeros

    # Fully unrolled recurrence (seq_len=8 is small and static): static,
    # sublane-aligned slices of `gin`; cross-step instruction interleave.
    # NOTE: if seq_len grows, switch to lax.fori_loop(unroll=2..4) to bound
    # vreg live ranges.
    for t in range(seq_len):
        # Single mask broadcast per step, reused by all four state updates.
        m = jnp.broadcast_to(lengths > t, (Bp, Hp))              # (Bp, Hp) bool
        g0 = gin[t * Bp:(t + 1) * Bp, :] + jnp.dot(
            h0.astype(jnp.bfloat16), whh0, preferred_element_type=jnp.float32)
        h0n, c0n = gates_to_state(g0, c0)
        # Fused layer-1 projection: one K-concatenated matmul instead of two.
        hcat = jnp.concatenate(
            [h0n.astype(jnp.bfloat16), h1.astype(jnp.bfloat16)], axis=-1)
        g1 = jnp.dot(hcat, w1, preferred_element_type=jnp.float32) + b1
        h1n, c1n = gates_to_state(g1, c1)
        # Freeze state past each sequence's length (packed-sequence semantics).
        h0 = jnp.where(m, h0n, h0)
        c0 = jnp.where(m, c0n, c0)
        h1 = jnp.where(m, h1n, h1)
        c1 = jnp.where(m, c1n, c1)

    # Fused FC heads: per-model fc weights are stacked along the fused hidden
    # axis and pre-scaled by 1/model_num, so one matmul + bias realizes
    # torch.mean(torch.stack(outputs), dim=0).  Output is lane-padded to 128
    # for unmasked, lane-dense stores; wrapper slices back to O.
    out_ref[...] = (jnp.dot(h1.astype(jnp.bfloat16), wfc_ref[...],
                            preferred_element_type=jnp.float32)
                    + bfc_ref[...])


def ensemble_forward(x, lengths, fused, *, output_size):
    """Ensemble forward. x: (B, T, F) float32, lengths: (B,) int32 -> (B, O)."""
    B, T, F = x.shape
    Bp = ((B + 7) // 8) * 8                      # pad batch to sublane multiple
    Fp = fused["wih0"].shape[0]                  # lane-padded feature dim
    Hp = fused["wfc"].shape[0]                   # fused (lane-padded) hidden dim
    Op = fused["wfc"].shape[1]                   # lane-padded output dim

    x_p = jnp.pad(x.astype(jnp.float32),
                  ((0, Bp - B), (0, 0), (0, Fp - F)))
    # time-major flattened rows: row t*Bp + b  <->  (timestep t, batch b)
    x_rows = jnp.transpose(x_p, (1, 0, 2)).reshape(T * Bp, Fp).astype(jnp.bfloat16)

    len_p = jnp.pad(lengths.astype(jnp.int32), (0, Bp - B)).reshape(Bp, 1)

    kernel = functools.partial(_fused_ensemble_lstm_kernel,
                               hp=Hp, seq_len=T, batch_p=Bp)
    vmem = pl.BlockSpec(memory_space=pltpu.MemorySpace.VMEM)
    out = pl.pallas_call(
        kernel,
        out_shape=jax.ShapeDtypeStruct((Bp, Op), jnp.float32),
        in_specs=[vmem] * 9,
        out_specs=vmem,
    )(x_rows, len_p,
      fused["wih0"], fused["whh0"], fused["b0"],
      fused["w1"], fused["b1"],
      fused["wfc"], fused["bfc"])
    return out[:B, :output_size]


# ----------------------------------------------------------------------------
# Deterministic per-model parameter construction (PyTorch LSTM layout,
# uniform(-1/sqrt(H), 1/sqrt(H)) init) and fusion into block-diagonal slabs.
# ----------------------------------------------------------------------------
def _init_torch_lstm_params(key, input_size, hidden_size, output_size):
    F, H, O = input_size, hidden_size, output_size
    k = 1.0 / (H ** 0.5)
    keys = jax.random.split(key, 10)

    def u(kk, shape):
        return np.asarray(jax.random.uniform(kk, shape, jnp.float32, -k, k))

    return {
        "w_ih_l0": u(keys[0], (4 * H, F)),
        "w_hh_l0": u(keys[1], (4 * H, H)),
        "b_ih_l0": u(keys[2], (4 * H,)),
        "b_hh_l0": u(keys[3], (4 * H,)),
        "w_ih_l1": u(keys[4], (4 * H, H)),
        "w_hh_l1": u(keys[5], (4 * H, H)),
        "b_ih_l1": u(keys[6], (4 * H,)),
        "b_hh_l1": u(keys[7], (4 * H,)),
        "fc_w":    u(keys[8], (O, H)),
        "fc_b":    u(keys[9], (O,)),
    }


def _build_fused_params(per_model, hidden_sizes, input_size, output_size,
                        model_num, lane=128):
    """Pack all models into one block-diagonal recurrence.

    Fused hidden axis Hp = sum(H_m) rounded up to a lane multiple (padded
    hidden units have all-zero weights/biases -> they stay exactly 0).
    Gate columns are grouped as 4 slabs [i|f|g|o] of width Hp each, so
    in-kernel gate slices land on 128-lane boundaries.  Layer-1 input and
    recurrent weights are vstacked into one (2*Hp, 4*Hp) slab so the kernel
    does a single K-concatenated matmul.  FC weights are stacked along Hp and
    pre-scaled by 1/model_num so one matmul + bias yields the ensemble mean.
    Weight slabs are stored in bf16 (biases stay f32).
    """
    offs = np.cumsum([0] + list(hidden_sizes))
    h_tot = int(offs[-1])
    Hp = int(-(-h_tot // lane) * lane)
    Fp = int(-(-input_size // lane) * lane)
    Op = int(-(-output_size // lane) * lane)
    inv_m = 1.0 / model_num

    wih0 = np.zeros((Fp, 4 * Hp), np.float32)
    whh0 = np.zeros((Hp, 4 * Hp), np.float32)
    b0 = np.zeros((1, 4 * Hp), np.float32)
    wih1 = np.zeros((Hp, 4 * Hp), np.float32)
    whh1 = np.zeros((Hp, 4 * Hp), np.float32)
    b1 = np.zeros((1, 4 * Hp), np.float32)
    wfc = np.zeros((Hp, Op), np.float32)
    bfc = np.zeros((1, Op), np.float32)

    for m, (p, H) in enumerate(zip(per_model, hidden_sizes)):
        o = int(offs[m])
        for g in range(4):                       # PyTorch gate order i, f, g, o
            dst = slice(g * Hp + o, g * Hp + o + H)
            src = slice(g * H, (g + 1) * H)
            wih0[:input_size, dst] = p["w_ih_l0"][src, :].T
            whh0[o:o + H, dst] = p["w_hh_l0"][src, :].T
            b0[0, dst] = p["b_ih_l0"][src] + p["b_hh_l0"][src]
            wih1[o:o + H, dst] = p["w_ih_l1"][src, :].T
            whh1[o:o + H, dst] = p["w_hh_l1"][src, :].T
            b1[0, dst] = p["b_ih_l1"][src] + p["b_hh_l1"][src]
        wfc[o:o + H, :output_size] = p["fc_w"].T * inv_m
        bfc[0, :output_size] += p["fc_b"] * inv_m

    w1 = np.vstack([wih1, whh1])                 # (2*Hp, 4*Hp): [h0_new | h1]

    return {
        "wih0": jnp.asarray(wih0, jnp.bfloat16),
        "whh0": jnp.asarray(whh0, jnp.bfloat16),
        "b0": jnp.asarray(b0, jnp.float32),
        "w1": jnp.asarray(w1, jnp.bfloat16),
        "b1": jnp.asarray(b1, jnp.float32),
        "wfc": jnp.asarray(wfc, jnp.bfloat16),
        "bfc": jnp.asarray(bfc, jnp.float32),
    }


class EnsembleModelPallas:
    """Mirrors Ensemble_Model: model_num==1 uses the supplied config, otherwise
    models 0,1 -> (60, 64, 2, 7) and models >= 2 -> (60, 32, 2, 7)."""

    def __init__(self, model_num, key, input_size=60, hidden_size=64,
                 num_layers=2, output_size=7):
        assert num_layers == 2, "only the 2-layer configuration used by the spec is implemented"
        if model_num == 1:
            configs = [(input_size, hidden_size, num_layers, output_size)]
        else:
            configs = [(60, 64, 2, 7) if i in (0, 1) else (60, 32, 2, 7)
                       for i in range(model_num)]
        self.model_num = model_num
        self.configs = configs
        F, O = configs[0][0], configs[0][3]
        self.output_size = O

        keys = jax.random.split(key, model_num)
        # TODO(synk): torch.load(combined_weight_path) has no Pallas equivalent;
        # weights are synthesized deterministically instead of loaded.
        self.per_model = [
            _init_torch_lstm_params(keys[i], cfg[0], cfg[1], cfg[3])
            for i, cfg in enumerate(configs)
        ]
        self.fused = _build_fused_params(
            self.per_model, [cfg[1] for cfg in configs], F, O, model_num)

        self._fwd = jax.jit(
            functools.partial(ensemble_forward, output_size=O))

    def __call__(self, x, lengths):
        return self._fwd(x, lengths, self.fused)


# ----------------------------------------------------------------------------
# Pure-numpy f32 reference (per-model LSTM + FC, then mean) for validation.
# ----------------------------------------------------------------------------
def _reference_forward(x, lengths, per_model, configs):
    x = np.asarray(x, np.float32)
    lengths = np.asarray(lengths)
    B, T, _ = x.shape
    outs = []
    for p, cfg in zip(per_model, configs):
        H = cfg[1]

        def cell(x_t, h, c, wih, whh, bih, bhh):
            g = x_t @ wih.T + h @ whh.T + bih + bhh
            i = 1.0 / (1.0 + np.exp(-g[:, 0 * H:1 * H]))
            f = 1.0 / (1.0 + np.exp(-g[:, 1 * H:2 * H]))
            gg = np.tanh(g[:, 2 * H:3 * H])
            o = 1.0 / (1.0 + np.exp(-g[:, 3 * H:4 * H]))
            c_new = f * c + i * gg
            return o * np.tanh(c_new), c_new

        h0 = np.zeros((B, H), np.float32); c0 = np.zeros((B, H), np.float32)
        h1 = np.zeros((B, H), np.float32); c1 = np.zeros((B, H), np.float32)
        for t in range(T):
            m = (lengths > t).astype(np.float32)[:, None]
            h0n, c0n = cell(x[:, t], h0, c0, p["w_ih_l0"], p["w_hh_l0"],
                            p["b_ih_l0"], p["b_hh_l0"])
            h1n, c1n = cell(h0n, h1, c1, p["w_ih_l1"], p["w_hh_l1"],
                            p["b_ih_l1"], p["b_hh_l1"])
            h0 = m * h0n + (1 - m) * h0; c0 = m * c0n + (1 - m) * c0
            h1 = m * h1n + (1 - m) * h1; c1 = m * c1n + (1 - m) * c1
        outs.append(h1 @ p["fc_w"].T + p["fc_b"])
    return np.mean(np.stack(outs, 0), axis=0)


if __name__ == "__main__":
    key = jax.random.PRNGKey(0)
    k_x, k_model = jax.random.split(key)

    B, T, F = 2, 8, 60                     # batch, seq_len, input_size
    x = jax.random.normal(k_x, (B, T, F), dtype=jnp.float32)
    lengths = jnp.array([8, 5], dtype=jnp.int32)

    ensemble = EnsembleModelPallas(model_num=3, key=k_model)
    out = jax.block_until_ready(ensemble(x, lengths))       # (B, 7)
    assert out.shape == (B, 7) and out.dtype == jnp.float32

    ref = _reference_forward(np.asarray(x), np.asarray(lengths),
                             ensemble.per_model, ensemble.configs)
    # Slightly looser atol than the pure-f32 version to accommodate the bf16
    # weight slabs (c-state / gate math remain f32); still tight enough to
    # catch any layout/packing bug.
    np.testing.assert_allclose(np.asarray(out), ref, rtol=2e-2, atol=6e-3)

    print("KERNEL_OK")
</pallas_src>

<mosaic_0001>
module attributes {stable_mosaic.version = 11 : i64} {
  func.func @_fused_ensemble_lstm_kernel(%arg0: memref<64x128xbf16, #tpu.memory_space<vmem>>, %arg1: memref<8x1xi32, #tpu.memory_space<vmem>>, %arg2: memref<128x1024xbf16, #tpu.memory_space<vmem>>, %arg3: memref<256x1024xbf16, #tpu.memory_space<vmem>>, %arg4: memref<1x1024xf32, #tpu.memory_space<vmem>>, %arg5: memref<512x1024xbf16, #tpu.memory_space<vmem>>, %arg6: memref<1x1024xf32, #tpu.memory_space<vmem>>, %arg7: memref<256x128xbf16, #tpu.memory_space<vmem>>, %arg8: memref<1x128xf32, #tpu.memory_space<vmem>>, %arg9: memref<8x128xf32, #tpu.memory_space<vmem>>) attributes {dimension_semantics = [], scalar_prefetch = 0 : i64, scratch_operands = 0 : i64, tpu.core_type = #tpu.core_type<tc>} {
    %c0 = arith.constant 0 : index
    %c0_0 = arith.constant 0 : index
    %0 = vector.load %arg1[%c0, %c0_0] : memref<8x1xi32, #tpu.memory_space<vmem>>, vector<8x1xi32>
    %c0_1 = arith.constant 0 : index
    %c0_2 = arith.constant 0 : index
    %1 = vector.load %arg0[%c0_1, %c0_2] : memref<64x128xbf16, #tpu.memory_space<vmem>>, vector<64x128xbf16>
    %c0_3 = arith.constant 0 : index
    %c0_4 = arith.constant 0 : index
    %2 = vector.load %arg2[%c0_3, %c0_4] : memref<128x1024xbf16, #tpu.memory_space<vmem>>, vector<128x1024xbf16>
    %cst = arith.constant dense<0.000000e+00> : vector<64x1024xf32>
    %3 = tpu.matmul %1, %2, %cst {dimension_numbers = #tpu.dot_dimension_numbers<[1], [0], [0], [1], [0, 0, 1, 1], [], []>} : vector<64x128xbf16>, vector<128x1024xbf16>, vector<64x1024xf32> -> vector<64x1024xf32>
    %c0_5 = arith.constant 0 : index
    %c0_6 = arith.constant 0 : index
    %4 = vector.load %arg4[%c0_5, %c0_6] : memref<1x1024xf32, #tpu.memory_space<vmem>>, vector<1x1024xf32>
    %5 = vector.broadcast %4 : vector<1x1024xf32> to vector<64x1024xf32>
    %6 = arith.addf %3, %5 : vector<64x1024xf32>
    %c0_7 = arith.constant 0 : index
    %c0_8 = arith.constant 0 : index
    %7 = vector.load %arg3[%c0_7, %c0_8] : memref<256x1024xbf16, #tpu.memory_space<vmem>>, vector<256x1024xbf16>
    %c0_9 = arith.constant 0 : index
    %c0_10 = arith.constant 0 : index
    %8 = vector.load %arg5[%c0_9, %c0_10] : memref<512x1024xbf16, #tpu.memory_space<vmem>>, vector<512x1024xbf16>
    %c0_11 = arith.constant 0 : index
    %c0_12 = arith.constant 0 : index
    %9 = vector.load %arg6[%c0_11, %c0_12] : memref<1x1024xf32, #tpu.memory_space<vmem>>, vector<1x1024xf32>
    %cst_13 = arith.constant 0.000000e+00 : f32
    %10 = vector.broadcast %cst_13 : f32 to vector<8x256xf32>
    %c0_i32 = arith.constant 0 : i32
    %11 = vector.broadcast %c0_i32 : i32 to vector<8x1xi32>
    %12 = arith.cmpi sgt, %0, %11 : vector<8x1xi32>
    %13 = vector.shape_cast %12 : vector<8x1xi1> to vector<8x1xi1>
    %14 = vector.broadcast %13 : vector<8x1xi1> to vector<8x256xi1>
    %15 = vector.extract_strided_slice %6 {offsets = [0, 0], sizes = [8, 1024], strides = [1, 1]} : vector<64x1024xf32> to vector<8x1024xf32>
    %16 = arith.truncf %10 : vector<8x256xf32> to vector<8x256xbf16>
    %cst_14 = arith.constant dense<0.000000e+00> : vector<8x1024xf32>
    %17 = tpu.matmul %16, %7, %cst_14 {dimension_numbers = #tpu.dot_dimension_numbers<[1], [0], [0], [1], [0, 0, 1, 1], [], []>} : vector<8x256xbf16>, vector<256x1024xbf16>, vector<8x1024xf32> -> vector<8x1024xf32>
    %18 = arith.addf %15, %17 : vector<8x1024xf32>
    %19 = vector.extract_strided_slice %18 {offsets = [0, 0], sizes = [8, 256], strides = [1, 1]} : vector<8x1024xf32> to vector<8x256xf32>
    %20 = arith.negf %19 : vector<8x256xf32>
    %21 = math.exp %20 : vector<8x256xf32>
    %cst_15 = arith.constant 1.000000e+00 : f32
    %22 = vector.broadcast %cst_15 : f32 to vector<8x256xf32>
    %23 = arith.addf %22, %21 : vector<8x256xf32>
    %24 = arith.divf %22, %23 : vector<8x256xf32>
    %25 = vector.extract_strided_slice %18 {offsets = [0, 256], sizes = [8, 256], strides = [1, 1]} : vector<8x1024xf32> to vector<8x256xf32>
    %26 = arith.negf %25 : vector<8x256xf32>
    %27 = math.exp %26 : vector<8x256xf32>
    %cst_16 = arith.constant 1.000000e+00 : f32
    %28 = vector.broadcast %cst_16 : f32 to vector<8x256xf32>
    %29 = arith.addf %28, %27 : vector<8x256xf32>
    %30 = arith.divf %28, %29 : vector<8x256xf32>
    %31 = vector.extract_strided_slice %18 {offsets = [0, 512], sizes = [8, 256], strides = [1, 1]} : vector<8x1024xf32> to vector<8x256xf32>
    %32 = math.tanh %31 : vector<8x256xf32>
    %33 = vector.extract_strided_slice %18 {offsets = [0, 768], sizes = [8, 256], strides = [1, 1]} : vector<8x1024xf32> to vector<8x256xf32>
    %34 = arith.negf %33 : vector<8x256xf32>
    %35 = math.exp %34 : vector<8x256xf32>
    %cst_17 = arith.constant 1.000000e+00 : f32
    %36 = vector.broadcast %cst_17 : f32 to vector<8x256xf32>
    %37 = arith.addf %36, %35 : vector<8x256xf32>
    %38 = arith.divf %36, %37 : vector<8x256xf32>
    %39 = arith.mulf %30, %10 : vector<8x256xf32>
    %40 = arith.mulf %24, %32 : vector<8x256xf32>
    %41 = arith.addf %39, %40 : vector<8x256xf32>
    %42 = math.tanh %41 : vector<8x256xf32>
    %43 = arith.mulf %38, %42 : vector<8x256xf32>
    %44 = arith.truncf %43 : vector<8x256xf32> to vector<8x256xbf16>
    %45 = arith.truncf %10 : vector<8x256xf32> to vector<8x256xbf16>
    %46 = tpu.concatenate %44, %45 in 1 : vector<8x256xbf16>, vector<8x256xbf16> -> vector<8x512xbf16>
    %cst_18 = arith.constant dense<0.000000e+00> : vector<8x1024xf32>
    %47 = tpu.matmul %46, %8, %cst_18 {dimension_numbers = #tpu.dot_dimension_numbers<[1], [0], [0], [1], [0, 0, 1, 1], [], []>} : vector<8x512xbf16>, vector<512x1024xbf16>, vector<8x1024xf32> -> vector<8x1024xf32>
    %48 = vector.broadcast %9 : vector<1x1024xf32> to vector<8x1024xf32>
    %49 = arith.addf %47, %48 : vector<8x1024xf32>
    %50 = vector.extract_strided_slice %49 {offsets = [0, 0], sizes = [8, 256], strides = [1, 1]} : vector<8x1024xf32> to vector<8x256xf32>
    %51 = arith.negf %50 : vector<8x256xf32>
    %52 = math.exp %51 : vector<8x256xf32>
    %cst_19 = arith.constant 1.000000e+00 : f32
    %53 = vector.broadcast %cst_19 : f32 to vector<8x256xf32>
    %54 = arith.addf %53, %52 : vector<8x256xf32>
    %55 = arith.divf %53, %54 : vector<8x256xf32>
    %56 = vector.extract_strided_slice %49 {offsets = [0, 256], sizes = [8, 256], strides = [1, 1]} : vector<8x1024xf32> to vector<8x256xf32>
    %57 = arith.negf %56 : vector<8x256xf32>
    %58 = math.exp %57 : vector<8x256xf32>
    %cst_20 = arith.constant 1.000000e+00 : f32
    %59 = vector.broadcast %cst_20 : f32 to vector<8x256xf32>
    %60 = arith.addf %59, %58 : vector<8x256xf32>
    %61 = arith.divf %59, %60 : vector<8x256xf32>
    %62 = vector.extract_strided_slice %49 {offsets = [0, 512], sizes = [8, 256], strides = [1, 1]} : vector<8x1024xf32> to vector<8x256xf32>
    %63 = math.tanh %62 : vector<8x256xf32>
    %64 = vector.extract_strided_slice %49 {offsets = [0, 768], sizes = [8, 256], strides = [1, 1]} : vector<8x1024xf32> to vector<8x256xf32>
    %65 = arith.negf %64 : vector<8x256xf32>
    %66 = math.exp %65 : vector<8x256xf32>
    %cst_21 = arith.constant 1.000000e+00 : f32
    %67 = vector.broadcast %cst_21 : f32 to vector<8x256xf32>
    %68 = arith.addf %67, %66 : vector<8x256xf32>
    %69 = arith.divf %67, %68 : vector<8x256xf32>
    %70 = arith.mulf %61, %10 : vector<8x256xf32>
    %71 = arith.mulf %55, %63 : vector<8x256xf32>
    %72 = arith.addf %70, %71 : vector<8x256xf32>
    %73 = math.tanh %72 : vector<8x256xf32>
    %74 = arith.mulf %69, %73 : vector<8x256xf32>
    %75 = arith.select %14, %43, %10 : vector<8x256xi1>, vector<8x256xf32>
    %76 = arith.select %14, %41, %10 : vector<8x256xi1>, vector<8x256xf32>
    %77 = arith.select %14, %74, %10 : vector<8x256xi1>, vector<8x256xf32>
    %78 = arith.select %14, %72, %10 : vector<8x256xi1>, vector<8x256xf32>
    %c1_i32 = arith.constant 1 : i32
    %79 = vector.broadcast %c1_i32 : i32 to vector<8x1xi32>
    %80 = arith.cmpi sgt, %0, %79 : vector<8x1xi32>
    %81 = vector.shape_cast %80 : vector<8x1xi1> to vector<8x1xi1>
    %82 = vector.broadcast %81 : vector<8x1xi1> to vector<8x256xi1>
    %83 = vector.extract_strided_slice %6 {offsets = [8, 0], sizes = [8, 1024], strides = [1, 1]} : vector<64x1024xf32> to vector<8x1024xf32>
    %84 = arith.truncf %75 : vector<8x256xf32> to vector<8x256xbf16>
    %cst_22 = arith.constant dense<0.000000e+00> : vector<8x1024xf32>
    %85 = tpu.matmul %84, %7, %cst_22 {dimension_numbers = #tpu.dot_dimension_numbers<[1], [0], [0], [1], [0, 0, 1, 1], [], []>} : vector<8x256xbf16>, vector<256x1024xbf16>, vector<8x1024xf32> -> vector<8x1024xf32>
    %86 = arith.addf %83, %85 : vector<8x1024xf32>
    %87 = vector.extract_strided_slice %86 {offsets = [0, 0], sizes = [8, 256], strides = [1, 1]} : vector<8x1024xf32> to vector<8x256xf32>
    %88 = arith.negf %87 : vector<8x256xf32>
    %89 = math.exp %88 : vector<8x256xf32>
    %cst_23 = arith.constant 1.000000e+00 : f32
    %90 = vector.broadcast %cst_23 : f32 to vector<8x256xf32>
    %91 = arith.addf %90, %89 : vector<8x256xf32>
    %92 = arith.divf %90, %91 : vector<8x256xf32>
    %93 = vector.extract_strided_slice %86 {offsets = [0, 256], sizes = [8, 256], strides = [1, 1]} : vector<8x1024xf32> to vector<8x256xf32>
    %94 = arith.negf %93 : vector<8x256xf32>
    %95 = math.exp %94 : vector<8x256xf32>
    %cst_24 = arith.constant 1.000000e+00 : f32
    %96 = vector.broadcast %cst_24 : f32 to vector<8x256xf32>
    %97 = arith.addf %96, %95 : vector<8x256xf32>
    %98 = arith.divf %96, %97 : vector<8x256xf32>
    %99 = vector.extract_strided_slice %86 {offsets = [0, 512], sizes = [8, 256], strides = [1, 1]} : vector<8x1024xf32> to vector<8x256xf32>
    %100 = math.tanh %99 : vector<8x256xf32>
    %101 = vector.extract_strided_slice %86 {offsets = [0, 768], sizes = [8, 256], strides = [1, 1]} : vector<8x1024xf32> to vector<8x256xf32>
    %102 = arith.negf %101 : vector<8x256xf32>
    %103 = math.exp %102 : vector<8x256xf32>
    %cst_25 = arith.constant 1.000000e+00 : f32
    %104 = vector.broadcast %cst_25 : f32 to vector<8x256xf32>
    %105 = arith.addf %104, %103 : vector<8x256xf32>
    %106 = arith.divf %104, %105 : vector<8x256xf32>
    %107 = arith.mulf %98, %76 : vector<8x256xf32>
    %108 = arith.mulf %92, %100 : vector<8x256xf32>
    %109 = arith.addf %107, %108 : vector<8x256xf32>
    %110 = math.tanh %109 : vector<8x256xf32>
    %111 = arith.mulf %106, %110 : vector<8x256xf32>
    %112 = arith.truncf %111 : vector<8x256xf32> to vector<8x256xbf16>
    %113 = arith.truncf %77 : vector<8x256xf32> to vector<8x256xbf16>
    %114 = tpu.concatenate %112, %113 in 1 : vector<8x256xbf16>, vector<8x256xbf16> -> vector<8x512xbf16>
    %cst_26 = arith.constant dense<0.000000e+00> : vector<8x1024xf32>
    %115 = tpu.matmul %114, %8, %cst_26 {dimension_numbers = #tpu.dot_dimension_numbers<[1], [0], [0], [1], [0, 0, 1, 1], [], []>} : vector<8x512xbf16>, vector<512x1024xbf16>, vector<8x1024xf32> -> vector<8x1024xf32>
    %116 = vector.broadcast %9 : vector<1x1024xf32> to vector<8x1024xf32>
    %117 = arith.addf %115, %116 : vector<8x1024xf32>
    %118 = vector.extract_strided_slice %117 {offsets = [0, 0], sizes = [8, 256], strides = [1, 1]} : vector<8x1024xf32> to vector<8x256xf32>
    %119 = arith.negf %118 : vector<8x256xf32>
    %120 = math.exp %119 : vector<8x256xf32>
    %cst_27 = arith.constant 1.000000e+00 : f32
    %121 = vector.broadcast %cst_27 : f32 to vector<8x256xf32>
    %122 = arith.addf %121, %120 : vector<8x256xf32>
    %123 = arith.divf %121, %122 : vector<8x256xf32>
    %124 = vector.extract_strided_slice %117 {offsets = [0, 256], sizes = [8, 256], strides = [1, 1]} : vector<8x1024xf32> to vector<8x256xf32>
    %125 = arith.negf %124 : vector<8x256xf32>
    %126 = math.exp %125 : vector<8x256xf32>
    %cst_28 = arith.constant 1.000000e+00 : f32
    %127 = vector.broadcast %cst_28 : f32 to vector<8x256xf32>
    %128 = arith.addf %127, %126 : vector<8x256xf32>
    %129 = arith.divf %127, %128 : vector<8x256xf32>
    %130 = vector.extract_strided_slice %117 {offsets = [0, 512], sizes = [8, 256], strides = [1, 1]} : vector<8x1024xf32> to vector<8x256xf32>
    %131 = math.tanh %130 : vector<8x256xf32>
    %132 = vector.extract_strided_slice %117 {offsets = [0, 768], sizes = [8, 256], strides = [1, 1]} : vector<8x1024xf32> to vector<8x256xf32>
    %133 = arith.negf %132 : vector<8x256xf32>
    %134 = math.exp %133 : vector<8x256xf32>
    %cst_29 = arith.constant 1.000000e+00 : f32
    %135 = vector.broadcast %cst_29 : f32 to vector<8x256xf32>
    %136 = arith.addf %135, %134 : vector<8x256xf32>
    %137 = arith.divf %135, %136 : vector<8x256xf32>
    %138 = arith.mulf %129, %78 : vector<8x256xf32>
    %139 = arith.mulf %123, %131 : vector<8x256xf32>
    %140 = arith.addf %138, %139 : vector<8x256xf32>
    %141 = math.tanh %140 : vector<8x256xf32>
    %142 = arith.mulf %137, %141 : vector<8x256xf32>
    %143 = arith.select %82, %111, %75 : vector<8x256xi1>, vector<8x256xf32>
    %144 = arith.select %82, %109, %76 : vector<8x256xi1>, vector<8x256xf32>
    %145 = arith.select %82, %142, %77 : vector<8x256xi1>, vector<8x256xf32>
    %146 = arith.select %82, %140, %78 : vector<8x256xi1>, vector<8x256xf32>
    %c2_i32 = arith.constant 2 : i32
    %147 = vector.broadcast %c2_i32 : i32 to vector<8x1xi32>
    %148 = arith.cmpi sgt, %0, %147 : vector<8x1xi32>
    %149 = vector.shape_cast %148 : vector<8x1xi1> to vector<8x1xi1>
    %150 = vector.broadcast %149 : vector<8x1xi1> to vector<8x256xi1>
    %151 = vector.extract_strided_slice %6 {offsets = [16, 0], sizes = [8, 1024], strides = [1, 1]} : vector<64x1024xf32> to vector<8x1024xf32>
    %152 = arith.truncf %143 : vector<8x256xf32> to vector<8x256xbf16>
    %cst_30 = arith.constant dense<0.000000e+00> : vector<8x1024xf32>
    %153 = tpu.matmul %152, %7, %cst_30 {dimension_numbers = #tpu.dot_dimension_numbers<[1], [0], [0], [1], [0, 0, 1, 1], [], []>} : vector<8x256xbf16>, vector<256x1024xbf16>, vector<8x1024xf32> -> vector<8x1024xf32>
    %154 = arith.addf %151, %153 : vector<8x1024xf32>
    %155 = vector.extract_strided_slice %154 {offsets = [0, 0], sizes = [8, 256], strides = [1, 1]} : vector<8x1024xf32> to vector<8x256xf32>
    %156 = arith.negf %155 : vector<8x256xf32>
    %157 = math.exp %156 : vector<8x256xf32>
    %cst_31 = arith.constant 1.000000e+00 : f32
    %158 = vector.broadcast %cst_31 : f32 to vector<8x256xf32>
    %159 = arith.addf %158, %157 : vector<8x256xf32>
    %160 = arith.divf %158, %159 : vector<8x256xf32>
    %161 = vector.extract_strided_slice %154 {offsets = [0, 256], sizes = [8, 256], strides = [1, 1]} : vector<8x1024xf32> to vector<8x256xf32>
    %162 = arith.negf %161 : vector<8x256xf32>
    %163 = math.exp %162 : vector<8x256xf32>
    %cst_32 = arith.constant 1.000000e+00 : f32
    %164 = vector.broadcast %cst_32 : f32 to vector<8x256xf32>
    %165 = arith.addf %164, %163 : vector<8x256xf32>
    %166 = arith.divf %164, %165 : vector<8x256xf32>
    %167 = vector.extract_strided_slice %154 {offsets = [0, 512], sizes = [8, 256], strides = [1, 1]} : vector<8x1024xf32> to vector<8x256xf32>
    %168 = math.tanh %167 : vector<8x256xf32>
    %169 = vector.extract_strided_slice %154 {offsets = [0, 768], sizes = [8, 256], strides = [1, 1]} : vector<8x1024xf32> to vector<8x256xf32>
    %170 = arith.negf %169 : vector<8x256xf32>
    %171 = math.exp %170 : vector<8x256xf32>
    %cst_33 = arith.constant 1.000000e+00 : f32
    %172 = vector.broadcast %cst_33 : f32 to vector<8x256xf32>
    %173 = arith.addf %172, %171 : vector<8x256xf32>
    %174 = arith.divf %172, %173 : vector<8x256xf32>
    %175 = arith.mulf %166, %144 : vector<8x256xf32>
    %176 = arith.mulf %160, %168 : vector<8x256xf32>
    %177 = arith.addf %175, %176 : vector<8x256xf32>
    %178 = math.tanh %177 : vector<8x256xf32>
    %179 = arith.mulf %174, %178 : vector<8x256xf32>
    %180 = arith.truncf %179 : vector<8x256xf32> to vector<8x256xbf16>
    %181 = arith.truncf %145 : vector<8x256xf32> to vector<8x256xbf16>
    %182 = tpu.concatenate %180, %181 in 1 : vector<8x256xbf16>, vector<8x256xbf16> -> vector<8x512xbf16>
    %cst_34 = arith.constant dense<0.000000e+00> : vector<8x1024xf32>
    %183 = tpu.matmul %182, %8, %cst_34 {dimension_numbers = #tpu.dot_dimension_numbers<[1], [0], [0], [1], [0, 0, 1, 1], [], []>} : vector<8x512xbf16>, vector<512x1024xbf16>, vector<8x1024xf32> -> vector<8x1024xf32>
    %184 = vector.broadcast %9 : vector<1x1024xf32> to vector<8x1024xf32>
    %185 = arith.addf %183, %184 : vector<8x1024xf32>
    %186 = vector.extract_strided_slice %185 {offsets = [0, 0], sizes = [8, 256], strides = [1, 1]} : vector<8x1024xf32> to vector<8x256xf32>
    %187 = arith.negf %186 : vector<8x256xf32>
    %188 = math.exp %187 : vector<8x256xf32>
    %cst_35 = arith.constant 1.000000e+00 : f32
    %189 = vector.broadcast %cst_35 : f32 to vector<8x256xf32>
    %190 = arith.addf %189, %188 : vector<8x256xf32>
    %191 = arith.divf %189, %190 : vector<8x256xf32>
    %192 = vector.extract_strided_slice %185 {offsets = [0, 256], sizes = [8, 256], strides = [1, 1]} : vector<8x1024xf32> to vector<8x256xf32>
    %193 = arith.negf %192 : vector<8x256xf32>
    %194 = math.exp %193 : vector<8x256xf32>
    %cst_36 = arith.constant 1.000000e+00 : f32
    %195 = vector.broadcast %cst_36 : f32 to vector<8x256xf32>
    %196 = arith.addf %195, %194 : vector<8x256xf32>
    %197 = arith.divf %195, %196 : vector<8x256xf32>
    %198 = vector.extract_strided_slice %185 {offsets = [0, 512], sizes = [8, 256], strides = [1, 1]} : vector<8x1024xf32> to vector<8x256xf32>
    %199 = math.tanh %198 : vector<8x256xf32>
    %200 = vector.extract_strided_slice %185 {offsets = [0, 768], sizes = [8, 256], strides = [1, 1]} : vector<8x1024xf32> to vector<8x256xf32>
    %201 = arith.negf %200 : vector<8x256xf32>
    %202 = math.exp %201 : vector<8x256xf32>
    %cst_37 = arith.constant 1.000000e+00 : f32
    %203 = vector.broadcast %cst_37 : f32 to vector<8x256xf32>
    %204 = arith.addf %203, %202 : vector<8x256xf32>
    %205 = arith.divf %203, %204 : vector<8x256xf32>
    %206 = arith.mulf %197, %146 : vector<8x256xf32>
    %207 = arith.mulf %191, %199 : vector<8x256xf32>
    %208 = arith.addf %206, %207 : vector<8x256xf32>
    %209 = math.tanh %208 : vector<8x256xf32>
    %210 = arith.mulf %205, %209 : vector<8x256xf32>
    %211 = arith.select %150, %179, %143 : vector<8x256xi1>, vector<8x256xf32>
    %212 = arith.select %150, %177, %144 : vector<8x256xi1>, vector<8x256xf32>
    %213 = arith.select %150, %210, %145 : vector<8x256xi1>, vector<8x256xf32>
    %214 = arith.select %150, %208, %146 : vector<8x256xi1>, vector<8x256xf32>
    %c3_i32 = arith.constant 3 : i32
    %215 = vector.broadcast %c3_i32 : i32 to vector<8x1xi32>
    %216 = arith.cmpi sgt, %0, %215 : vector<8x1xi32>
    %217 = vector.shape_cast %216 : vector<8x1xi1> to vector<8x1xi1>
    %218 = vector.broadcast %217 : vector<8x1xi1> to vector<8x256xi1>
    %219 = vector.extract_strided_slice %6 {offsets = [24, 0], sizes = [8, 1024], strides = [1, 1]} : vector<64x1024xf32> to vector<8x1024xf32>
    %220 = arith.truncf %211 : vector<8x256xf32> to vector<8x256xbf16>
    %cst_38 = arith.constant dense<0.000000e+00> : vector<8x1024xf32>
    %221 = tpu.matmul %220, %7, %cst_38 {dimension_numbers = #tpu.dot_dimension_numbers<[1], [0], [0], [1], [0, 0, 1, 1], [], []>} : vector<8x256xbf16>, vector<256x1024xbf16>, vector<8x1024xf32> -> vector<8x1024xf32>
    %222 = arith.addf %219, %221 : vector<8x1024xf32>
    %223 = vector.extract_strided_slice %222 {offsets = [0, 0], sizes = [8, 256], strides = [1, 1]} : vector<8x1024xf32> to vector<8x256xf32>
    %224 = arith.negf %223 : vector<8x256xf32>
    %225 = math.exp %224 : vector<8x256xf32>
    %cst_39 = arith.constant 1.000000e+00 : f32
    %226 = vector.broadcast %cst_39 : f32 to vector<8x256xf32>
    %227 = arith.addf %226, %225 : vector<8x256xf32>
    %228 = arith.divf %226, %227 : vector<8x256xf32>
    %229 = vector.extract_strided_slice %222 {offsets = [0, 256], sizes = [8, 256], strides = [1, 1]} : vector<8x1024xf32> to vector<8x256xf32>
    %230 = arith.negf %229 : vector<8x256xf32>
    %231 = math.exp %230 : vector<8x256xf32>
    %cst_40 = arith.constant 1.000000e+00 : f32
    %232 = vector.broadcast %cst_40 : f32 to vector<8x256xf32>
    %233 = arith.addf %232, %231 : vector<8x256xf32>
    %234 = arith.divf %232, %233 : vector<8x256xf32>
    %235 = vector.extract_strided_slice %222 {offsets = [0, 512], sizes = [8, 256], strides = [1, 1]} : vector<8x1024xf32> to vector<8x256xf32>
    %236 = math.tanh %235 : vector<8x256xf32>
    %237 = vector.extract_strided_slice %222 {offsets = [0, 768], sizes = [8, 256], strides = [1, 1]} : vector<8x1024xf32> to vector<8x256xf32>
    %238 = arith.negf %237 : vector<8x256xf32>
    %239 = math.exp %238 : vector<8x256xf32>
    %cst_41 = arith.constant 1.000000e+00 : f32
    %240 = vector.broadcast %cst_41 : f32 to vector<8x256xf32>
    %241 = arith.addf %240, %239 : vector<8x256xf32>
    %242 = arith.divf %240, %241 : vector<8x256xf32>
    %243 = arith.mulf %234, %212 : vector<8x256xf32>
    %244 = arith.mulf %228, %236 : vector<8x256xf32>
    %245 = arith.addf %243, %244 : vector<8x256xf32>
    %246 = math.tanh %245 : vector<8x256xf32>
    %247 = arith.mulf %242, %246 : vector<8x256xf32>
    %248 = arith.truncf %247 : vector<8x256xf32> to vector<8x256xbf16>
    %249 = arith.truncf %213 : vector<8x256xf32> to vector<8x256xbf16>
    %250 = tpu.concatenate %248, %249 in 1 : vector<8x256xbf16>, vector<8x256xbf16> -> vector<8x512xbf16>
    %cst_42 = arith.constant dense<0.000000e+00> : vector<8x1024xf32>
    %251 = tpu.matmul %250, %8, %cst_42 {dimension_numbers = #tpu.dot_dimension_numbers<[1], [0], [0], [1], [0, 0, 1, 1], [], []>} : vector<8x512xbf16>, vector<512x1024xbf16>, vector<8x1024xf32> -> vector<8x1024xf32>
    %252 = vector.broadcast %9 : vector<1x1024xf32> to vector<8x1024xf32>
    %253 = arith.addf %251, %252 : vector<8x1024xf32>
    %254 = vector.extract_strided_slice %253 {offsets = [0, 0], sizes = [8, 256], strides = [1, 1]} : vector<8x1024xf32> to vector<8x256xf32>
    %255 = arith.negf %254 : vector<8x256xf32>
    %256 = math.exp %255 : vector<8x256xf32>
    %cst_43 = arith.constant 1.000000e+00 : f32
    %257 = vector.broadcast %cst_43 : f32 to vector<8x256xf32>
    %258 = arith.addf %257, %256 : vector<8x256xf32>
    %259 = arith.divf %257, %258 : vector<8x256xf32>
    %260 = vector.extract_strided_slice %253 {offsets = [0, 256], sizes = [8, 256], strides = [1, 1]} : vector<8x1024xf32> to vector<8x256xf32>
    %261 = arith.negf %260 : vector<8x256xf32>
    %262 = math.exp %261 : vector<8x256xf32>
    %cst_44 = arith.constant 1.000000e+00 : f32
    %263 = vector.broadcast %cst_44 : f32 to vector<8x256xf32>
    %264 = arith.addf %263, %262 : vector<8x256xf32>
    %265 = arith.divf %263, %264 : vector<8x256xf32>
    %266 = vector.extract_strided_slice %253 {offsets = [0, 512], sizes = [8, 256], strides = [1, 1]} : vector<8x1024xf32> to vector<8x256xf32>
    %267 = math.tanh %266 : vector<8x256xf32>
    %268 = vector.extract_strided_slice %253 {offsets = [0, 768], sizes = [8, 256], strides = [1, 1]} : vector<8x1024xf32> to vector<8x256xf32>
    %269 = arith.negf %268 : vector<8x256xf32>
    %270 = math.exp %269 : vector<8x256xf32>
    %cst_45 = arith.constant 1.000000e+00 : f32
    %271 = vector.broadcast %cst_45 : f32 to vector<8x256xf32>
    %272 = arith.addf %271, %270 : vector<8x256xf32>
    %273 = arith.divf %271, %272 : vector<8x256xf32>
    %274 = arith.mulf %265, %214 : vector<8x256xf32>
    %275 = arith.mulf %259, %267 : vector<8x256xf32>
    %276 = arith.addf %274, %275 : vector<8x256xf32>
    %277 = math.tanh %276 : vector<8x256xf32>
    %278 = arith.mulf %273, %277 : vector<8x256xf32>
    %279 = arith.select %218, %247, %211 : vector<8x256xi1>, vector<8x256xf32>
    %280 = arith.select %218, %245, %212 : vector<8x256xi1>, vector<8x256xf32>
    %281 = arith.select %218, %278, %213 : vector<8x256xi1>, vector<8x256xf32>
    %282 = arith.select %218, %276, %214 : vector<8x256xi1>, vector<8x256xf32>
    %c4_i32 = arith.constant 4 : i32
    %283 = vector.broadcast %c4_i32 : i32 to vector<8x1xi32>
    %284 = arith.cmpi sgt, %0, %283 : vector<8x1xi32>
    %285 = vector.shape_cast %284 : vector<8x1xi1> to vector<8x1xi1>
    %286 = vector.broadcast %285 : vector<8x1xi1> to vector<8x256xi1>
    %287 = vector.extract_strided_slice %6 {offsets = [32, 0], sizes = [8, 1024], strides = [1, 1]} : vector<64x1024xf32> to vector<8x1024xf32>
    %288 = arith.truncf %279 : vector<8x256xf32> to vector<8x256xbf16>
    %cst_46 = arith.constant dense<0.000000e+00> : vector<8x1024xf32>
    %289 = tpu.matmul %288, %7, %cst_46 {dimension_numbers = #tpu.dot_dimension_numbers<[1], [0], [0], [1], [0, 0, 1, 1], [], []>} : vector<8x256xbf16>, vector<256x1024xbf16>, vector<8x1024xf32> -> vector<8x1024xf32>
    %290 = arith.addf %287, %289 : vector<8x1024xf32>
    %291 = vector.extract_strided_slice %290 {offsets = [0, 0], sizes = [8, 256], strides = [1, 1]} : vector<8x1024xf32> to vector<8x256xf32>
    %292 = arith.negf %291 : vector<8x256xf32>
    %293 = math.exp %292 : vector<8x256xf32>
    %cst_47 = arith.constant 1.000000e+00 : f32
    %294 = vector.broadcast %cst_47 : f32 to vector<8x256xf32>
    %295 = arith.addf %294, %293 : vector<8x256xf32>
    %296 = arith.divf %294, %295 : vector<8x256xf32>
    %297 = vector.extract_strided_slice %290 {offsets = [0, 256], sizes = [8, 256], strides = [1, 1]} : vector<8x1024xf32> to vector<8x256xf32>
    %298 = arith.negf %297 : vector<8x256xf32>
    %299 = math.exp %298 : vector<8x256xf32>
    %cst_48 = arith.constant 1.000000e+00 : f32
    %300 = vector.broadcast %cst_48 : f32 to vector<8x256xf32>
    %301 = arith.addf %300, %299 : vector<8x256xf32>
    %302 = arith.divf %300, %301 : vector<8x256xf32>
    %303 = vector.extract_strided_slice %290 {offsets = [0, 512], sizes = [8, 256], strides = [1, 1]} : vector<8x1024xf32> to vector<8x256xf32>
    %304 = math.tanh %303 : vector<8x256xf32>
    %305 = vector.extract_strided_slice %290 {offsets = [0, 768], sizes = [8, 256], strides = [1, 1]} : vector<8x1024xf32> to vector<8x256xf32>
    %306 = arith.negf %305 : vector<8x256xf32>
    %307 = math.exp %306 : vector<8x256xf32>
    %cst_49 = arith.constant 1.000000e+00 : f32
    %308 = vector.broadcast %cst_49 : f32 to vector<8x256xf32>
    %309 = arith.addf %308, %307 : vector<8x256xf32>
    %310 = arith.divf %308, %309 : vector<8x256xf32>
    %311 = arith.mulf %302, %280 : vector<8x256xf32>
    %312 = arith.mulf %296, %304 : vector<8x256xf32>
    %313 = arith.addf %311, %312 : vector<8x256xf32>
    %314 = math.tanh %313 : vector<8x256xf32>
    %315 = arith.mulf %310, %314 : vector<8x256xf32>
    %316 = arith.truncf %315 : vector<8x256xf32> to vector<8x256xbf16>
    %317 = arith.truncf %281 : vector<8x256xf32> to vector<8x256xbf16>
    %318 = tpu.concatenate %316, %317 in 1 : vector<8x256xbf16>, vector<8x256xbf16> -> vector<8x512xbf16>
    %cst_50 = arith.constant dense<0.000000e+00> : vector<8x1024xf32>
    %319 = tpu.matmul %318, %8, %cst_50 {dimension_numbers = #tpu.dot_dimension_numbers<[1], [0], [0], [1], [0, 0, 1, 1], [], []>} : vector<8x512xbf16>, vector<512x1024xbf16>, vector<8x1024xf32> -> vector<8x1024xf32>
    %320 = vector.broadcast %9 : vector<1x1024xf32> to vector<8x1024xf32>
    %321 = arith.addf %319, %320 : vector<8x1024xf32>
    %322 = vector.extract_strided_slice %321 {offsets = [0, 0], sizes = [8, 256], strides = [1, 1]} : vector<8x1024xf32> to vector<8x256xf32>
    %323 = arith.negf %322 : vector<8x256xf32>
    %324 = math.exp %323 : vector<8x256xf32>
    %cst_51 = arith.constant 1.000000e+00 : f32
    %325 = vector.broadcast %cst_51 : f32 to vector<8x256xf32>
    %326 = arith.addf %325, %324 : vector<8x256xf32>
    %327 = arith.divf %325, %326 : vector<8x256xf32>
    %328 = vector.extract_strided_slice %321 {offsets = [0, 256], sizes = [8, 256], strides = [1, 1]} : vector<8x1024xf32> to vector<8x256xf32>
    %329 = arith.negf %328 : vector<8x256xf32>
    %330 = math.exp %329 : vector<8x256xf32>
    %cst_52 = arith.constant 1.000000e+00 : f32
    %331 = vector.broadcast %cst_52 : f32 to vector<8x256xf32>
    %332 = arith.addf %331, %330 : vector<8x256xf32>
    %333 = arith.divf %331, %332 : vector<8x256xf32>
    %334 = vector.extract_strided_slice %321 {offsets = [0, 512], sizes = [8, 256], strides = [1, 1]} : vector<8x1024xf32> to vector<8x256xf32>
    %335 = math.tanh %334 : vector<8x256xf32>
    %336 = vector.extract_strided_slice %321 {offsets = [0, 768], sizes = [8, 256], strides = [1, 1]} : vector<8x1024xf32> to vector<8x256xf32>
    %337 = arith.negf %336 : vector<8x256xf32>
    %338 = math.exp %337 : vector<8x256xf32>
    %cst_53 = arith.constant 1.000000e+00 : f32
    %339 = vector.broadcast %cst_53 : f32 to vector<8x256xf32>
    %340 = arith.addf %339, %338 : vector<8x256xf32>
    %341 = arith.divf %339, %340 : vector<8x256xf32>
    %342 = arith.mulf %333, %282 : vector<8x256xf32>
    %343 = arith.mulf %327, %335 : vector<8x256xf32>
    %344 = arith.addf %342, %343 : vector<8x256xf32>
    %345 = math.tanh %344 : vector<8x256xf32>
    %346 = arith.mulf %341, %345 : vector<8x256xf32>
    %347 = arith.select %286, %315, %279 : vector<8x256xi1>, vector<8x256xf32>
    %348 = arith.select %286, %313, %280 : vector<8x256xi1>, vector<8x256xf32>
    %349 = arith.select %286, %346, %281 : vector<8x256xi1>, vector<8x256xf32>
    %350 = arith.select %286, %344, %282 : vector<8x256xi1>, vector<8x256xf32>
    %c5_i32 = arith.constant 5 : i32
    %351 = vector.broadcast %c5_i32 : i32 to vector<8x1xi32>
    %352 = arith.cmpi sgt, %0, %351 : vector<8x1xi32>
    %353 = vector.shape_cast %352 : vector<8x1xi1> to vector<8x1xi1>
    %354 = vector.broadcast %353 : vector<8x1xi1> to vector<8x256xi1>
    %355 = vector.extract_strided_slice %6 {offsets = [40, 0], sizes = [8, 1024], strides = [1, 1]} : vector<64x1024xf32> to vector<8x1024xf32>
    %356 = arith.truncf %347 : vector<8x256xf32> to vector<8x256xbf16>
    %cst_54 = arith.constant dense<0.000000e+00> : vector<8x1024xf32>
    %357 = tpu.matmul %356, %7, %cst_54 {dimension_numbers = #tpu.dot_dimension_numbers<[1], [0], [0], [1], [0, 0, 1, 1], [], []>} : vector<8x256xbf16>, vector<256x1024xbf16>, vector<8x1024xf32> -> vector<8x1024xf32>
    %358 = arith.addf %355, %357 : vector<8x1024xf32>
    %359 = vector.extract_strided_slice %358 {offsets = [0, 0], sizes = [8, 256], strides = [1, 1]} : vector<8x1024xf32> to vector<8x256xf32>
    %360 = arith.negf %359 : vector<8x256xf32>
    %361 = math.exp %360 : vector<8x256xf32>
    %cst_55 = arith.constant 1.000000e+00 : f32
    %362 = vector.broadcast %cst_55 : f32 to vector<8x256xf32>
    %363 = arith.addf %362, %361 : vector<8x256xf32>
    %364 = arith.divf %362, %363 : vector<8x256xf32>
    %365 = vector.extract_strided_slice %358 {offsets = [0, 256], sizes = [8, 256], strides = [1, 1]} : vector<8x1024xf32> to vector<8x256xf32>
    %366 = arith.negf %365 : vector<8x256xf32>
    %367 = math.exp %366 : vector<8x256xf32>
    %cst_56 = arith.constant 1.000000e+00 : f32
    %368 = vector.broadcast %cst_56 : f32 to vector<8x256xf32>
    %369 = arith.addf %368, %367 : vector<8x256xf32>
    %370 = arith.divf %368, %369 : vector<8x256xf32>
    %371 = vector.extract_strided_slice %358 {offsets = [0, 512], sizes = [8, 256], strides = [1, 1]} : vector<8x1024xf32> to vector<8x256xf32>
    %372 = math.tanh %371 : vector<8x256xf32>
    %373 = vector.extract_strided_slice %358 {offsets = [0, 768], sizes = [8, 256], strides = [1, 1]} : vector<8x1024xf32> to vector<8x256xf32>
    %374 = arith.negf %373 : vector<8x256xf32>
    %375 = math.exp %374 : vector<8x256xf32>
    %cst_57 = arith.constant 1.000000e+00 : f32
    %376 = vector.broadcast %cst_57 : f32 to vector<8x256xf32>
    %377 = arith.addf %376, %375 : vector<8x256xf32>
    %378 = arith.divf %376, %377 : vector<8x256xf32>
    %379 = arith.mulf %370, %348 : vector<8x256xf32>
    %380 = arith.mulf %364, %372 : vector<8x256xf32>
    %381 = arith.addf %379, %380 : vector<8x256xf32>
    %382 = math.tanh %381 : vector<8x256xf32>
    %383 = arith.mulf %378, %382 : vector<8x256xf32>
    %384 = arith.truncf %383 : vector<8x256xf32> to vector<8x256xbf16>
    %385 = arith.truncf %349 : vector<8x256xf32> to vector<8x256xbf16>
    %386 = tpu.concatenate %384, %385 in 1 : vector<8x256xbf16>, vector<8x256xbf16> -> vector<8x512xbf16>
    %cst_58 = arith.constant dense<0.000000e+00> : vector<8x1024xf32>
    %387 = tpu.matmul %386, %8, %cst_58 {dimension_numbers = #tpu.dot_dimension_numbers<[1], [0], [0], [1], [0, 0, 1, 1], [], []>} : vector<8x512xbf16>, vector<512x1024xbf16>, vector<8x1024xf32> -> vector<8x1024xf32>
    %388 = vector.broadcast %9 : vector<1x1024xf32> to vector<8x1024xf32>
    %389 = arith.addf %387, %388 : vector<8x1024xf32>
    %390 = vector.extract_strided_slice %389 {offsets = [0, 0], sizes = [8, 256], strides = [1, 1]} : vector<8x1024xf32> to vector<8x256xf32>
    %391 = arith.negf %390 : vector<8x256xf32>
    %392 = math.exp %391 : vector<8x256xf32>
    %cst_59 = arith.constant 1.000000e+00 : f32
    %393 = vector.broadcast %cst_59 : f32 to vector<8x256xf32>
    %394 = arith.addf %393, %392 : vector<8x256xf32>
    %395 = arith.divf %393, %394 : vector<8x256xf32>
    %396 = vector.extract_strided_slice %389 {offsets = [0, 256], sizes = [8, 256], strides = [1, 1]} : vector<8x1024xf32> to vector<8x256xf32>
    %397 = arith.negf %396 : vector<8x256xf32>
    %398 = math.exp %397 : vector<8x256xf32>
    %cst_60 = arith.constant 1.000000e+00 : f32
    %399 = vector.broadcast %cst_60 : f32 to vector<8x256xf32>
    %400 = arith.addf %399, %398 : vector<8x256xf32>
    %401 = arith.divf %399, %400 : vector<8x256xf32>
    %402 = vector.extract_strided_slice %389 {offsets = [0, 512], sizes = [8, 256], strides = [1, 1]} : vector<8x1024xf32> to vector<8x256xf32>
    %403 = math.tanh %402 : vector<8x256xf32>
    %404 = vector.extract_strided_slice %389 {offsets = [0, 768], sizes = [8, 256], strides = [1, 1]} : vector<8x1024xf32> to vector<8x256xf32>
    %405 = arith.negf %404 : vector<8x256xf32>
    %406 = math.exp %405 : vector<8x256xf32>
    %cst_61 = arith.constant 1.000000e+00 : f32
    %407 = vector.broadcast %cst_61 : f32 to vector<8x256xf32>
    %408 = arith.addf %407, %406 : vector<8x256xf32>
    %409 = arith.divf %407, %408 : vector<8x256xf32>
    %410 = arith.mulf %401, %350 : vector<8x256xf32>
    %411 = arith.mulf %395, %403 : vector<8x256xf32>
    %412 = arith.addf %410, %411 : vector<8x256xf32>
    %413 = math.tanh %412 : vector<8x256xf32>
    %414 = arith.mulf %409, %413 : vector<8x256xf32>
    %415 = arith.select %354, %383, %347 : vector<8x256xi1>, vector<8x256xf32>
    %416 = arith.select %354, %381, %348 : vector<8x256xi1>, vector<8x256xf32>
    %417 = arith.select %354, %414, %349 : vector<8x256xi1>, vector<8x256xf32>
    %418 = arith.select %354, %412, %350 : vector<8x256xi1>, vector<8x256xf32>
    %c6_i32 = arith.constant 6 : i32
    %419 = vector.broadcast %c6_i32 : i32 to vector<8x1xi32>
    %420 = arith.cmpi sgt, %0, %419 : vector<8x1xi32>
    %421 = vector.shape_cast %420 : vector<8x1xi1> to vector<8x1xi1>
    %422 = vector.broadcast %421 : vector<8x1xi1> to vector<8x256xi1>
    %423 = vector.extract_strided_slice %6 {offsets = [48, 0], sizes = [8, 1024], strides = [1, 1]} : vector<64x1024xf32> to vector<8x1024xf32>
    %424 = arith.truncf %415 : vector<8x256xf32> to vector<8x256xbf16>
    %cst_62 = arith.constant dense<0.000000e+00> : vector<8x1024xf32>
    %425 = tpu.matmul %424, %7, %cst_62 {dimension_numbers = #tpu.dot_dimension_numbers<[1], [0], [0], [1], [0, 0, 1, 1], [], []>} : vector<8x256xbf16>, vector<256x1024xbf16>, vector<8x1024xf32> -> vector<8x1024xf32>
    %426 = arith.addf %423, %425 : vector<8x1024xf32>
    %427 = vector.extract_strided_slice %426 {offsets = [0, 0], sizes = [8, 256], strides = [1, 1]} : vector<8x1024xf32> to vector<8x256xf32>
    %428 = arith.negf %427 : vector<8x256xf32>
    %429 = math.exp %428 : vector<8x256xf32>
    %cst_63 = arith.constant 1.000000e+00 : f32
    %430 = vector.broadcast %cst_63 : f32 to vector<8x256xf32>
    %431 = arith.addf %430, %429 : vector<8x256xf32>
    %432 = arith.divf %430, %431 : vector<8x256xf32>
    %433 = vector.extract_strided_slice %426 {offsets = [0, 256], sizes = [8, 256], strides = [1, 1]} : vector<8x1024xf32> to vector<8x256xf32>
    %434 = arith.negf %433 : vector<8x256xf32>
    %435 = math.exp %434 : vector<8x256xf32>
    %cst_64 = arith.constant 1.000000e+00 : f32
    %436 = vector.broadcast %cst_64 : f32 to vector<8x256xf32>
    %437 = arith.addf %436, %435 : vector<8x256xf32>
    %438 = arith.divf %436, %437 : vector<8x256xf32>
    %439 = vector.extract_strided_slice %426 {offsets = [0, 512], sizes = [8, 256], strides = [1, 1]} : vector<8x1024xf32> to vector<8x256xf32>
    %440 = math.tanh %439 : vector<8x256xf32>
    %441 = vector.extract_strided_slice %426 {offsets = [0, 768], sizes = [8, 256], strides = [1, 1]} : vector<8x1024xf32> to vector<8x256xf32>
    %442 = arith.negf %441 : vector<8x256xf32>
    %443 = math.exp %442 : vector<8x256xf32>
    %cst_65 = arith.constant 1.000000e+00 : f32
    %444 = vector.broadcast %cst_65 : f32 to vector<8x256xf32>
    %445 = arith.addf %444, %443 : vector<8x256xf32>
    %446 = arith.divf %444, %445 : vector<8x256xf32>
    %447 = arith.mulf %438, %416 : vector<8x256xf32>
    %448 = arith.mulf %432, %440 : vector<8x256xf32>
    %449 = arith.addf %447, %448 : vector<8x256xf32>
    %450 = math.tanh %449 : vector<8x256xf32>
    %451 = arith.mulf %446, %450 : vector<8x256xf32>
    %452 = arith.truncf %451 : vector<8x256xf32> to vector<8x256xbf16>
    %453 = arith.truncf %417 : vector<8x256xf32> to vector<8x256xbf16>
    %454 = tpu.concatenate %452, %453 in 1 : vector<8x256xbf16>, vector<8x256xbf16> -> vector<8x512xbf16>
    %cst_66 = arith.constant dense<0.000000e+00> : vector<8x1024xf32>
    %455 = tpu.matmul %454, %8, %cst_66 {dimension_numbers = #tpu.dot_dimension_numbers<[1], [0], [0], [1], [0, 0, 1, 1], [], []>} : vector<8x512xbf16>, vector<512x1024xbf16>, vector<8x1024xf32> -> vector<8x1024xf32>
    %456 = vector.broadcast %9 : vector<1x1024xf32> to vector<8x1024xf32>
    %457 = arith.addf %455, %456 : vector<8x1024xf32>
    %458 = vector.extract_strided_slice %457 {offsets = [0, 0], sizes = [8, 256], strides = [1, 1]} : vector<8x1024xf32> to vector<8x256xf32>
    %459 = arith.negf %458 : vector<8x256xf32>
    %460 = math.exp %459 : vector<8x256xf32>
    %cst_67 = arith.constant 1.000000e+00 : f32
    %461 = vector.broadcast %cst_67 : f32 to vector<8x256xf32>
    %462 = arith.addf %461, %460 : vector<8x256xf32>
    %463 = arith.divf %461, %462 : vector<8x256xf32>
    %464 = vector.extract_strided_slice %457 {offsets = [0, 256], sizes = [8, 256], strides = [1, 1]} : vector<8x1024xf32> to vector<8x256xf32>
    %465 = arith.negf %464 : vector<8x256xf32>
    %466 = math.exp %465 : vector<8x256xf32>
    %cst_68 = arith.constant 1.000000e+00 : f32
    %467 = vector.broadcast %cst_68 : f32 to vector<8x256xf32>
    %468 = arith.addf %467, %466 : vector<8x256xf32>
    %469 = arith.divf %467, %468 : vector<8x256xf32>
    %470 = vector.extract_strided_slice %457 {offsets = [0, 512], sizes = [8, 256], strides = [1, 1]} : vector<8x1024xf32> to vector<8x256xf32>
    %471 = math.tanh %470 : vector<8x256xf32>
    %472 = vector.extract_strided_slice %457 {offsets = [0, 768], sizes = [8, 256], strides = [1, 1]} : vector<8x1024xf32> to vector<8x256xf32>
    %473 = arith.negf %472 : vector<8x256xf32>
    %474 = math.exp %473 : vector<8x256xf32>
    %cst_69 = arith.constant 1.000000e+00 : f32
    %475 = vector.broadcast %cst_69 : f32 to vector<8x256xf32>
    %476 = arith.addf %475, %474 : vector<8x256xf32>
    %477 = arith.divf %475, %476 : vector<8x256xf32>
    %478 = arith.mulf %469, %418 : vector<8x256xf32>
    %479 = arith.mulf %463, %471 : vector<8x256xf32>
    %480 = arith.addf %478, %479 : vector<8x256xf32>
    %481 = math.tanh %480 : vector<8x256xf32>
    %482 = arith.mulf %477, %481 : vector<8x256xf32>
    %483 = arith.select %422, %451, %415 : vector<8x256xi1>, vector<8x256xf32>
    %484 = arith.select %422, %449, %416 : vector<8x256xi1>, vector<8x256xf32>
    %485 = arith.select %422, %482, %417 : vector<8x256xi1>, vector<8x256xf32>
    %486 = arith.select %422, %480, %418 : vector<8x256xi1>, vector<8x256xf32>
    %c7_i32 = arith.constant 7 : i32
    %487 = vector.broadcast %c7_i32 : i32 to vector<8x1xi32>
    %488 = arith.cmpi sgt, %0, %487 : vector<8x1xi32>
    %489 = vector.shape_cast %488 : vector<8x1xi1> to vector<8x1xi1>
    %490 = vector.broadcast %489 : vector<8x1xi1> to vector<8x256xi1>
    %491 = vector.extract_strided_slice %6 {offsets = [56, 0], sizes = [8, 1024], strides = [1, 1]} : vector<64x1024xf32> to vector<8x1024xf32>
    %492 = arith.truncf %483 : vector<8x256xf32> to vector<8x256xbf16>
    %cst_70 = arith.constant dense<0.000000e+00> : vector<8x1024xf32>
    %493 = tpu.matmul %492, %7, %cst_70 {dimension_numbers = #tpu.dot_dimension_numbers<[1], [0], [0], [1], [0, 0, 1, 1], [], []>} : vector<8x256xbf16>, vector<256x1024xbf16>, vector<8x1024xf32> -> vector<8x1024xf32>
    %494 = arith.addf %491, %493 : vector<8x1024xf32>
    %495 = vector.extract_strided_slice %494 {offsets = [0, 0], sizes = [8, 256], strides = [1, 1]} : vector<8x1024xf32> to vector<8x256xf32>
    %496 = arith.negf %495 : vector<8x256xf32>
    %497 = math.exp %496 : vector<8x256xf32>
    %cst_71 = arith.constant 1.000000e+00 : f32
    %498 = vector.broadcast %cst_71 : f32 to vector<8x256xf32>
    %499 = arith.addf %498, %497 : vector<8x256xf32>
    %500 = arith.divf %498, %499 : vector<8x256xf32>
    %501 = vector.extract_strided_slice %494 {offsets = [0, 256], sizes = [8, 256], strides = [1, 1]} : vector<8x1024xf32> to vector<8x256xf32>
    %502 = arith.negf %501 : vector<8x256xf32>
    %503 = math.exp %502 : vector<8x256xf32>
    %cst_72 = arith.constant 1.000000e+00 : f32
    %504 = vector.broadcast %cst_72 : f32 to vector<8x256xf32>
    %505 = arith.addf %504, %503 : vector<8x256xf32>
    %506 = arith.divf %504, %505 : vector<8x256xf32>
    %507 = vector.extract_strided_slice %494 {offsets = [0, 512], sizes = [8, 256], strides = [1, 1]} : vector<8x1024xf32> to vector<8x256xf32>
    %508 = math.tanh %507 : vector<8x256xf32>
    %509 = vector.extract_strided_slice %494 {offsets = [0, 768], sizes = [8, 256], strides = [1, 1]} : vector<8x1024xf32> to vector<8x256xf32>
    %510 = arith.negf %509 : vector<8x256xf32>
    %511 = math.exp %510 : vector<8x256xf32>
    %cst_73 = arith.constant 1.000000e+00 : f32
    %512 = vector.broadcast %cst_73 : f32 to vector<8x256xf32>
    %513 = arith.addf %512, %511 : vector<8x256xf32>
    %514 = arith.divf %512, %513 : vector<8x256xf32>
    %515 = arith.mulf %506, %484 : vector<8x256xf32>
    %516 = arith.mulf %500, %508 : vector<8x256xf32>
    %517 = arith.addf %515, %516 : vector<8x256xf32>
    %518 = math.tanh %517 : vector<8x256xf32>
    %519 = arith.mulf %514, %518 : vector<8x256xf32>
    %520 = arith.truncf %519 : vector<8x256xf32> to vector<8x256xbf16>
    %521 = arith.truncf %485 : vector<8x256xf32> to vector<8x256xbf16>
    %522 = tpu.concatenate %520, %521 in 1 : vector<8x256xbf16>, vector<8x256xbf16> -> vector<8x512xbf16>
    %cst_74 = arith.constant dense<0.000000e+00> : vector<8x1024xf32>
    %523 = tpu.matmul %522, %8, %cst_74 {dimension_numbers = #tpu.dot_dimension_numbers<[1], [0], [0], [1], [0, 0, 1, 1], [], []>} : vector<8x512xbf16>, vector<512x1024xbf16>, vector<8x1024xf32> -> vector<8x1024xf32>
    %524 = vector.broadcast %9 : vector<1x1024xf32> to vector<8x1024xf32>
    %525 = arith.addf %523, %524 : vector<8x1024xf32>
    %526 = vector.extract_strided_slice %525 {offsets = [0, 0], sizes = [8, 256], strides = [1, 1]} : vector<8x1024xf32> to vector<8x256xf32>
    %527 = arith.negf %526 : vector<8x256xf32>
    %528 = math.exp %527 : vector<8x256xf32>
    %cst_75 = arith.constant 1.000000e+00 : f32
    %529 = vector.broadcast %cst_75 : f32 to vector<8x256xf32>
    %530 = arith.addf %529, %528 : vector<8x256xf32>
    %531 = arith.divf %529, %530 : vector<8x256xf32>
    %532 = vector.extract_strided_slice %525 {offsets = [0, 256], sizes = [8, 256], strides = [1, 1]} : vector<8x1024xf32> to vector<8x256xf32>
    %533 = arith.negf %532 : vector<8x256xf32>
    %534 = math.exp %533 : vector<8x256xf32>
    %cst_76 = arith.constant 1.000000e+00 : f32
    %535 = vector.broadcast %cst_76 : f32 to vector<8x256xf32>
    %536 = arith.addf %535, %534 : vector<8x256xf32>
    %537 = arith.divf %535, %536 : vector<8x256xf32>
    %538 = vector.extract_strided_slice %525 {offsets = [0, 512], sizes = [8, 256], strides = [1, 1]} : vector<8x1024xf32> to vector<8x256xf32>
    %539 = math.tanh %538 : vector<8x256xf32>
    %540 = vector.extract_strided_slice %525 {offsets = [0, 768], sizes = [8, 256], strides = [1, 1]} : vector<8x1024xf32> to vector<8x256xf32>
    %541 = arith.negf %540 : vector<8x256xf32>
    %542 = math.exp %541 : vector<8x256xf32>
    %cst_77 = arith.constant 1.000000e+00 : f32
    %543 = vector.broadcast %cst_77 : f32 to vector<8x256xf32>
    %544 = arith.addf %543, %542 : vector<8x256xf32>
    %545 = arith.divf %543, %544 : vector<8x256xf32>
    %546 = arith.mulf %537, %486 : vector<8x256xf32>
    %547 = arith.mulf %531, %539 : vector<8x256xf32>
    %548 = arith.addf %546, %547 : vector<8x256xf32>
    %549 = math.tanh %548 : vector<8x256xf32>
    %550 = arith.mulf %545, %549 : vector<8x256xf32>
    %551 = arith.select %490, %550, %485 : vector<8x256xi1>, vector<8x256xf32>
    %552 = arith.truncf %551 : vector<8x256xf32> to vector<8x256xbf16>
    %c0_78 = arith.constant 0 : index
    %c0_79 = arith.constant 0 : index
    %553 = vector.load %arg7[%c0_78, %c0_79] : memref<256x128xbf16, #tpu.memory_space<vmem>>, vector<256x128xbf16>
    %cst_80 = arith.constant dense<0.000000e+00> : vector<8x128xf32>
    %554 = tpu.matmul %552, %553, %cst_80 {dimension_numbers = #tpu.dot_dimension_numbers<[1], [0], [0], [1], [0, 0, 1, 1], [], []>} : vector<8x256xbf16>, vector<256x128xbf16>, vector<8x128xf32> -> vector<8x128xf32>
    %c0_81 = arith.constant 0 : index
    %c0_82 = arith.constant 0 : index
    %555 = vector.load %arg8[%c0_81, %c0_82] : memref<1x128xf32, #tpu.memory_space<vmem>>, vector<1x128xf32>
    %556 = vector.broadcast %555 : vector<1x128xf32> to vector<8x128xf32>
    %557 = arith.addf %554, %556 : vector<8x128xf32>
    %c0_83 = arith.constant 0 : index
    %c0_84 = arith.constant 0 : index
    %558 = vector.load %arg9[%c0_83, %c0_84] : memref<8x128xf32, #tpu.memory_space<vmem>>, vector<8x128xf32>
    tpu.vector_store %arg9[%c0_83, %c0_84], %557 {strides = array<i32>} : memref<8x128xf32, #tpu.memory_space<vmem>>, vector<8x128xf32>,
    return
  }
}

</mosaic_0001>

<llo_original>
// kernel: ensemble_forward.1
$region0: #{ensemble_forward.1}
  #allocation0 [shape = 'u32[]', space=smem, size = 0x4, offset = 0x4, fixed_abs, tag = 'smem constant byte address 0x4 - core index']
  #allocation1 [shape = 'u32[72,128]{1,0:T(1,128)}', space=vmem, size = 0x9000, scoped, tag = 'internal scratch']
  %s0 = inlined_call_operand.vmem [shape: bf16[64,128], index: 0, kind: input, shape index: {}]
  %s1 = inlined_call_operand.vmem [shape: s32[8,1], index: 1, kind: input, shape index: {}]
  %s2 = inlined_call_operand.hbm [shape: bf16[128,1024], index: 2, kind: input, shape index: {}]
  %s3 = inlined_call_operand.hbm [shape: bf16[256,1024], index: 3, kind: input, shape index: {}]
  %s4 = inlined_call_operand.vmem [shape: f32[1,1024], index: 4, kind: input, shape index: {}]
  %s5 = inlined_call_operand.hbm [shape: bf16[512,1024], index: 5, kind: input, shape index: {}]
  %s6 = inlined_call_operand.hbm [shape: f32[1,1024], index: 6, kind: input, shape index: {}]
  %s7 = inlined_call_operand.vmem [shape: bf16[256,128], index: 7, kind: input, shape index: {}]
  %s8 = inlined_call_operand.vmem [shape: f32[1,128], index: 8, kind: input, shape index: {}]
  %s9 = inlined_call_operand.vmem [shape: f32[8,128], index: 9, kind: output, shape index: {}]
  %s10 = sld [smem:[#allocation0]]
  $region62: #{ensemble_forward.1} parent=0
    _
  %s12 = ssub.s32 1, %s10
  %s13 = scalar_select 0, %s12, %s10
  $region1: #{ensemble_forward.1} parent=0
    #allocation2 [shape = 'u8[262144]{0}', space=vmem, size = 0x40000, scoped, tag = 'input window, operand 2, single buffered']
    #allocation3 [shape = 's32[1]{0}', space=sflag, size = 0x4, scoped, tag = 'scoped memory for ensemble_forward.1']
    #allocation4 [shape = 'u8[524288]{0}', space=vmem, size = 0x80000, scoped, tag = 'input window, operand 3, single buffered']
    #allocation5 [shape = 's32[1]{0}', space=sflag, size = 0x4, scoped, tag = 'scoped memory for ensemble_forward.1']
    #allocation6 [shape = 'u8[1048576]{0}', space=vmem, size = 0x100000, scoped, tag = 'input window, operand 5, single buffered']
    #allocation7 [shape = 'u8[4096]{0}', space=vmem, size = 0x1000, scoped, tag = 'input window, operand 6, single buffered']
    #allocation8 [shape = 's32[1]{0}', space=sflag, size = 0x4, scoped, tag = 'scoped memory for ensemble_forward.1']
    %14 = vsyncpa [#allocation3], 0
    %15 = vsyncpa [#allocation5], 0
    %16 = vsyncpa [#allocation8], 0
    // Predicated region
    $region2: #{ensemble_forward.1} parent=1 // pred_check
      _
    $region3: #{ensemble_forward.1} parent=1 // pred_check_branch
      %18 = sbr.rel (0) target = $region5
    $region4: #{ensemble_forward.1} parent=1 // pred_region
      _
    $region5: #{ensemble_forward.1} parent=1 // pred_fallthru
      _
    // Predicated region
    $region6: #{ensemble_forward.1} parent=1 // pred_check
      _
    $region7: #{ensemble_forward.1} parent=1 // pred_check_branch
      %20 = sbr.rel (0) target = $region9
    $region8: #{ensemble_forward.1} parent=1 // pred_region
      _
    $region9: #{ensemble_forward.1} parent=1 // pred_fallthru
      _
    // Predicated region
    $region10: #{ensemble_forward.1} parent=1 // pred_check
      _
    $region11: #{ensemble_forward.1} parent=1 // pred_check_branch
      %22 = sbr.rel (0) target = $region13
    $region12: #{ensemble_forward.1} parent=1 // pred_region
      %24 = vsyncadd [#allocation3], 0
      %s25 = sshll.u32 %s2, 4
      %s26 = int_to_ptr.hbm [resolvable:$true] %s25
      %s27 = sshll.u32 [#allocation2], 4
      %s28 = int_to_ptr.vmem [resolvable:$true] %s27
      %33 = dma.hbm_to_vmem [thread:$0]  %s26, 8192, %s28, [#allocation3], 512, 512, 32
    $region13: #{ensemble_forward.1} parent=1 // pred_fallthru
      _
    // Predicated region
    $region14: #{ensemble_forward.1} parent=1 // pred_check
      _
    $region15: #{ensemble_forward.1} parent=1 // pred_check_branch
      %35 = sbr.rel (0) target = $region17
    $region16: #{ensemble_forward.1} parent=1 // pred_region
      %37 = vsyncadd [#allocation5], 0
      %s38 = sshll.u32 %s3, 4
      %s39 = int_to_ptr.hbm [resolvable:$true] %s38
      %s40 = sshll.u32 [#allocation4], 4
      %s41 = int_to_ptr.vmem [resolvable:$true] %s40
      %46 = dma.hbm_to_vmem [thread:$0]  %s39, 16384, %s41, [#allocation5], 512, 512, 32
    $region17: #{ensemble_forward.1} parent=1 // pred_fallthru
      _
    // Predicated region
    $region18: #{ensemble_forward.1} parent=1 // pred_check
      _
    $region19: #{ensemble_forward.1} parent=1 // pred_check_branch
      %48 = sbr.rel (0) target = $region21
    $region20: #{ensemble_forward.1} parent=1 // pred_region
      _
    $region21: #{ensemble_forward.1} parent=1 // pred_fallthru
      _
    // Predicated region
    $region22: #{ensemble_forward.1} parent=1 // pred_check
      _
    $region23: #{ensemble_forward.1} parent=1 // pred_check_branch
      %50 = sbr.rel (0) target = $region25
    $region24: #{ensemble_forward.1} parent=1 // pred_region
      %52 = vsyncadd [#allocation5], 0
      %s53 = sshll.u32 %s5, 4
      %s54 = int_to_ptr.hbm [resolvable:$true] %s53
      %s55 = sshll.u32 [#allocation6], 4
      %s56 = int_to_ptr.vmem [resolvable:$true] %s55
      %61 = dma.hbm_to_vmem [thread:$0]  %s54, 32768, %s56, [#allocation5], 512, 512, 32
    $region25: #{ensemble_forward.1} parent=1 // pred_fallthru
      _
    // Predicated region
    $region26: #{ensemble_forward.1} parent=1 // pred_check
      _
    $region27: #{ensemble_forward.1} parent=1 // pred_check_branch
      %63 = sbr.rel (0) target = $region29
    $region28: #{ensemble_forward.1} parent=1 // pred_region
      %65 = vsyncadd [#allocation8], 0
      %s67 = sshll.u32 %s6, 4
      %s68 = int_to_ptr.hbm [resolvable:$true] %s67
      %s69 = sshll.u32 [#allocation7], 4
      %s70 = int_to_ptr.vmem [resolvable:$true] %s69
      %72 = dma.hbm_to_vmem [thread:$0]  %s68, 128, %s70, [#allocation8]
    $region29: #{ensemble_forward.1} parent=1 // pred_fallthru
      _
    // Predicated region
    $region30: #{ensemble_forward.1} parent=1 // pred_check
      _
    $region31: #{ensemble_forward.1} parent=1 // pred_check_branch
      %74 = sbr.rel (0) target = $region33
    $region32: #{ensemble_forward.1} parent=1 // pred_region
      _
    $region33: #{ensemble_forward.1} parent=1 // pred_fallthru
      _
    // Predicated region
    $region34: #{ensemble_forward.1} parent=1 // pred_check
      _
    $region35: #{ensemble_forward.1} parent=1 // pred_check_branch
      %76 = sbr.rel (0) target = $region37
    $region36: #{ensemble_forward.1} parent=1 // pred_region
      _
    $region37: #{ensemble_forward.1} parent=1 // pred_fallthru
      _
    // Predicated region
    $region38: #{ensemble_forward.1} parent=1 // pred_check
      _
    $region39: #{ensemble_forward.1} parent=1 // pred_check_branch
      %78 = sbr.rel (0) target = $region41
    $region40: #{ensemble_forward.1} parent=1 // pred_region
      %80 = dma.done [#allocation3], 8192
    $region41: #{ensemble_forward.1} parent=1 // pred_fallthru
      _
    // Predicated region
    $region42: #{ensemble_forward.1} parent=1 // pred_check
      _
    $region43: #{ensemble_forward.1} parent=1 // pred_check_branch
      %82 = sbr.rel (0) target = $region45
    $region44: #{ensemble_forward.1} parent=1 // pred_region
      %84 = dma.done [#allocation5], 16384
    $region45: #{ensemble_forward.1} parent=1 // pred_fallthru
      _
    // Predicated region
    $region46: #{ensemble_forward.1} parent=1 // pred_check
      _
    $region47: #{ensemble_forward.1} parent=1 // pred_check_branch
      %86 = sbr.rel (0) target = $region49
    $region48: #{ensemble_forward.1} parent=1 // pred_region
      %88 = dma.done [#allocation5], 32768
    $region49: #{ensemble_forward.1} parent=1 // pred_fallthru
      _
    // Predicated region
    $region50: #{ensemble_forward.1} parent=1 // pred_check
      _
    $region51: #{ensemble_forward.1} parent=1 // pred_check_branch
      %90 = sbr.rel (0) target = $region53
    $region52: #{ensemble_forward.1} parent=1 // pred_region
      %92 = dma.done [#allocation8], 128
    $region53: #{ensemble_forward.1} parent=1 // pred_fallthru
      _
    %v94 = vld [vmem:[%s1] sm:$0xff]
    %v95 = vld [vmem:[%s0] sm:$0xf]
    %v96 = vld [vmem:[%s0 + $0x4] sm:$0xf]
    %v97 = vld [vmem:[%s0 + $0x8] sm:$0xf]
    %v98 = vld [vmem:[%s0 + $0xc] sm:$0xf]
    %v99 = vld [vmem:[%s0 + $0x10] sm:$0xf]
    %v100 = vld [vmem:[%s0 + $0x14] sm:$0xf]
    %v101 = vld [vmem:[%s0 + $0x18] sm:$0xf]
    %v102 = vld [vmem:[%s0 + $0x1c] sm:$0xf]
    %v103 = vld [vmem:[#allocation2] sm:$0xff]
    %v104 = vld [vmem:[#allocation2 + $0x8] sm:$0xff]
    %v105 = vld [vmem:[#allocation2 + $0x10] sm:$0xff]
    %v106 = vld [vmem:[#allocation2 + $0x18] sm:$0xff]
    %v107 = vld [vmem:[#allocation2 + $0x20] sm:$0xff]
    %v108 = vld [vmem:[#allocation2 + $0x28] sm:$0xff]
    %v109 = vld [vmem:[#allocation2 + $0x30] sm:$0xff]
    %v110 = vld [vmem:[#allocation2 + $0x38] sm:$0xff]
    %v111 = vld [vmem:[#allocation2 + $0x40] sm:$0xff]
    %v112 = vld [vmem:[#allocation2 + $0x48] sm:$0xff]
    %v113 = vld [vmem:[#allocation2 + $0x50] sm:$0xff]
    %v114 = vld [vmem:[#allocation2 + $0x58] sm:$0xff]
    %v115 = vld [vmem:[#allocation2 + $0x60] sm:$0xff]
    %v116 = vld [vmem:[#allocation2 + $0x68] sm:$0xff]
    %v117 = vld [vmem:[#allocation2 + $0x70] sm:$0xff]
    %v118 = vld [vmem:[#allocation2 + $0x78] sm:$0xff]
    %v119 = vld [vmem:[#allocation2 + $0x80] sm:$0xff]
    %v120 = vld [vmem:[#allocation2 + $0x88] sm:$0xff]
    %v121 = vld [vmem:[#allocation2 + $0x90] sm:$0xff]
    %v122 = vld [vmem:[#allocation2 + $0x98] sm:$0xff]
    %v123 = vld [vmem:[#allocation2 + $0xa0] sm:$0xff]
    %v124 = vld [vmem:[#allocation2 + $0xa8] sm:$0xff]
    %v125 = vld [vmem:[#allocation2 + $0xb0] sm:$0xff]
    %v126 = vld [vmem:[#allocation2 + $0xb8] sm:$0xff]
    %v127 = vld [vmem:[#allocation2 + $0xc0] sm:$0xff]
    %v128 = vld [vmem:[#allocation2 + $0xc8] sm:$0xff]
    %v129 = vld [vmem:[#allocation2 + $0xd0] sm:$0xff]
    %v130 = vld [vmem:[#allocation2 + $0xd8] sm:$0xff]
    %v131 = vld [vmem:[#allocation2 + $0xe0] sm:$0xff]
    %v132 = vld [vmem:[#allocation2 + $0xe8] sm:$0xff]
    %v133 = vld [vmem:[#allocation2 + $0xf0] sm:$0xff]
    %v134 = vld [vmem:[#allocation2 + $0xf8] sm:$0xff]
    %v135 = vld [vmem:[#allocation2 + $0x100] sm:$0xff]
    %v136 = vld [vmem:[#allocation2 + $0x108] sm:$0xff]
    %v137 = vld [vmem:[#allocation2 + $0x110] sm:$0xff]
    %v138 = vld [vmem:[#allocation2 + $0x118] sm:$0xff]
    %v139 = vld [vmem:[#allocation2 + $0x120] sm:$0xff]
    %v140 = vld [vmem:[#allocation2 + $0x128] sm:$0xff]
    %v141 = vld [vmem:[#allocation2 + $0x130] sm:$0xff]
    %v142 = vld [vmem:[#allocation2 + $0x138] sm:$0xff]
    %v143 = vld [vmem:[#allocation2 + $0x140] sm:$0xff]
    %v144 = vld [vmem:[#allocation2 + $0x148] sm:$0xff]
    %v145 = vld [vmem:[#allocation2 + $0x150] sm:$0xff]
    %v146 = vld [vmem:[#allocation2 + $0x158] sm:$0xff]
    %v147 = vld [vmem:[#allocation2 + $0x160] sm:$0xff]
    %v148 = vld [vmem:[#allocation2 + $0x168] sm:$0xff]
    %v149 = vld [vmem:[#allocation2 + $0x170] sm:$0xff]
    %v150 = vld [vmem:[#allocation2 + $0x178] sm:$0xff]
    %v151 = vld [vmem:[#allocation2 + $0x180] sm:$0xff]
    %v152 = vld [vmem:[#allocation2 + $0x188] sm:$0xff]
    %v153 = vld [vmem:[#allocation2 + $0x190] sm:$0xff]
    %v154 = vld [vmem:[#allocation2 + $0x198] sm:$0xff]
    %v155 = vld [vmem:[#allocation2 + $0x1a0] sm:$0xff]
    %v156 = vld [vmem:[#allocation2 + $0x1a8] sm:$0xff]
    %v157 = vld [vmem:[#allocation2 + $0x1b0] sm:$0xff]
    %v158 = vld [vmem:[#allocation2 + $0x1b8] sm:$0xff]
    %v159 = vld [vmem:[#allocation2 + $0x1c0] sm:$0xff]
    %v160 = vld [vmem:[#allocation2 + $0x1c8] sm:$0xff]
    %v161 = vld [vmem:[#allocation2 + $0x1d0] sm:$0xff]
    %v162 = vld [vmem:[#allocation2 + $0x1d8] sm:$0xff]
    %v163 = vld [vmem:[#allocation2 + $0x1e0] sm:$0xff]
    %v164 = vld [vmem:[#allocation2 + $0x1e8] sm:$0xff]
    %v165 = vld [vmem:[#allocation2 + $0x1f0] sm:$0xff]
    %v166 = vld [vmem:[#allocation2 + $0x1f8] sm:$0xff]
    %v167 = vld [vmem:[%s4] sm:$0xff]
    %v169 = vperm.slane %v167, 0
    %v170 = vperm.slane %v167, 1
    %v171 = vperm.slane %v167, 2
    %v172 = vperm.slane %v167, 3
    %v173 = vperm.slane %v167, 4
    %v174 = vperm.slane %v167, 5
    %v175 = vperm.slane %v167, 6
    %v176 = vperm.slane %v167, 7
    %v193 = vunpack.c.l.b16 %v95
    %v194 = vunpack.c.l.b16 %v96
    %v195 = vunpack.c.l.b16 %v97
    %v196 = vunpack.c.l.b16 %v98
    %v197 = vunpack.c.l.b16 %v99
    %v198 = vunpack.c.l.b16 %v100
    %v199 = vunpack.c.l.b16 %v101
    %v200 = vunpack.c.l.b16 %v102
    %v201 = vpack.c.b16 %v194, %v193
    %v202 = vpack.c.b16 %v196, %v195
    %v203 = vpack.c.b16 %v198, %v197
    %v204 = vpack.c.b16 %v200, %v199
    %v273 = vunpack.c.l.b16 %v103
    %v274 = vunpack.c.h.b16 %v103
    %v275 = vunpack.c.l.b16 %v104
    %v276 = vunpack.c.h.b16 %v104
    %v277 = vunpack.c.l.b16 %v105
    %v278 = vunpack.c.h.b16 %v105
    %v279 = vunpack.c.l.b16 %v106
    %v280 = vunpack.c.h.b16 %v106
    %v281 = vunpack.c.l.b16 %v107
    %v282 = vunpack.c.h.b16 %v107
    %v283 = vunpack.c.l.b16 %v108
    %v284 = vunpack.c.h.b16 %v108
    %v285 = vunpack.c.l.b16 %v109
    %v286 = vunpack.c.h.b16 %v109
    %v287 = vunpack.c.l.b16 %v110
    %v288 = vunpack.c.h.b16 %v110
    %v289 = vunpack.c.l.b16 %v111
    %v290 = vunpack.c.h.b16 %v111
    %v291 = vunpack.c.l.b16 %v112
    %v292 = vunpack.c.h.b16 %v112
    %v293 = vunpack.c.l.b16 %v113
    %v294 = vunpack.c.h.b16 %v113
    %v295 = vunpack.c.l.b16 %v114
    %v296 = vunpack.c.h.b16 %v114
    %v297 = vunpack.c.l.b16 %v115
    %v298 = vunpack.c.h.b16 %v115
    %v299 = vunpack.c.l.b16 %v116
    %v300 = vunpack.c.h.b16 %v116
    %v301 = vunpack.c.l.b16 %v117
    %v302 = vunpack.c.h.b16 %v117
    %v303 = vunpack.c.l.b16 %v118
    %v304 = vunpack.c.h.b16 %v118
    %v305 = vunpack.c.l.b16 %v119
    %v306 = vunpack.c.h.b16 %v119
    %v307 = vunpack.c.l.b16 %v120
    %v308 = vunpack.c.h.b16 %v120
    %v309 = vunpack.c.l.b16 %v121
    %v310 = vunpack.c.h.b16 %v121
    %v311 = vunpack.c.l.b16 %v122
    %v312 = vunpack.c.h.b16 %v122
    %v313 = vunpack.c.l.b16 %v123
    %v314 = vunpack.c.h.b16 %v123
    %v315 = vunpack.c.l.b16 %v124
    %v316 = vunpack.c.h.b16 %v124
    %v317 = vunpack.c.l.b16 %v125
    %v318 = vunpack.c.h.b16 %v125
    %v319 = vunpack.c.l.b16 %v126
    %v320 = vunpack.c.h.b16 %v126
    %v321 = vunpack.c.l.b16 %v127
    %v322 = vunpack.c.h.b16 %v127
    %v323 = vunpack.c.l.b16 %v128
    %v324 = vunpack.c.h.b16 %v128
    %v325 = vunpack.c.l.b16 %v129
    %v326 = vunpack.c.h.b16 %v129
    %v327 = vunpack.c.l.b16 %v130
    %v328 = vunpack.c.h.b16 %v130
    %v329 = vunpack.c.l.b16 %v131
    %v330 = vunpack.c.h.b16 %v131
    %v331 = vunpack.c.l.b16 %v132
    %v332 = vunpack.c.h.b16 %v132
    %v333 = vunpack.c.l.b16 %v133
    %v334 = vunpack.c.h.b16 %v133
    %v335 = vunpack.c.l.b16 %v134
    %v336 = vunpack.c.h.b16 %v134
    %v337 = vunpack.c.l.b16 %v135
    %v338 = vunpack.c.h.b16 %v135
    %v339 = vunpack.c.l.b16 %v136
    %v340 = vunpack.c.h.b16 %v136
    %v341 = vunpack.c.l.b16 %v137
    %v342 = vunpack.c.h.b16 %v137
    %v343 = vunpack.c.l.b16 %v138
    %v344 = vunpack.c.h.b16 %v138
    %v345 = vunpack.c.l.b16 %v139
    %v346 = vunpack.c.h.b16 %v139
    %v347 = vunpack.c.l.b16 %v140
    %v348 = vunpack.c.h.b16 %v140
    %v349 = vunpack.c.l.b16 %v141
    %v350 = vunpack.c.h.b16 %v141
    %v351 = vunpack.c.l.b16 %v142
    %v352 = vunpack.c.h.b16 %v142
    %v353 = vunpack.c.l.b16 %v143
    %v354 = vunpack.c.h.b16 %v143
    %v355 = vunpack.c.l.b16 %v144
    %v356 = vunpack.c.h.b16 %v144
    %v357 = vunpack.c.l.b16 %v145
    %v358 = vunpack.c.h.b16 %v145
    %v359 = vunpack.c.l.b16 %v146
    %v360 = vunpack.c.h.b16 %v146
    %v361 = vunpack.c.l.b16 %v147
    %v362 = vunpack.c.h.b16 %v147
    %v363 = vunpack.c.l.b16 %v148
    %v364 = vunpack.c.h.b16 %v148
    %v365 = vunpack.c.l.b16 %v149
    %v366 = vunpack.c.h.b16 %v149
    %v367 = vunpack.c.l.b16 %v150
    %v368 = vunpack.c.h.b16 %v150
    %v369 = vunpack.c.l.b16 %v151
    %v370 = vunpack.c.h.b16 %v151
    %v371 = vunpack.c.l.b16 %v152
    %v372 = vunpack.c.h.b16 %v152
    %v373 = vunpack.c.l.b16 %v153
    %v374 = vunpack.c.h.b16 %v153
    %v375 = vunpack.c.l.b16 %v154
    %v376 = vunpack.c.h.b16 %v154
    %v377 = vunpack.c.l.b16 %v155
    %v378 = vunpack.c.h.b16 %v155
    %v379 = vunpack.c.l.b16 %v156
    %v380 = vunpack.c.h.b16 %v156
    %v381 = vunpack.c.l.b16 %v157
    %v382 = vunpack.c.h.b16 %v157
    %v383 = vunpack.c.l.b16 %v158
    %v384 = vunpack.c.h.b16 %v158
    %v385 = vunpack.c.l.b16 %v159
    %v386 = vunpack.c.h.b16 %v159
    %v387 = vunpack.c.l.b16 %v160
    %v388 = vunpack.c.h.b16 %v160
    %v389 = vunpack.c.l.b16 %v161
    %v390 = vunpack.c.h.b16 %v161
    %v391 = vunpack.c.l.b16 %v162
    %v392 = vunpack.c.h.b16 %v162
    %v393 = vunpack.c.l.b16 %v163
    %v394 = vunpack.c.h.b16 %v163
    %v395 = vunpack.c.l.b16 %v164
    %v396 = vunpack.c.h.b16 %v164
    %v397 = vunpack.c.l.b16 %v165
    %v398 = vunpack.c.h.b16 %v165
    %v399 = vunpack.c.l.b16 %v166
    %v400 = vunpack.c.h.b16 %v166
    %v401 = vpack.c.b16 %v281, %v273
    %v402 = vpack.c.b16 %v282, %v274
    %v403 = vpack.c.b16 %v283, %v275
    %v404 = vpack.c.b16 %v284, %v276
    %v405 = vpack.c.b16 %v285, %v277
    %v406 = vpack.c.b16 %v286, %v278
    %v407 = vpack.c.b16 %v287, %v279
    %v408 = vpack.c.b16 %v288, %v280
    %v409 = vpack.c.b16 %v297, %v289
    %v410 = vpack.c.b16 %v298, %v290
    %v411 = vpack.c.b16 %v299, %v291
    %v412 = vpack.c.b16 %v300, %v292
    %v413 = vpack.c.b16 %v301, %v293
    %v414 = vpack.c.b16 %v302, %v294
    %v415 = vpack.c.b16 %v303, %v295
    %v416 = vpack.c.b16 %v304, %v296
    %v417 = vpack.c.b16 %v313, %v305
    %v418 = vpack.c.b16 %v314, %v306
    %v419 = vpack.c.b16 %v315, %v307
    %v420 = vpack.c.b16 %v316, %v308
    %v421 = vpack.c.b16 %v317, %v309
    %v422 = vpack.c.b16 %v318, %v310
    %v423 = vpack.c.b16 %v319, %v311
    %v424 = vpack.c.b16 %v320, %v312
    %v425 = vpack.c.b16 %v329, %v321
    %v426 = vpack.c.b16 %v330, %v322
    %v427 = vpack.c.b16 %v331, %v323
    %v428 = vpack.c.b16 %v332, %v324
    %v429 = vpack.c.b16 %v333, %v325
    %v430 = vpack.c.b16 %v334, %v326
    %v431 = vpack.c.b16 %v335, %v327
    %v432 = vpack.c.b16 %v336, %v328
    %v433 = vpack.c.b16 %v345, %v337
    %v434 = vpack.c.b16 %v346, %v338
    %v435 = vpack.c.b16 %v347, %v339
    %v436 = vpack.c.b16 %v348, %v340
    %v437 = vpack.c.b16 %v349, %v341
    %v438 = vpack.c.b16 %v350, %v342
    %v439 = vpack.c.b16 %v351, %v343
    %v440 = vpack.c.b16 %v352, %v344
    %v441 = vpack.c.b16 %v361, %v353
    %v442 = vpack.c.b16 %v362, %v354
    %v443 = vpack.c.b16 %v363, %v355
    %v444 = vpack.c.b16 %v364, %v356
    %v445 = vpack.c.b16 %v365, %v357
    %v446 = vpack.c.b16 %v366, %v358
    %v447 = vpack.c.b16 %v367, %v359
    %v448 = vpack.c.b16 %v368, %v360
    %v449 = vpack.c.b16 %v377, %v369
    %v450 = vpack.c.b16 %v378, %v370
    %v451 = vpack.c.b16 %v379, %v371
    %v452 = vpack.c.b16 %v380, %v372
    %v453 = vpack.c.b16 %v381, %v373
    %v454 = vpack.c.b16 %v382, %v374
    %v455 = vpack.c.b16 %v383, %v375
    %v456 = vpack.c.b16 %v384, %v376
    %v457 = vpack.c.b16 %v393, %v385
    %v458 = vpack.c.b16 %v394, %v386
    %v459 = vpack.c.b16 %v395, %v387
    %v460 = vpack.c.b16 %v396, %v388
    %v461 = vpack.c.b16 %v397, %v389
    %v462 = vpack.c.b16 %v398, %v390
    %v463 = vpack.c.b16 %v399, %v391
    %v464 = vpack.c.b16 %v400, %v392
    %529 = vmatpush.bf16.msra.mxu0 %v457
    %530 = vmatpush.bf16.msra.mxu0 %v449
    %531 = vmatpush.bf16.msra.mxu0 %v441
    %532 = vmatpush.bf16.msra.mxu0 %v433
    %533 = vmatpush.bf16.msra.mxu0 %v425
    %534 = vmatpush.bf16.msra.mxu0 %v417
    %535 = vmatpush.bf16.msra.mxu0 %v409
    %536 = vmatpush.bf16.msra.mxu0 %v401
    %537 = vmatmul.bf16.gmra.mxu0 %v201
    %v538 = vpop.f32.mrf.mxu0
    %v539 = vadd.f32 %v169, %v538
    %v540 = vpop.f32.mrf.mxu0
    %v541 = vadd.f32 %v169, %v540
    %542 = vmatmul.bf16.gmra.mxu0 %v202
    %v543 = vpop.f32.mrf.mxu0
    %v544 = vadd.f32 %v169, %v543
    %v545 = vpop.f32.mrf.mxu0
    %v546 = vadd.f32 %v169, %v545
    %547 = vmatmul.bf16.gmra.mxu0 %v203
    %v548 = vpop.f32.mrf.mxu0
    %v549 = vadd.f32 %v169, %v548
    %v550 = vpop.f32.mrf.mxu0
    %v551 = vadd.f32 %v169, %v550
    %552 = vmatmul.bf16.gmra.mxu0 %v204
    %v553 = vpop.f32.mrf.mxu0
    %v554 = vadd.f32 %v169, %v553
    %v555 = vpop.f32.mrf.mxu0
    %v556 = vadd.f32 %v169, %v555
    %557 = vdwg.mxu0
    %558 = vmatpush.bf16.msra.mxu0 %v458
    %559 = vmatpush.bf16.msra.mxu0 %v450
    %560 = vmatpush.bf16.msra.mxu0 %v442
    %561 = vmatpush.bf16.msra.mxu0 %v434
    %562 = vmatpush.bf16.msra.mxu0 %v426
    %563 = vmatpush.bf16.msra.mxu0 %v418
    %564 = vmatpush.bf16.msra.mxu0 %v410
    %565 = vmatpush.bf16.msra.mxu0 %v402
    %566 = vmatmul.bf16.gmra.mxu0 %v201
    %v567 = vpop.f32.mrf.mxu0
    %v568 = vadd.f32 %v170, %v567
    %v569 = vpop.f32.mrf.mxu0
    %v570 = vadd.f32 %v170, %v569
    %571 = vmatmul.bf16.gmra.mxu0 %v202
    %v572 = vpop.f32.mrf.mxu0
    %v573 = vadd.f32 %v170, %v572
    %v574 = vpop.f32.mrf.mxu0
    %v575 = vadd.f32 %v170, %v574
    %576 = vmatmul.bf16.gmra.mxu0 %v203
    %v577 = vpop.f32.mrf.mxu0
    %v578 = vadd.f32 %v170, %v577
    %v579 = vpop.f32.mrf.mxu0
    %v580 = vadd.f32 %v170, %v579
    %581 = vmatmul.bf16.gmra.mxu0 %v204
    %v582 = vpop.f32.mrf.mxu0
    %v583 = vadd.f32 %v170, %v582
    %v584 = vpop.f32.mrf.mxu0
    %v585 = vadd.f32 %v170, %v584
    %586 = vdwg.mxu0
    %587 = vmatpush.bf16.msra.mxu0 %v459
    %588 = vmatpush.bf16.msra.mxu0 %v451
    %589 = vmatpush.bf16.msra.mxu0 %v443
    %590 = vmatpush.bf16.msra.mxu0 %v435
    %591 = vmatpush.bf16.msra.mxu0 %v427
    %592 = vmatpush.bf16.msra.mxu0 %v419
    %593 = vmatpush.bf16.msra.mxu0 %v411
    %594 = vmatpush.bf16.msra.mxu0 %v403
    %595 = vmatmul.bf16.gmra.mxu0 %v201
    %v596 = vpop.f32.mrf.mxu0
    %v597 = vadd.f32 %v171, %v596
    %v598 = vpop.f32.mrf.mxu0
    %v599 = vadd.f32 %v171, %v598
    %600 = vmatmul.bf16.gmra.mxu0 %v202
    %v601 = vpop.f32.mrf.mxu0
    %v602 = vadd.f32 %v171, %v601
    %v603 = vpop.f32.mrf.mxu0
    %v604 = vadd.f32 %v171, %v603
    %605 = vmatmul.bf16.gmra.mxu0 %v203
    %v606 = vpop.f32.mrf.mxu0
    %v607 = vadd.f32 %v171, %v606
    %v608 = vpop.f32.mrf.mxu0
    %v609 = vadd.f32 %v171, %v608
    %610 = vmatmul.bf16.gmra.mxu0 %v204
    %v611 = vpop.f32.mrf.mxu0
    %v612 = vadd.f32 %v171, %v611
    %v613 = vpop.f32.mrf.mxu0
    %v614 = vadd.f32 %v171, %v613
    %615 = vdwg.mxu0
    %616 = vmatpush.bf16.msra.mxu0 %v460
    %617 = vmatpush.bf16.msra.mxu0 %v452
    %618 = vmatpush.bf16.msra.mxu0 %v444
    %619 = vmatpush.bf16.msra.mxu0 %v436
    %620 = vmatpush.bf16.msra.mxu0 %v428
    %621 = vmatpush.bf16.msra.mxu0 %v420
    %622 = vmatpush.bf16.msra.mxu0 %v412
    %623 = vmatpush.bf16.msra.mxu0 %v404
    %624 = vmatmul.bf16.gmra.mxu0 %v201
    %v625 = vpop.f32.mrf.mxu0
    %v626 = vadd.f32 %v172, %v625
    %v627 = vpop.f32.mrf.mxu0
    %v628 = vadd.f32 %v172, %v627
    %629 = vmatmul.bf16.gmra.mxu0 %v202
    %v630 = vpop.f32.mrf.mxu0
    %v631 = vadd.f32 %v172, %v630
    %v632 = vpop.f32.mrf.mxu0
    %v633 = vadd.f32 %v172, %v632
    %634 = vmatmul.bf16.gmra.mxu0 %v203
    %v635 = vpop.f32.mrf.mxu0
    %v636 = vadd.f32 %v172, %v635
    %v637 = vpop.f32.mrf.mxu0
    %v638 = vadd.f32 %v172, %v637
    %639 = vmatmul.bf16.gmra.mxu0 %v204
    %v640 = vpop.f32.mrf.mxu0
    %v641 = vadd.f32 %v172, %v640
    %v642 = vpop.f32.mrf.mxu0
    %v643 = vadd.f32 %v172, %v642
    %644 = vdwg.mxu0
    %645 = vmatpush.bf16.msra.mxu0 %v461
    %646 = vmatpush.bf16.msra.mxu0 %v453
    %647 = vmatpush.bf16.msra.mxu0 %v445
    %648 = vmatpush.bf16.msra.mxu0 %v437
    %649 = vmatpush.bf16.msra.mxu0 %v429
    %650 = vmatpush.bf16.msra.mxu0 %v421
    %651 = vmatpush.bf16.msra.mxu0 %v413
    %652 = vmatpush.bf16.msra.mxu0 %v405
    %653 = vmatmul.bf16.gmra.mxu0 %v201
    %v654 = vpop.f32.mrf.mxu0
    %v655 = vadd.f32 %v173, %v654
    %v656 = vpop.f32.mrf.mxu0
    %v657 = vadd.f32 %v173, %v656
    %658 = vmatmul.bf16.gmra.mxu0 %v202
    %v659 = vpop.f32.mrf.mxu0
    %v660 = vadd.f32 %v173, %v659
    %v661 = vpop.f32.mrf.mxu0
    %v662 = vadd.f32 %v173, %v661
    %663 = vmatmul.bf16.gmra.mxu0 %v203
    %v664 = vpop.f32.mrf.mxu0
    %v665 = vadd.f32 %v173, %v664
    %v666 = vpop.f32.mrf.mxu0
    %v667 = vadd.f32 %v173, %v666
    %668 = vmatmul.bf16.gmra.mxu0 %v204
    %v669 = vpop.f32.mrf.mxu0
    %v670 = vadd.f32 %v173, %v669
    %v671 = vpop.f32.mrf.mxu0
    %v672 = vadd.f32 %v173, %v671
    %673 = vdwg.mxu0
    %674 = vmatpush.bf16.msra.mxu0 %v462
    %675 = vmatpush.bf16.msra.mxu0 %v454
    %676 = vmatpush.bf16.msra.mxu0 %v446
    %677 = vmatpush.bf16.msra.mxu0 %v438
    %678 = vmatpush.bf16.msra.mxu0 %v430
    %679 = vmatpush.bf16.msra.mxu0 %v422
    %680 = vmatpush.bf16.msra.mxu0 %v414
    %681 = vmatpush.bf16.msra.mxu0 %v406
    %682 = vmatmul.bf16.gmra.mxu0 %v201
    %v683 = vpop.f32.mrf.mxu0
    %v684 = vadd.f32 %v174, %v683
    %v685 = vpop.f32.mrf.mxu0
    %v686 = vadd.f32 %v174, %v685
    %687 = vmatmul.bf16.gmra.mxu0 %v202
    %v688 = vpop.f32.mrf.mxu0
    %v689 = vadd.f32 %v174, %v688
    %v690 = vpop.f32.mrf.mxu0
    %v691 = vadd.f32 %v174, %v690
    %692 = vmatmul.bf16.gmra.mxu0 %v203
    %v693 = vpop.f32.mrf.mxu0
    %v694 = vadd.f32 %v174, %v693
    %v695 = vpop.f32.mrf.mxu0
    %v696 = vadd.f32 %v174, %v695
    %697 = vmatmul.bf16.gmra.mxu0 %v204
    %v698 = vpop.f32.mrf.mxu0
    %v699 = vadd.f32 %v174, %v698
    %v700 = vpop.f32.mrf.mxu0
    %v701 = vadd.f32 %v174, %v700
    %702 = vdwg.mxu0
    %703 = vmatpush.bf16.msra.mxu0 %v463
    %704 = vmatpush.bf16.msra.mxu0 %v455
    %705 = vmatpush.bf16.msra.mxu0 %v447
    %706 = vmatpush.bf16.msra.mxu0 %v439
    %707 = vmatpush.bf16.msra.mxu0 %v431
    %708 = vmatpush.bf16.msra.mxu0 %v423
    %709 = vmatpush.bf16.msra.mxu0 %v415
    %710 = vmatpush.bf16.msra.mxu0 %v407
    %711 = vmatmul.bf16.gmra.mxu0 %v201
    %v712 = vpop.f32.mrf.mxu0
    %v713 = vadd.f32 %v175, %v712
    %v714 = vpop.f32.mrf.mxu0
    %v715 = vadd.f32 %v175, %v714
    %716 = vmatmul.bf16.gmra.mxu0 %v202
    %v717 = vpop.f32.mrf.mxu0
    %v718 = vadd.f32 %v175, %v717
    %v719 = vpop.f32.mrf.mxu0
    %v720 = vadd.f32 %v175, %v719
    %721 = vmatmul.bf16.gmra.mxu0 %v203
    %v722 = vpop.f32.mrf.mxu0
    %v723 = vadd.f32 %v175, %v722
    %v724 = vpop.f32.mrf.mxu0
    %v725 = vadd.f32 %v175, %v724
    %726 = vmatmul.bf16.gmra.mxu0 %v204
    %v727 = vpop.f32.mrf.mxu0
    %v728 = vadd.f32 %v175, %v727
    %v729 = vpop.f32.mrf.mxu0
    %v730 = vadd.f32 %v175, %v729
    %731 = vdwg.mxu0
    %732 = vmatpush.bf16.msra.mxu0 %v464
    %733 = vmatpush.bf16.msra.mxu0 %v456
    %734 = vmatpush.bf16.msra.mxu0 %v448
    %735 = vmatpush.bf16.msra.mxu0 %v440
    %736 = vmatpush.bf16.msra.mxu0 %v432
    %737 = vmatpush.bf16.msra.mxu0 %v424
    %738 = vmatpush.bf16.msra.mxu0 %v416
    %739 = vmatpush.bf16.msra.mxu0 %v408
    %740 = vmatmul.bf16.gmra.mxu0 %v201
    %v741 = vpop.f32.mrf.mxu0
    %v742 = vadd.f32 %v176, %v741
    %v743 = vpop.f32.mrf.mxu0
    %v744 = vadd.f32 %v176, %v743
    %745 = vmatmul.bf16.gmra.mxu0 %v202
    %v746 = vpop.f32.mrf.mxu0
    %v747 = vadd.f32 %v176, %v746
    %v748 = vpop.f32.mrf.mxu0
    %v749 = vadd.f32 %v176, %v748
    %750 = vmatmul.bf16.gmra.mxu0 %v203
    %v751 = vpop.f32.mrf.mxu0
    %v752 = vadd.f32 %v176, %v751
    %v753 = vpop.f32.mrf.mxu0
    %v754 = vadd.f32 %v176, %v753
    %755 = vmatmul.bf16.gmra.mxu0 %v204
    %v756 = vpop.f32.mrf.mxu0
    %v757 = vadd.f32 %v176, %v756
    %v758 = vpop.f32.mrf.mxu0
    %v759 = vadd.f32 %v176, %v758
    %760 = vdwg.mxu0
    %v761 = vld [vmem:[#allocation4] sm:$0xff]
    %v762 = vld [vmem:[#allocation4 + $0x8] sm:$0xff]
    %v763 = vld [vmem:[#allocation4 + $0x10] sm:$0xff]
    %v764 = vld [vmem:[#allocation4 + $0x18] sm:$0xff]
    %v765 = vld [vmem:[#allocation4 + $0x20] sm:$0xff]
    %v766 = vld [vmem:[#allocation4 + $0x28] sm:$0xff]
    %v767 = vld [vmem:[#allocation4 + $0x30] sm:$0xff]
    %v768 = vld [vmem:[#allocation4 + $0x38] sm:$0xff]
    %v769 = vld [vmem:[#allocation4 + $0x40] sm:$0xff]
    %v770 = vld [vmem:[#allocation4 + $0x48] sm:$0xff]
    %v771 = vld [vmem:[#allocation4 + $0x50] sm:$0xff]
    %v772 = vld [vmem:[#allocation4 + $0x58] sm:$0xff]
    %v773 = vld [vmem:[#allocation4 + $0x60] sm:$0xff]
    %v774 = vld [vmem:[#allocation4 + $0x68] sm:$0xff]
    %v775 = vld [vmem:[#allocation4 + $0x70] sm:$0xff]
    %v776 = vld [vmem:[#allocation4 + $0x78] sm:$0xff]
    %v777 = vld [vmem:[#allocation4 + $0x80] sm:$0xff]
    %v778 = vld [vmem:[#allocation4 + $0x88] sm:$0xff]
    %v779 = vld [vmem:[#allocation4 + $0x90] sm:$0xff]
    %v780 = vld [vmem:[#allocation4 + $0x98] sm:$0xff]
    %v781 = vld [vmem:[#allocation4 + $0xa0] sm:$0xff]
    %v782 = vld [vmem:[#allocation4 + $0xa8] sm:$0xff]
    %v783 = vld [vmem:[#allocation4 + $0xb0] sm:$0xff]
    %v784 = vld [vmem:[#allocation4 + $0xb8] sm:$0xff]
    %v785 = vld [vmem:[#allocation4 + $0xc0] sm:$0xff]
    %v786 = vld [vmem:[#allocation4 + $0xc8] sm:$0xff]
    %v787 = vld [vmem:[#allocation4 + $0xd0] sm:$0xff]
    %v788 = vld [vmem:[#allocation4 + $0xd8] sm:$0xff]
    %v789 = vld [vmem:[#allocation4 + $0xe0] sm:$0xff]
    %v790 = vld [vmem:[#allocation4 + $0xe8] sm:$0xff]
    %v791 = vld [vmem:[#allocation4 + $0xf0] sm:$0xff]
    %v792 = vld [vmem:[#allocation4 + $0xf8] sm:$0xff]
    %v793 = vld [vmem:[#allocation4 + $0x100] sm:$0xff]
    %v794 = vld [vmem:[#allocation4 + $0x108] sm:$0xff]
    %v795 = vld [vmem:[#allocation4 + $0x110] sm:$0xff]
    %v796 = vld [vmem:[#allocation4 + $0x118] sm:$0xff]
    %v797 = vld [vmem:[#allocation4 + $0x120] sm:$0xff]
    %v798 = vld [vmem:[#allocation4 + $0x128] sm:$0xff]
    %v799 = vld [vmem:[#allocation4 + $0x130] sm:$0xff]
    %v800 = vld [vmem:[#allocation4 + $0x138] sm:$0xff]
    %v801 = vld [vmem:[#allocation4 + $0x140] sm:$0xff]
    %v802 = vld [vmem:[#allocation4 + $0x148] sm:$0xff]
    %v803 = vld [vmem:[#allocation4 + $0x150] sm:$0xff]
    %v804 = vld [vmem:[#allocation4 + $0x158] sm:$0xff]
    %v805 = vld [vmem:[#allocation4 + $0x160] sm:$0xff]
    %v806 = vld [vmem:[#allocation4 + $0x168] sm:$0xff]
    %v807 = vld [vmem:[#allocation4 + $0x170] sm:$0xff]
    %v808 = vld [vmem:[#allocation4 + $0x178] sm:$0xff]
    %v809 = vld [vmem:[#allocation4 + $0x180] sm:$0xff]
    %v810 = vld [vmem:[#allocation4 + $0x188] sm:$0xff]
    %v811 = vld [vmem:[#allocation4 + $0x190] sm:$0xff]
    %v812 = vld [vmem:[#allocation4 + $0x198] sm:$0xff]
    %v813 = vld [vmem:[#allocation4 + $0x1a0] sm:$0xff]
    %v814 = vld [vmem:[#allocation4 + $0x1a8] sm:$0xff]
    %v815 = vld [vmem:[#allocation4 + $0x1b0] sm:$0xff]
    %v816 = vld [vmem:[#allocation4 + $0x1b8] sm:$0xff]
    %v817 = vld [vmem:[#allocation4 + $0x1c0] sm:$0xff]
    %v818 = vld [vmem:[#allocation4 + $0x1c8] sm:$0xff]
    %v819 = vld [vmem:[#allocation4 + $0x1d0] sm:$0xff]
    %v820 = vld [vmem:[#allocation4 + $0x1d8] sm:$0xff]
    %v821 = vld [vmem:[#allocation4 + $0x1e0] sm:$0xff]
    %v822 = vld [vmem:[#allocation4 + $0x1e8] sm:$0xff]
    %v823 = vld [vmem:[#allocation4 + $0x1f0] sm:$0xff]
    %v824 = vld [vmem:[#allocation4 + $0x1f8] sm:$0xff]
    %v825 = vld [vmem:[#allocation4 + $0x200] sm:$0xff]
    %v826 = vld [vmem:[#allocation4 + $0x208] sm:$0xff]
    %v827 = vld [vmem:[#allocation4 + $0x210] sm:$0xff]
    %v828 = vld [vmem:[#allocation4 + $0x218] sm:$0xff]
    %v829 = vld [vmem:[#allocation4 + $0x220] sm:$0xff]
    %v830 = vld [vmem:[#allocation4 + $0x228] sm:$0xff]
    %v831 = vld [vmem:[#allocation4 + $0x230] sm:$0xff]
    %v832 = vld [vmem:[#allocation4 + $0x238] sm:$0xff]
    %v833 = vld [vmem:[#allocation4 + $0x240] sm:$0xff]
    %v834 = vld [vmem:[#allocation4 + $0x248] sm:$0xff]
    %v835 = vld [vmem:[#allocation4 + $0x250] sm:$0xff]
    %v836 = vld [vmem:[#allocation4 + $0x258] sm:$0xff]
    %v837 = vld [vmem:[#allocation4 + $0x260] sm:$0xff]
    %v838 = vld [vmem:[#allocation4 + $0x268] sm:$0xff]
    %v839 = vld [vmem:[#allocation4 + $0x270] sm:$0xff]
    %v840 = vld [vmem:[#allocation4 + $0x278] sm:$0xff]
    %v841 = vld [vmem:[#allocation4 + $0x280] sm:$0xff]
    %v842 = vld [vmem:[#allocation4 + $0x288] sm:$0xff]
    %v843 = vld [vmem:[#allocation4 + $0x290] sm:$0xff]
    %v844 = vld [vmem:[#allocation4 + $0x298] sm:$0xff]
    %v845 = vld [vmem:[#allocation4 + $0x2a0] sm:$0xff]
    %v846 = vld [vmem:[#allocation4 + $0x2a8] sm:$0xff]
    %v847 = vld [vmem:[#allocation4 + $0x2b0] sm:$0xff]
    %v848 = vld [vmem:[#allocation4 + $0x2b8] sm:$0xff]
    %v849 = vld [vmem:[#allocation4 + $0x2c0] sm:$0xff]
    %v850 = vld [vmem:[#allocation4 + $0x2c8] sm:$0xff]
    %v851 = vld [vmem:[#allocation4 + $0x2d0] sm:$0xff]
    %v852 = vld [vmem:[#allocation4 + $0x2d8] sm:$0xff]
    %v853 = vld [vmem:[#allocation4 + $0x2e0] sm:$0xff]
    %v854 = vld [vmem:[#allocation4 + $0x2e8] sm:$0xff]
    %v855 = vld [vmem:[#allocation4 + $0x2f0] sm:$0xff]
    %v856 = vld [vmem:[#allocation4 + $0x2f8] sm:$0xff]
    %v857 = vld [vmem:[#allocation4 + $0x300] sm:$0xff]
    %v858 = vld [vmem:[#allocation4 + $0x308] sm:$0xff]
    %v859 = vld [vmem:[#allocation4 + $0x310] sm:$0xff]
    %v860 = vld [vmem:[#allocation4 + $0x318] sm:$0xff]
    %v861 = vld [vmem:[#allocation4 + $0x320] sm:$0xff]
    %v862 = vld [vmem:[#allocation4 + $0x328] sm:$0xff]
    %v863 = vld [vmem:[#allocation4 + $0x330] sm:$0xff]
    %v864 = vld [vmem:[#allocation4 + $0x338] sm:$0xff]
    %v865 = vld [vmem:[#allocation4 + $0x340] sm:$0xff]
    %v866 = vld [vmem:[#allocation4 + $0x348] sm:$0xff]
    %v867 = vld [vmem:[#allocation4 + $0x350] sm:$0xff]
    %v868 = vld [vmem:[#allocation4 + $0x358] sm:$0xff]
    %v869 = vld [vmem:[#allocation4 + $0x360] sm:$0xff]
    %v870 = vld [vmem:[#allocation4 + $0x368] sm:$0xff]
    %v871 = vld [vmem:[#allocation4 + $0x370] sm:$0xff]
    %v872 = vld [vmem:[#allocation4 + $0x378] sm:$0xff]
    %v873 = vld [vmem:[#allocation4 + $0x380] sm:$0xff]
    %v874 = vld [vmem:[#allocation4 + $0x388] sm:$0xff]
    %v875 = vld [vmem:[#allocation4 + $0x390] sm:$0xff]
    %v876 = vld [vmem:[#allocation4 + $0x398] sm:$0xff]
    %v877 = vld [vmem:[#allocation4 + $0x3a0] sm:$0xff]
    %v878 = vld [vmem:[#allocation4 + $0x3a8] sm:$0xff]
    %v879 = vld [vmem:[#allocation4 + $0x3b0] sm:$0xff]
    %v880 = vld [vmem:[#allocation4 + $0x3b8] sm:$0xff]
    %v881 = vld [vmem:[#allocation4 + $0x3c0] sm:$0xff]
    %v882 = vld [vmem:[#allocation4 + $0x3c8] sm:$0xff]
    %v883 = vld [vmem:[#allocation4 + $0x3d0] sm:$0xff]
    %v884 = vld [vmem:[#allocation4 + $0x3d8] sm:$0xff]
    %v885 = vld [vmem:[#allocation4 + $0x3e0] sm:$0xff]
    %v886 = vld [vmem:[#allocation4 + $0x3e8] sm:$0xff]
    %v887 = vld [vmem:[#allocation4 + $0x3f0] sm:$0xff]
    %v888 = vld [vmem:[#allocation4 + $0x3f8] sm:$0xff]
    %v889 = vld [vmem:[#allocation6] sm:$0xff]
    %v890 = vld [vmem:[#allocation6 + $0x8] sm:$0xff]
    %v891 = vld [vmem:[#allocation6 + $0x10] sm:$0xff]
    %v892 = vld [vmem:[#allocation6 + $0x18] sm:$0xff]
    %v893 = vld [vmem:[#allocation6 + $0x20] sm:$0xff]
    %v894 = vld [vmem:[#allocation6 + $0x28] sm:$0xff]
    %v895 = vld [vmem:[#allocation6 + $0x30] sm:$0xff]
    %v896 = vld [vmem:[#allocation6 + $0x38] sm:$0xff]
    %v897 = vld [vmem:[#allocation6 + $0x40] sm:$0xff]
    %v898 = vld [vmem:[#allocation6 + $0x48] sm:$0xff]
    %v899 = vld [vmem:[#allocation6 + $0x50] sm:$0xff]
    %v900 = vld [vmem:[#allocation6 + $0x58] sm:$0xff]
    %v901 = vld [vmem:[#allocation6 + $0x60] sm:$0xff]
    %v902 = vld [vmem:[#allocation6 + $0x68] sm:$0xff]
    %v903 = vld [vmem:[#allocation6 + $0x70] sm:$0xff]
    %v904 = vld [vmem:[#allocation6 + $0x78] sm:$0xff]
    %v905 = vld [vmem:[#allocation6 + $0x80] sm:$0xff]
    %v906 = vld [vmem:[#allocation6 + $0x88] sm:$0xff]
    %v907 = vld [vmem:[#allocation6 + $0x90] sm:$0xff]
    %v908 = vld [vmem:[#allocation6 + $0x98] sm:$0xff]
    %v909 = vld [vmem:[#allocation6 + $0xa0] sm:$0xff]
    %v910 = vld [vmem:[#allocation6 + $0xa8] sm:$0xff]
    %v911 = vld [vmem:[#allocation6 + $0xb0] sm:$0xff]
    %v912 = vld [vmem:[#allocation6 + $0xb8] sm:$0xff]
    %v913 = vld [vmem:[#allocation6 + $0xc0] sm:$0xff]
    %v914 = vld [vmem:[#allocation6 + $0xc8] sm:$0xff]
    %v915 = vld [vmem:[#allocation6 + $0xd0] sm:$0xff]
    %v916 = vld [vmem:[#allocation6 + $0xd8] sm:$0xff]
    %v917 = vld [vmem:[#allocation6 + $0xe0] sm:$0xff]
    %v918 = vld [vmem:[#allocation6 + $0xe8] sm:$0xff]
    %v919 = vld [vmem:[#allocation6 + $0xf0] sm:$0xff]
    %v920 = vld [vmem:[#allocation6 + $0xf8] sm:$0xff]
    %v921 = vld [vmem:[#allocation6 + $0x100] sm:$0xff]
    %v922 = vld [vmem:[#allocation6 + $0x108] sm:$0xff]
    %v923 = vld [vmem:[#allocation6 + $0x110] sm:$0xff]
    %v924 = vld [vmem:[#allocation6 + $0x118] sm:$0xff]
    %v925 = vld [vmem:[#allocation6 + $0x120] sm:$0xff]
    %v926 = vld [vmem:[#allocation6 + $0x128] sm:$0xff]
    %v927 = vld [vmem:[#allocation6 + $0x130] sm:$0xff]
    %v928 = vld [vmem:[#allocation6 + $0x138] sm:$0xff]
    %v929 = vld [vmem:[#allocation6 + $0x140] sm:$0xff]
    %v930 = vld [vmem:[#allocation6 + $0x148] sm:$0xff]
    %v931 = vld [vmem:[#allocation6 + $0x150] sm:$0xff]
    %v932 = vld [vmem:[#allocation6 + $0x158] sm:$0xff]
    %v933 = vld [vmem:[#allocation6 + $0x160] sm:$0xff]
    %v934 = vld [vmem:[#allocation6 + $0x168] sm:$0xff]
    %v935 = vld [vmem:[#allocation6 + $0x170] sm:$0xff]
    %v936 = vld [vmem:[#allocation6 + $0x178] sm:$0xff]
    %v937 = vld [vmem:[#allocation6 + $0x180] sm:$0xff]
    %v938 = vld [vmem:[#allocation6 + $0x188] sm:$0xff]
    %v939 = vld [vmem:[#allocation6 + $0x190] sm:$0xff]
    %v940 = vld [vmem:[#allocation6 + $0x198] sm:$0xff]
    %v941 = vld [vmem:[#allocation6 + $0x1a0] sm:$0xff]
    %v942 = vld [vmem:[#allocation6 + $0x1a8] sm:$0xff]
    %v943 = vld [vmem:[#allocation6 + $0x1b0] sm:$0xff]
    %v944 = vld [vmem:[#allocation6 + $0x1b8] sm:$0xff]
    %v945 = vld [vmem:[#allocation6 + $0x1c0] sm:$0xff]
    %v946 = vld [vmem:[#allocation6 + $0x1c8] sm:$0xff]
    %v947 = vld [vmem:[#allocation6 + $0x1d0] sm:$0xff]
    %v948 = vld [vmem:[#allocation6 + $0x1d8] sm:$0xff]
    %v949 = vld [vmem:[#allocation6 + $0x1e0] sm:$0xff]
    %v950 = vld [vmem:[#allocation6 + $0x1e8] sm:$0xff]
    %v951 = vld [vmem:[#allocation6 + $0x1f0] sm:$0xff]
    %v952 = vld [vmem:[#allocation6 + $0x1f8] sm:$0xff]
    %v953 = vld [vmem:[#allocation6 + $0x200] sm:$0xff]
    %v954 = vld [vmem:[#allocation6 + $0x208] sm:$0xff]
    %v955 = vld [vmem:[#allocation6 + $0x210] sm:$0xff]
    %v956 = vld [vmem:[#allocation6 + $0x218] sm:$0xff]
    %v957 = vld [vmem:[#allocation6 + $0x220] sm:$0xff]
    %v958 = vld [vmem:[#allocation6 + $0x228] sm:$0xff]
    %v959 = vld [vmem:[#allocation6 + $0x230] sm:$0xff]
    %v960 = vld [vmem:[#allocation6 + $0x238] sm:$0xff]
    %v961 = vld [vmem:[#allocation6 + $0x240] sm:$0xff]
    %v962 = vld [vmem:[#allocation6 + $0x248] sm:$0xff]
    %v963 = vld [vmem:[#allocation6 + $0x250] sm:$0xff]
    %v964 = vld [vmem:[#allocation6 + $0x258] sm:$0xff]
    %v965 = vld [vmem:[#allocation6 + $0x260] sm:$0xff]
    %v966 = vld [vmem:[#allocation6 + $0x268] sm:$0xff]
    %v967 = vld [vmem:[#allocation6 + $0x270] sm:$0xff]
    %v968 = vld [vmem:[#allocation6 + $0x278] sm:$0xff]
    %v969 = vld [vmem:[#allocation6 + $0x280] sm:$0xff]
    %v970 = vld [vmem:[#allocation6 + $0x288] sm:$0xff]
    %v971 = vld [vmem:[#allocation6 + $0x290] sm:$0xff]
    %v972 = vld [vmem:[#allocation6 + $0x298] sm:$0xff]
    %v973 = vld [vmem:[#allocation6 + $0x2a0] sm:$0xff]
    %v974 = vld [vmem:[#allocation6 + $0x2a8] sm:$0xff]
    %v975 = vld [vmem:[#allocation6 + $0x2b0] sm:$0xff]
    %v976 = vld [vmem:[#allocation6 + $0x2b8] sm:$0xff]
    %v977 = vld [vmem:[#allocation6 + $0x2c0] sm:$0xff]
    %v978 = vld [vmem:[#allocation6 + $0x2c8] sm:$0xff]
    %v979 = vld [vmem:[#allocation6 + $0x2d0] sm:$0xff]
    %v980 = vld [vmem:[#allocation6 + $0x2d8] sm:$0xff]
    %v981 = vld [vmem:[#allocation6 + $0x2e0] sm:$0xff]
    %v982 = vld [vmem:[#allocation6 + $0x2e8] sm:$0xff]
    %v983 = vld [vmem:[#allocation6 + $0x2f0] sm:$0xff]
    %v984 = vld [vmem:[#allocation6 + $0x2f8] sm:$0xff]
    %v985 = vld [vmem:[#allocation6 + $0x300] sm:$0xff]
    %v986 = vld [vmem:[#allocation6 + $0x308] sm:$0xff]
    %v987 = vld [vmem:[#allocation6 + $0x310] sm:$0xff]
    %v988 = vld [vmem:[#allocation6 + $0x318] sm:$0xff]
    %v989 = vld [vmem:[#allocation6 + $0x320] sm:$0xff]
    %v990 = vld [vmem:[#allocation6 + $0x328] sm:$0xff]
    %v991 = vld [vmem:[#allocation6 + $0x330] sm:$0xff]
    %v992 = vld [vmem:[#allocation6 + $0x338] sm:$0xff]
    %v993 = vld [vmem:[#allocation6 + $0x340] sm:$0xff]
    %v994 = vld [vmem:[#allocation6 + $0x348] sm:$0xff]
    %v995 = vld [vmem:[#allocation6 + $0x350] sm:$0xff]
    %v996 = vld [vmem:[#allocation6 + $0x358] sm:$0xff]
    %v997 = vld [vmem:[#allocation6 + $0x360] sm:$0xff]
    %v998 = vld [vmem:[#allocation6 + $0x368] sm:$0xff]
    %v999 = vld [vmem:[#allocation6 + $0x370] sm:$0xff]
    %v1000 = vld [vmem:[#allocation6 + $0x378] sm:$0xff]
    %v1001 = vld [vmem:[#allocation6 + $0x380] sm:$0xff]
    %v1002 = vld [vmem:[#allocation6 + $0x388] sm:$0xff]
    %v1003 = vld [vmem:[#allocation6 + $0x390] sm:$0xff]
    %v1004 = vld [vmem:[#allocation6 + $0x398] sm:$0xff]
    %v1005 = vld [vmem:[#allocation6 + $0x3a0] sm:$0xff]
    %v1006 = vld [vmem:[#allocation6 + $0x3a8] sm:$0xff]
    %v1007 = vld [vmem:[#allocation6 + $0x3b0] sm:$0xff]
    %v1008 = vld [vmem:[#allocation6 + $0x3b8] sm:$0xff]
    %v1009 = vld [vmem:[#allocation6 + $0x3c0] sm:$0xff]
    %v1010 = vld [vmem:[#allocation6 + $0x3c8] sm:$0xff]
    %v1011 = vld [vmem:[#allocation6 + $0x3d0] sm:$0xff]
    %v1012 = vld [vmem:[#allocation6 + $0x3d8] sm:$0xff]
    %v1013 = vld [vmem:[#allocation6 + $0x3e0] sm:$0xff]
    %v1014 = vld [vmem:[#allocation6 + $0x3e8] sm:$0xff]
    %v1015 = vld [vmem:[#allocation6 + $0x3f0] sm:$0xff]
    %v1016 = vld [vmem:[#allocation6 + $0x3f8] sm:$0xff]
    %v1017 = vld [vmem:[#allocation6 + $0x400] sm:$0xff]
    %v1018 = vld [vmem:[#allocation6 + $0x408] sm:$0xff]
    %v1019 = vld [vmem:[#allocation6 + $0x410] sm:$0xff]
    %v1020 = vld [vmem:[#allocation6 + $0x418] sm:$0xff]
    %v1021 = vld [vmem:[#allocation6 + $0x420] sm:$0xff]
    %v1022 = vld [vmem:[#allocation6 + $0x428] sm:$0xff]
    %v1023 = vld [vmem:[#allocation6 + $0x430] sm:$0xff]
    %v1024 = vld [vmem:[#allocation6 + $0x438] sm:$0xff]
    %v1025 = vld [vmem:[#allocation6 + $0x440] sm:$0xff]
    %v1026 = vld [vmem:[#allocation6 + $0x448] sm:$0xff]
    %v1027 = vld [vmem:[#allocation6 + $0x450] sm:$0xff]
    %v1028 = vld [vmem:[#allocation6 + $0x458] sm:$0xff]
    %v1029 = vld [vmem:[#allocation6 + $0x460] sm:$0xff]
    %v1030 = vld [vmem:[#allocation6 + $0x468] sm:$0xff]
    %v1031 = vld [vmem:[#allocation6 + $0x470] sm:$0xff]
    %v1032 = vld [vmem:[#allocation6 + $0x478] sm:$0xff]
    %v1033 = vld [vmem:[#allocation6 + $0x480] sm:$0xff]
    %v1034 = vld [vmem:[#allocation6 + $0x488] sm:$0xff]
    %v1035 = vld [vmem:[#allocation6 + $0x490] sm:$0xff]
    %v1036 = vld [vmem:[#allocation6 + $0x498] sm:$0xff]
    %v1037 = vld [vmem:[#allocation6 + $0x4a0] sm:$0xff]
    %v1038 = vld [vmem:[#allocation6 + $0x4a8] sm:$0xff]
    %v1039 = vld [vmem:[#allocation6 + $0x4b0] sm:$0xff]
    %v1040 = vld [vmem:[#allocation6 + $0x4b8] sm:$0xff]
    %v1041 = vld [vmem:[#allocation6 + $0x4c0] sm:$0xff]
    %v1042 = vld [vmem:[#allocation6 + $0x4c8] sm:$0xff]
    %v1043 = vld [vmem:[#allocation6 + $0x4d0] sm:$0xff]
    %v1044 = vld [vmem:[#allocation6 + $0x4d8] sm:$0xff]
    %v1045 = vld [vmem:[#allocation6 + $0x4e0] sm:$0xff]
    %v1046 = vld [vmem:[#allocation6 + $0x4e8] sm:$0xff]
    %v1047 = vld [vmem:[#allocation6 + $0x4f0] sm:$0xff]
    %v1048 = vld [vmem:[#allocation6 + $0x4f8] sm:$0xff]
    %v1049 = vld [vmem:[#allocation6 + $0x500] sm:$0xff]
    %v1050 = vld [vmem:[#allocation6 + $0x508] sm:$0xff]
    %v1051 = vld [vmem:[#allocation6 + $0x510] sm:$0xff]
    %v1052 = vld [vmem:[#allocation6 + $0x518] sm:$0xff]
    %v1053 = vld [vmem:[#allocation6 + $0x520] sm:$0xff]
    %v1054 = vld [vmem:[#allocation6 + $0x528] sm:$0xff]
    %v1055 = vld [vmem:[#allocation6 + $0x530] sm:$0xff]
    %v1056 = vld [vmem:[#allocation6 + $0x538] sm:$0xff]
    %v1057 = vld [vmem:[#allocation6 + $0x540] sm:$0xff]
    %v1058 = vld [vmem:[#allocation6 + $0x548] sm:$0xff]
    %v1059 = vld [vmem:[#allocation6 + $0x550] sm:$0xff]
    %v1060 = vld [vmem:[#allocation6 + $0x558] sm:$0xff]
    %v1061 = vld [vmem:[#allocation6 + $0x560] sm:$0xff]
    %v1062 = vld [vmem:[#allocation6 + $0x568] sm:$0xff]
    %v1063 = vld [vmem:[#allocation6 + $0x570] sm:$0xff]
    %v1064 = vld [vmem:[#allocation6 + $0x578] sm:$0xff]
    %v1065 = vld [vmem:[#allocation6 + $0x580] sm:$0xff]
    %v1066 = vld [vmem:[#allocation6 + $0x588] sm:$0xff]
    %v1067 = vld [vmem:[#allocation6 + $0x590] sm:$0xff]
    %v1068 = vld [vmem:[#allocation6 + $0x598] sm:$0xff]
    %v1069 = vld [vmem:[#allocation6 + $0x5a0] sm:$0xff]
    %v1070 = vld [vmem:[#allocation6 + $0x5a8] sm:$0xff]
    %v1071 = vld [vmem:[#allocation6 + $0x5b0] sm:$0xff]
    %v1072 = vld [vmem:[#allocation6 + $0x5b8] sm:$0xff]
    %v1073 = vld [vmem:[#allocation6 + $0x5c0] sm:$0xff]
    %v1074 = vld [vmem:[#allocation6 + $0x5c8] sm:$0xff]
    %v1075 = vld [vmem:[#allocation6 + $0x5d0] sm:$0xff]
    %v1076 = vld [vmem:[#allocation6 + $0x5d8] sm:$0xff]
    %v1077 = vld [vmem:[#allocation6 + $0x5e0] sm:$0xff]
    %v1078 = vld [vmem:[#allocation6 + $0x5e8] sm:$0xff]
    %v1079 = vld [vmem:[#allocation6 + $0x5f0] sm:$0xff]
    %v1080 = vld [vmem:[#allocation6 + $0x5f8] sm:$0xff]
    %v1081 = vld [vmem:[#allocation6 + $0x600] sm:$0xff]
    %v1082 = vld [vmem:[#allocation6 + $0x608] sm:$0xff]
    %v1083 = vld [vmem:[#allocation6 + $0x610] sm:$0xff]
    %v1084 = vld [vmem:[#allocation6 + $0x618] sm:$0xff]
    %v1085 = vld [vmem:[#allocation6 + $0x620] sm:$0xff]
    %v1086 = vld [vmem:[#allocation6 + $0x628] sm:$0xff]
    %v1087 = vld [vmem:[#allocation6 + $0x630] sm:$0xff]
    %v1088 = vld [vmem:[#allocation6 + $0x638] sm:$0xff]
    %v1089 = vld [vmem:[#allocation6 + $0x640] sm:$0xff]
    %v1090 = vld [vmem:[#allocation6 + $0x648] sm:$0xff]
    %v1091 = vld [vmem:[#allocation6 + $0x650] sm:$0xff]
    %v1092 = vld [vmem:[#allocation6 + $0x658] sm:$0xff]
    %v1093 = vld [vmem:[#allocation6 + $0x660] sm:$0xff]
    %v1094 = vld [vmem:[#allocation6 + $0x668] sm:$0xff]
    %v1095 = vld [vmem:[#allocation6 + $0x670] sm:$0xff]
    %v1096 = vld [vmem:[#allocation6 + $0x678] sm:$0xff]
    %v1097 = vld [vmem:[#allocation6 + $0x680] sm:$0xff]
    %v1098 = vld [vmem:[#allocation6 + $0x688] sm:$0xff]
    %v1099 = vld [vmem:[#allocation6 + $0x690] sm:$0xff]
    %v1100 = vld [vmem:[#allocation6 + $0x698] sm:$0xff]
    %v1101 = vld [vmem:[#allocation6 + $0x6a0] sm:$0xff]
    %v1102 = vld [vmem:[#allocation6 + $0x6a8] sm:$0xff]
    %v1103 = vld [vmem:[#allocation6 + $0x6b0] sm:$0xff]
    %v1104 = vld [vmem:[#allocation6 + $0x6b8] sm:$0xff]
    %v1105 = vld [vmem:[#allocation6 + $0x6c0] sm:$0xff]
    %v1106 = vld [vmem:[#allocation6 + $0x6c8] sm:$0xff]
    %v1107 = vld [vmem:[#allocation6 + $0x6d0] sm:$0xff]
    %v1108 = vld [vmem:[#allocation6 + $0x6d8] sm:$0xff]
    %v1109 = vld [vmem:[#allocation6 + $0x6e0] sm:$0xff]
    %v1110 = vld [vmem:[#allocation6 + $0x6e8] sm:$0xff]
    %v1111 = vld [vmem:[#allocation6 + $0x6f0] sm:$0xff]
    %v1112 = vld [vmem:[#allocation6 + $0x6f8] sm:$0xff]
    %v1113 = vld [vmem:[#allocation6 + $0x700] sm:$0xff]
    %v1114 = vld [vmem:[#allocation6 + $0x708] sm:$0xff]
    %v1115 = vld [vmem:[#allocation6 + $0x710] sm:$0xff]
    %v1116 = vld [vmem:[#allocation6 + $0x718] sm:$0xff]
    %v1117 = vld [vmem:[#allocation6 + $0x720] sm:$0xff]
    %v1118 = vld [vmem:[#allocation6 + $0x728] sm:$0xff]
    %v1119 = vld [vmem:[#allocation6 + $0x730] sm:$0xff]
    %v1120 = vld [vmem:[#allocation6 + $0x738] sm:$0xff]
    %v1121 = vld [vmem:[#allocation6 + $0x740] sm:$0xff]
    %v1122 = vld [vmem:[#allocation6 + $0x748] sm:$0xff]
    %v1123 = vld [vmem:[#allocation6 + $0x750] sm:$0xff]
    %v1124 = vld [vmem:[#allocation6 + $0x758] sm:$0xff]
    %v1125 = vld [vmem:[#allocation6 + $0x760] sm:$0xff]
    %v1126 = vld [vmem:[#allocation6 + $0x768] sm:$0xff]
    %v1127 = vld [vmem:[#allocation6 + $0x770] sm:$0xff]
    %v1128 = vld [vmem:[#allocation6 + $0x778] sm:$0xff]
    %v1129 = vld [vmem:[#allocation6 + $0x780] sm:$0xff]
    %v1130 = vld [vmem:[#allocation6 + $0x788] sm:$0xff]
    %v1131 = vld [vmem:[#allocation6 + $0x790] sm:$0xff]
    %v1132 = vld [vmem:[#allocation6 + $0x798] sm:$0xff]
    %v1133 = vld [vmem:[#allocation6 + $0x7a0] sm:$0xff]
    %v1134 = vld [vmem:[#allocation6 + $0x7a8] sm:$0xff]
    %v1135 = vld [vmem:[#allocation6 + $0x7b0] sm:$0xff]
    %v1136 = vld [vmem:[#allocation6 + $0x7b8] sm:$0xff]
    %v1137 = vld [vmem:[#allocation6 + $0x7c0] sm:$0xff]
    %v1138 = vld [vmem:[#allocation6 + $0x7c8] sm:$0xff]
    %v1139 = vld [vmem:[#allocation6 + $0x7d0] sm:$0xff]
    %v1140 = vld [vmem:[#allocation6 + $0x7d8] sm:$0xff]
    %v1141 = vld [vmem:[#allocation6 + $0x7e0] sm:$0xff]
    %v1142 = vld [vmem:[#allocation6 + $0x7e8] sm:$0xff]
    %v1143 = vld [vmem:[#allocation6 + $0x7f0] sm:$0xff]
    %v1144 = vld [vmem:[#allocation6 + $0x7f8] sm:$0xff]
    %v1145 = vld [vmem:[#allocation7] sm:$0xff]
    %vm1146 = vcmp.gt.s32.totalorder %v94, 0
    %v1147 = vsel %vm1146, 1, 0
    %1148 = vset.pattern.permute.xlu0 0
    %1149 = vperm.xlu0 %1148, %v1147
    %v1150 = vpop.permute.xlu0 %1149
    %vm1151 = vcmp.eq.s32.totalorder %v1150, 1
    %v1280 = vunpack.c.l.b16 %v761
    %v1281 = vunpack.c.h.b16 %v761
    %v1282 = vunpack.c.l.b16 %v762
    %v1283 = vunpack.c.h.b16 %v762
    %v1284 = vunpack.c.l.b16 %v763
    %v1285 = vunpack.c.h.b16 %v763
    %v1286 = vunpack.c.l.b16 %v764
    %v1287 = vunpack.c.h.b16 %v764
    %v1288 = vunpack.c.l.b16 %v765
    %v1289 = vunpack.c.h.b16 %v765
    %v1290 = vunpack.c.l.b16 %v766
    %v1291 = vunpack.c.h.b16 %v766
    %v1292 = vunpack.c.l.b16 %v767
    %v1293 = vunpack.c.h.b16 %v767
    %v1294 = vunpack.c.l.b16 %v768
    %v1295 = vunpack.c.h.b16 %v768
    %v1296 = vunpack.c.l.b16 %v769
    %v1297 = vunpack.c.h.b16 %v769
    %v1298 = vunpack.c.l.b16 %v770
    %v1299 = vunpack.c.h.b16 %v770
    %v1300 = vunpack.c.l.b16 %v771
    %v1301 = vunpack.c.h.b16 %v771
    %v1302 = vunpack.c.l.b16 %v772
    %v1303 = vunpack.c.h.b16 %v772
    %v1304 = vunpack.c.l.b16 %v773
    %v1305 = vunpack.c.h.b16 %v773
    %v1306 = vunpack.c.l.b16 %v774
    %v1307 = vunpack.c.h.b16 %v774
    %v1308 = vunpack.c.l.b16 %v775
    %v1309 = vunpack.c.h.b16 %v775
    %v1310 = vunpack.c.l.b16 %v776
    %v1311 = vunpack.c.h.b16 %v776
    %v1312 = vunpack.c.l.b16 %v777
    %v1313 = vunpack.c.h.b16 %v777
    %v1314 = vunpack.c.l.b16 %v778
    %v1315 = vunpack.c.h.b16 %v778
    %v1316 = vunpack.c.l.b16 %v779
    %v1317 = vunpack.c.h.b16 %v779
    %v1318 = vunpack.c.l.b16 %v780
    %v1319 = vunpack.c.h.b16 %v780
    %v1320 = vunpack.c.l.b16 %v781
    %v1321 = vunpack.c.h.b16 %v781
    %v1322 = vunpack.c.l.b16 %v782
    %v1323 = vunpack.c.h.b16 %v782
    %v1324 = vunpack.c.l.b16 %v783
    %v1325 = vunpack.c.h.b16 %v783
    %v1326 = vunpack.c.l.b16 %v784
    %v1327 = vunpack.c.h.b16 %v784
    %v1328 = vunpack.c.l.b16 %v785
    %v1329 = vunpack.c.h.b16 %v785
    %v1330 = vunpack.c.l.b16 %v786
    %v1331 = vunpack.c.h.b16 %v786
    %v1332 = vunpack.c.l.b16 %v787
    %v1333 = vunpack.c.h.b16 %v787
    %v1334 = vunpack.c.l.b16 %v788
    %v1335 = vunpack.c.h.b16 %v788
    %v1336 = vunpack.c.l.b16 %v789
    %v1337 = vunpack.c.h.b16 %v789
    %v1338 = vunpack.c.l.b16 %v790
    %v1339 = vunpack.c.h.b16 %v790
    %v1340 = vunpack.c.l.b16 %v791
    %v1341 = vunpack.c.h.b16 %v791
    %v1342 = vunpack.c.l.b16 %v792
    %v1343 = vunpack.c.h.b16 %v792
    %v1344 = vunpack.c.l.b16 %v793
    %v1345 = vunpack.c.h.b16 %v793
    %v1346 = vunpack.c.l.b16 %v794
    %v1347 = vunpack.c.h.b16 %v794
    %v1348 = vunpack.c.l.b16 %v795
    %v1349 = vunpack.c.h.b16 %v795
    %v1350 = vunpack.c.l.b16 %v796
    %v1351 = vunpack.c.h.b16 %v796
    %v1352 = vunpack.c.l.b16 %v797
    %v1353 = vunpack.c.h.b16 %v797
    %v1354 = vunpack.c.l.b16 %v798
    %v1355 = vunpack.c.h.b16 %v798
    %v1356 = vunpack.c.l.b16 %v799
    %v1357 = vunpack.c.h.b16 %v799
    %v1358 = vunpack.c.l.b16 %v800
    %v1359 = vunpack.c.h.b16 %v800
    %v1360 = vunpack.c.l.b16 %v801
    %v1361 = vunpack.c.h.b16 %v801
    %v1362 = vunpack.c.l.b16 %v802
    %v1363 = vunpack.c.h.b16 %v802
    %v1364 = vunpack.c.l.b16 %v803
    %v1365 = vunpack.c.h.b16 %v803
    %v1366 = vunpack.c.l.b16 %v804
    %v1367 = vunpack.c.h.b16 %v804
    %v1368 = vunpack.c.l.b16 %v805
    %v1369 = vunpack.c.h.b16 %v805
    %v1370 = vunpack.c.l.b16 %v806
    %v1371 = vunpack.c.h.b16 %v806
    %v1372 = vunpack.c.l.b16 %v807
    %v1373 = vunpack.c.h.b16 %v807
    %v1374 = vunpack.c.l.b16 %v808
    %v1375 = vunpack.c.h.b16 %v808
    %v1376 = vunpack.c.l.b16 %v809
    %v1377 = vunpack.c.h.b16 %v809
    %v1378 = vunpack.c.l.b16 %v810
    %v1379 = vunpack.c.h.b16 %v810
    %v1380 = vunpack.c.l.b16 %v811
    %v1381 = vunpack.c.h.b16 %v811
    %v1382 = vunpack.c.l.b16 %v812
    %v1383 = vunpack.c.h.b16 %v812
    %v1384 = vunpack.c.l.b16 %v813
    %v1385 = vunpack.c.h.b16 %v813
    %v1386 = vunpack.c.l.b16 %v814
    %v1387 = vunpack.c.h.b16 %v814
    %v1388 = vunpack.c.l.b16 %v815
    %v1389 = vunpack.c.h.b16 %v815
    %v1390 = vunpack.c.l.b16 %v816
    %v1391 = vunpack.c.h.b16 %v816
    %v1392 = vunpack.c.l.b16 %v817
    %v1393 = vunpack.c.h.b16 %v817
    %v1394 = vunpack.c.l.b16 %v818
    %v1395 = vunpack.c.h.b16 %v818
    %v1396 = vunpack.c.l.b16 %v819
    %v1397 = vunpack.c.h.b16 %v819
    %v1398 = vunpack.c.l.b16 %v820
    %v1399 = vunpack.c.h.b16 %v820
    %v1400 = vunpack.c.l.b16 %v821
    %v1401 = vunpack.c.h.b16 %v821
    %v1402 = vunpack.c.l.b16 %v822
    %v1403 = vunpack.c.h.b16 %v822
    %v1404 = vunpack.c.l.b16 %v823
    %v1405 = vunpack.c.h.b16 %v823
    %v1406 = vunpack.c.l.b16 %v824
    %v1407 = vunpack.c.h.b16 %v824
    %v1408 = vunpack.c.l.b16 %v825
    %v1409 = vunpack.c.h.b16 %v825
    %v1410 = vunpack.c.l.b16 %v826
    %v1411 = vunpack.c.h.b16 %v826
    %v1412 = vunpack.c.l.b16 %v827
    %v1413 = vunpack.c.h.b16 %v827
    %v1414 = vunpack.c.l.b16 %v828
    %v1415 = vunpack.c.h.b16 %v828
    %v1416 = vunpack.c.l.b16 %v829
    %v1417 = vunpack.c.h.b16 %v829
    %v1418 = vunpack.c.l.b16 %v830
    %v1419 = vunpack.c.h.b16 %v830
    %v1420 = vunpack.c.l.b16 %v831
    %v1421 = vunpack.c.h.b16 %v831
    %v1422 = vunpack.c.l.b16 %v832
    %v1423 = vunpack.c.h.b16 %v832
    %v1424 = vunpack.c.l.b16 %v833
    %v1425 = vunpack.c.h.b16 %v833
    %v1426 = vunpack.c.l.b16 %v834
    %v1427 = vunpack.c.h.b16 %v834
    %v1428 = vunpack.c.l.b16 %v835
    %v1429 = vunpack.c.h.b16 %v835
    %v1430 = vunpack.c.l.b16 %v836
    %v1431 = vunpack.c.h.b16 %v836
    %v1432 = vunpack.c.l.b16 %v837
    %v1433 = vunpack.c.h.b16 %v837
    %v1434 = vunpack.c.l.b16 %v838
    %v1435 = vunpack.c.h.b16 %v838
    %v1436 = vunpack.c.l.b16 %v839
    %v1437 = vunpack.c.h.b16 %v839
    %v1438 = vunpack.c.l.b16 %v840
    %v1439 = vunpack.c.h.b16 %v840
    %v1440 = vunpack.c.l.b16 %v841
    %v1441 = vunpack.c.h.b16 %v841
    %v1442 = vunpack.c.l.b16 %v842
    %v1443 = vunpack.c.h.b16 %v842
    %v1444 = vunpack.c.l.b16 %v843
    %v1445 = vunpack.c.h.b16 %v843
    %v1446 = vunpack.c.l.b16 %v844
    %v1447 = vunpack.c.h.b16 %v844
    %v1448 = vunpack.c.l.b16 %v845
    %v1449 = vunpack.c.h.b16 %v845
    %v1450 = vunpack.c.l.b16 %v846
    %v1451 = vunpack.c.h.b16 %v846
    %v1452 = vunpack.c.l.b16 %v847
    %v1453 = vunpack.c.h.b16 %v847
    %v1454 = vunpack.c.l.b16 %v848
    %v1455 = vunpack.c.h.b16 %v848
    %v1456 = vunpack.c.l.b16 %v849
    %v1457 = vunpack.c.h.b16 %v849
    %v1458 = vunpack.c.l.b16 %v850
    %v1459 = vunpack.c.h.b16 %v850
    %v1460 = vunpack.c.l.b16 %v851
    %v1461 = vunpack.c.h.b16 %v851
    %v1462 = vunpack.c.l.b16 %v852
    %v1463 = vunpack.c.h.b16 %v852
    %v1464 = vunpack.c.l.b16 %v853
    %v1465 = vunpack.c.h.b16 %v853
    %v1466 = vunpack.c.l.b16 %v854
    %v1467 = vunpack.c.h.b16 %v854
    %v1468 = vunpack.c.l.b16 %v855
    %v1469 = vunpack.c.h.b16 %v855
    %v1470 = vunpack.c.l.b16 %v856
    %v1471 = vunpack.c.h.b16 %v856
    %v1472 = vunpack.c.l.b16 %v857
    %v1473 = vunpack.c.h.b16 %v857
    %v1474 = vunpack.c.l.b16 %v858
    %v1475 = vunpack.c.h.b16 %v858
    %v1476 = vunpack.c.l.b16 %v859
    %v1477 = vunpack.c.h.b16 %v859
    %v1478 = vunpack.c.l.b16 %v860
    %v1479 = vunpack.c.h.b16 %v860
    %v1480 = vunpack.c.l.b16 %v861
    %v1481 = vunpack.c.h.b16 %v861
    %v1482 = vunpack.c.l.b16 %v862
    %v1483 = vunpack.c.h.b16 %v862
    %v1484 = vunpack.c.l.b16 %v863
    %v1485 = vunpack.c.h.b16 %v863
    %v1486 = vunpack.c.l.b16 %v864
    %v1487 = vunpack.c.h.b16 %v864
    %v1488 = vunpack.c.l.b16 %v865
    %v1489 = vunpack.c.h.b16 %v865
    %v1490 = vunpack.c.l.b16 %v866
    %v1491 = vunpack.c.h.b16 %v866
    %v1492 = vunpack.c.l.b16 %v867
    %v1493 = vunpack.c.h.b16 %v867
    %v1494 = vunpack.c.l.b16 %v868
    %v1495 = vunpack.c.h.b16 %v868
    %v1496 = vunpack.c.l.b16 %v869
    %v1497 = vunpack.c.h.b16 %v869
    %v1498 = vunpack.c.l.b16 %v870
    %v1499 = vunpack.c.h.b16 %v870
    %v1500 = vunpack.c.l.b16 %v871
    %v1501 = vunpack.c.h.b16 %v871
    %v1502 = vunpack.c.l.b16 %v872
    %v1503 = vunpack.c.h.b16 %v872
    %v1504 = vunpack.c.l.b16 %v873
    %v1505 = vunpack.c.h.b16 %v873
    %v1506 = vunpack.c.l.b16 %v874
    %v1507 = vunpack.c.h.b16 %v874
    %v1508 = vunpack.c.l.b16 %v875
    %v1509 = vunpack.c.h.b16 %v875
    %v1510 = vunpack.c.l.b16 %v876
    %v1511 = vunpack.c.h.b16 %v876
    %v1512 = vunpack.c.l.b16 %v877
    %v1513 = vunpack.c.h.b16 %v877
    %v1514 = vunpack.c.l.b16 %v878
    %v1515 = vunpack.c.h.b16 %v878
    %v1516 = vunpack.c.l.b16 %v879
    %v1517 = vunpack.c.h.b16 %v879
    %v1518 = vunpack.c.l.b16 %v880
    %v1519 = vunpack.c.h.b16 %v880
    %v1520 = vunpack.c.l.b16 %v881
    %v1521 = vunpack.c.h.b16 %v881
    %v1522 = vunpack.c.l.b16 %v882
    %v1523 = vunpack.c.h.b16 %v882
    %v1524 = vunpack.c.l.b16 %v883
    %v1525 = vunpack.c.h.b16 %v883
    %v1526 = vunpack.c.l.b16 %v884
    %v1527 = vunpack.c.h.b16 %v884
    %v1528 = vunpack.c.l.b16 %v885
    %v1529 = vunpack.c.h.b16 %v885
    %v1530 = vunpack.c.l.b16 %v886
    %v1531 = vunpack.c.h.b16 %v886
    %v1532 = vunpack.c.l.b16 %v887
    %v1533 = vunpack.c.h.b16 %v887
    %v1534 = vunpack.c.l.b16 %v888
    %v1535 = vunpack.c.h.b16 %v888
    %v1536 = vpack.c.b16 %v1288, %v1280
    %v1537 = vpack.c.b16 %v1289, %v1281
    %v1538 = vpack.c.b16 %v1290, %v1282
    %v1539 = vpack.c.b16 %v1291, %v1283
    %v1540 = vpack.c.b16 %v1292, %v1284
    %v1541 = vpack.c.b16 %v1293, %v1285
    %v1542 = vpack.c.b16 %v1294, %v1286
    %v1543 = vpack.c.b16 %v1295, %v1287
    %v1544 = vpack.c.b16 %v1304, %v1296
    %v1545 = vpack.c.b16 %v1305, %v1297
    %v1546 = vpack.c.b16 %v1306, %v1298
    %v1547 = vpack.c.b16 %v1307, %v1299
    %v1548 = vpack.c.b16 %v1308, %v1300
    %v1549 = vpack.c.b16 %v1309, %v1301
    %v1550 = vpack.c.b16 %v1310, %v1302
    %v1551 = vpack.c.b16 %v1311, %v1303
    %v1552 = vpack.c.b16 %v1320, %v1312
    %v1553 = vpack.c.b16 %v1321, %v1313
    %v1554 = vpack.c.b16 %v1322, %v1314
    %v1555 = vpack.c.b16 %v1323, %v1315
    %v1556 = vpack.c.b16 %v1324, %v1316
    %v1557 = vpack.c.b16 %v1325, %v1317
    %v1558 = vpack.c.b16 %v1326, %v1318
    %v1559 = vpack.c.b16 %v1327, %v1319
    %v1560 = vpack.c.b16 %v1336, %v1328
    %v1561 = vpack.c.b16 %v1337, %v1329
    %v1562 = vpack.c.b16 %v1338, %v1330
    %v1563 = vpack.c.b16 %v1339, %v1331
    %v1564 = vpack.c.b16 %v1340, %v1332
    %v1565 = vpack.c.b16 %v1341, %v1333
    %v1566 = vpack.c.b16 %v1342, %v1334
    %v1567 = vpack.c.b16 %v1343, %v1335
    %v1568 = vpack.c.b16 %v1352, %v1344
    %v1569 = vpack.c.b16 %v1353, %v1345
    %v1570 = vpack.c.b16 %v1354, %v1346
    %v1571 = vpack.c.b16 %v1355, %v1347
    %v1572 = vpack.c.b16 %v1356, %v1348
    %v1573 = vpack.c.b16 %v1357, %v1349
    %v1574 = vpack.c.b16 %v1358, %v1350
    %v1575 = vpack.c.b16 %v1359, %v1351
    %v1576 = vpack.c.b16 %v1368, %v1360
    %v1577 = vpack.c.b16 %v1369, %v1361
    %v1578 = vpack.c.b16 %v1370, %v1362
    %v1579 = vpack.c.b16 %v1371, %v1363
    %v1580 = vpack.c.b16 %v1372, %v1364
    %v1581 = vpack.c.b16 %v1373, %v1365
    %v1582 = vpack.c.b16 %v1374, %v1366
    %v1583 = vpack.c.b16 %v1375, %v1367
    %v1584 = vpack.c.b16 %v1384, %v1376
    %v1585 = vpack.c.b16 %v1385, %v1377
    %v1586 = vpack.c.b16 %v1386, %v1378
    %v1587 = vpack.c.b16 %v1387, %v1379
    %v1588 = vpack.c.b16 %v1388, %v1380
    %v1589 = vpack.c.b16 %v1389, %v1381
    %v1590 = vpack.c.b16 %v1390, %v1382
    %v1591 = vpack.c.b16 %v1391, %v1383
    %v1592 = vpack.c.b16 %v1400, %v1392
    %v1593 = vpack.c.b16 %v1401, %v1393
    %v1594 = vpack.c.b16 %v1402, %v1394
    %v1595 = vpack.c.b16 %v1403, %v1395
    %v1596 = vpack.c.b16 %v1404, %v1396
    %v1597 = vpack.c.b16 %v1405, %v1397
    %v1598 = vpack.c.b16 %v1406, %v1398
    %v1599 = vpack.c.b16 %v1407, %v1399
    %v1600 = vpack.c.b16 %v1416, %v1408
    %v1601 = vpack.c.b16 %v1417, %v1409
    %v1602 = vpack.c.b16 %v1418, %v1410
    %v1603 = vpack.c.b16 %v1419, %v1411
    %v1604 = vpack.c.b16 %v1420, %v1412
    %v1605 = vpack.c.b16 %v1421, %v1413
    %v1606 = vpack.c.b16 %v1422, %v1414
    %v1607 = vpack.c.b16 %v1423, %v1415
    %v1608 = vpack.c.b16 %v1432, %v1424
    %v1609 = vpack.c.b16 %v1433, %v1425
    %v1610 = vpack.c.b16 %v1434, %v1426
    %v1611 = vpack.c.b16 %v1435, %v1427
    %v1612 = vpack.c.b16 %v1436, %v1428
    %v1613 = vpack.c.b16 %v1437, %v1429
    %v1614 = vpack.c.b16 %v1438, %v1430
    %v1615 = vpack.c.b16 %v1439, %v1431
    %v1616 = vpack.c.b16 %v1448, %v1440
    %v1617 = vpack.c.b16 %v1449, %v1441
    %v1618 = vpack.c.b16 %v1450, %v1442
    %v1619 = vpack.c.b16 %v1451, %v1443
    %v1620 = vpack.c.b16 %v1452, %v1444
    %v1621 = vpack.c.b16 %v1453, %v1445
    %v1622 = vpack.c.b16 %v1454, %v1446
    %v1623 = vpack.c.b16 %v1455, %v1447
    %v1624 = vpack.c.b16 %v1464, %v1456
    %v1625 = vpack.c.b16 %v1465, %v1457
    %v1626 = vpack.c.b16 %v1466, %v1458
    %v1627 = vpack.c.b16 %v1467, %v1459
    %v1628 = vpack.c.b16 %v1468, %v1460
    %v1629 = vpack.c.b16 %v1469, %v1461
    %v1630 = vpack.c.b16 %v1470, %v1462
    %v1631 = vpack.c.b16 %v1471, %v1463
    %v1632 = vpack.c.b16 %v1480, %v1472
    %v1633 = vpack.c.b16 %v1481, %v1473
    %v1634 = vpack.c.b16 %v1482, %v1474
    %v1635 = vpack.c.b16 %v1483, %v1475
    %v1636 = vpack.c.b16 %v1484, %v1476
    %v1637 = vpack.c.b16 %v1485, %v1477
    %v1638 = vpack.c.b16 %v1486, %v1478
    %v1639 = vpack.c.b16 %v1487, %v1479
    %v1640 = vpack.c.b16 %v1496, %v1488
    %v1641 = vpack.c.b16 %v1497, %v1489
    %v1642 = vpack.c.b16 %v1498, %v1490
    %v1643 = vpack.c.b16 %v1499, %v1491
    %v1644 = vpack.c.b16 %v1500, %v1492
    %v1645 = vpack.c.b16 %v1501, %v1493
    %v1646 = vpack.c.b16 %v1502, %v1494
    %v1647 = vpack.c.b16 %v1503, %v1495
    %v1648 = vpack.c.b16 %v1512, %v1504
    %v1649 = vpack.c.b16 %v1513, %v1505
    %v1650 = vpack.c.b16 %v1514, %v1506
    %v1651 = vpack.c.b16 %v1515, %v1507
    %v1652 = vpack.c.b16 %v1516, %v1508
    %v1653 = vpack.c.b16 %v1517, %v1509
    %v1654 = vpack.c.b16 %v1518, %v1510
    %v1655 = vpack.c.b16 %v1519, %v1511
    %v1656 = vpack.c.b16 %v1528, %v1520
    %v1657 = vpack.c.b16 %v1529, %v1521
    %v1658 = vpack.c.b16 %v1530, %v1522
    %v1659 = vpack.c.b16 %v1531, %v1523
    %v1660 = vpack.c.b16 %v1532, %v1524
    %v1661 = vpack.c.b16 %v1533, %v1525
    %v1662 = vpack.c.b16 %v1534, %v1526
    %v1663 = vpack.c.b16 %v1535, %v1527
    %1792 = vmatpush.bf16.msra.mxu0 %v1592
    %1793 = vmatpush.bf16.msra.mxu0 %v1584
    %1794 = vmatpush.bf16.msra.mxu0 %v1576
    %1795 = vmatpush.bf16.msra.mxu0 %v1568
    %1796 = vmatpush.bf16.msra.mxu0 %v1560
    %1797 = vmatpush.bf16.msra.mxu0 %v1552
    %1798 = vmatpush.bf16.msra.mxu0 %v1544
    %1799 = vmatpush.bf16.msra.mxu0 %v1536
    %1800 = vmatmul.bf16.gmra.mxu0 0
    %v1801 = vpop.f32.mrf.mxu0
    %v1802 = vadd.f32 0.0, %v1801
    %v1803 = vpop.f32.mrf.mxu0
    %1804 = vdwg.mxu0
    %1805 = vmatpush.bf16.msra.mxu0 %v1656
    %1806 = vmatpush.bf16.msra.mxu0 %v1648
    %1807 = vmatpush.bf16.msra.mxu0 %v1640
    %1808 = vmatpush.bf16.msra.mxu0 %v1632
    %1809 = vmatpush.bf16.msra.mxu0 %v1624
    %1810 = vmatpush.bf16.msra.mxu0 %v1616
    %1811 = vmatpush.bf16.msra.mxu0 %v1608
    %1812 = vmatpush.bf16.msra.mxu0 %v1600
    %1813 = vmatmul.bf16.gmra.mxu0 0
    %v1814 = vpop.f32.mrf.mxu0
    %v1815 = vadd.f32 %v1802, %v1814
    %v1816 = vpop.f32.mrf.mxu0
    %1817 = vdwg.mxu0
    %1818 = vmatpush.bf16.msra.mxu0 %v1593
    %1819 = vmatpush.bf16.msra.mxu0 %v1585
    %1820 = vmatpush.bf16.msra.mxu0 %v1577
    %1821 = vmatpush.bf16.msra.mxu0 %v1569
    %1822 = vmatpush.bf16.msra.mxu0 %v1561
    %1823 = vmatpush.bf16.msra.mxu0 %v1553
    %1824 = vmatpush.bf16.msra.mxu0 %v1545
    %1825 = vmatpush.bf16.msra.mxu0 %v1537
    %1826 = vmatmul.bf16.gmra.mxu0 0
    %v1827 = vpop.f32.mrf.mxu0
    %v1828 = vadd.f32 0.0, %v1827
    %v1829 = vpop.f32.mrf.mxu0
    %1830 = vdwg.mxu0
    %1831 = vmatpush.bf16.msra.mxu0 %v1657
    %1832 = vmatpush.bf16.msra.mxu0 %v1649
    %1833 = vmatpush.bf16.msra.mxu0 %v1641
    %1834 = vmatpush.bf16.msra.mxu0 %v1633
    %1835 = vmatpush.bf16.msra.mxu0 %v1625
    %1836 = vmatpush.bf16.msra.mxu0 %v1617
    %1837 = vmatpush.bf16.msra.mxu0 %v1609
    %1838 = vmatpush.bf16.msra.mxu0 %v1601
    %1839 = vmatmul.bf16.gmra.mxu0 0
    %v1840 = vpop.f32.mrf.mxu0
    %v1841 = vadd.f32 %v1828, %v1840
    %v1842 = vpop.f32.mrf.mxu0
    %1843 = vdwg.mxu0
    %1844 = vmatpush.bf16.msra.mxu0 %v1594
    %1845 = vmatpush.bf16.msra.mxu0 %v1586
    %1846 = vmatpush.bf16.msra.mxu0 %v1578
    %1847 = vmatpush.bf16.msra.mxu0 %v1570
    %1848 = vmatpush.bf16.msra.mxu0 %v1562
    %1849 = vmatpush.bf16.msra.mxu0 %v1554
    %1850 = vmatpush.bf16.msra.mxu0 %v1546
    %1851 = vmatpush.bf16.msra.mxu0 %v1538
    %1852 = vmatmul.bf16.gmra.mxu0 0
    %v1853 = vpop.f32.mrf.mxu0
    %v1854 = vadd.f32 0.0, %v1853
    %v1855 = vpop.f32.mrf.mxu0
    %1856 = vdwg.mxu0
    %1857 = vmatpush.bf16.msra.mxu0 %v1658
    %1858 = vmatpush.bf16.msra.mxu0 %v1650
    %1859 = vmatpush.bf16.msra.mxu0 %v1642
    %1860 = vmatpush.bf16.msra.mxu0 %v1634
    %1861 = vmatpush.bf16.msra.mxu0 %v1626
    %1862 = vmatpush.bf16.msra.mxu0 %v1618
    %1863 = vmatpush.bf16.msra.mxu0 %v1610
    %1864 = vmatpush.bf16.msra.mxu0 %v1602
    %1865 = vmatmul.bf16.gmra.mxu0 0
    %v1866 = vpop.f32.mrf.mxu0
    %v1867 = vadd.f32 %v1854, %v1866
    %v1868 = vpop.f32.mrf.mxu0
    %1869 = vdwg.mxu0
    %1870 = vmatpush.bf16.msra.mxu0 %v1595
    %1871 = vmatpush.bf16.msra.mxu0 %v1587
    %1872 = vmatpush.bf16.msra.mxu0 %v1579
    %1873 = vmatpush.bf16.msra.mxu0 %v1571
    %1874 = vmatpush.bf16.msra.mxu0 %v1563
    %1875 = vmatpush.bf16.msra.mxu0 %v1555
    %1876 = vmatpush.bf16.msra.mxu0 %v1547
    %1877 = vmatpush.bf16.msra.mxu0 %v1539
    %1878 = vmatmul.bf16.gmra.mxu0 0
    %v1879 = vpop.f32.mrf.mxu0
    %v1880 = vadd.f32 0.0, %v1879
    %v1881 = vpop.f32.mrf.mxu0
    %1882 = vdwg.mxu0
    %1883 = vmatpush.bf16.msra.mxu0 %v1659
    %1884 = vmatpush.bf16.msra.mxu0 %v1651
    %1885 = vmatpush.bf16.msra.mxu0 %v1643
    %1886 = vmatpush.bf16.msra.mxu0 %v1635
    %1887 = vmatpush.bf16.msra.mxu0 %v1627
    %1888 = vmatpush.bf16.msra.mxu0 %v1619
    %1889 = vmatpush.bf16.msra.mxu0 %v1611
    %1890 = vmatpush.bf16.msra.mxu0 %v1603
    %1891 = vmatmul.bf16.gmra.mxu0 0
    %v1892 = vpop.f32.mrf.mxu0
    %v1893 = vadd.f32 %v1880, %v1892
    %v1894 = vpop.f32.mrf.mxu0
    %1895 = vdwg.mxu0
    %1896 = vmatpush.bf16.msra.mxu0 %v1596
    %1897 = vmatpush.bf16.msra.mxu0 %v1588
    %1898 = vmatpush.bf16.msra.mxu0 %v1580
    %1899 = vmatpush.bf16.msra.mxu0 %v1572
    %1900 = vmatpush.bf16.msra.mxu0 %v1564
    %1901 = vmatpush.bf16.msra.mxu0 %v1556
    %1902 = vmatpush.bf16.msra.mxu0 %v1548
    %1903 = vmatpush.bf16.msra.mxu0 %v1540
    %1904 = vmatmul.bf16.gmra.mxu0 0
    %v1905 = vpop.f32.mrf.mxu0
    %v1906 = vadd.f32 0.0, %v1905
    %v1907 = vpop.f32.mrf.mxu0
    %1908 = vdwg.mxu0
    %1909 = vmatpush.bf16.msra.mxu0 %v1660
    %1910 = vmatpush.bf16.msra.mxu0 %v1652
    %1911 = vmatpush.bf16.msra.mxu0 %v1644
    %1912 = vmatpush.bf16.msra.mxu0 %v1636
    %1913 = vmatpush.bf16.msra.mxu0 %v1628
    %1914 = vmatpush.bf16.msra.mxu0 %v1620
    %1915 = vmatpush.bf16.msra.mxu0 %v1612
    %1916 = vmatpush.bf16.msra.mxu0 %v1604
    %1917 = vmatmul.bf16.gmra.mxu0 0
    %v1918 = vpop.f32.mrf.mxu0
    %v1919 = vadd.f32 %v1906, %v1918
    %v1920 = vpop.f32.mrf.mxu0
    %1921 = vdwg.mxu0
    %1922 = vmatpush.bf16.msra.mxu0 %v1597
    %1923 = vmatpush.bf16.msra.mxu0 %v1589
    %1924 = vmatpush.bf16.msra.mxu0 %v1581
    %1925 = vmatpush.bf16.msra.mxu0 %v1573
    %1926 = vmatpush.bf16.msra.mxu0 %v1565
    %1927 = vmatpush.bf16.msra.mxu0 %v1557
    %1928 = vmatpush.bf16.msra.mxu0 %v1549
    %1929 = vmatpush.bf16.msra.mxu0 %v1541
    %1930 = vmatmul.bf16.gmra.mxu0 0
    %v1931 = vpop.f32.mrf.mxu0
    %v1932 = vadd.f32 0.0, %v1931
    %v1933 = vpop.f32.mrf.mxu0
    %1934 = vdwg.mxu0
    %1935 = vmatpush.bf16.msra.mxu0 %v1661
    %1936 = vmatpush.bf16.msra.mxu0 %v1653
    %1937 = vmatpush.bf16.msra.mxu0 %v1645
    %1938 = vmatpush.bf16.msra.mxu0 %v1637
    %1939 = vmatpush.bf16.msra.mxu0 %v1629
    %1940 = vmatpush.bf16.msra.mxu0 %v1621
    %1941 = vmatpush.bf16.msra.mxu0 %v1613
    %1942 = vmatpush.bf16.msra.mxu0 %v1605
    %1943 = vmatmul.bf16.gmra.mxu0 0
    %v1944 = vpop.f32.mrf.mxu0
    %v1945 = vadd.f32 %v1932, %v1944
    %v1946 = vpop.f32.mrf.mxu0
    %1947 = vdwg.mxu0
    %1948 = vmatpush.bf16.msra.mxu0 %v1598
    %1949 = vmatpush.bf16.msra.mxu0 %v1590
    %1950 = vmatpush.bf16.msra.mxu0 %v1582
    %1951 = vmatpush.bf16.msra.mxu0 %v1574
    %1952 = vmatpush.bf16.msra.mxu0 %v1566
    %1953 = vmatpush.bf16.msra.mxu0 %v1558
    %1954 = vmatpush.bf16.msra.mxu0 %v1550
    %1955 = vmatpush.bf16.msra.mxu0 %v1542
    %1956 = vmatmul.bf16.gmra.mxu0 0
    %v1957 = vpop.f32.mrf.mxu0
    %v1958 = vadd.f32 0.0, %v1957
    %v1959 = vpop.f32.mrf.mxu0
    %1960 = vdwg.mxu0
    %1961 = vmatpush.bf16.msra.mxu0 %v1662
    %1962 = vmatpush.bf16.msra.mxu0 %v1654
    %1963 = vmatpush.bf16.msra.mxu0 %v1646
    %1964 = vmatpush.bf16.msra.mxu0 %v1638
    %1965 = vmatpush.bf16.msra.mxu0 %v1630
    %1966 = vmatpush.bf16.msra.mxu0 %v1622
    %1967 = vmatpush.bf16.msra.mxu0 %v1614
    %1968 = vmatpush.bf16.msra.mxu0 %v1606
    %1969 = vmatmul.bf16.gmra.mxu0 0
    %v1970 = vpop.f32.mrf.mxu0
    %v1971 = vadd.f32 %v1958, %v1970
    %v1972 = vpop.f32.mrf.mxu0
    %1973 = vdwg.mxu0
    %1974 = vmatpush.bf16.msra.mxu0 %v1599
    %1975 = vmatpush.bf16.msra.mxu0 %v1591
    %1976 = vmatpush.bf16.msra.mxu0 %v1583
    %1977 = vmatpush.bf16.msra.mxu0 %v1575
    %1978 = vmatpush.bf16.msra.mxu0 %v1567
    %1979 = vmatpush.bf16.msra.mxu0 %v1559
    %1980 = vmatpush.bf16.msra.mxu0 %v1551
    %1981 = vmatpush.bf16.msra.mxu0 %v1543
    %1982 = vmatmul.bf16.gmra.mxu0 0
    %v1983 = vpop.f32.mrf.mxu0
    %v1984 = vadd.f32 0.0, %v1983
    %v1985 = vpop.f32.mrf.mxu0
    %1986 = vdwg.mxu0
    %1987 = vmatpush.bf16.msra.mxu0 %v1663
    %1988 = vmatpush.bf16.msra.mxu0 %v1655
    %1989 = vmatpush.bf16.msra.mxu0 %v1647
    %1990 = vmatpush.bf16.msra.mxu0 %v1639
    %1991 = vmatpush.bf16.msra.mxu0 %v1631
    %1992 = vmatpush.bf16.msra.mxu0 %v1623
    %1993 = vmatpush.bf16.msra.mxu0 %v1615
    %1994 = vmatpush.bf16.msra.mxu0 %v1607
    %1995 = vmatmul.bf16.gmra.mxu0 0
    %v1996 = vpop.f32.mrf.mxu0
    %v1997 = vadd.f32 %v1984, %v1996
    %v1998 = vpop.f32.mrf.mxu0
    %1999 = vdwg.mxu0
    %v2000 = vadd.f32 %v539, %v1815
    %v2001 = vadd.f32 %v568, %v1841
    %v2002 = vadd.f32 %v597, %v1867
    %v2003 = vadd.f32 %v626, %v1893
    %v2004 = vadd.f32 %v655, %v1919
    %v2005 = vadd.f32 %v684, %v1945
    %v2006 = vadd.f32 %v713, %v1971
    %v2007 = vadd.f32 %v742, %v1997
    %v2008 = vxor.u32 %v2000, 2147483648
    %v2009 = vxor.u32 %v2001, 2147483648
    %v2010 = vmul.f32 %v2008, 1.442695
    %v2011 = vpow.pop %v2010
    %v2012 = vmul.f32 %v2009, 1.442695
    %v2013 = vpow.pop %v2012
    %v2014 = vadd.f32 %v2011, 1.0
    %v2015 = vadd.f32 %v2013, 1.0
    %v2016 = vrcp.pop %v2014
    %v2017 = vmul.f32 %v2014, %v2016
    %v2018 = vsub.f32 1.0, %v2017
    %v2019 = vmul.f32 %v2016, %v2018
    %v2020 = vadd.f32 %v2016, %v2019
    %vm2021 = vweird.f32 %v2014
    %vm2022 = vweird.f32 %v2016
    %vm2023 = vmor %vm2021, %vm2022
    %v2024 = vsel %vm2023, %v2016, %v2020
    %v2025 = vand.u32 2147483647, %v2014
    %vm2026 = vcmp.eq.f32.partialorder %v2025, 8.507059e+37
    %v2027 = vand.u32 %v2014, 2147483648
    %v2028 = vor.u32 1.1754944e-38, %v2027
    %v2029 = vsel %vm2026, %v2028, %v2024
    %v2030 = vmul.f32 1.0, %v2029
    %v2031 = vrcp.pop %v2015
    %v2032 = vmul.f32 %v2015, %v2031
    %v2033 = vsub.f32 1.0, %v2032
    %v2034 = vmul.f32 %v2031, %v2033
    %v2035 = vadd.f32 %v2031, %v2034
    %vm2036 = vweird.f32 %v2015
    %vm2037 = vweird.f32 %v2031
    %vm2038 = vmor %vm2036, %vm2037
    %v2039 = vsel %vm2038, %v2031, %v2035
    %v2040 = vand.u32 2147483647, %v2015
    %vm2041 = vcmp.eq.f32.partialorder %v2040, 8.507059e+37
    %v2042 = vand.u32 %v2015, 2147483648
    %v2043 = vor.u32 1.1754944e-38, %v2042
    %v2044 = vsel %vm2041, %v2043, %v2039
    %v2045 = vmul.f32 1.0, %v2044
    %v2046 = vxor.u32 %v2002, 2147483648
    %v2047 = vxor.u32 %v2003, 2147483648
    %v2048 = vmul.f32 %v2046, 1.442695
    %v2049 = vpow.pop %v2048
    %v2050 = vmul.f32 %v2047, 1.442695
    %v2051 = vpow.pop %v2050
    %v2052 = vadd.f32 %v2049, 1.0
    %v2053 = vadd.f32 %v2051, 1.0
    %v2054 = vrcp.pop %v2052
    %v2055 = vmul.f32 %v2052, %v2054
    %v2056 = vsub.f32 1.0, %v2055
    %v2057 = vmul.f32 %v2054, %v2056
    %v2058 = vadd.f32 %v2054, %v2057
    %vm2059 = vweird.f32 %v2052
    %vm2060 = vweird.f32 %v2054
    %vm2061 = vmor %vm2059, %vm2060
    %v2062 = vsel %vm2061, %v2054, %v2058
    %v2063 = vand.u32 2147483647, %v2052
    %vm2064 = vcmp.eq.f32.partialorder %v2063, 8.507059e+37
    %v2065 = vand.u32 %v2052, 2147483648
    %v2066 = vor.u32 1.1754944e-38, %v2065
    %v2067 = vsel %vm2064, %v2066, %v2062
    %v2068 = vmul.f32 1.0, %v2067
    %v2069 = vrcp.pop %v2053
    %v2070 = vmul.f32 %v2053, %v2069
    %v2071 = vsub.f32 1.0, %v2070
    %v2072 = vmul.f32 %v2069, %v2071
    %v2073 = vadd.f32 %v2069, %v2072
    %vm2074 = vweird.f32 %v2053
    %vm2075 = vweird.f32 %v2069
    %vm2076 = vmor %vm2074, %vm2075
    %v2077 = vsel %vm2076, %v2069, %v2073
    %v2078 = vand.u32 2147483647, %v2053
    %vm2079 = vcmp.eq.f32.partialorder %v2078, 8.507059e+37
    %v2080 = vand.u32 %v2053, 2147483648
    %v2081 = vor.u32 1.1754944e-38, %v2080
    %v2082 = vsel %vm2079, %v2081, %v2077
    %v2083 = vmul.f32 1.0, %v2082
    %v2084 = vtanh.pop %v2004
    %v2085 = vtanh.pop %v2005
    %v2086 = vxor.u32 %v2006, 2147483648
    %v2087 = vxor.u32 %v2007, 2147483648
    %v2088 = vmul.f32 %v2086, 1.442695
    %v2089 = vpow.pop %v2088
    %v2090 = vmul.f32 %v2087, 1.442695
    %v2091 = vpow.pop %v2090
    %v2092 = vadd.f32 %v2089, 1.0
    %v2093 = vadd.f32 %v2091, 1.0
    %v2094 = vrcp.pop %v2092
    %v2095 = vmul.f32 %v2092, %v2094
    %v2096 = vsub.f32 1.0, %v2095
    %v2097 = vmul.f32 %v2094, %v2096
    %v2098 = vadd.f32 %v2094, %v2097
    %vm2099 = vweird.f32 %v2092
    %vm2100 = vweird.f32 %v2094
    %vm2101 = vmor %vm2099, %vm2100
    %v2102 = vsel %vm2101, %v2094, %v2098
    %v2103 = vand.u32 2147483647, %v2092
    %vm2104 = vcmp.eq.f32.partialorder %v2103, 8.507059e+37
    %v2105 = vand.u32 %v2092, 2147483648
    %v2106 = vor.u32 1.1754944e-38, %v2105
    %v2107 = vsel %vm2104, %v2106, %v2102
    %v2108 = vmul.f32 1.0, %v2107
    %v2109 = vrcp.pop %v2093
    %v2110 = vmul.f32 %v2093, %v2109
    %v2111 = vsub.f32 1.0, %v2110
    %v2112 = vmul.f32 %v2109, %v2111
    %v2113 = vadd.f32 %v2109, %v2112
    %vm2114 = vweird.f32 %v2093
    %vm2115 = vweird.f32 %v2109
    %vm2116 = vmor %vm2114, %vm2115
    %v2117 = vsel %vm2116, %v2109, %v2113
    %v2118 = vand.u32 2147483647, %v2093
    %vm2119 = vcmp.eq.f32.partialorder %v2118, 8.507059e+37
    %v2120 = vand.u32 %v2093, 2147483648
    %v2121 = vor.u32 1.1754944e-38, %v2120
    %v2122 = vsel %vm2119, %v2121, %v2117
    %v2123 = vmul.f32 1.0, %v2122
    %v2124 = vmul.f32 %v2068, 0.0
    %v2125 = vmul.f32 %v2083, 0.0
    %v2126 = vmul.f32 %v2030, %v2084
    %v2127 = vmul.f32 %v2045, %v2085
    %v2128 = vadd.f32 %v2124, %v2126
    %v2129 = vadd.f32 %v2125, %v2127
    %v2130 = vtanh.pop %v2128
    %v2131 = vtanh.pop %v2129
    %v2132 = vmul.f32 %v2108, %v2130
    %v2133 = vmul.f32 %v2123, %v2131
    %v2134 = vpack.c.bf16 %v2133, %v2132
    %v2136 = vunpack.c.l.b16 %v2134
    %v2137 = vunpack.c.h.b16 %v2134
    %v2138 = vpack.c.b16 %v2136, %v2136
    %v2139 = vpack.c.b16 %v2137, %v2137
    %v2143 = vperm.slane %v1145, 0
    %v2144 = vperm.slane %v1145, 1
    %v2145 = vperm.slane %v1145, 2
    %v2146 = vperm.slane %v1145, 3
    %v2147 = vperm.slane %v1145, 4
    %v2148 = vperm.slane %v1145, 5
    %v2149 = vperm.slane %v1145, 6
    %v2150 = vperm.slane %v1145, 7
    %v2415 = vunpack.c.l.b16 %v889
    %v2416 = vunpack.c.h.b16 %v889
    %v2417 = vunpack.c.l.b16 %v890
    %v2418 = vunpack.c.h.b16 %v890
    %v2419 = vunpack.c.l.b16 %v891
    %v2420 = vunpack.c.h.b16 %v891
    %v2421 = vunpack.c.l.b16 %v892
    %v2422 = vunpack.c.h.b16 %v892
    %v2423 = vunpack.c.l.b16 %v893
    %v2424 = vunpack.c.h.b16 %v893
    %v2425 = vunpack.c.l.b16 %v894
    %v2426 = vunpack.c.h.b16 %v894
    %v2427 = vunpack.c.l.b16 %v895
    %v2428 = vunpack.c.h.b16 %v895
    %v2429 = vunpack.c.l.b16 %v896
    %v2430 = vunpack.c.h.b16 %v896
    %v2431 = vunpack.c.l.b16 %v897
    %v2432 = vunpack.c.h.b16 %v897
    %v2433 = vunpack.c.l.b16 %v898
    %v2434 = vunpack.c.h.b16 %v898
    %v2435 = vunpack.c.l.b16 %v899
    %v2436 = vunpack.c.h.b16 %v899
    %v2437 = vunpack.c.l.b16 %v900
    %v2438 = vunpack.c.h.b16 %v900
    %v2439 = vunpack.c.l.b16 %v901
    %v2440 = vunpack.c.h.b16 %v901
    %v2441 = vunpack.c.l.b16 %v902
    %v2442 = vunpack.c.h.b16 %v902
    %v2443 = vunpack.c.l.b16 %v903
    %v2444 = vunpack.c.h.b16 %v903
    %v2445 = vunpack.c.l.b16 %v904
    %v2446 = vunpack.c.h.b16 %v904
    %v2447 = vunpack.c.l.b16 %v905
    %v2448 = vunpack.c.h.b16 %v905
    %v2449 = vunpack.c.l.b16 %v906
    %v2450 = vunpack.c.h.b16 %v906
    %v2451 = vunpack.c.l.b16 %v907
    %v2452 = vunpack.c.h.b16 %v907
    %v2453 = vunpack.c.l.b16 %v908
    %v2454 = vunpack.c.h.b16 %v908
    %v2455 = vunpack.c.l.b16 %v909
    %v2456 = vunpack.c.h.b16 %v909
    %v2457 = vunpack.c.l.b16 %v910
    %v2458 = vunpack.c.h.b16 %v910
    %v2459 = vunpack.c.l.b16 %v911
    %v2460 = vunpack.c.h.b16 %v911
    %v2461 = vunpack.c.l.b16 %v912
    %v2462 = vunpack.c.h.b16 %v912
    %v2463 = vunpack.c.l.b16 %v913
    %v2464 = vunpack.c.h.b16 %v913
    %v2465 = vunpack.c.l.b16 %v914
    %v2466 = vunpack.c.h.b16 %v914
    %v2467 = vunpack.c.l.b16 %v915
    %v2468 = vunpack.c.h.b16 %v915
    %v2469 = vunpack.c.l.b16 %v916
    %v2470 = vunpack.c.h.b16 %v916
    %v2471 = vunpack.c.l.b16 %v917
    %v2472 = vunpack.c.h.b16 %v917
    %v2473 = vunpack.c.l.b16 %v918
    %v2474 = vunpack.c.h.b16 %v918
    %v2475 = vunpack.c.l.b16 %v919
    %v2476 = vunpack.c.h.b16 %v919
    %v2477 = vunpack.c.l.b16 %v920
    %v2478 = vunpack.c.h.b16 %v920
    %v2479 = vunpack.c.l.b16 %v921
    %v2480 = vunpack.c.h.b16 %v921
    %v2481 = vunpack.c.l.b16 %v922
    %v2482 = vunpack.c.h.b16 %v922
    %v2483 = vunpack.c.l.b16 %v923
    %v2484 = vunpack.c.h.b16 %v923
    %v2485 = vunpack.c.l.b16 %v924
    %v2486 = vunpack.c.h.b16 %v924
    %v2487 = vunpack.c.l.b16 %v925
    %v2488 = vunpack.c.h.b16 %v925
    %v2489 = vunpack.c.l.b16 %v926
    %v2490 = vunpack.c.h.b16 %v926
    %v2491 = vunpack.c.l.b16 %v927
    %v2492 = vunpack.c.h.b16 %v927
    %v2493 = vunpack.c.l.b16 %v928
    %v2494 = vunpack.c.h.b16 %v928
    %v2495 = vunpack.c.l.b16 %v929
    %v2496 = vunpack.c.h.b16 %v929
    %v2497 = vunpack.c.l.b16 %v930
    %v2498 = vunpack.c.h.b16 %v930
    %v2499 = vunpack.c.l.b16 %v931
    %v2500 = vunpack.c.h.b16 %v931
    %v2501 = vunpack.c.l.b16 %v932
    %v2502 = vunpack.c.h.b16 %v932
    %v2503 = vunpack.c.l.b16 %v933
    %v2504 = vunpack.c.h.b16 %v933
    %v2505 = vunpack.c.l.b16 %v934
    %v2506 = vunpack.c.h.b16 %v934
    %v2507 = vunpack.c.l.b16 %v935
    %v2508 = vunpack.c.h.b16 %v935
    %v2509 = vunpack.c.l.b16 %v936
    %v2510 = vunpack.c.h.b16 %v936
    %v2511 = vunpack.c.l.b16 %v937
    %v2512 = vunpack.c.h.b16 %v937
    %v2513 = vunpack.c.l.b16 %v938
    %v2514 = vunpack.c.h.b16 %v938
    %v2515 = vunpack.c.l.b16 %v939
    %v2516 = vunpack.c.h.b16 %v939
    %v2517 = vunpack.c.l.b16 %v940
    %v2518 = vunpack.c.h.b16 %v940
    %v2519 = vunpack.c.l.b16 %v941
    %v2520 = vunpack.c.h.b16 %v941
    %v2521 = vunpack.c.l.b16 %v942
    %v2522 = vunpack.c.h.b16 %v942
    %v2523 = vunpack.c.l.b16 %v943
    %v2524 = vunpack.c.h.b16 %v943
    %v2525 = vunpack.c.l.b16 %v944
    %v2526 = vunpack.c.h.b16 %v944
    %v2527 = vunpack.c.l.b16 %v945
    %v2528 = vunpack.c.h.b16 %v945
    %v2529 = vunpack.c.l.b16 %v946
    %v2530 = vunpack.c.h.b16 %v946
    %v2531 = vunpack.c.l.b16 %v947
    %v2532 = vunpack.c.h.b16 %v947
    %v2533 = vunpack.c.l.b16 %v948
    %v2534 = vunpack.c.h.b16 %v948
    %v2535 = vunpack.c.l.b16 %v949
    %v2536 = vunpack.c.h.b16 %v949
    %v2537 = vunpack.c.l.b16 %v950
    %v2538 = vunpack.c.h.b16 %v950
    %v2539 = vunpack.c.l.b16 %v951
    %v2540 = vunpack.c.h.b16 %v951
    %v2541 = vunpack.c.l.b16 %v952
    %v2542 = vunpack.c.h.b16 %v952
    %v2543 = vunpack.c.l.b16 %v953
    %v2544 = vunpack.c.h.b16 %v953
    %v2545 = vunpack.c.l.b16 %v954
    %v2546 = vunpack.c.h.b16 %v954
    %v2547 = vunpack.c.l.b16 %v955
    %v2548 = vunpack.c.h.b16 %v955
    %v2549 = vunpack.c.l.b16 %v956
    %v2550 = vunpack.c.h.b16 %v956
    %v2551 = vunpack.c.l.b16 %v957
    %v2552 = vunpack.c.h.b16 %v957
    %v2553 = vunpack.c.l.b16 %v958
    %v2554 = vunpack.c.h.b16 %v958
    %v2555 = vunpack.c.l.b16 %v959
    %v2556 = vunpack.c.h.b16 %v959
    %v2557 = vunpack.c.l.b16 %v960
    %v2558 = vunpack.c.h.b16 %v960
    %v2559 = vunpack.c.l.b16 %v961
    %v2560 = vunpack.c.h.b16 %v961
    %v2561 = vunpack.c.l.b16 %v962
    %v2562 = vunpack.c.h.b16 %v962
    %v2563 = vunpack.c.l.b16 %v963
    %v2564 = vunpack.c.h.b16 %v963
    %v2565 = vunpack.c.l.b16 %v964
    %v2566 = vunpack.c.h.b16 %v964
    %v2567 = vunpack.c.l.b16 %v965
    %v2568 = vunpack.c.h.b16 %v965
    %v2569 = vunpack.c.l.b16 %v966
    %v2570 = vunpack.c.h.b16 %v966
    %v2571 = vunpack.c.l.b16 %v967
    %v2572 = vunpack.c.h.b16 %v967
    %v2573 = vunpack.c.l.b16 %v968
    %v2574 = vunpack.c.h.b16 %v968
    %v2575 = vunpack.c.l.b16 %v969
    %v2576 = vunpack.c.h.b16 %v969
    %v2577 = vunpack.c.l.b16 %v970
    %v2578 = vunpack.c.h.b16 %v970
    %v2579 = vunpack.c.l.b16 %v971
    %v2580 = vunpack.c.h.b16 %v971
    %v2581 = vunpack.c.l.b16 %v972
    %v2582 = vunpack.c.h.b16 %v972
    %v2583 = vunpack.c.l.b16 %v973
    %v2584 = vunpack.c.h.b16 %v973
    %v2585 = vunpack.c.l.b16 %v974
    %v2586 = vunpack.c.h.b16 %v974
    %v2587 = vunpack.c.l.b16 %v975
    %v2588 = vunpack.c.h.b16 %v975
    %v2589 = vunpack.c.l.b16 %v976
    %v2590 = vunpack.c.h.b16 %v976
    %v2591 = vunpack.c.l.b16 %v977
    %v2592 = vunpack.c.h.b16 %v977
    %v2593 = vunpack.c.l.b16 %v978
    %v2594 = vunpack.c.h.b16 %v978
    %v2595 = vunpack.c.l.b16 %v979
    %v2596 = vunpack.c.h.b16 %v979
    %v2597 = vunpack.c.l.b16 %v980
    %v2598 = vunpack.c.h.b16 %v980
    %v2599 = vunpack.c.l.b16 %v981
    %v2600 = vunpack.c.h.b16 %v981
    %v2601 = vunpack.c.l.b16 %v982
    %v2602 = vunpack.c.h.b16 %v982
    %v2603 = vunpack.c.l.b16 %v983
    %v2604 = vunpack.c.h.b16 %v983
    %v2605 = vunpack.c.l.b16 %v984
    %v2606 = vunpack.c.h.b16 %v984
    %v2607 = vunpack.c.l.b16 %v985
    %v2608 = vunpack.c.h.b16 %v985
    %v2609 = vunpack.c.l.b16 %v986
    %v2610 = vunpack.c.h.b16 %v986
    %v2611 = vunpack.c.l.b16 %v987
    %v2612 = vunpack.c.h.b16 %v987
    %v2613 = vunpack.c.l.b16 %v988
    %v2614 = vunpack.c.h.b16 %v988
    %v2615 = vunpack.c.l.b16 %v989
    %v2616 = vunpack.c.h.b16 %v989
    %v2617 = vunpack.c.l.b16 %v990
    %v2618 = vunpack.c.h.b16 %v990
    %v2619 = vunpack.c.l.b16 %v991
    %v2620 = vunpack.c.h.b16 %v991
    %v2621 = vunpack.c.l.b16 %v992
    %v2622 = vunpack.c.h.b16 %v992
    %v2623 = vunpack.c.l.b16 %v993
    %v2624 = vunpack.c.h.b16 %v993
    %v2625 = vunpack.c.l.b16 %v994
    %v2626 = vunpack.c.h.b16 %v994
    %v2627 = vunpack.c.l.b16 %v995
    %v2628 = vunpack.c.h.b16 %v995
    %v2629 = vunpack.c.l.b16 %v996
    %v2630 = vunpack.c.h.b16 %v996
    %v2631 = vunpack.c.l.b16 %v997
    %v2632 = vunpack.c.h.b16 %v997
    %v2633 = vunpack.c.l.b16 %v998
    %v2634 = vunpack.c.h.b16 %v998
    %v2635 = vunpack.c.l.b16 %v999
    %v2636 = vunpack.c.h.b16 %v999
    %v2637 = vunpack.c.l.b16 %v1000
    %v2638 = vunpack.c.h.b16 %v1000
    %v2639 = vunpack.c.l.b16 %v1001
    %v2640 = vunpack.c.h.b16 %v1001
    %v2641 = vunpack.c.l.b16 %v1002
    %v2642 = vunpack.c.h.b16 %v1002
    %v2643 = vunpack.c.l.b16 %v1003
    %v2644 = vunpack.c.h.b16 %v1003
    %v2645 = vunpack.c.l.b16 %v1004
    %v2646 = vunpack.c.h.b16 %v1004
    %v2647 = vunpack.c.l.b16 %v1005
    %v2648 = vunpack.c.h.b16 %v1005
    %v2649 = vunpack.c.l.b16 %v1006
    %v2650 = vunpack.c.h.b16 %v1006
    %v2651 = vunpack.c.l.b16 %v1007
    %v2652 = vunpack.c.h.b16 %v1007
    %v2653 = vunpack.c.l.b16 %v1008
    %v2654 = vunpack.c.h.b16 %v1008
    %v2655 = vunpack.c.l.b16 %v1009
    %v2656 = vunpack.c.h.b16 %v1009
    %v2657 = vunpack.c.l.b16 %v1010
    %v2658 = vunpack.c.h.b16 %v1010
    %v2659 = vunpack.c.l.b16 %v1011
    %v2660 = vunpack.c.h.b16 %v1011
    %v2661 = vunpack.c.l.b16 %v1012
    %v2662 = vunpack.c.h.b16 %v1012
    %v2663 = vunpack.c.l.b16 %v1013
    %v2664 = vunpack.c.h.b16 %v1013
    %v2665 = vunpack.c.l.b16 %v1014
    %v2666 = vunpack.c.h.b16 %v1014
    %v2667 = vunpack.c.l.b16 %v1015
    %v2668 = vunpack.c.h.b16 %v1015
    %v2669 = vunpack.c.l.b16 %v1016
    %v2670 = vunpack.c.h.b16 %v1016
    %v2671 = vunpack.c.l.b16 %v1017
    %v2672 = vunpack.c.h.b16 %v1017
    %v2673 = vunpack.c.l.b16 %v1018
    %v2674 = vunpack.c.h.b16 %v1018
    %v2675 = vunpack.c.l.b16 %v1019
    %v2676 = vunpack.c.h.b16 %v1019
    %v2677 = vunpack.c.l.b16 %v1020
    %v2678 = vunpack.c.h.b16 %v1020
    %v2679 = vunpack.c.l.b16 %v1021
    %v2680 = vunpack.c.h.b16 %v1021
    %v2681 = vunpack.c.l.b16 %v1022
    %v2682 = vunpack.c.h.b16 %v1022
    %v2683 = vunpack.c.l.b16 %v1023
    %v2684 = vunpack.c.h.b16 %v1023
    %v2685 = vunpack.c.l.b16 %v1024
    %v2686 = vunpack.c.h.b16 %v1024
    %v2687 = vunpack.c.l.b16 %v1025
    %v2688 = vunpack.c.h.b16 %v1025
    %v2689 = vunpack.c.l.b16 %v1026
    %v2690 = vunpack.c.h.b16 %v1026
    %v2691 = vunpack.c.l.b16 %v1027
    %v2692 = vunpack.c.h.b16 %v1027
    %v2693 = vunpack.c.l.b16 %v1028
    %v2694 = vunpack.c.h.b16 %v1028
    %v2695 = vunpack.c.l.b16 %v1029
    %v2696 = vunpack.c.h.b16 %v1029
    %v2697 = vunpack.c.l.b16 %v1030
    %v2698 = vunpack.c.h.b16 %v1030
    %v2699 = vunpack.c.l.b16 %v1031
    %v2700 = vunpack.c.h.b16 %v1031
    %v2701 = vunpack.c.l.b16 %v1032
    %v2702 = vunpack.c.h.b16 %v1032
    %v2703 = vunpack.c.l.b16 %v1033
    %v2704 = vunpack.c.h.b16 %v1033
    %v2705 = vunpack.c.l.b16 %v1034
    %v2706 = vunpack.c.h.b16 %v1034
    %v2707 = vunpack.c.l.b16 %v1035
    %v2708 = vunpack.c.h.b16 %v1035
    %v2709 = vunpack.c.l.b16 %v1036
    %v2710 = vunpack.c.h.b16 %v1036
    %v2711 = vunpack.c.l.b16 %v1037
    %v2712 = vunpack.c.h.b16 %v1037
    %v2713 = vunpack.c.l.b16 %v1038
    %v2714 = vunpack.c.h.b16 %v1038
    %v2715 = vunpack.c.l.b16 %v1039
    %v2716 = vunpack.c.h.b16 %v1039
    %v2717 = vunpack.c.l.b16 %v1040
    %v2718 = vunpack.c.h.b16 %v1040
    %v2719 = vunpack.c.l.b16 %v1041
    %v2720 = vunpack.c.h.b16 %v1041
    %v2721 = vunpack.c.l.b16 %v1042
    %v2722 = vunpack.c.h.b16 %v1042
    %v2723 = vunpack.c.l.b16 %v1043
    %v2724 = vunpack.c.h.b16 %v1043
    %v2725 = vunpack.c.l.b16 %v1044
    %v2726 = vunpack.c.h.b16 %v1044
    %v2727 = vunpack.c.l.b16 %v1045
    %v2728 = vunpack.c.h.b16 %v1045
    %v2729 = vunpack.c.l.b16 %v1046
    %v2730 = vunpack.c.h.b16 %v1046
    %v2731 = vunpack.c.l.b16 %v1047
    %v2732 = vunpack.c.h.b16 %v1047
    %v2733 = vunpack.c.l.b16 %v1048
    %v2734 = vunpack.c.h.b16 %v1048
    %v2735 = vunpack.c.l.b16 %v1049
    %v2736 = vunpack.c.h.b16 %v1049
    %v2737 = vunpack.c.l.b16 %v1050
    %v2738 = vunpack.c.h.b16 %v1050
    %v2739 = vunpack.c.l.b16 %v1051
    %v2740 = vunpack.c.h.b16 %v1051
    %v2741 = vunpack.c.l.b16 %v1052
    %v2742 = vunpack.c.h.b16 %v1052
    %v2743 = vunpack.c.l.b16 %v1053
    %v2744 = vunpack.c.h.b16 %v1053
    %v2745 = vunpack.c.l.b16 %v1054
    %v2746 = vunpack.c.h.b16 %v1054
    %v2747 = vunpack.c.l.b16 %v1055
    %v2748 = vunpack.c.h.b16 %v1055
    %v2749 = vunpack.c.l.b16 %v1056
    %v2750 = vunpack.c.h.b16 %v1056
    %v2751 = vunpack.c.l.b16 %v1057
    %v2752 = vunpack.c.h.b16 %v1057
    %v2753 = vunpack.c.l.b16 %v1058
    %v2754 = vunpack.c.h.b16 %v1058
    %v2755 = vunpack.c.l.b16 %v1059
    %v2756 = vunpack.c.h.b16 %v1059
    %v2757 = vunpack.c.l.b16 %v1060
    %v2758 = vunpack.c.h.b16 %v1060
    %v2759 = vunpack.c.l.b16 %v1061
    %v2760 = vunpack.c.h.b16 %v1061
    %v2761 = vunpack.c.l.b16 %v1062
    %v2762 = vunpack.c.h.b16 %v1062
    %v2763 = vunpack.c.l.b16 %v1063
    %v2764 = vunpack.c.h.b16 %v1063
    %v2765 = vunpack.c.l.b16 %v1064
    %v2766 = vunpack.c.h.b16 %v1064
    %v2767 = vunpack.c.l.b16 %v1065
    %v2768 = vunpack.c.h.b16 %v1065
    %v2769 = vunpack.c.l.b16 %v1066
    %v2770 = vunpack.c.h.b16 %v1066
    %v2771 = vunpack.c.l.b16 %v1067
    %v2772 = vunpack.c.h.b16 %v1067
    %v2773 = vunpack.c.l.b16 %v1068
    %v2774 = vunpack.c.h.b16 %v1068
    %v2775 = vunpack.c.l.b16 %v1069
    %v2776 = vunpack.c.h.b16 %v1069
    %v2777 = vunpack.c.l.b16 %v1070
    %v2778 = vunpack.c.h.b16 %v1070
    %v2779 = vunpack.c.l.b16 %v1071
    %v2780 = vunpack.c.h.b16 %v1071
    %v2781 = vunpack.c.l.b16 %v1072
    %v2782 = vunpack.c.h.b16 %v1072
    %v2783 = vunpack.c.l.b16 %v1073
    %v2784 = vunpack.c.h.b16 %v1073
    %v2785 = vunpack.c.l.b16 %v1074
    %v2786 = vunpack.c.h.b16 %v1074
    %v2787 = vunpack.c.l.b16 %v1075
    %v2788 = vunpack.c.h.b16 %v1075
    %v2789 = vunpack.c.l.b16 %v1076
    %v2790 = vunpack.c.h.b16 %v1076
    %v2791 = vunpack.c.l.b16 %v1077
    %v2792 = vunpack.c.h.b16 %v1077
    %v2793 = vunpack.c.l.b16 %v1078
    %v2794 = vunpack.c.h.b16 %v1078
    %v2795 = vunpack.c.l.b16 %v1079
    %v2796 = vunpack.c.h.b16 %v1079
    %v2797 = vunpack.c.l.b16 %v1080
    %v2798 = vunpack.c.h.b16 %v1080
    %v2799 = vunpack.c.l.b16 %v1081
    %v2800 = vunpack.c.h.b16 %v1081
    %v2801 = vunpack.c.l.b16 %v1082
    %v2802 = vunpack.c.h.b16 %v1082
    %v2803 = vunpack.c.l.b16 %v1083
    %v2804 = vunpack.c.h.b16 %v1083
    %v2805 = vunpack.c.l.b16 %v1084
    %v2806 = vunpack.c.h.b16 %v1084
    %v2807 = vunpack.c.l.b16 %v1085
    %v2808 = vunpack.c.h.b16 %v1085
    %v2809 = vunpack.c.l.b16 %v1086
    %v2810 = vunpack.c.h.b16 %v1086
    %v2811 = vunpack.c.l.b16 %v1087
    %v2812 = vunpack.c.h.b16 %v1087
    %v2813 = vunpack.c.l.b16 %v1088
    %v2814 = vunpack.c.h.b16 %v1088
    %v2815 = vunpack.c.l.b16 %v1089
    %v2816 = vunpack.c.h.b16 %v1089
    %v2817 = vunpack.c.l.b16 %v1090
    %v2818 = vunpack.c.h.b16 %v1090
    %v2819 = vunpack.c.l.b16 %v1091
    %v2820 = vunpack.c.h.b16 %v1091
    %v2821 = vunpack.c.l.b16 %v1092
    %v2822 = vunpack.c.h.b16 %v1092
    %v2823 = vunpack.c.l.b16 %v1093
    %v2824 = vunpack.c.h.b16 %v1093
    %v2825 = vunpack.c.l.b16 %v1094
    %v2826 = vunpack.c.h.b16 %v1094
    %v2827 = vunpack.c.l.b16 %v1095
    %v2828 = vunpack.c.h.b16 %v1095
    %v2829 = vunpack.c.l.b16 %v1096
    %v2830 = vunpack.c.h.b16 %v1096
    %v2831 = vunpack.c.l.b16 %v1097
    %v2832 = vunpack.c.h.b16 %v1097
    %v2833 = vunpack.c.l.b16 %v1098
    %v2834 = vunpack.c.h.b16 %v1098
    %v2835 = vunpack.c.l.b16 %v1099
    %v2836 = vunpack.c.h.b16 %v1099
    %v2837 = vunpack.c.l.b16 %v1100
    %v2838 = vunpack.c.h.b16 %v1100
    %v2839 = vunpack.c.l.b16 %v1101
    %v2840 = vunpack.c.h.b16 %v1101
    %v2841 = vunpack.c.l.b16 %v1102
    %v2842 = vunpack.c.h.b16 %v1102
    %v2843 = vunpack.c.l.b16 %v1103
    %v2844 = vunpack.c.h.b16 %v1103
    %v2845 = vunpack.c.l.b16 %v1104
    %v2846 = vunpack.c.h.b16 %v1104
    %v2847 = vunpack.c.l.b16 %v1105
    %v2848 = vunpack.c.h.b16 %v1105
    %v2849 = vunpack.c.l.b16 %v1106
    %v2850 = vunpack.c.h.b16 %v1106
    %v2851 = vunpack.c.l.b16 %v1107
    %v2852 = vunpack.c.h.b16 %v1107
    %v2853 = vunpack.c.l.b16 %v1108
    %v2854 = vunpack.c.h.b16 %v1108
    %v2855 = vunpack.c.l.b16 %v1109
    %v2856 = vunpack.c.h.b16 %v1109
    %v2857 = vunpack.c.l.b16 %v1110
    %v2858 = vunpack.c.h.b16 %v1110
    %v2859 = vunpack.c.l.b16 %v1111
    %v2860 = vunpack.c.h.b16 %v1111
    %v2861 = vunpack.c.l.b16 %v1112
    %v2862 = vunpack.c.h.b16 %v1112
    %v2863 = vunpack.c.l.b16 %v1113
    %v2864 = vunpack.c.h.b16 %v1113
    %v2865 = vunpack.c.l.b16 %v1114
    %v2866 = vunpack.c.h.b16 %v1114
    %v2867 = vunpack.c.l.b16 %v1115
    %v2868 = vunpack.c.h.b16 %v1115
    %v2869 = vunpack.c.l.b16 %v1116
    %v2870 = vunpack.c.h.b16 %v1116
    %v2871 = vunpack.c.l.b16 %v1117
    %v2872 = vunpack.c.h.b16 %v1117
    %v2873 = vunpack.c.l.b16 %v1118
    %v2874 = vunpack.c.h.b16 %v1118
    %v2875 = vunpack.c.l.b16 %v1119
    %v2876 = vunpack.c.h.b16 %v1119
    %v2877 = vunpack.c.l.b16 %v1120
    %v2878 = vunpack.c.h.b16 %v1120
    %v2879 = vunpack.c.l.b16 %v1121
    %v2880 = vunpack.c.h.b16 %v1121
    %v2881 = vunpack.c.l.b16 %v1122
    %v2882 = vunpack.c.h.b16 %v1122
    %v2883 = vunpack.c.l.b16 %v1123
    %v2884 = vunpack.c.h.b16 %v1123
    %v2885 = vunpack.c.l.b16 %v1124
    %v2886 = vunpack.c.h.b16 %v1124
    %v2887 = vunpack.c.l.b16 %v1125
    %v2888 = vunpack.c.h.b16 %v1125
    %v2889 = vunpack.c.l.b16 %v1126
    %v2890 = vunpack.c.h.b16 %v1126
    %v2891 = vunpack.c.l.b16 %v1127
    %v2892 = vunpack.c.h.b16 %v1127
    %v2893 = vunpack.c.l.b16 %v1128
    %v2894 = vunpack.c.h.b16 %v1128
    %v2895 = vunpack.c.l.b16 %v1129
    %v2896 = vunpack.c.h.b16 %v1129
    %v2897 = vunpack.c.l.b16 %v1130
    %v2898 = vunpack.c.h.b16 %v1130
    %v2899 = vunpack.c.l.b16 %v1131
    %v2900 = vunpack.c.h.b16 %v1131
    %v2901 = vunpack.c.l.b16 %v1132
    %v2902 = vunpack.c.h.b16 %v1132
    %v2903 = vunpack.c.l.b16 %v1133
    %v2904 = vunpack.c.h.b16 %v1133
    %v2905 = vunpack.c.l.b16 %v1134
    %v2906 = vunpack.c.h.b16 %v1134
    %v2907 = vunpack.c.l.b16 %v1135
    %v2908 = vunpack.c.h.b16 %v1135
    %v2909 = vunpack.c.l.b16 %v1136
    %v2910 = vunpack.c.h.b16 %v1136
    %v2911 = vunpack.c.l.b16 %v1137
    %v2912 = vunpack.c.h.b16 %v1137
    %v2913 = vunpack.c.l.b16 %v1138
    %v2914 = vunpack.c.h.b16 %v1138
    %v2915 = vunpack.c.l.b16 %v1139
    %v2916 = vunpack.c.h.b16 %v1139
    %v2917 = vunpack.c.l.b16 %v1140
    %v2918 = vunpack.c.h.b16 %v1140
    %v2919 = vunpack.c.l.b16 %v1141
    %v2920 = vunpack.c.h.b16 %v1141
    %v2921 = vunpack.c.l.b16 %v1142
    %v2922 = vunpack.c.h.b16 %v1142
    %v2923 = vunpack.c.l.b16 %v1143
    %v2924 = vunpack.c.h.b16 %v1143
    %v2925 = vunpack.c.l.b16 %v1144
    %v2926 = vunpack.c.h.b16 %v1144
    %v2927 = vpack.c.b16 %v2423, %v2415
    %v2928 = vpack.c.b16 %v2424, %v2416
    %v2929 = vpack.c.b16 %v2425, %v2417
    %v2930 = vpack.c.b16 %v2426, %v2418
    %v2931 = vpack.c.b16 %v2427, %v2419
    %v2932 = vpack.c.b16 %v2428, %v2420
    %v2933 = vpack.c.b16 %v2429, %v2421
    %v2934 = vpack.c.b16 %v2430, %v2422
    %v2935 = vpack.c.b16 %v2439, %v2431
    %v2936 = vpack.c.b16 %v2440, %v2432
    %v2937 = vpack.c.b16 %v2441, %v2433
    %v2938 = vpack.c.b16 %v2442, %v2434
    %v2939 = vpack.c.b16 %v2443, %v2435
    %v2940 = vpack.c.b16 %v2444, %v2436
    %v2941 = vpack.c.b16 %v2445, %v2437
    %v2942 = vpack.c.b16 %v2446, %v2438
    %v2943 = vpack.c.b16 %v2455, %v2447
    %v2944 = vpack.c.b16 %v2456, %v2448
    %v2945 = vpack.c.b16 %v2457, %v2449
    %v2946 = vpack.c.b16 %v2458, %v2450
    %v2947 = vpack.c.b16 %v2459, %v2451
    %v2948 = vpack.c.b16 %v2460, %v2452
    %v2949 = vpack.c.b16 %v2461, %v2453
    %v2950 = vpack.c.b16 %v2462, %v2454
    %v2951 = vpack.c.b16 %v2471, %v2463
    %v2952 = vpack.c.b16 %v2472, %v2464
    %v2953 = vpack.c.b16 %v2473, %v2465
    %v2954 = vpack.c.b16 %v2474, %v2466
    %v2955 = vpack.c.b16 %v2475, %v2467
    %v2956 = vpack.c.b16 %v2476, %v2468
    %v2957 = vpack.c.b16 %v2477, %v2469
    %v2958 = vpack.c.b16 %v2478, %v2470
    %v2959 = vpack.c.b16 %v2487, %v2479
    %v2960 = vpack.c.b16 %v2488, %v2480
    %v2961 = vpack.c.b16 %v2489, %v2481
    %v2962 = vpack.c.b16 %v2490, %v2482
    %v2963 = vpack.c.b16 %v2491, %v2483
    %v2964 = vpack.c.b16 %v2492, %v2484
    %v2965 = vpack.c.b16 %v2493, %v2485
    %v2966 = vpack.c.b16 %v2494, %v2486
    %v2967 = vpack.c.b16 %v2503, %v2495
    %v2968 = vpack.c.b16 %v2504, %v2496
    %v2969 = vpack.c.b16 %v2505, %v2497
    %v2970 = vpack.c.b16 %v2506, %v2498
    %v2971 = vpack.c.b16 %v2507, %v2499
    %v2972 = vpack.c.b16 %v2508, %v2500
    %v2973 = vpack.c.b16 %v2509, %v2501
    %v2974 = vpack.c.b16 %v2510, %v2502
    %v2975 = vpack.c.b16 %v2519, %v2511
    %v2976 = vpack.c.b16 %v2520, %v2512
    %v2977 = vpack.c.b16 %v2521, %v2513
    %v2978 = vpack.c.b16 %v2522, %v2514
    %v2979 = vpack.c.b16 %v2523, %v2515
    %v2980 = vpack.c.b16 %v2524, %v2516
    %v2981 = vpack.c.b16 %v2525, %v2517
    %v2982 = vpack.c.b16 %v2526, %v2518
    %v2983 = vpack.c.b16 %v2535, %v2527
    %v2984 = vpack.c.b16 %v2536, %v2528
    %v2985 = vpack.c.b16 %v2537, %v2529
    %v2986 = vpack.c.b16 %v2538, %v2530
    %v2987 = vpack.c.b16 %v2539, %v2531
    %v2988 = vpack.c.b16 %v2540, %v2532
    %v2989 = vpack.c.b16 %v2541, %v2533
    %v2990 = vpack.c.b16 %v2542, %v2534
    %v2991 = vpack.c.b16 %v2551, %v2543
    %v2992 = vpack.c.b16 %v2552, %v2544
    %v2993 = vpack.c.b16 %v2553, %v2545
    %v2994 = vpack.c.b16 %v2554, %v2546
    %v2995 = vpack.c.b16 %v2555, %v2547
    %v2996 = vpack.c.b16 %v2556, %v2548
    %v2997 = vpack.c.b16 %v2557, %v2549
    %v2998 = vpack.c.b16 %v2558, %v2550
    %v2999 = vpack.c.b16 %v2567, %v2559
    %v3000 = vpack.c.b16 %v2568, %v2560
    %v3001 = vpack.c.b16 %v2569, %v2561
    %v3002 = vpack.c.b16 %v2570, %v2562
    %v3003 = vpack.c.b16 %v2571, %v2563
    %v3004 = vpack.c.b16 %v2572, %v2564
    %v3005 = vpack.c.b16 %v2573, %v2565
    %v3006 = vpack.c.b16 %v2574, %v2566
    %v3007 = vpack.c.b16 %v2583, %v2575
    %v3008 = vpack.c.b16 %v2584, %v2576
    %v3009 = vpack.c.b16 %v2585, %v2577
    %v3010 = vpack.c.b16 %v2586, %v2578
    %v3011 = vpack.c.b16 %v2587, %v2579
    %v3012 = vpack.c.b16 %v2588, %v2580
    %v3013 = vpack.c.b16 %v2589, %v2581
    %v3014 = vpack.c.b16 %v2590, %v2582
    %v3015 = vpack.c.b16 %v2599, %v2591
    %v3016 = vpack.c.b16 %v2600, %v2592
    %v3017 = vpack.c.b16 %v2601, %v2593
    %v3018 = vpack.c.b16 %v2602, %v2594
    %v3019 = vpack.c.b16 %v2603, %v2595
    %v3020 = vpack.c.b16 %v2604, %v2596
    %v3021 = vpack.c.b16 %v2605, %v2597
    %v3022 = vpack.c.b16 %v2606, %v2598
    %v3023 = vpack.c.b16 %v2615, %v2607
    %v3024 = vpack.c.b16 %v2616, %v2608
    %v3025 = vpack.c.b16 %v2617, %v2609
    %v3026 = vpack.c.b16 %v2618, %v2610
    %v3027 = vpack.c.b16 %v2619, %v2611
    %v3028 = vpack.c.b16 %v2620, %v2612
    %v3029 = vpack.c.b16 %v2621, %v2613
    %v3030 = vpack.c.b16 %v2622, %v2614
    %v3031 = vpack.c.b16 %v2631, %v2623
    %v3032 = vpack.c.b16 %v2632, %v2624
    %v3033 = vpack.c.b16 %v2633, %v2625
    %v3034 = vpack.c.b16 %v2634, %v2626
    %v3035 = vpack.c.b16 %v2635, %v2627
    %v3036 = vpack.c.b16 %v2636, %v2628
    %v3037 = vpack.c.b16 %v2637, %v2629
    %v3038 = vpack.c.b16 %v2638, %v2630
    %v3039 = vpack.c.b16 %v2647, %v2639
    %v3040 = vpack.c.b16 %v2648, %v2640
    %v3041 = vpack.c.b16 %v2649, %v2641
    %v3042 = vpack.c.b16 %v2650, %v2642
    %v3043 = vpack.c.b16 %v2651, %v2643
    %v3044 = vpack.c.b16 %v2652, %v2644
    %v3045 = vpack.c.b16 %v2653, %v2645
    %v3046 = vpack.c.b16 %v2654, %v2646
    %v3047 = vpack.c.b16 %v2663, %v2655
    %v3048 = vpack.c.b16 %v2664, %v2656
    %v3049 = vpack.c.b16 %v2665, %v2657
    %v3050 = vpack.c.b16 %v2666, %v2658
    %v3051 = vpack.c.b16 %v2667, %v2659
    %v3052 = vpack.c.b16 %v2668, %v2660
    %v3053 = vpack.c.b16 %v2669, %v2661
    %v3054 = vpack.c.b16 %v2670, %v2662
    %v3055 = vpack.c.b16 %v2679, %v2671
    %v3056 = vpack.c.b16 %v2680, %v2672
    %v3057 = vpack.c.b16 %v2681, %v2673
    %v3058 = vpack.c.b16 %v2682, %v2674
    %v3059 = vpack.c.b16 %v2683, %v2675
    %v3060 = vpack.c.b16 %v2684, %v2676
    %v3061 = vpack.c.b16 %v2685, %v2677
    %v3062 = vpack.c.b16 %v2686, %v2678
    %v3063 = vpack.c.b16 %v2695, %v2687
    %v3064 = vpack.c.b16 %v2696, %v2688
    %v3065 = vpack.c.b16 %v2697, %v2689
    %v3066 = vpack.c.b16 %v2698, %v2690
    %v3067 = vpack.c.b16 %v2699, %v2691
    %v3068 = vpack.c.b16 %v2700, %v2692
    %v3069 = vpack.c.b16 %v2701, %v2693
    %v3070 = vpack.c.b16 %v2702, %v2694
    %v3071 = vpack.c.b16 %v2711, %v2703
    %v3072 = vpack.c.b16 %v2712, %v2704
    %v3073 = vpack.c.b16 %v2713, %v2705
    %v3074 = vpack.c.b16 %v2714, %v2706
    %v3075 = vpack.c.b16 %v2715, %v2707
    %v3076 = vpack.c.b16 %v2716, %v2708
    %v3077 = vpack.c.b16 %v2717, %v2709
    %v3078 = vpack.c.b16 %v2718, %v2710
    %v3079 = vpack.c.b16 %v2727, %v2719
    %v3080 = vpack.c.b16 %v2728, %v2720
    %v3081 = vpack.c.b16 %v2729, %v2721
    %v3082 = vpack.c.b16 %v2730, %v2722
    %v3083 = vpack.c.b16 %v2731, %v2723
    %v3084 = vpack.c.b16 %v2732, %v2724
    %v3085 = vpack.c.b16 %v2733, %v2725
    %v3086 = vpack.c.b16 %v2734, %v2726
    %v3087 = vpack.c.b16 %v2743, %v2735
    %v3088 = vpack.c.b16 %v2744, %v2736
    %v3089 = vpack.c.b16 %v2745, %v2737
    %v3090 = vpack.c.b16 %v2746, %v2738
    %v3091 = vpack.c.b16 %v2747, %v2739
    %v3092 = vpack.c.b16 %v2748, %v2740
    %v3093 = vpack.c.b16 %v2749, %v2741
    %v3094 = vpack.c.b16 %v2750, %v2742
    %v3095 = vpack.c.b16 %v2759, %v2751
    %v3096 = vpack.c.b16 %v2760, %v2752
    %v3097 = vpack.c.b16 %v2761, %v2753
    %v3098 = vpack.c.b16 %v2762, %v2754
    %v3099 = vpack.c.b16 %v2763, %v2755
    %v3100 = vpack.c.b16 %v2764, %v2756
    %v3101 = vpack.c.b16 %v2765, %v2757
    %v3102 = vpack.c.b16 %v2766, %v2758
    %v3103 = vpack.c.b16 %v2775, %v2767
    %v3104 = vpack.c.b16 %v2776, %v2768
    %v3105 = vpack.c.b16 %v2777, %v2769
    %v3106 = vpack.c.b16 %v2778, %v2770
    %v3107 = vpack.c.b16 %v2779, %v2771
    %v3108 = vpack.c.b16 %v2780, %v2772
    %v3109 = vpack.c.b16 %v2781, %v2773
    %v3110 = vpack.c.b16 %v2782, %v2774
    %v3111 = vpack.c.b16 %v2791, %v2783
    %v3112 = vpack.c.b16 %v2792, %v2784
    %v3113 = vpack.c.b16 %v2793, %v2785
    %v3114 = vpack.c.b16 %v2794, %v2786
    %v3115 = vpack.c.b16 %v2795, %v2787
    %v3116 = vpack.c.b16 %v2796, %v2788
    %v3117 = vpack.c.b16 %v2797, %v2789
    %v3118 = vpack.c.b16 %v2798, %v2790
    %v3119 = vpack.c.b16 %v2807, %v2799
    %v3120 = vpack.c.b16 %v2808, %v2800
    %v3121 = vpack.c.b16 %v2809, %v2801
    %v3122 = vpack.c.b16 %v2810, %v2802
    %v3123 = vpack.c.b16 %v2811, %v2803
    %v3124 = vpack.c.b16 %v2812, %v2804
    %v3125 = vpack.c.b16 %v2813, %v2805
    %v3126 = vpack.c.b16 %v2814, %v2806
    %v3127 = vpack.c.b16 %v2823, %v2815
    %v3128 = vpack.c.b16 %v2824, %v2816
    %v3129 = vpack.c.b16 %v2825, %v2817
    %v3130 = vpack.c.b16 %v2826, %v2818
    %v3131 = vpack.c.b16 %v2827, %v2819
    %v3132 = vpack.c.b16 %v2828, %v2820
    %v3133 = vpack.c.b16 %v2829, %v2821
    %v3134 = vpack.c.b16 %v2830, %v2822
    %v3135 = vpack.c.b16 %v2839, %v2831
    %v3136 = vpack.c.b16 %v2840, %v2832
    %v3137 = vpack.c.b16 %v2841, %v2833
    %v3138 = vpack.c.b16 %v2842, %v2834
    %v3139 = vpack.c.b16 %v2843, %v2835
    %v3140 = vpack.c.b16 %v2844, %v2836
    %v3141 = vpack.c.b16 %v2845, %v2837
    %v3142 = vpack.c.b16 %v2846, %v2838
    %v3143 = vpack.c.b16 %v2855, %v2847
    %v3144 = vpack.c.b16 %v2856, %v2848
    %v3145 = vpack.c.b16 %v2857, %v2849
    %v3146 = vpack.c.b16 %v2858, %v2850
    %v3147 = vpack.c.b16 %v2859, %v2851
    %v3148 = vpack.c.b16 %v2860, %v2852
    %v3149 = vpack.c.b16 %v2861, %v2853
    %v3150 = vpack.c.b16 %v2862, %v2854
    %v3151 = vpack.c.b16 %v2871, %v2863
    %v3152 = vpack.c.b16 %v2872, %v2864
    %v3153 = vpack.c.b16 %v2873, %v2865
    %v3154 = vpack.c.b16 %v2874, %v2866
    %v3155 = vpack.c.b16 %v2875, %v2867
    %v3156 = vpack.c.b16 %v2876, %v2868
    %v3157 = vpack.c.b16 %v2877, %v2869
    %v3158 = vpack.c.b16 %v2878, %v2870
    %v3159 = vpack.c.b16 %v2887, %v2879
    %v3160 = vpack.c.b16 %v2888, %v2880
    %v3161 = vpack.c.b16 %v2889, %v2881
    %v3162 = vpack.c.b16 %v2890, %v2882
    %v3163 = vpack.c.b16 %v2891, %v2883
    %v3164 = vpack.c.b16 %v2892, %v2884
    %v3165 = vpack.c.b16 %v2893, %v2885
    %v3166 = vpack.c.b16 %v2894, %v2886
    %v3167 = vpack.c.b16 %v2903, %v2895
    %v3168 = vpack.c.b16 %v2904, %v2896
    %v3169 = vpack.c.b16 %v2905, %v2897
    %v3170 = vpack.c.b16 %v2906, %v2898
    %v3171 = vpack.c.b16 %v2907, %v2899
    %v3172 = vpack.c.b16 %v2908, %v2900
    %v3173 = vpack.c.b16 %v2909, %v2901
    %v3174 = vpack.c.b16 %v2910, %v2902
    %v3175 = vpack.c.b16 %v2919, %v2911
    %v3176 = vpack.c.b16 %v2920, %v2912
    %v3177 = vpack.c.b16 %v2921, %v2913
    %v3178 = vpack.c.b16 %v2922, %v2914
    %v3179 = vpack.c.b16 %v2923, %v2915
    %v3180 = vpack.c.b16 %v2924, %v2916
    %v3181 = vpack.c.b16 %v2925, %v2917
    %v3182 = vpack.c.b16 %v2926, %v2918
    %3439 = vmatpush.bf16.msra.mxu0 %v2983
    %3440 = vmatpush.bf16.msra.mxu0 %v2975
    %3441 = vmatpush.bf16.msra.mxu0 %v2967
    %3442 = vmatpush.bf16.msra.mxu0 %v2959
    %3443 = vmatpush.bf16.msra.mxu0 %v2951
    %3444 = vmatpush.bf16.msra.mxu0 %v2943
    %3445 = vmatpush.bf16.msra.mxu0 %v2935
    %3446 = vmatpush.bf16.msra.mxu0 %v2927
    %3447 = vmatmul.bf16.gmra.mxu0 %v2138
    %v3448 = vpop.f32.mrf.mxu0
    %v3449 = vadd.f32 %v2143, %v3448
    %v3450 = vpop.f32.mrf.mxu0
    %3451 = vdwg.mxu0
    %3452 = vmatpush.bf16.msra.mxu0 %v3047
    %3453 = vmatpush.bf16.msra.mxu0 %v3039
    %3454 = vmatpush.bf16.msra.mxu0 %v3031
    %3455 = vmatpush.bf16.msra.mxu0 %v3023
    %3456 = vmatpush.bf16.msra.mxu0 %v3015
    %3457 = vmatpush.bf16.msra.mxu0 %v3007
    %3458 = vmatpush.bf16.msra.mxu0 %v2999
    %3459 = vmatpush.bf16.msra.mxu0 %v2991
    %3460 = vmatmul.bf16.gmra.mxu0 %v2139
    %v3461 = vpop.f32.mrf.mxu0
    %v3462 = vadd.f32 %v3449, %v3461
    %v3463 = vpop.f32.mrf.mxu0
    %3464 = vdwg.mxu0
    %3465 = vmatpush.bf16.msra.mxu0 %v3111
    %3466 = vmatpush.bf16.msra.mxu0 %v3103
    %3467 = vmatpush.bf16.msra.mxu0 %v3095
    %3468 = vmatpush.bf16.msra.mxu0 %v3087
    %3469 = vmatpush.bf16.msra.mxu0 %v3079
    %3470 = vmatpush.bf16.msra.mxu0 %v3071
    %3471 = vmatpush.bf16.msra.mxu0 %v3063
    %3472 = vmatpush.bf16.msra.mxu0 %v3055
    %3473 = vmatmul.bf16.gmra.mxu0 0
    %v3474 = vpop.f32.mrf.mxu0
    %v3475 = vadd.f32 %v3462, %v3474
    %v3476 = vpop.f32.mrf.mxu0
    %3477 = vdwg.mxu0
    %3478 = vmatpush.bf16.msra.mxu0 %v3175
    %3479 = vmatpush.bf16.msra.mxu0 %v3167
    %3480 = vmatpush.bf16.msra.mxu0 %v3159
    %3481 = vmatpush.bf16.msra.mxu0 %v3151
    %3482 = vmatpush.bf16.msra.mxu0 %v3143
    %3483 = vmatpush.bf16.msra.mxu0 %v3135
    %3484 = vmatpush.bf16.msra.mxu0 %v3127
    %3485 = vmatpush.bf16.msra.mxu0 %v3119
    %3486 = vmatmul.bf16.gmra.mxu0 0
    %v3487 = vpop.f32.mrf.mxu0
    %v3488 = vadd.f32 %v3475, %v3487
    %v3489 = vpop.f32.mrf.mxu0
    %3490 = vdwg.mxu0
    %3491 = vmatpush.bf16.msra.mxu0 %v2984
    %3492 = vmatpush.bf16.msra.mxu0 %v2976
    %3493 = vmatpush.bf16.msra.mxu0 %v2968
    %3494 = vmatpush.bf16.msra.mxu0 %v2960
    %3495 = vmatpush.bf16.msra.mxu0 %v2952
    %3496 = vmatpush.bf16.msra.mxu0 %v2944
    %3497 = vmatpush.bf16.msra.mxu0 %v2936
    %3498 = vmatpush.bf16.msra.mxu0 %v2928
    %3499 = vmatmul.bf16.gmra.mxu0 %v2138
    %v3500 = vpop.f32.mrf.mxu0
    %v3501 = vadd.f32 %v2144, %v3500
    %v3502 = vpop.f32.mrf.mxu0
    %3503 = vdwg.mxu0
    %3504 = vmatpush.bf16.msra.mxu0 %v3048
    %3505 = vmatpush.bf16.msra.mxu0 %v3040
    %3506 = vmatpush.bf16.msra.mxu0 %v3032
    %3507 = vmatpush.bf16.msra.mxu0 %v3024
    %3508 = vmatpush.bf16.msra.mxu0 %v3016
    %3509 = vmatpush.bf16.msra.mxu0 %v3008
    %3510 = vmatpush.bf16.msra.mxu0 %v3000
    %3511 = vmatpush.bf16.msra.mxu0 %v2992
    %3512 = vmatmul.bf16.gmra.mxu0 %v2139
    %v3513 = vpop.f32.mrf.mxu0
    %v3514 = vadd.f32 %v3501, %v3513
    %v3515 = vpop.f32.mrf.mxu0
    %3516 = vdwg.mxu0
    %3517 = vmatpush.bf16.msra.mxu0 %v3112
    %3518 = vmatpush.bf16.msra.mxu0 %v3104
    %3519 = vmatpush.bf16.msra.mxu0 %v3096
    %3520 = vmatpush.bf16.msra.mxu0 %v3088
    %3521 = vmatpush.bf16.msra.mxu0 %v3080
    %3522 = vmatpush.bf16.msra.mxu0 %v3072
    %3523 = vmatpush.bf16.msra.mxu0 %v3064
    %3524 = vmatpush.bf16.msra.mxu0 %v3056
    %3525 = vmatmul.bf16.gmra.mxu0 0
    %v3526 = vpop.f32.mrf.mxu0
    %v3527 = vadd.f32 %v3514, %v3526
    %v3528 = vpop.f32.mrf.mxu0
    %3529 = vdwg.mxu0
    %3530 = vmatpush.bf16.msra.mxu0 %v3176
    %3531 = vmatpush.bf16.msra.mxu0 %v3168
    %3532 = vmatpush.bf16.msra.mxu0 %v3160
    %3533 = vmatpush.bf16.msra.mxu0 %v3152
    %3534 = vmatpush.bf16.msra.mxu0 %v3144
    %3535 = vmatpush.bf16.msra.mxu0 %v3136
    %3536 = vmatpush.bf16.msra.mxu0 %v3128
    %3537 = vmatpush.bf16.msra.mxu0 %v3120
    %3538 = vmatmul.bf16.gmra.mxu0 0
    %v3539 = vpop.f32.mrf.mxu0
    %v3540 = vadd.f32 %v3527, %v3539
    %v3541 = vpop.f32.mrf.mxu0
    %3542 = vdwg.mxu0
    %3543 = vmatpush.bf16.msra.mxu0 %v2985
    %3544 = vmatpush.bf16.msra.mxu0 %v2977
    %3545 = vmatpush.bf16.msra.mxu0 %v2969
    %3546 = vmatpush.bf16.msra.mxu0 %v2961
    %3547 = vmatpush.bf16.msra.mxu0 %v2953
    %3548 = vmatpush.bf16.msra.mxu0 %v2945
    %3549 = vmatpush.bf16.msra.mxu0 %v2937
    %3550 = vmatpush.bf16.msra.mxu0 %v2929
    %3551 = vmatmul.bf16.gmra.mxu0 %v2138
    %v3552 = vpop.f32.mrf.mxu0
    %v3553 = vadd.f32 %v2145, %v3552
    %v3554 = vpop.f32.mrf.mxu0
    %3555 = vdwg.mxu0
    %3556 = vmatpush.bf16.msra.mxu0 %v3049
    %3557 = vmatpush.bf16.msra.mxu0 %v3041
    %3558 = vmatpush.bf16.msra.mxu0 %v3033
    %3559 = vmatpush.bf16.msra.mxu0 %v3025
    %3560 = vmatpush.bf16.msra.mxu0 %v3017
    %3561 = vmatpush.bf16.msra.mxu0 %v3009
    %3562 = vmatpush.bf16.msra.mxu0 %v3001
    %3563 = vmatpush.bf16.msra.mxu0 %v2993
    %3564 = vmatmul.bf16.gmra.mxu0 %v2139
    %v3565 = vpop.f32.mrf.mxu0
    %v3566 = vadd.f32 %v3553, %v3565
    %v3567 = vpop.f32.mrf.mxu0
    %3568 = vdwg.mxu0
    %3569 = vmatpush.bf16.msra.mxu0 %v3113
    %3570 = vmatpush.bf16.msra.mxu0 %v3105
    %3571 = vmatpush.bf16.msra.mxu0 %v3097
    %3572 = vmatpush.bf16.msra.mxu0 %v3089
    %3573 = vmatpush.bf16.msra.mxu0 %v3081
    %3574 = vmatpush.bf16.msra.mxu0 %v3073
    %3575 = vmatpush.bf16.msra.mxu0 %v3065
    %3576 = vmatpush.bf16.msra.mxu0 %v3057
    %3577 = vmatmul.bf16.gmra.mxu0 0
    %v3578 = vpop.f32.mrf.mxu0
    %v3579 = vadd.f32 %v3566, %v3578
    %v3580 = vpop.f32.mrf.mxu0
    %3581 = vdwg.mxu0
    %3582 = vmatpush.bf16.msra.mxu0 %v3177
    %3583 = vmatpush.bf16.msra.mxu0 %v3169
    %3584 = vmatpush.bf16.msra.mxu0 %v3161
    %3585 = vmatpush.bf16.msra.mxu0 %v3153
    %3586 = vmatpush.bf16.msra.mxu0 %v3145
    %3587 = vmatpush.bf16.msra.mxu0 %v3137
    %3588 = vmatpush.bf16.msra.mxu0 %v3129
    %3589 = vmatpush.bf16.msra.mxu0 %v3121
    %3590 = vmatmul.bf16.gmra.mxu0 0
    %v3591 = vpop.f32.mrf.mxu0
    %v3592 = vadd.f32 %v3579, %v3591
    %v3593 = vpop.f32.mrf.mxu0
    %3594 = vdwg.mxu0
    %3595 = vmatpush.bf16.msra.mxu0 %v2986
    %3596 = vmatpush.bf16.msra.mxu0 %v2978
    %3597 = vmatpush.bf16.msra.mxu0 %v2970
    %3598 = vmatpush.bf16.msra.mxu0 %v2962
    %3599 = vmatpush.bf16.msra.mxu0 %v2954
    %3600 = vmatpush.bf16.msra.mxu0 %v2946
    %3601 = vmatpush.bf16.msra.mxu0 %v2938
    %3602 = vmatpush.bf16.msra.mxu0 %v2930
    %3603 = vmatmul.bf16.gmra.mxu0 %v2138
    %v3604 = vpop.f32.mrf.mxu0
    %v3605 = vadd.f32 %v2146, %v3604
    %v3606 = vpop.f32.mrf.mxu0
    %3607 = vdwg.mxu0
    %3608 = vmatpush.bf16.msra.mxu0 %v3050
    %3609 = vmatpush.bf16.msra.mxu0 %v3042
    %3610 = vmatpush.bf16.msra.mxu0 %v3034
    %3611 = vmatpush.bf16.msra.mxu0 %v3026
    %3612 = vmatpush.bf16.msra.mxu0 %v3018
    %3613 = vmatpush.bf16.msra.mxu0 %v3010
    %3614 = vmatpush.bf16.msra.mxu0 %v3002
    %3615 = vmatpush.bf16.msra.mxu0 %v2994
    %3616 = vmatmul.bf16.gmra.mxu0 %v2139
    %v3617 = vpop.f32.mrf.mxu0
    %v3618 = vadd.f32 %v3605, %v3617
    %v3619 = vpop.f32.mrf.mxu0
    %3620 = vdwg.mxu0
    %3621 = vmatpush.bf16.msra.mxu0 %v3114
    %3622 = vmatpush.bf16.msra.mxu0 %v3106
    %3623 = vmatpush.bf16.msra.mxu0 %v3098
    %3624 = vmatpush.bf16.msra.mxu0 %v3090
    %3625 = vmatpush.bf16.msra.mxu0 %v3082
    %3626 = vmatpush.bf16.msra.mxu0 %v3074
    %3627 = vmatpush.bf16.msra.mxu0 %v3066
    %3628 = vmatpush.bf16.msra.mxu0 %v3058
    %3629 = vmatmul.bf16.gmra.mxu0 0
    %v3630 = vpop.f32.mrf.mxu0
    %v3631 = vadd.f32 %v3618, %v3630
    %v3632 = vpop.f32.mrf.mxu0
    %3633 = vdwg.mxu0
    %3634 = vmatpush.bf16.msra.mxu0 %v3178
    %3635 = vmatpush.bf16.msra.mxu0 %v3170
    %3636 = vmatpush.bf16.msra.mxu0 %v3162
    %3637 = vmatpush.bf16.msra.mxu0 %v3154
    %3638 = vmatpush.bf16.msra.mxu0 %v3146
    %3639 = vmatpush.bf16.msra.mxu0 %v3138
    %3640 = vmatpush.bf16.msra.mxu0 %v3130
    %3641 = vmatpush.bf16.msra.mxu0 %v3122
    %3642 = vmatmul.bf16.gmra.mxu0 0
    %v3643 = vpop.f32.mrf.mxu0
    %v3644 = vadd.f32 %v3631, %v3643
    %v3645 = vpop.f32.mrf.mxu0
    %3646 = vdwg.mxu0
    %3647 = vmatpush.bf16.msra.mxu0 %v2987
    %3648 = vmatpush.bf16.msra.mxu0 %v2979
    %3649 = vmatpush.bf16.msra.mxu0 %v2971
    %3650 = vmatpush.bf16.msra.mxu0 %v2963
    %3651 = vmatpush.bf16.msra.mxu0 %v2955
    %3652 = vmatpush.bf16.msra.mxu0 %v2947
    %3653 = vmatpush.bf16.msra.mxu0 %v2939
    %3654 = vmatpush.bf16.msra.mxu0 %v2931
    %3655 = vmatmul.bf16.gmra.mxu0 %v2138
    %v3656 = vpop.f32.mrf.mxu0
    %v3657 = vadd.f32 %v2147, %v3656
    %v3658 = vpop.f32.mrf.mxu0
    %3659 = vdwg.mxu0
    %3660 = vmatpush.bf16.msra.mxu0 %v3051
    %3661 = vmatpush.bf16.msra.mxu0 %v3043
    %3662 = vmatpush.bf16.msra.mxu0 %v3035
    %3663 = vmatpush.bf16.msra.mxu0 %v3027
    %3664 = vmatpush.bf16.msra.mxu0 %v3019
    %3665 = vmatpush.bf16.msra.mxu0 %v3011
    %3666 = vmatpush.bf16.msra.mxu0 %v3003
    %3667 = vmatpush.bf16.msra.mxu0 %v2995
    %3668 = vmatmul.bf16.gmra.mxu0 %v2139
    %v3669 = vpop.f32.mrf.mxu0
    %v3670 = vadd.f32 %v3657, %v3669
    %v3671 = vpop.f32.mrf.mxu0
    %3672 = vdwg.mxu0
    %3673 = vmatpush.bf16.msra.mxu0 %v3115
    %3674 = vmatpush.bf16.msra.mxu0 %v3107
    %3675 = vmatpush.bf16.msra.mxu0 %v3099
    %3676 = vmatpush.bf16.msra.mxu0 %v3091
    %3677 = vmatpush.bf16.msra.mxu0 %v3083
    %3678 = vmatpush.bf16.msra.mxu0 %v3075
    %3679 = vmatpush.bf16.msra.mxu0 %v3067
    %3680 = vmatpush.bf16.msra.mxu0 %v3059
    %3681 = vmatmul.bf16.gmra.mxu0 0
    %v3682 = vpop.f32.mrf.mxu0
    %v3683 = vadd.f32 %v3670, %v3682
    %v3684 = vpop.f32.mrf.mxu0
    %3685 = vdwg.mxu0
    %3686 = vmatpush.bf16.msra.mxu0 %v3179
    %3687 = vmatpush.bf16.msra.mxu0 %v3171
    %3688 = vmatpush.bf16.msra.mxu0 %v3163
    %3689 = vmatpush.bf16.msra.mxu0 %v3155
    %3690 = vmatpush.bf16.msra.mxu0 %v3147
    %3691 = vmatpush.bf16.msra.mxu0 %v3139
    %3692 = vmatpush.bf16.msra.mxu0 %v3131
    %3693 = vmatpush.bf16.msra.mxu0 %v3123
    %3694 = vmatmul.bf16.gmra.mxu0 0
    %v3695 = vpop.f32.mrf.mxu0
    %v3696 = vadd.f32 %v3683, %v3695
    %v3697 = vpop.f32.mrf.mxu0
    %3698 = vdwg.mxu0
    %3699 = vmatpush.bf16.msra.mxu0 %v2988
    %3700 = vmatpush.bf16.msra.mxu0 %v2980
    %3701 = vmatpush.bf16.msra.mxu0 %v2972
    %3702 = vmatpush.bf16.msra.mxu0 %v2964
    %3703 = vmatpush.bf16.msra.mxu0 %v2956
    %3704 = vmatpush.bf16.msra.mxu0 %v2948
    %3705 = vmatpush.bf16.msra.mxu0 %v2940
    %3706 = vmatpush.bf16.msra.mxu0 %v2932
    %3707 = vmatmul.bf16.gmra.mxu0 %v2138
    %v3708 = vpop.f32.mrf.mxu0
    %v3709 = vadd.f32 %v2148, %v3708
    %v3710 = vpop.f32.mrf.mxu0
    %3711 = vdwg.mxu0
    %3712 = vmatpush.bf16.msra.mxu0 %v3052
    %3713 = vmatpush.bf16.msra.mxu0 %v3044
    %3714 = vmatpush.bf16.msra.mxu0 %v3036
    %3715 = vmatpush.bf16.msra.mxu0 %v3028
    %3716 = vmatpush.bf16.msra.mxu0 %v3020
    %3717 = vmatpush.bf16.msra.mxu0 %v3012
    %3718 = vmatpush.bf16.msra.mxu0 %v3004
    %3719 = vmatpush.bf16.msra.mxu0 %v2996
    %3720 = vmatmul.bf16.gmra.mxu0 %v2139
    %v3721 = vpop.f32.mrf.mxu0
    %v3722 = vadd.f32 %v3709, %v3721
    %v3723 = vpop.f32.mrf.mxu0
    %3724 = vdwg.mxu0
    %3725 = vmatpush.bf16.msra.mxu0 %v3116
    %3726 = vmatpush.bf16.msra.mxu0 %v3108
    %3727 = vmatpush.bf16.msra.mxu0 %v3100
    %3728 = vmatpush.bf16.msra.mxu0 %v3092
    %3729 = vmatpush.bf16.msra.mxu0 %v3084
    %3730 = vmatpush.bf16.msra.mxu0 %v3076
    %3731 = vmatpush.bf16.msra.mxu0 %v3068
    %3732 = vmatpush.bf16.msra.mxu0 %v3060
    %3733 = vmatmul.bf16.gmra.mxu0 0
    %v3734 = vpop.f32.mrf.mxu0
    %v3735 = vadd.f32 %v3722, %v3734
    %v3736 = vpop.f32.mrf.mxu0
    %3737 = vdwg.mxu0
    %3738 = vmatpush.bf16.msra.mxu0 %v3180
    %3739 = vmatpush.bf16.msra.mxu0 %v3172
    %3740 = vmatpush.bf16.msra.mxu0 %v3164
    %3741 = vmatpush.bf16.msra.mxu0 %v3156
    %3742 = vmatpush.bf16.msra.mxu0 %v3148
    %3743 = vmatpush.bf16.msra.mxu0 %v3140
    %3744 = vmatpush.bf16.msra.mxu0 %v3132
    %3745 = vmatpush.bf16.msra.mxu0 %v3124
    %3746 = vmatmul.bf16.gmra.mxu0 0
    %v3747 = vpop.f32.mrf.mxu0
    %v3748 = vadd.f32 %v3735, %v3747
    %v3749 = vpop.f32.mrf.mxu0
    %3750 = vdwg.mxu0
    %3751 = vmatpush.bf16.msra.mxu0 %v2989
    %3752 = vmatpush.bf16.msra.mxu0 %v2981
    %3753 = vmatpush.bf16.msra.mxu0 %v2973
    %3754 = vmatpush.bf16.msra.mxu0 %v2965
    %3755 = vmatpush.bf16.msra.mxu0 %v2957
    %3756 = vmatpush.bf16.msra.mxu0 %v2949
    %3757 = vmatpush.bf16.msra.mxu0 %v2941
    %3758 = vmatpush.bf16.msra.mxu0 %v2933
    %3759 = vmatmul.bf16.gmra.mxu0 %v2138
    %v3760 = vpop.f32.mrf.mxu0
    %v3761 = vadd.f32 %v2149, %v3760
    %v3762 = vpop.f32.mrf.mxu0
    %3763 = vdwg.mxu0
    %3764 = vmatpush.bf16.msra.mxu0 %v3053
    %3765 = vmatpush.bf16.msra.mxu0 %v3045
    %3766 = vmatpush.bf16.msra.mxu0 %v3037
    %3767 = vmatpush.bf16.msra.mxu0 %v3029
    %3768 = vmatpush.bf16.msra.mxu0 %v3021
    %3769 = vmatpush.bf16.msra.mxu0 %v3013
    %3770 = vmatpush.bf16.msra.mxu0 %v3005
    %3771 = vmatpush.bf16.msra.mxu0 %v2997
    %3772 = vmatmul.bf16.gmra.mxu0 %v2139
    %v3773 = vpop.f32.mrf.mxu0
    %v3774 = vadd.f32 %v3761, %v3773
    %v3775 = vpop.f32.mrf.mxu0
    %3776 = vdwg.mxu0
    %3777 = vmatpush.bf16.msra.mxu0 %v3117
    %3778 = vmatpush.bf16.msra.mxu0 %v3109
    %3779 = vmatpush.bf16.msra.mxu0 %v3101
    %3780 = vmatpush.bf16.msra.mxu0 %v3093
    %3781 = vmatpush.bf16.msra.mxu0 %v3085
    %3782 = vmatpush.bf16.msra.mxu0 %v3077
    %3783 = vmatpush.bf16.msra.mxu0 %v3069
    %3784 = vmatpush.bf16.msra.mxu0 %v3061
    %3785 = vmatmul.bf16.gmra.mxu0 0
    %v3786 = vpop.f32.mrf.mxu0
    %v3787 = vadd.f32 %v3774, %v3786
    %v3788 = vpop.f32.mrf.mxu0
    %3789 = vdwg.mxu0
    %3790 = vmatpush.bf16.msra.mxu0 %v3181
    %3791 = vmatpush.bf16.msra.mxu0 %v3173
    %3792 = vmatpush.bf16.msra.mxu0 %v3165
    %3793 = vmatpush.bf16.msra.mxu0 %v3157
    %3794 = vmatpush.bf16.msra.mxu0 %v3149
    %3795 = vmatpush.bf16.msra.mxu0 %v3141
    %3796 = vmatpush.bf16.msra.mxu0 %v3133
    %3797 = vmatpush.bf16.msra.mxu0 %v3125
    %3798 = vmatmul.bf16.gmra.mxu0 0
    %v3799 = vpop.f32.mrf.mxu0
    %v3800 = vadd.f32 %v3787, %v3799
    %v3801 = vpop.f32.mrf.mxu0
    %3802 = vdwg.mxu0
    %3803 = vmatpush.bf16.msra.mxu0 %v2990
    %3804 = vmatpush.bf16.msra.mxu0 %v2982
    %3805 = vmatpush.bf16.msra.mxu0 %v2974
    %3806 = vmatpush.bf16.msra.mxu0 %v2966
    %3807 = vmatpush.bf16.msra.mxu0 %v2958
    %3808 = vmatpush.bf16.msra.mxu0 %v2950
    %3809 = vmatpush.bf16.msra.mxu0 %v2942
    %3810 = vmatpush.bf16.msra.mxu0 %v2934
    %3811 = vmatmul.bf16.gmra.mxu0 %v2138
    %v3812 = vpop.f32.mrf.mxu0
    %v3813 = vadd.f32 %v2150, %v3812
    %v3814 = vpop.f32.mrf.mxu0
    %3815 = vdwg.mxu0
    %3816 = vmatpush.bf16.msra.mxu0 %v3054
    %3817 = vmatpush.bf16.msra.mxu0 %v3046
    %3818 = vmatpush.bf16.msra.mxu0 %v3038
    %3819 = vmatpush.bf16.msra.mxu0 %v3030
    %3820 = vmatpush.bf16.msra.mxu0 %v3022
    %3821 = vmatpush.bf16.msra.mxu0 %v3014
    %3822 = vmatpush.bf16.msra.mxu0 %v3006
    %3823 = vmatpush.bf16.msra.mxu0 %v2998
    %3824 = vmatmul.bf16.gmra.mxu0 %v2139
    %v3825 = vpop.f32.mrf.mxu0
    %v3826 = vadd.f32 %v3813, %v3825
    %v3827 = vpop.f32.mrf.mxu0
    %3828 = vdwg.mxu0
    %3829 = vmatpush.bf16.msra.mxu0 %v3118
    %3830 = vmatpush.bf16.msra.mxu0 %v3110
    %3831 = vmatpush.bf16.msra.mxu0 %v3102
    %3832 = vmatpush.bf16.msra.mxu0 %v3094
    %3833 = vmatpush.bf16.msra.mxu0 %v3086
    %3834 = vmatpush.bf16.msra.mxu0 %v3078
    %3835 = vmatpush.bf16.msra.mxu0 %v3070
    %3836 = vmatpush.bf16.msra.mxu0 %v3062
    %3837 = vmatmul.bf16.gmra.mxu0 0
    %v3838 = vpop.f32.mrf.mxu0
    %v3839 = vadd.f32 %v3826, %v3838
    %v3840 = vpop.f32.mrf.mxu0
    %3841 = vdwg.mxu0
    %3842 = vmatpush.bf16.msra.mxu0 %v3182
    %3843 = vmatpush.bf16.msra.mxu0 %v3174
    %3844 = vmatpush.bf16.msra.mxu0 %v3166
    %3845 = vmatpush.bf16.msra.mxu0 %v3158
    %3846 = vmatpush.bf16.msra.mxu0 %v3150
    %3847 = vmatpush.bf16.msra.mxu0 %v3142
    %3848 = vmatpush.bf16.msra.mxu0 %v3134
    %3849 = vmatpush.bf16.msra.mxu0 %v3126
    %3850 = vmatmul.bf16.gmra.mxu0 0
    %v3851 = vpop.f32.mrf.mxu0
    %v3852 = vadd.f32 %v3839, %v3851
    %v3853 = vpop.f32.mrf.mxu0
    %3854 = vdwg.mxu0
    %v3855 = vxor.u32 %v3488, 2147483648
    %v3856 = vxor.u32 %v3540, 2147483648
    %v3857 = vmul.f32 %v3855, 1.442695
    %v3858 = vpow.pop %v3857
    %v3859 = vmul.f32 %v3856, 1.442695
    %v3860 = vpow.pop %v3859
    %v3861 = vadd.f32 %v3858, 1.0
    %v3862 = vadd.f32 %v3860, 1.0
    %v3863 = vrcp.pop %v3861
    %v3864 = vmul.f32 %v3861, %v3863
    %v3865 = vsub.f32 1.0, %v3864
    %v3866 = vmul.f32 %v3863, %v3865
    %v3867 = vadd.f32 %v3863, %v3866
    %vm3868 = vweird.f32 %v3861
    %vm3869 = vweird.f32 %v3863
    %vm3870 = vmor %vm3868, %vm3869
    %v3871 = vsel %vm3870, %v3863, %v3867
    %v3872 = vand.u32 2147483647, %v3861
    %vm3873 = vcmp.eq.f32.partialorder %v3872, 8.507059e+37
    %v3874 = vand.u32 %v3861, 2147483648
    %v3875 = vor.u32 1.1754944e-38, %v3874
    %v3876 = vsel %vm3873, %v3875, %v3871
    %v3877 = vmul.f32 1.0, %v3876
    %v3878 = vrcp.pop %v3862
    %v3879 = vmul.f32 %v3862, %v3878
    %v3880 = vsub.f32 1.0, %v3879
    %v3881 = vmul.f32 %v3878, %v3880
    %v3882 = vadd.f32 %v3878, %v3881
    %vm3883 = vweird.f32 %v3862
    %vm3884 = vweird.f32 %v3878
    %vm3885 = vmor %vm3883, %vm3884
    %v3886 = vsel %vm3885, %v3878, %v3882
    %v3887 = vand.u32 2147483647, %v3862
    %vm3888 = vcmp.eq.f32.partialorder %v3887, 8.507059e+37
    %v3889 = vand.u32 %v3862, 2147483648
    %v3890 = vor.u32 1.1754944e-38, %v3889
    %v3891 = vsel %vm3888, %v3890, %v3886
    %v3892 = vmul.f32 1.0, %v3891
    %v3893 = vxor.u32 %v3592, 2147483648
    %v3894 = vxor.u32 %v3644, 2147483648
    %v3895 = vmul.f32 %v3893, 1.442695
    %v3896 = vpow.pop %v3895
    %v3897 = vmul.f32 %v3894, 1.442695
    %v3898 = vpow.pop %v3897
    %v3899 = vadd.f32 %v3896, 1.0
    %v3900 = vadd.f32 %v3898, 1.0
    %v3901 = vrcp.pop %v3899
    %v3902 = vmul.f32 %v3899, %v3901
    %v3903 = vsub.f32 1.0, %v3902
    %v3904 = vmul.f32 %v3901, %v3903
    %v3905 = vadd.f32 %v3901, %v3904
    %vm3906 = vweird.f32 %v3899
    %vm3907 = vweird.f32 %v3901
    %vm3908 = vmor %vm3906, %vm3907
    %v3909 = vsel %vm3908, %v3901, %v3905
    %v3910 = vand.u32 2147483647, %v3899
    %vm3911 = vcmp.eq.f32.partialorder %v3910, 8.507059e+37
    %v3912 = vand.u32 %v3899, 2147483648
    %v3913 = vor.u32 1.1754944e-38, %v3912
    %v3914 = vsel %vm3911, %v3913, %v3909
    %v3915 = vmul.f32 1.0, %v3914
    %v3916 = vrcp.pop %v3900
    %v3917 = vmul.f32 %v3900, %v3916
    %v3918 = vsub.f32 1.0, %v3917
    %v3919 = vmul.f32 %v3916, %v3918
    %v3920 = vadd.f32 %v3916, %v3919
    %vm3921 = vweird.f32 %v3900
    %vm3922 = vweird.f32 %v3916
    %vm3923 = vmor %vm3921, %vm3922
    %v3924 = vsel %vm3923, %v3916, %v3920
    %v3925 = vand.u32 2147483647, %v3900
    %vm3926 = vcmp.eq.f32.partialorder %v3925, 8.507059e+37
    %v3927 = vand.u32 %v3900, 2147483648
    %v3928 = vor.u32 1.1754944e-38, %v3927
    %v3929 = vsel %vm3926, %v3928, %v3924
    %v3930 = vmul.f32 1.0, %v3929
    %v3931 = vtanh.pop %v3696
    %v3932 = vtanh.pop %v3748
    %v3933 = vxor.u32 %v3800, 2147483648
    %v3934 = vxor.u32 %v3852, 2147483648
    %v3935 = vmul.f32 %v3933, 1.442695
    %v3936 = vpow.pop %v3935
    %v3937 = vmul.f32 %v3934, 1.442695
    %v3938 = vpow.pop %v3937
    %v3939 = vadd.f32 %v3936, 1.0
    %v3940 = vadd.f32 %v3938, 1.0
    %v3941 = vrcp.pop %v3939
    %v3942 = vmul.f32 %v3939, %v3941
    %v3943 = vsub.f32 1.0, %v3942
    %v3944 = vmul.f32 %v3941, %v3943
    %v3945 = vadd.f32 %v3941, %v3944
    %vm3946 = vweird.f32 %v3939
    %vm3947 = vweird.f32 %v3941
    %vm3948 = vmor %vm3946, %vm3947
    %v3949 = vsel %vm3948, %v3941, %v3945
    %v3950 = vand.u32 2147483647, %v3939
    %vm3951 = vcmp.eq.f32.partialorder %v3950, 8.507059e+37
    %v3952 = vand.u32 %v3939, 2147483648
    %v3953 = vor.u32 1.1754944e-38, %v3952
    %v3954 = vsel %vm3951, %v3953, %v3949
    %v3955 = vmul.f32 1.0, %v3954
    %v3956 = vrcp.pop %v3940
    %v3957 = vmul.f32 %v3940, %v3956
    %v3958 = vsub.f32 1.0, %v3957
    %v3959 = vmul.f32 %v3956, %v3958
    %v3960 = vadd.f32 %v3956, %v3959
    %vm3961 = vweird.f32 %v3940
    %vm3962 = vweird.f32 %v3956
    %vm3963 = vmor %vm3961, %vm3962
    %v3964 = vsel %vm3963, %v3956, %v3960
    %v3965 = vand.u32 2147483647, %v3940
    %vm3966 = vcmp.eq.f32.partialorder %v3965, 8.507059e+37
    %v3967 = vand.u32 %v3940, 2147483648
    %v3968 = vor.u32 1.1754944e-38, %v3967
    %v3969 = vsel %vm3966, %v3968, %v3964
    %v3970 = vmul.f32 1.0, %v3969
    %v3971 = vmul.f32 %v3915, 0.0
    %v3972 = vmul.f32 %v3930, 0.0
    %v3973 = vmul.f32 %v3877, %v3931
    %v3974 = vmul.f32 %v3892, %v3932
    %v3975 = vadd.f32 %v3971, %v3973
    %v3976 = vadd.f32 %v3972, %v3974
    %v3977 = vtanh.pop %v3975
    %v3978 = vtanh.pop %v3976
    %v3979 = vmul.f32 %v3955, %v3977
    %v3980 = vmul.f32 %v3970, %v3978
    %v3981 = vsel %vm1151, %v2132, 0.0
    %v3982 = vsel %vm1151, %v2133, 0.0
    %v3983 = vsel %vm1151, %v2128, 0.0
    %v3984 = vsel %vm1151, %v2129, 0.0
    %v3985 = vsel %vm1151, %v3979, 0.0
    %v3986 = vsel %vm1151, %v3980, 0.0
    %v3987 = vsel %vm1151, %v3975, 0.0
    %v3988 = vsel %vm1151, %v3976, 0.0
    %vm3989 = vcmp.gt.s32.totalorder %v94, 1
    %v3990 = vsel %vm3989, 1, 0
    %3991 = vset.pattern.permute.xlu0 0
    %3992 = vperm.xlu0 %3991, %v3990
    %v3993 = vpop.permute.xlu0 %3992
    %vm3994 = vcmp.eq.s32.totalorder %v3993, 1
    %v3995 = vpack.c.bf16 %v3981, %v3981
    %v3996 = vpack.c.bf16 %v3982, %v3982
    %3997 = vmatpush.bf16.msra.mxu0 %v1592
    %3998 = vmatpush.bf16.msra.mxu0 %v1584
    %3999 = vmatpush.bf16.msra.mxu0 %v1576
    %4000 = vmatpush.bf16.msra.mxu0 %v1568
    %4001 = vmatpush.bf16.msra.mxu0 %v1560
    %4002 = vmatpush.bf16.msra.mxu0 %v1552
    %4003 = vmatpush.bf16.msra.mxu0 %v1544
    %4004 = vmatpush.bf16.msra.mxu0 %v1536
    %4005 = vmatmul.bf16.gmra.mxu0 %v3995
    %v4006 = vpop.f32.mrf.mxu0
    %v4007 = vadd.f32 0.0, %v4006
    %v4008 = vpop.f32.mrf.mxu0
    %4009 = vdwg.mxu0
    %4010 = vmatpush.bf16.msra.mxu0 %v1656
    %4011 = vmatpush.bf16.msra.mxu0 %v1648
    %4012 = vmatpush.bf16.msra.mxu0 %v1640
    %4013 = vmatpush.bf16.msra.mxu0 %v1632
    %4014 = vmatpush.bf16.msra.mxu0 %v1624
    %4015 = vmatpush.bf16.msra.mxu0 %v1616
    %4016 = vmatpush.bf16.msra.mxu0 %v1608
    %4017 = vmatpush.bf16.msra.mxu0 %v1600
    %4018 = vmatmul.bf16.gmra.mxu0 %v3996
    %v4019 = vpop.f32.mrf.mxu0
    %v4020 = vadd.f32 %v4007, %v4019
    %v4021 = vpop.f32.mrf.mxu0
    %4022 = vdwg.mxu0
    %4023 = vmatpush.bf16.msra.mxu0 %v1593
    %4024 = vmatpush.bf16.msra.mxu0 %v1585
    %4025 = vmatpush.bf16.msra.mxu0 %v1577
    %4026 = vmatpush.bf16.msra.mxu0 %v1569
    %4027 = vmatpush.bf16.msra.mxu0 %v1561
    %4028 = vmatpush.bf16.msra.mxu0 %v1553
    %4029 = vmatpush.bf16.msra.mxu0 %v1545
    %4030 = vmatpush.bf16.msra.mxu0 %v1537
    %4031 = vmatmul.bf16.gmra.mxu0 %v3995
    %v4032 = vpop.f32.mrf.mxu0
    %v4033 = vadd.f32 0.0, %v4032
    %v4034 = vpop.f32.mrf.mxu0
    %4035 = vdwg.mxu0
    %4036 = vmatpush.bf16.msra.mxu0 %v1657
    %4037 = vmatpush.bf16.msra.mxu0 %v1649
    %4038 = vmatpush.bf16.msra.mxu0 %v1641
    %4039 = vmatpush.bf16.msra.mxu0 %v1633
    %4040 = vmatpush.bf16.msra.mxu0 %v1625
    %4041 = vmatpush.bf16.msra.mxu0 %v1617
    %4042 = vmatpush.bf16.msra.mxu0 %v1609
    %4043 = vmatpush.bf16.msra.mxu0 %v1601
    %4044 = vmatmul.bf16.gmra.mxu0 %v3996
    %v4045 = vpop.f32.mrf.mxu0
    %v4046 = vadd.f32 %v4033, %v4045
    %v4047 = vpop.f32.mrf.mxu0
    %4048 = vdwg.mxu0
    %4049 = vmatpush.bf16.msra.mxu0 %v1594
    %4050 = vmatpush.bf16.msra.mxu0 %v1586
    %4051 = vmatpush.bf16.msra.mxu0 %v1578
    %4052 = vmatpush.bf16.msra.mxu0 %v1570
    %4053 = vmatpush.bf16.msra.mxu0 %v1562
    %4054 = vmatpush.bf16.msra.mxu0 %v1554
    %4055 = vmatpush.bf16.msra.mxu0 %v1546
    %4056 = vmatpush.bf16.msra.mxu0 %v1538
    %4057 = vmatmul.bf16.gmra.mxu0 %v3995
    %v4058 = vpop.f32.mrf.mxu0
    %v4059 = vadd.f32 0.0, %v4058
    %v4060 = vpop.f32.mrf.mxu0
    %4061 = vdwg.mxu0
    %4062 = vmatpush.bf16.msra.mxu0 %v1658
    %4063 = vmatpush.bf16.msra.mxu0 %v1650
    %4064 = vmatpush.bf16.msra.mxu0 %v1642
    %4065 = vmatpush.bf16.msra.mxu0 %v1634
    %4066 = vmatpush.bf16.msra.mxu0 %v1626
    %4067 = vmatpush.bf16.msra.mxu0 %v1618
    %4068 = vmatpush.bf16.msra.mxu0 %v1610
    %4069 = vmatpush.bf16.msra.mxu0 %v1602
    %4070 = vmatmul.bf16.gmra.mxu0 %v3996
    %v4071 = vpop.f32.mrf.mxu0
    %v4072 = vadd.f32 %v4059, %v4071
    %v4073 = vpop.f32.mrf.mxu0
    %4074 = vdwg.mxu0
    %4075 = vmatpush.bf16.msra.mxu0 %v1595
    %4076 = vmatpush.bf16.msra.mxu0 %v1587
    %4077 = vmatpush.bf16.msra.mxu0 %v1579
    %4078 = vmatpush.bf16.msra.mxu0 %v1571
    %4079 = vmatpush.bf16.msra.mxu0 %v1563
    %4080 = vmatpush.bf16.msra.mxu0 %v1555
    %4081 = vmatpush.bf16.msra.mxu0 %v1547
    %4082 = vmatpush.bf16.msra.mxu0 %v1539
    %4083 = vmatmul.bf16.gmra.mxu0 %v3995
    %v4084 = vpop.f32.mrf.mxu0
    %v4085 = vadd.f32 0.0, %v4084
    %v4086 = vpop.f32.mrf.mxu0
    %4087 = vdwg.mxu0
    %4088 = vmatpush.bf16.msra.mxu0 %v1659
    %4089 = vmatpush.bf16.msra.mxu0 %v1651
    %4090 = vmatpush.bf16.msra.mxu0 %v1643
    %4091 = vmatpush.bf16.msra.mxu0 %v1635
    %4092 = vmatpush.bf16.msra.mxu0 %v1627
    %4093 = vmatpush.bf16.msra.mxu0 %v1619
    %4094 = vmatpush.bf16.msra.mxu0 %v1611
    %4095 = vmatpush.bf16.msra.mxu0 %v1603
    %4096 = vmatmul.bf16.gmra.mxu0 %v3996
    %v4097 = vpop.f32.mrf.mxu0
    %v4098 = vadd.f32 %v4085, %v4097
    %v4099 = vpop.f32.mrf.mxu0
    %4100 = vdwg.mxu0
    %4101 = vmatpush.bf16.msra.mxu0 %v1596
    %4102 = vmatpush.bf16.msra.mxu0 %v1588
    %4103 = vmatpush.bf16.msra.mxu0 %v1580
    %4104 = vmatpush.bf16.msra.mxu0 %v1572
    %4105 = vmatpush.bf16.msra.mxu0 %v1564
    %4106 = vmatpush.bf16.msra.mxu0 %v1556
    %4107 = vmatpush.bf16.msra.mxu0 %v1548
    %4108 = vmatpush.bf16.msra.mxu0 %v1540
    %4109 = vmatmul.bf16.gmra.mxu0 %v3995
    %v4110 = vpop.f32.mrf.mxu0
    %v4111 = vadd.f32 0.0, %v4110
    %v4112 = vpop.f32.mrf.mxu0
    %4113 = vdwg.mxu0
    %4114 = vmatpush.bf16.msra.mxu0 %v1660
    %4115 = vmatpush.bf16.msra.mxu0 %v1652
    %4116 = vmatpush.bf16.msra.mxu0 %v1644
    %4117 = vmatpush.bf16.msra.mxu0 %v1636
    %4118 = vmatpush.bf16.msra.mxu0 %v1628
    %4119 = vmatpush.bf16.msra.mxu0 %v1620
    %4120 = vmatpush.bf16.msra.mxu0 %v1612
    %4121 = vmatpush.bf16.msra.mxu0 %v1604
    %4122 = vmatmul.bf16.gmra.mxu0 %v3996
    %v4123 = vpop.f32.mrf.mxu0
    %v4124 = vadd.f32 %v4111, %v4123
    %v4125 = vpop.f32.mrf.mxu0
    %4126 = vdwg.mxu0
    %4127 = vmatpush.bf16.msra.mxu0 %v1597
    %4128 = vmatpush.bf16.msra.mxu0 %v1589
    %4129 = vmatpush.bf16.msra.mxu0 %v1581
    %4130 = vmatpush.bf16.msra.mxu0 %v1573
    %4131 = vmatpush.bf16.msra.mxu0 %v1565
    %4132 = vmatpush.bf16.msra.mxu0 %v1557
    %4133 = vmatpush.bf16.msra.mxu0 %v1549
    %4134 = vmatpush.bf16.msra.mxu0 %v1541
    %4135 = vmatmul.bf16.gmra.mxu0 %v3995
    %v4136 = vpop.f32.mrf.mxu0
    %v4137 = vadd.f32 0.0, %v4136
    %v4138 = vpop.f32.mrf.mxu0
    %4139 = vdwg.mxu0
    %4140 = vmatpush.bf16.msra.mxu0 %v1661
    %4141 = vmatpush.bf16.msra.mxu0 %v1653
    %4142 = vmatpush.bf16.msra.mxu0 %v1645
    %4143 = vmatpush.bf16.msra.mxu0 %v1637
    %4144 = vmatpush.bf16.msra.mxu0 %v1629
    %4145 = vmatpush.bf16.msra.mxu0 %v1621
    %4146 = vmatpush.bf16.msra.mxu0 %v1613
    %4147 = vmatpush.bf16.msra.mxu0 %v1605
    %4148 = vmatmul.bf16.gmra.mxu0 %v3996
    %v4149 = vpop.f32.mrf.mxu0
    %v4150 = vadd.f32 %v4137, %v4149
    %v4151 = vpop.f32.mrf.mxu0
    %4152 = vdwg.mxu0
    %4153 = vmatpush.bf16.msra.mxu0 %v1598
    %4154 = vmatpush.bf16.msra.mxu0 %v1590
    %4155 = vmatpush.bf16.msra.mxu0 %v1582
    %4156 = vmatpush.bf16.msra.mxu0 %v1574
    %4157 = vmatpush.bf16.msra.mxu0 %v1566
    %4158 = vmatpush.bf16.msra.mxu0 %v1558
    %4159 = vmatpush.bf16.msra.mxu0 %v1550
    %4160 = vmatpush.bf16.msra.mxu0 %v1542
    %4161 = vmatmul.bf16.gmra.mxu0 %v3995
    %v4162 = vpop.f32.mrf.mxu0
    %v4163 = vadd.f32 0.0, %v4162
    %v4164 = vpop.f32.mrf.mxu0
    %4165 = vdwg.mxu0
    %4166 = vmatpush.bf16.msra.mxu0 %v1662
    %4167 = vmatpush.bf16.msra.mxu0 %v1654
    %4168 = vmatpush.bf16.msra.mxu0 %v1646
    %4169 = vmatpush.bf16.msra.mxu0 %v1638
    %4170 = vmatpush.bf16.msra.mxu0 %v1630
    %4171 = vmatpush.bf16.msra.mxu0 %v1622
    %4172 = vmatpush.bf16.msra.mxu0 %v1614
    %4173 = vmatpush.bf16.msra.mxu0 %v1606
    %4174 = vmatmul.bf16.gmra.mxu0 %v3996
    %v4175 = vpop.f32.mrf.mxu0
    %v4176 = vadd.f32 %v4163, %v4175
    %v4177 = vpop.f32.mrf.mxu0
    %4178 = vdwg.mxu0
    %4179 = vmatpush.bf16.msra.mxu0 %v1599
    %4180 = vmatpush.bf16.msra.mxu0 %v1591
    %4181 = vmatpush.bf16.msra.mxu0 %v1583
    %4182 = vmatpush.bf16.msra.mxu0 %v1575
    %4183 = vmatpush.bf16.msra.mxu0 %v1567
    %4184 = vmatpush.bf16.msra.mxu0 %v1559
    %4185 = vmatpush.bf16.msra.mxu0 %v1551
    %4186 = vmatpush.bf16.msra.mxu0 %v1543
    %4187 = vmatmul.bf16.gmra.mxu0 %v3995
    %v4188 = vpop.f32.mrf.mxu0
    %v4189 = vadd.f32 0.0, %v4188
    %v4190 = vpop.f32.mrf.mxu0
    %4191 = vdwg.mxu0
    %4192 = vmatpush.bf16.msra.mxu0 %v1663
    %4193 = vmatpush.bf16.msra.mxu0 %v1655
    %4194 = vmatpush.bf16.msra.mxu0 %v1647
    %4195 = vmatpush.bf16.msra.mxu0 %v1639
    %4196 = vmatpush.bf16.msra.mxu0 %v1631
    %4197 = vmatpush.bf16.msra.mxu0 %v1623
    %4198 = vmatpush.bf16.msra.mxu0 %v1615
    %4199 = vmatpush.bf16.msra.mxu0 %v1607
    %4200 = vmatmul.bf16.gmra.mxu0 %v3996
    %v4201 = vpop.f32.mrf.mxu0
    %v4202 = vadd.f32 %v4189, %v4201
    %v4203 = vpop.f32.mrf.mxu0
    %4204 = vdwg.mxu0
    %v4205 = vadd.f32 %v541, %v4020
    %v4206 = vadd.f32 %v570, %v4046
    %v4207 = vadd.f32 %v599, %v4072
    %v4208 = vadd.f32 %v628, %v4098
    %v4209 = vadd.f32 %v657, %v4124
    %v4210 = vadd.f32 %v686, %v4150
    %v4211 = vadd.f32 %v715, %v4176
    %v4212 = vadd.f32 %v744, %v4202
    %v4213 = vxor.u32 %v4205, 2147483648
    %v4214 = vxor.u32 %v4206, 2147483648
    %v4215 = vmul.f32 %v4213, 1.442695
    %v4216 = vpow.pop %v4215
    %v4217 = vmul.f32 %v4214, 1.442695
    %v4218 = vpow.pop %v4217
    %v4219 = vadd.f32 %v4216, 1.0
    %v4220 = vadd.f32 %v4218, 1.0
    %v4221 = vrcp.pop %v4219
    %v4222 = vmul.f32 %v4219, %v4221
    %v4223 = vsub.f32 1.0, %v4222
    %v4224 = vmul.f32 %v4221, %v4223
    %v4225 = vadd.f32 %v4221, %v4224
    %vm4226 = vweird.f32 %v4219
    %vm4227 = vweird.f32 %v4221
    %vm4228 = vmor %vm4226, %vm4227
    %v4229 = vsel %vm4228, %v4221, %v4225
    %v4230 = vand.u32 2147483647, %v4219
    %vm4231 = vcmp.eq.f32.partialorder %v4230, 8.507059e+37
    %v4232 = vand.u32 %v4219, 2147483648
    %v4233 = vor.u32 1.1754944e-38, %v4232
    %v4234 = vsel %vm4231, %v4233, %v4229
    %v4235 = vmul.f32 1.0, %v4234
    %v4236 = vrcp.pop %v4220
    %v4237 = vmul.f32 %v4220, %v4236
    %v4238 = vsub.f32 1.0, %v4237
    %v4239 = vmul.f32 %v4236, %v4238
    %v4240 = vadd.f32 %v4236, %v4239
    %vm4241 = vweird.f32 %v4220
    %vm4242 = vweird.f32 %v4236
    %vm4243 = vmor %vm4241, %vm4242
    %v4244 = vsel %vm4243, %v4236, %v4240
    %v4245 = vand.u32 2147483647, %v4220
    %vm4246 = vcmp.eq.f32.partialorder %v4245, 8.507059e+37
    %v4247 = vand.u32 %v4220, 2147483648
    %v4248 = vor.u32 1.1754944e-38, %v4247
    %v4249 = vsel %vm4246, %v4248, %v4244
    %v4250 = vmul.f32 1.0, %v4249
    %v4251 = vxor.u32 %v4207, 2147483648
    %v4252 = vxor.u32 %v4208, 2147483648
    %v4253 = vmul.f32 %v4251, 1.442695
    %v4254 = vpow.pop %v4253
    %v4255 = vmul.f32 %v4252, 1.442695
    %v4256 = vpow.pop %v4255
    %v4257 = vadd.f32 %v4254, 1.0
    %v4258 = vadd.f32 %v4256, 1.0
    %v4259 = vrcp.pop %v4257
    %v4260 = vmul.f32 %v4257, %v4259
    %v4261 = vsub.f32 1.0, %v4260
    %v4262 = vmul.f32 %v4259, %v4261
    %v4263 = vadd.f32 %v4259, %v4262
    %vm4264 = vweird.f32 %v4257
    %vm4265 = vweird.f32 %v4259
    %vm4266 = vmor %vm4264, %vm4265
    %v4267 = vsel %vm4266, %v4259, %v4263
    %v4268 = vand.u32 2147483647, %v4257
    %vm4269 = vcmp.eq.f32.partialorder %v4268, 8.507059e+37
    %v4270 = vand.u32 %v4257, 2147483648
    %v4271 = vor.u32 1.1754944e-38, %v4270
    %v4272 = vsel %vm4269, %v4271, %v4267
    %v4273 = vmul.f32 1.0, %v4272
    %v4274 = vrcp.pop %v4258
    %v4275 = vmul.f32 %v4258, %v4274
    %v4276 = vsub.f32 1.0, %v4275
    %v4277 = vmul.f32 %v4274, %v4276
    %v4278 = vadd.f32 %v4274, %v4277
    %vm4279 = vweird.f32 %v4258
    %vm4280 = vweird.f32 %v4274
    %vm4281 = vmor %vm4279, %vm4280
    %v4282 = vsel %vm4281, %v4274, %v4278
    %v4283 = vand.u32 2147483647, %v4258
    %vm4284 = vcmp.eq.f32.partialorder %v4283, 8.507059e+37
    %v4285 = vand.u32 %v4258, 2147483648
    %v4286 = vor.u32 1.1754944e-38, %v4285
    %v4287 = vsel %vm4284, %v4286, %v4282
    %v4288 = vmul.f32 1.0, %v4287
    %v4289 = vtanh.pop %v4209
    %v4290 = vtanh.pop %v4210
    %v4291 = vxor.u32 %v4211, 2147483648
    %v4292 = vxor.u32 %v4212, 2147483648
    %v4293 = vmul.f32 %v4291, 1.442695
    %v4294 = vpow.pop %v4293
    %v4295 = vmul.f32 %v4292, 1.442695
    %v4296 = vpow.pop %v4295
    %v4297 = vadd.f32 %v4294, 1.0
    %v4298 = vadd.f32 %v4296, 1.0
    %v4299 = vrcp.pop %v4297
    %v4300 = vmul.f32 %v4297, %v4299
    %v4301 = vsub.f32 1.0, %v4300
    %v4302 = vmul.f32 %v4299, %v4301
    %v4303 = vadd.f32 %v4299, %v4302
    %vm4304 = vweird.f32 %v4297
    %vm4305 = vweird.f32 %v4299
    %vm4306 = vmor %vm4304, %vm4305
    %v4307 = vsel %vm4306, %v4299, %v4303
    %v4308 = vand.u32 2147483647, %v4297
    %vm4309 = vcmp.eq.f32.partialorder %v4308, 8.507059e+37
    %v4310 = vand.u32 %v4297, 2147483648
    %v4311 = vor.u32 1.1754944e-38, %v4310
    %v4312 = vsel %vm4309, %v4311, %v4307
    %v4313 = vmul.f32 1.0, %v4312
    %v4314 = vrcp.pop %v4298
    %v4315 = vmul.f32 %v4298, %v4314
    %v4316 = vsub.f32 1.0, %v4315
    %v4317 = vmul.f32 %v4314, %v4316
    %v4318 = vadd.f32 %v4314, %v4317
    %vm4319 = vweird.f32 %v4298
    %vm4320 = vweird.f32 %v4314
    %vm4321 = vmor %vm4319, %vm4320
    %v4322 = vsel %vm4321, %v4314, %v4318
    %v4323 = vand.u32 2147483647, %v4298
    %vm4324 = vcmp.eq.f32.partialorder %v4323, 8.507059e+37
    %v4325 = vand.u32 %v4298, 2147483648
    %v4326 = vor.u32 1.1754944e-38, %v4325
    %v4327 = vsel %vm4324, %v4326, %v4322
    %v4328 = vmul.f32 1.0, %v4327
    %v4329 = vmul.f32 %v4273, %v3983
    %v4330 = vmul.f32 %v4288, %v3984
    %v4331 = vmul.f32 %v4235, %v4289
    %v4332 = vmul.f32 %v4250, %v4290
    %v4333 = vadd.f32 %v4329, %v4331
    %v4334 = vadd.f32 %v4330, %v4332
    %v4335 = vtanh.pop %v4333
    %v4336 = vtanh.pop %v4334
    %v4337 = vmul.f32 %v4313, %v4335
    %v4338 = vmul.f32 %v4328, %v4336
    %v4339 = vpack.c.bf16 %v4338, %v4337
    %v4340 = vpack.c.bf16 %v3986, %v3985
    %v4342 = vunpack.c.l.b16 %v4339
    %v4343 = vunpack.c.h.b16 %v4339
    %v4344 = vpack.c.b16 %v4342, %v4342
    %v4345 = vpack.c.b16 %v4343, %v4343
    %v4349 = vunpack.c.l.b16 %v4340
    %v4350 = vunpack.c.h.b16 %v4340
    %v4351 = vpack.c.b16 %v4349, %v4349
    %v4352 = vpack.c.b16 %v4350, %v4350
    %4355 = vmatpush.bf16.msra.mxu0 %v2983
    %4356 = vmatpush.bf16.msra.mxu0 %v2975
    %4357 = vmatpush.bf16.msra.mxu0 %v2967
    %4358 = vmatpush.bf16.msra.mxu0 %v2959
    %4359 = vmatpush.bf16.msra.mxu0 %v2951
    %4360 = vmatpush.bf16.msra.mxu0 %v2943
    %4361 = vmatpush.bf16.msra.mxu0 %v2935
    %4362 = vmatpush.bf16.msra.mxu0 %v2927
    %4363 = vmatmul.bf16.gmra.mxu0 %v4344
    %v4364 = vpop.f32.mrf.mxu0
    %v4365 = vadd.f32 %v2143, %v4364
    %v4366 = vpop.f32.mrf.mxu0
    %4367 = vdwg.mxu0
    %4368 = vmatpush.bf16.msra.mxu0 %v3047
    %4369 = vmatpush.bf16.msra.mxu0 %v3039
    %4370 = vmatpush.bf16.msra.mxu0 %v3031
    %4371 = vmatpush.bf16.msra.mxu0 %v3023
    %4372 = vmatpush.bf16.msra.mxu0 %v3015
    %4373 = vmatpush.bf16.msra.mxu0 %v3007
    %4374 = vmatpush.bf16.msra.mxu0 %v2999
    %4375 = vmatpush.bf16.msra.mxu0 %v2991
    %4376 = vmatmul.bf16.gmra.mxu0 %v4345
    %v4377 = vpop.f32.mrf.mxu0
    %v4378 = vadd.f32 %v4365, %v4377
    %v4379 = vpop.f32.mrf.mxu0
    %4380 = vdwg.mxu0
    %4381 = vmatpush.bf16.msra.mxu0 %v3111
    %4382 = vmatpush.bf16.msra.mxu0 %v3103
    %4383 = vmatpush.bf16.msra.mxu0 %v3095
    %4384 = vmatpush.bf16.msra.mxu0 %v3087
    %4385 = vmatpush.bf16.msra.mxu0 %v3079
    %4386 = vmatpush.bf16.msra.mxu0 %v3071
    %4387 = vmatpush.bf16.msra.mxu0 %v3063
    %4388 = vmatpush.bf16.msra.mxu0 %v3055
    %4389 = vmatmul.bf16.gmra.mxu0 %v4351
    %v4390 = vpop.f32.mrf.mxu0
    %v4391 = vadd.f32 %v4378, %v4390
    %v4392 = vpop.f32.mrf.mxu0
    %4393 = vdwg.mxu0
    %4394 = vmatpush.bf16.msra.mxu0 %v3175
    %4395 = vmatpush.bf16.msra.mxu0 %v3167
    %4396 = vmatpush.bf16.msra.mxu0 %v3159
    %4397 = vmatpush.bf16.msra.mxu0 %v3151
    %4398 = vmatpush.bf16.msra.mxu0 %v3143
    %4399 = vmatpush.bf16.msra.mxu0 %v3135
    %4400 = vmatpush.bf16.msra.mxu0 %v3127
    %4401 = vmatpush.bf16.msra.mxu0 %v3119
    %4402 = vmatmul.bf16.gmra.mxu0 %v4352
    %v4403 = vpop.f32.mrf.mxu0
    %v4404 = vadd.f32 %v4391, %v4403
    %v4405 = vpop.f32.mrf.mxu0
    %4406 = vdwg.mxu0
    %4407 = vmatpush.bf16.msra.mxu0 %v2984
    %4408 = vmatpush.bf16.msra.mxu0 %v2976
    %4409 = vmatpush.bf16.msra.mxu0 %v2968
    %4410 = vmatpush.bf16.msra.mxu0 %v2960
    %4411 = vmatpush.bf16.msra.mxu0 %v2952
    %4412 = vmatpush.bf16.msra.mxu0 %v2944
    %4413 = vmatpush.bf16.msra.mxu0 %v2936
    %4414 = vmatpush.bf16.msra.mxu0 %v2928
    %4415 = vmatmul.bf16.gmra.mxu0 %v4344
    %v4416 = vpop.f32.mrf.mxu0
    %v4417 = vadd.f32 %v2144, %v4416
    %v4418 = vpop.f32.mrf.mxu0
    %4419 = vdwg.mxu0
    %4420 = vmatpush.bf16.msra.mxu0 %v3048
    %4421 = vmatpush.bf16.msra.mxu0 %v3040
    %4422 = vmatpush.bf16.msra.mxu0 %v3032
    %4423 = vmatpush.bf16.msra.mxu0 %v3024
    %4424 = vmatpush.bf16.msra.mxu0 %v3016
    %4425 = vmatpush.bf16.msra.mxu0 %v3008
    %4426 = vmatpush.bf16.msra.mxu0 %v3000
    %4427 = vmatpush.bf16.msra.mxu0 %v2992
    %4428 = vmatmul.bf16.gmra.mxu0 %v4345
    %v4429 = vpop.f32.mrf.mxu0
    %v4430 = vadd.f32 %v4417, %v4429
    %v4431 = vpop.f32.mrf.mxu0
    %4432 = vdwg.mxu0
    %4433 = vmatpush.bf16.msra.mxu0 %v3112
    %4434 = vmatpush.bf16.msra.mxu0 %v3104
    %4435 = vmatpush.bf16.msra.mxu0 %v3096
    %4436 = vmatpush.bf16.msra.mxu0 %v3088
    %4437 = vmatpush.bf16.msra.mxu0 %v3080
    %4438 = vmatpush.bf16.msra.mxu0 %v3072
    %4439 = vmatpush.bf16.msra.mxu0 %v3064
    %4440 = vmatpush.bf16.msra.mxu0 %v3056
    %4441 = vmatmul.bf16.gmra.mxu0 %v4351
    %v4442 = vpop.f32.mrf.mxu0
    %v4443 = vadd.f32 %v4430, %v4442
    %v4444 = vpop.f32.mrf.mxu0
    %4445 = vdwg.mxu0
    %4446 = vmatpush.bf16.msra.mxu0 %v3176
    %4447 = vmatpush.bf16.msra.mxu0 %v3168
    %4448 = vmatpush.bf16.msra.mxu0 %v3160
    %4449 = vmatpush.bf16.msra.mxu0 %v3152
    %4450 = vmatpush.bf16.msra.mxu0 %v3144
    %4451 = vmatpush.bf16.msra.mxu0 %v3136
    %4452 = vmatpush.bf16.msra.mxu0 %v3128
    %4453 = vmatpush.bf16.msra.mxu0 %v3120
    %4454 = vmatmul.bf16.gmra.mxu0 %v4352
    %v4455 = vpop.f32.mrf.mxu0
    %v4456 = vadd.f32 %v4443, %v4455
    %v4457 = vpop.f32.mrf.mxu0
    %4458 = vdwg.mxu0
    %4459 = vmatpush.bf16.msra.mxu0 %v2985
    %4460 = vmatpush.bf16.msra.mxu0 %v2977
    %4461 = vmatpush.bf16.msra.mxu0 %v2969
    %4462 = vmatpush.bf16.msra.mxu0 %v2961
    %4463 = vmatpush.bf16.msra.mxu0 %v2953
    %4464 = vmatpush.bf16.msra.mxu0 %v2945
    %4465 = vmatpush.bf16.msra.mxu0 %v2937
    %4466 = vmatpush.bf16.msra.mxu0 %v2929
    %4467 = vmatmul.bf16.gmra.mxu0 %v4344
    %v4468 = vpop.f32.mrf.mxu0
    %v4469 = vadd.f32 %v2145, %v4468
    %v4470 = vpop.f32.mrf.mxu0
    %4471 = vdwg.mxu0
    %4472 = vmatpush.bf16.msra.mxu0 %v3049
    %4473 = vmatpush.bf16.msra.mxu0 %v3041
    %4474 = vmatpush.bf16.msra.mxu0 %v3033
    %4475 = vmatpush.bf16.msra.mxu0 %v3025
    %4476 = vmatpush.bf16.msra.mxu0 %v3017
    %4477 = vmatpush.bf16.msra.mxu0 %v3009
    %4478 = vmatpush.bf16.msra.mxu0 %v3001
    %4479 = vmatpush.bf16.msra.mxu0 %v2993
    %4480 = vmatmul.bf16.gmra.mxu0 %v4345
    %v4481 = vpop.f32.mrf.mxu0
    %v4482 = vadd.f32 %v4469, %v4481
    %v4483 = vpop.f32.mrf.mxu0
    %4484 = vdwg.mxu0
    %4485 = vmatpush.bf16.msra.mxu0 %v3113
    %4486 = vmatpush.bf16.msra.mxu0 %v3105
    %4487 = vmatpush.bf16.msra.mxu0 %v3097
    %4488 = vmatpush.bf16.msra.mxu0 %v3089
    %4489 = vmatpush.bf16.msra.mxu0 %v3081
    %4490 = vmatpush.bf16.msra.mxu0 %v3073
    %4491 = vmatpush.bf16.msra.mxu0 %v3065
    %4492 = vmatpush.bf16.msra.mxu0 %v3057
    %4493 = vmatmul.bf16.gmra.mxu0 %v4351
    %v4494 = vpop.f32.mrf.mxu0
    %v4495 = vadd.f32 %v4482, %v4494
    %v4496 = vpop.f32.mrf.mxu0
    %4497 = vdwg.mxu0
    %4498 = vmatpush.bf16.msra.mxu0 %v3177
    %4499 = vmatpush.bf16.msra.mxu0 %v3169
    %4500 = vmatpush.bf16.msra.mxu0 %v3161
    %4501 = vmatpush.bf16.msra.mxu0 %v3153
    %4502 = vmatpush.bf16.msra.mxu0 %v3145
    %4503 = vmatpush.bf16.msra.mxu0 %v3137
    %4504 = vmatpush.bf16.msra.mxu0 %v3129
    %4505 = vmatpush.bf16.msra.mxu0 %v3121
    %4506 = vmatmul.bf16.gmra.mxu0 %v4352
    %v4507 = vpop.f32.mrf.mxu0
    %v4508 = vadd.f32 %v4495, %v4507
    %v4509 = vpop.f32.mrf.mxu0
    %4510 = vdwg.mxu0
    %4511 = vmatpush.bf16.msra.mxu0 %v2986
    %4512 = vmatpush.bf16.msra.mxu0 %v2978
    %4513 = vmatpush.bf16.msra.mxu0 %v2970
    %4514 = vmatpush.bf16.msra.mxu0 %v2962
    %4515 = vmatpush.bf16.msra.mxu0 %v2954
    %4516 = vmatpush.bf16.msra.mxu0 %v2946
    %4517 = vmatpush.bf16.msra.mxu0 %v2938
    %4518 = vmatpush.bf16.msra.mxu0 %v2930
    %4519 = vmatmul.bf16.gmra.mxu0 %v4344
    %v4520 = vpop.f32.mrf.mxu0
    %v4521 = vadd.f32 %v2146, %v4520
    %v4522 = vpop.f32.mrf.mxu0
    %4523 = vdwg.mxu0
    %4524 = vmatpush.bf16.msra.mxu0 %v3050
    %4525 = vmatpush.bf16.msra.mxu0 %v3042
    %4526 = vmatpush.bf16.msra.mxu0 %v3034
    %4527 = vmatpush.bf16.msra.mxu0 %v3026
    %4528 = vmatpush.bf16.msra.mxu0 %v3018
    %4529 = vmatpush.bf16.msra.mxu0 %v3010
    %4530 = vmatpush.bf16.msra.mxu0 %v3002
    %4531 = vmatpush.bf16.msra.mxu0 %v2994
    %4532 = vmatmul.bf16.gmra.mxu0 %v4345
    %v4533 = vpop.f32.mrf.mxu0
    %v4534 = vadd.f32 %v4521, %v4533
    %v4535 = vpop.f32.mrf.mxu0
    %4536 = vdwg.mxu0
    %4537 = vmatpush.bf16.msra.mxu0 %v3114
    %4538 = vmatpush.bf16.msra.mxu0 %v3106
    %4539 = vmatpush.bf16.msra.mxu0 %v3098
    %4540 = vmatpush.bf16.msra.mxu0 %v3090
    %4541 = vmatpush.bf16.msra.mxu0 %v3082
    %4542 = vmatpush.bf16.msra.mxu0 %v3074
    %4543 = vmatpush.bf16.msra.mxu0 %v3066
    %4544 = vmatpush.bf16.msra.mxu0 %v3058
    %4545 = vmatmul.bf16.gmra.mxu0 %v4351
    %v4546 = vpop.f32.mrf.mxu0
    %v4547 = vadd.f32 %v4534, %v4546
    %v4548 = vpop.f32.mrf.mxu0
    %4549 = vdwg.mxu0
    %4550 = vmatpush.bf16.msra.mxu0 %v3178
    %4551 = vmatpush.bf16.msra.mxu0 %v3170
    %4552 = vmatpush.bf16.msra.mxu0 %v3162
    %4553 = vmatpush.bf16.msra.mxu0 %v3154
    %4554 = vmatpush.bf16.msra.mxu0 %v3146
    %4555 = vmatpush.bf16.msra.mxu0 %v3138
    %4556 = vmatpush.bf16.msra.mxu0 %v3130
    %4557 = vmatpush.bf16.msra.mxu0 %v3122
    %4558 = vmatmul.bf16.gmra.mxu0 %v4352
    %v4559 = vpop.f32.mrf.mxu0
    %v4560 = vadd.f32 %v4547, %v4559
    %v4561 = vpop.f32.mrf.mxu0
    %4562 = vdwg.mxu0
    %4563 = vmatpush.bf16.msra.mxu0 %v2987
    %4564 = vmatpush.bf16.msra.mxu0 %v2979
    %4565 = vmatpush.bf16.msra.mxu0 %v2971
    %4566 = vmatpush.bf16.msra.mxu0 %v2963
    %4567 = vmatpush.bf16.msra.mxu0 %v2955
    %4568 = vmatpush.bf16.msra.mxu0 %v2947
    %4569 = vmatpush.bf16.msra.mxu0 %v2939
    %4570 = vmatpush.bf16.msra.mxu0 %v2931
    %4571 = vmatmul.bf16.gmra.mxu0 %v4344
    %v4572 = vpop.f32.mrf.mxu0
    %v4573 = vadd.f32 %v2147, %v4572
    %v4574 = vpop.f32.mrf.mxu0
    %4575 = vdwg.mxu0
    %4576 = vmatpush.bf16.msra.mxu0 %v3051
    %4577 = vmatpush.bf16.msra.mxu0 %v3043
    %4578 = vmatpush.bf16.msra.mxu0 %v3035
    %4579 = vmatpush.bf16.msra.mxu0 %v3027
    %4580 = vmatpush.bf16.msra.mxu0 %v3019
    %4581 = vmatpush.bf16.msra.mxu0 %v3011
    %4582 = vmatpush.bf16.msra.mxu0 %v3003
    %4583 = vmatpush.bf16.msra.mxu0 %v2995
    %4584 = vmatmul.bf16.gmra.mxu0 %v4345
    %v4585 = vpop.f32.mrf.mxu0
    %v4586 = vadd.f32 %v4573, %v4585
    %v4587 = vpop.f32.mrf.mxu0
    %4588 = vdwg.mxu0
    %4589 = vmatpush.bf16.msra.mxu0 %v3115
    %4590 = vmatpush.bf16.msra.mxu0 %v3107
    %4591 = vmatpush.bf16.msra.mxu0 %v3099
    %4592 = vmatpush.bf16.msra.mxu0 %v3091
    %4593 = vmatpush.bf16.msra.mxu0 %v3083
    %4594 = vmatpush.bf16.msra.mxu0 %v3075
    %4595 = vmatpush.bf16.msra.mxu0 %v3067
    %4596 = vmatpush.bf16.msra.mxu0 %v3059
    %4597 = vmatmul.bf16.gmra.mxu0 %v4351
    %v4598 = vpop.f32.mrf.mxu0
    %v4599 = vadd.f32 %v4586, %v4598
    %v4600 = vpop.f32.mrf.mxu0
    %4601 = vdwg.mxu0
    %4602 = vmatpush.bf16.msra.mxu0 %v3179
    %4603 = vmatpush.bf16.msra.mxu0 %v3171
    %4604 = vmatpush.bf16.msra.mxu0 %v3163
    %4605 = vmatpush.bf16.msra.mxu0 %v3155
    %4606 = vmatpush.bf16.msra.mxu0 %v3147
    %4607 = vmatpush.bf16.msra.mxu0 %v3139
    %4608 = vmatpush.bf16.msra.mxu0 %v3131
    %4609 = vmatpush.bf16.msra.mxu0 %v3123
    %4610 = vmatmul.bf16.gmra.mxu0 %v4352
    %v4611 = vpop.f32.mrf.mxu0
    %v4612 = vadd.f32 %v4599, %v4611
    %v4613 = vpop.f32.mrf.mxu0
    %4614 = vdwg.mxu0
    %4615 = vmatpush.bf16.msra.mxu0 %v2988
    %4616 = vmatpush.bf16.msra.mxu0 %v2980
    %4617 = vmatpush.bf16.msra.mxu0 %v2972
    %4618 = vmatpush.bf16.msra.mxu0 %v2964
    %4619 = vmatpush.bf16.msra.mxu0 %v2956
    %4620 = vmatpush.bf16.msra.mxu0 %v2948
    %4621 = vmatpush.bf16.msra.mxu0 %v2940
    %4622 = vmatpush.bf16.msra.mxu0 %v2932
    %4623 = vmatmul.bf16.gmra.mxu0 %v4344
    %v4624 = vpop.f32.mrf.mxu0
    %v4625 = vadd.f32 %v2148, %v4624
    %v4626 = vpop.f32.mrf.mxu0
    %4627 = vdwg.mxu0
    %4628 = vmatpush.bf16.msra.mxu0 %v3052
    %4629 = vmatpush.bf16.msra.mxu0 %v3044
    %4630 = vmatpush.bf16.msra.mxu0 %v3036
    %4631 = vmatpush.bf16.msra.mxu0 %v3028
    %4632 = vmatpush.bf16.msra.mxu0 %v3020
    %4633 = vmatpush.bf16.msra.mxu0 %v3012
    %4634 = vmatpush.bf16.msra.mxu0 %v3004
    %4635 = vmatpush.bf16.msra.mxu0 %v2996
    %4636 = vmatmul.bf16.gmra.mxu0 %v4345
    %v4637 = vpop.f32.mrf.mxu0
    %v4638 = vadd.f32 %v4625, %v4637
    %v4639 = vpop.f32.mrf.mxu0
    %4640 = vdwg.mxu0
    %4641 = vmatpush.bf16.msra.mxu0 %v3116
    %4642 = vmatpush.bf16.msra.mxu0 %v3108
    %4643 = vmatpush.bf16.msra.mxu0 %v3100
    %4644 = vmatpush.bf16.msra.mxu0 %v3092
    %4645 = vmatpush.bf16.msra.mxu0 %v3084
    %4646 = vmatpush.bf16.msra.mxu0 %v3076
    %4647 = vmatpush.bf16.msra.mxu0 %v3068
    %4648 = vmatpush.bf16.msra.mxu0 %v3060
    %4649 = vmatmul.bf16.gmra.mxu0 %v4351
    %v4650 = vpop.f32.mrf.mxu0
    %v4651 = vadd.f32 %v4638, %v4650
    %v4652 = vpop.f32.mrf.mxu0
    %4653 = vdwg.mxu0
    %4654 = vmatpush.bf16.msra.mxu0 %v3180
    %4655 = vmatpush.bf16.msra.mxu0 %v3172
    %4656 = vmatpush.bf16.msra.mxu0 %v3164
    %4657 = vmatpush.bf16.msra.mxu0 %v3156
    %4658 = vmatpush.bf16.msra.mxu0 %v3148
    %4659 = vmatpush.bf16.msra.mxu0 %v3140
    %4660 = vmatpush.bf16.msra.mxu0 %v3132
    %4661 = vmatpush.bf16.msra.mxu0 %v3124
    %4662 = vmatmul.bf16.gmra.mxu0 %v4352
    %v4663 = vpop.f32.mrf.mxu0
    %v4664 = vadd.f32 %v4651, %v4663
    %v4665 = vpop.f32.mrf.mxu0
    %4666 = vdwg.mxu0
    %4667 = vmatpush.bf16.msra.mxu0 %v2989
    %4668 = vmatpush.bf16.msra.mxu0 %v2981
    %4669 = vmatpush.bf16.msra.mxu0 %v2973
    %4670 = vmatpush.bf16.msra.mxu0 %v2965
    %4671 = vmatpush.bf16.msra.mxu0 %v2957
    %4672 = vmatpush.bf16.msra.mxu0 %v2949
    %4673 = vmatpush.bf16.msra.mxu0 %v2941
    %4674 = vmatpush.bf16.msra.mxu0 %v2933
    %4675 = vmatmul.bf16.gmra.mxu0 %v4344
    %v4676 = vpop.f32.mrf.mxu0
    %v4677 = vadd.f32 %v2149, %v4676
    %v4678 = vpop.f32.mrf.mxu0
    %4679 = vdwg.mxu0
    %4680 = vmatpush.bf16.msra.mxu0 %v3053
    %4681 = vmatpush.bf16.msra.mxu0 %v3045
    %4682 = vmatpush.bf16.msra.mxu0 %v3037
    %4683 = vmatpush.bf16.msra.mxu0 %v3029
    %4684 = vmatpush.bf16.msra.mxu0 %v3021
    %4685 = vmatpush.bf16.msra.mxu0 %v3013
    %4686 = vmatpush.bf16.msra.mxu0 %v3005
    %4687 = vmatpush.bf16.msra.mxu0 %v2997
    %4688 = vmatmul.bf16.gmra.mxu0 %v4345
    %v4689 = vpop.f32.mrf.mxu0
    %v4690 = vadd.f32 %v4677, %v4689
    %v4691 = vpop.f32.mrf.mxu0
    %4692 = vdwg.mxu0
    %4693 = vmatpush.bf16.msra.mxu0 %v3117
    %4694 = vmatpush.bf16.msra.mxu0 %v3109
    %4695 = vmatpush.bf16.msra.mxu0 %v3101
    %4696 = vmatpush.bf16.msra.mxu0 %v3093
    %4697 = vmatpush.bf16.msra.mxu0 %v3085
    %4698 = vmatpush.bf16.msra.mxu0 %v3077
    %4699 = vmatpush.bf16.msra.mxu0 %v3069
    %4700 = vmatpush.bf16.msra.mxu0 %v3061
    %4701 = vmatmul.bf16.gmra.mxu0 %v4351
    %v4702 = vpop.f32.mrf.mxu0
    %v4703 = vadd.f32 %v4690, %v4702
    %v4704 = vpop.f32.mrf.mxu0
    %4705 = vdwg.mxu0
    %4706 = vmatpush.bf16.msra.mxu0 %v3181
    %4707 = vmatpush.bf16.msra.mxu0 %v3173
    %4708 = vmatpush.bf16.msra.mxu0 %v3165
    %4709 = vmatpush.bf16.msra.mxu0 %v3157
    %4710 = vmatpush.bf16.msra.mxu0 %v3149
    %4711 = vmatpush.bf16.msra.mxu0 %v3141
    %4712 = vmatpush.bf16.msra.mxu0 %v3133
    %4713 = vmatpush.bf16.msra.mxu0 %v3125
    %4714 = vmatmul.bf16.gmra.mxu0 %v4352
    %v4715 = vpop.f32.mrf.mxu0
    %v4716 = vadd.f32 %v4703, %v4715
    %v4717 = vpop.f32.mrf.mxu0
    %4718 = vdwg.mxu0
    %4719 = vmatpush.bf16.msra.mxu0 %v2990
    %4720 = vmatpush.bf16.msra.mxu0 %v2982
    %4721 = vmatpush.bf16.msra.mxu0 %v2974
    %4722 = vmatpush.bf16.msra.mxu0 %v2966
    %4723 = vmatpush.bf16.msra.mxu0 %v2958
    %4724 = vmatpush.bf16.msra.mxu0 %v2950
    %4725 = vmatpush.bf16.msra.mxu0 %v2942
    %4726 = vmatpush.bf16.msra.mxu0 %v2934
    %4727 = vmatmul.bf16.gmra.mxu0 %v4344
    %v4728 = vpop.f32.mrf.mxu0
    %v4729 = vadd.f32 %v2150, %v4728
    %v4730 = vpop.f32.mrf.mxu0
    %4731 = vdwg.mxu0
    %4732 = vmatpush.bf16.msra.mxu0 %v3054
    %4733 = vmatpush.bf16.msra.mxu0 %v3046
    %4734 = vmatpush.bf16.msra.mxu0 %v3038
    %4735 = vmatpush.bf16.msra.mxu0 %v3030
    %4736 = vmatpush.bf16.msra.mxu0 %v3022
    %4737 = vmatpush.bf16.msra.mxu0 %v3014
    %4738 = vmatpush.bf16.msra.mxu0 %v3006
    %4739 = vmatpush.bf16.msra.mxu0 %v2998
    %4740 = vmatmul.bf16.gmra.mxu0 %v4345
    %v4741 = vpop.f32.mrf.mxu0
    %v4742 = vadd.f32 %v4729, %v4741
    %v4743 = vpop.f32.mrf.mxu0
    %4744 = vdwg.mxu0
    %4745 = vmatpush.bf16.msra.mxu0 %v3118
    %4746 = vmatpush.bf16.msra.mxu0 %v3110
    %4747 = vmatpush.bf16.msra.mxu0 %v3102
    %4748 = vmatpush.bf16.msra.mxu0 %v3094
    %4749 = vmatpush.bf16.msra.mxu0 %v3086
    %4750 = vmatpush.bf16.msra.mxu0 %v3078
    %4751 = vmatpush.bf16.msra.mxu0 %v3070
    %4752 = vmatpush.bf16.msra.mxu0 %v3062
    %4753 = vmatmul.bf16.gmra.mxu0 %v4351
    %v4754 = vpop.f32.mrf.mxu0
    %v4755 = vadd.f32 %v4742, %v4754
    %v4756 = vpop.f32.mrf.mxu0
    %4757 = vdwg.mxu0
    %4758 = vmatpush.bf16.msra.mxu0 %v3182
    %4759 = vmatpush.bf16.msra.mxu0 %v3174
    %4760 = vmatpush.bf16.msra.mxu0 %v3166
    %4761 = vmatpush.bf16.msra.mxu0 %v3158
    %4762 = vmatpush.bf16.msra.mxu0 %v3150
    %4763 = vmatpush.bf16.msra.mxu0 %v3142
    %4764 = vmatpush.bf16.msra.mxu0 %v3134
    %4765 = vmatpush.bf16.msra.mxu0 %v3126
    %4766 = vmatmul.bf16.gmra.mxu0 %v4352
    %v4767 = vpop.f32.mrf.mxu0
    %v4768 = vadd.f32 %v4755, %v4767
    %v4769 = vpop.f32.mrf.mxu0
    %4770 = vdwg.mxu0
    %v4771 = vxor.u32 %v4404, 2147483648
    %v4772 = vxor.u32 %v4456, 2147483648
    %v4773 = vmul.f32 %v4771, 1.442695
    %v4774 = vpow.pop %v4773
    %v4775 = vmul.f32 %v4772, 1.442695
    %v4776 = vpow.pop %v4775
    %v4777 = vadd.f32 %v4774, 1.0
    %v4778 = vadd.f32 %v4776, 1.0
    %v4779 = vrcp.pop %v4777
    %v4780 = vmul.f32 %v4777, %v4779
    %v4781 = vsub.f32 1.0, %v4780
    %v4782 = vmul.f32 %v4779, %v4781
    %v4783 = vadd.f32 %v4779, %v4782
    %vm4784 = vweird.f32 %v4777
    %vm4785 = vweird.f32 %v4779
    %vm4786 = vmor %vm4784, %vm4785
    %v4787 = vsel %vm4786, %v4779, %v4783
    %v4788 = vand.u32 2147483647, %v4777
    %vm4789 = vcmp.eq.f32.partialorder %v4788, 8.507059e+37
    %v4790 = vand.u32 %v4777, 2147483648
    %v4791 = vor.u32 1.1754944e-38, %v4790
    %v4792 = vsel %vm4789, %v4791, %v4787
    %v4793 = vmul.f32 1.0, %v4792
    %v4794 = vrcp.pop %v4778
    %v4795 = vmul.f32 %v4778, %v4794
    %v4796 = vsub.f32 1.0, %v4795
    %v4797 = vmul.f32 %v4794, %v4796
    %v4798 = vadd.f32 %v4794, %v4797
    %vm4799 = vweird.f32 %v4778
    %vm4800 = vweird.f32 %v4794
    %vm4801 = vmor %vm4799, %vm4800
    %v4802 = vsel %vm4801, %v4794, %v4798
    %v4803 = vand.u32 2147483647, %v4778
    %vm4804 = vcmp.eq.f32.partialorder %v4803, 8.507059e+37
    %v4805 = vand.u32 %v4778, 2147483648
    %v4806 = vor.u32 1.1754944e-38, %v4805
    %v4807 = vsel %vm4804, %v4806, %v4802
    %v4808 = vmul.f32 1.0, %v4807
    %v4809 = vxor.u32 %v4508, 2147483648
    %v4810 = vxor.u32 %v4560, 2147483648
    %v4811 = vmul.f32 %v4809, 1.442695
    %v4812 = vpow.pop %v4811
    %v4813 = vmul.f32 %v4810, 1.442695
    %v4814 = vpow.pop %v4813
    %v4815 = vadd.f32 %v4812, 1.0
    %v4816 = vadd.f32 %v4814, 1.0
    %v4817 = vrcp.pop %v4815
    %v4818 = vmul.f32 %v4815, %v4817
    %v4819 = vsub.f32 1.0, %v4818
    %v4820 = vmul.f32 %v4817, %v4819
    %v4821 = vadd.f32 %v4817, %v4820
    %vm4822 = vweird.f32 %v4815
    %vm4823 = vweird.f32 %v4817
    %vm4824 = vmor %vm4822, %vm4823
    %v4825 = vsel %vm4824, %v4817, %v4821
    %v4826 = vand.u32 2147483647, %v4815
    %vm4827 = vcmp.eq.f32.partialorder %v4826, 8.507059e+37
    %v4828 = vand.u32 %v4815, 2147483648
    %v4829 = vor.u32 1.1754944e-38, %v4828
    %v4830 = vsel %vm4827, %v4829, %v4825
    %v4831 = vmul.f32 1.0, %v4830
    %v4832 = vrcp.pop %v4816
    %v4833 = vmul.f32 %v4816, %v4832
    %v4834 = vsub.f32 1.0, %v4833
    %v4835 = vmul.f32 %v4832, %v4834
    %v4836 = vadd.f32 %v4832, %v4835
    %vm4837 = vweird.f32 %v4816
    %vm4838 = vweird.f32 %v4832
    %vm4839 = vmor %vm4837, %vm4838
    %v4840 = vsel %vm4839, %v4832, %v4836
    %v4841 = vand.u32 2147483647, %v4816
    %vm4842 = vcmp.eq.f32.partialorder %v4841, 8.507059e+37
    %v4843 = vand.u32 %v4816, 2147483648
    %v4844 = vor.u32 1.1754944e-38, %v4843
    %v4845 = vsel %vm4842, %v4844, %v4840
    %v4846 = vmul.f32 1.0, %v4845
    %v4847 = vtanh.pop %v4612
    %v4848 = vtanh.pop %v4664
    %v4849 = vxor.u32 %v4716, 2147483648
    %v4850 = vxor.u32 %v4768, 2147483648
    %v4851 = vmul.f32 %v4849, 1.442695
    %v4852 = vpow.pop %v4851
    %v4853 = vmul.f32 %v4850, 1.442695
    %v4854 = vpow.pop %v4853
    %v4855 = vadd.f32 %v4852, 1.0
    %v4856 = vadd.f32 %v4854, 1.0
    %v4857 = vrcp.pop %v4855
    %v4858 = vmul.f32 %v4855, %v4857
    %v4859 = vsub.f32 1.0, %v4858
    %v4860 = vmul.f32 %v4857, %v4859
    %v4861 = vadd.f32 %v4857, %v4860
    %vm4862 = vweird.f32 %v4855
    %vm4863 = vweird.f32 %v4857
    %vm4864 = vmor %vm4862, %vm4863
    %v4865 = vsel %vm4864, %v4857, %v4861
    %v4866 = vand.u32 2147483647, %v4855
    %vm4867 = vcmp.eq.f32.partialorder %v4866, 8.507059e+37
    %v4868 = vand.u32 %v4855, 2147483648
    %v4869 = vor.u32 1.1754944e-38, %v4868
    %v4870 = vsel %vm4867, %v4869, %v4865
    %v4871 = vmul.f32 1.0, %v4870
    %v4872 = vrcp.pop %v4856
    %v4873 = vmul.f32 %v4856, %v4872
    %v4874 = vsub.f32 1.0, %v4873
    %v4875 = vmul.f32 %v4872, %v4874
    %v4876 = vadd.f32 %v4872, %v4875
    %vm4877 = vweird.f32 %v4856
    %vm4878 = vweird.f32 %v4872
    %vm4879 = vmor %vm4877, %vm4878
    %v4880 = vsel %vm4879, %v4872, %v4876
    %v4881 = vand.u32 2147483647, %v4856
    %vm4882 = vcmp.eq.f32.partialorder %v4881, 8.507059e+37
    %v4883 = vand.u32 %v4856, 2147483648
    %v4884 = vor.u32 1.1754944e-38, %v4883
    %v4885 = vsel %vm4882, %v4884, %v4880
    %v4886 = vmul.f32 1.0, %v4885
    %v4887 = vmul.f32 %v4831, %v3987
    %v4888 = vmul.f32 %v4846, %v3988
    %v4889 = vmul.f32 %v4793, %v4847
    %v4890 = vmul.f32 %v4808, %v4848
    %v4891 = vadd.f32 %v4887, %v4889
    %v4892 = vadd.f32 %v4888, %v4890
    %v4893 = vtanh.pop %v4891
    %v4894 = vtanh.pop %v4892
    %v4895 = vmul.f32 %v4871, %v4893
    %v4896 = vmul.f32 %v4886, %v4894
    %v4897 = vsel %vm3994, %v4337, %v3981
    %v4898 = vsel %vm3994, %v4338, %v3982
    %v4899 = vsel %vm3994, %v4333, %v3983
    %v4900 = vsel %vm3994, %v4334, %v3984
    %v4901 = vsel %vm3994, %v4895, %v3985
    %v4902 = vsel %vm3994, %v4896, %v3986
    %v4903 = vsel %vm3994, %v4891, %v3987
    %v4904 = vsel %vm3994, %v4892, %v3988
    %vm4905 = vcmp.gt.s32.totalorder %v94, 2
    %v4906 = vsel %vm4905, 1, 0
    %4907 = vset.pattern.permute.xlu0 0
    %4908 = vperm.xlu0 %4907, %v4906
    %v4909 = vpop.permute.xlu0 %4908
    %vm4910 = vcmp.eq.s32.totalorder %v4909, 1
    %v4911 = vpack.c.bf16 %v4897, %v4897
    %v4912 = vpack.c.bf16 %v4898, %v4898
    %4913 = vmatpush.bf16.msra.mxu0 %v1592
    %4914 = vmatpush.bf16.msra.mxu0 %v1584
    %4915 = vmatpush.bf16.msra.mxu0 %v1576
    %4916 = vmatpush.bf16.msra.mxu0 %v1568
    %4917 = vmatpush.bf16.msra.mxu0 %v1560
    %4918 = vmatpush.bf16.msra.mxu0 %v1552
    %4919 = vmatpush.bf16.msra.mxu0 %v1544
    %4920 = vmatpush.bf16.msra.mxu0 %v1536
    %4921 = vmatmul.bf16.gmra.mxu0 %v4911
    %v4922 = vpop.f32.mrf.mxu0
    %v4923 = vadd.f32 0.0, %v4922
    %v4924 = vpop.f32.mrf.mxu0
    %4925 = vdwg.mxu0
    %4926 = vmatpush.bf16.msra.mxu0 %v1656
    %4927 = vmatpush.bf16.msra.mxu0 %v1648
    %4928 = vmatpush.bf16.msra.mxu0 %v1640
    %4929 = vmatpush.bf16.msra.mxu0 %v1632
    %4930 = vmatpush.bf16.msra.mxu0 %v1624
    %4931 = vmatpush.bf16.msra.mxu0 %v1616
    %4932 = vmatpush.bf16.msra.mxu0 %v1608
    %4933 = vmatpush.bf16.msra.mxu0 %v1600
    %4934 = vmatmul.bf16.gmra.mxu0 %v4912
    %v4935 = vpop.f32.mrf.mxu0
    %v4936 = vadd.f32 %v4923, %v4935
    %v4937 = vpop.f32.mrf.mxu0
    %4938 = vdwg.mxu0
    %4939 = vmatpush.bf16.msra.mxu0 %v1593
    %4940 = vmatpush.bf16.msra.mxu0 %v1585
    %4941 = vmatpush.bf16.msra.mxu0 %v1577
    %4942 = vmatpush.bf16.msra.mxu0 %v1569
    %4943 = vmatpush.bf16.msra.mxu0 %v1561
    %4944 = vmatpush.bf16.msra.mxu0 %v1553
    %4945 = vmatpush.bf16.msra.mxu0 %v1545
    %4946 = vmatpush.bf16.msra.mxu0 %v1537
    %4947 = vmatmul.bf16.gmra.mxu0 %v4911
    %v4948 = vpop.f32.mrf.mxu0
    %v4949 = vadd.f32 0.0, %v4948
    %v4950 = vpop.f32.mrf.mxu0
    %4951 = vdwg.mxu0
    %4952 = vmatpush.bf16.msra.mxu0 %v1657
    %4953 = vmatpush.bf16.msra.mxu0 %v1649
    %4954 = vmatpush.bf16.msra.mxu0 %v1641
    %4955 = vmatpush.bf16.msra.mxu0 %v1633
    %4956 = vmatpush.bf16.msra.mxu0 %v1625
    %4957 = vmatpush.bf16.msra.mxu0 %v1617
    %4958 = vmatpush.bf16.msra.mxu0 %v1609
    %4959 = vmatpush.bf16.msra.mxu0 %v1601
    %4960 = vmatmul.bf16.gmra.mxu0 %v4912
    %v4961 = vpop.f32.mrf.mxu0
    %v4962 = vadd.f32 %v4949, %v4961
    %v4963 = vpop.f32.mrf.mxu0
    %4964 = vdwg.mxu0
    %4965 = vmatpush.bf16.msra.mxu0 %v1594
    %4966 = vmatpush.bf16.msra.mxu0 %v1586
    %4967 = vmatpush.bf16.msra.mxu0 %v1578
    %4968 = vmatpush.bf16.msra.mxu0 %v1570
    %4969 = vmatpush.bf16.msra.mxu0 %v1562
    %4970 = vmatpush.bf16.msra.mxu0 %v1554
    %4971 = vmatpush.bf16.msra.mxu0 %v1546
    %4972 = vmatpush.bf16.msra.mxu0 %v1538
    %4973 = vmatmul.bf16.gmra.mxu0 %v4911
    %v4974 = vpop.f32.mrf.mxu0
    %v4975 = vadd.f32 0.0, %v4974
    %v4976 = vpop.f32.mrf.mxu0
    %4977 = vdwg.mxu0
    %4978 = vmatpush.bf16.msra.mxu0 %v1658
    %4979 = vmatpush.bf16.msra.mxu0 %v1650
    %4980 = vmatpush.bf16.msra.mxu0 %v1642
    %4981 = vmatpush.bf16.msra.mxu0 %v1634
    %4982 = vmatpush.bf16.msra.mxu0 %v1626
    %4983 = vmatpush.bf16.msra.mxu0 %v1618
    %4984 = vmatpush.bf16.msra.mxu0 %v1610
    %4985 = vmatpush.bf16.msra.mxu0 %v1602
    %4986 = vmatmul.bf16.gmra.mxu0 %v4912
    %v4987 = vpop.f32.mrf.mxu0
    %v4988 = vadd.f32 %v4975, %v4987
    %v4989 = vpop.f32.mrf.mxu0
    %4990 = vdwg.mxu0
    %4991 = vmatpush.bf16.msra.mxu0 %v1595
    %4992 = vmatpush.bf16.msra.mxu0 %v1587
    %4993 = vmatpush.bf16.msra.mxu0 %v1579
    %4994 = vmatpush.bf16.msra.mxu0 %v1571
    %4995 = vmatpush.bf16.msra.mxu0 %v1563
    %4996 = vmatpush.bf16.msra.mxu0 %v1555
    %4997 = vmatpush.bf16.msra.mxu0 %v1547
    %4998 = vmatpush.bf16.msra.mxu0 %v1539
    %4999 = vmatmul.bf16.gmra.mxu0 %v4911
    %v5000 = vpop.f32.mrf.mxu0
    %v5001 = vadd.f32 0.0, %v5000
    %v5002 = vpop.f32.mrf.mxu0
    %5003 = vdwg.mxu0
    %5004 = vmatpush.bf16.msra.mxu0 %v1659
    %5005 = vmatpush.bf16.msra.mxu0 %v1651
    %5006 = vmatpush.bf16.msra.mxu0 %v1643
    %5007 = vmatpush.bf16.msra.mxu0 %v1635
    %5008 = vmatpush.bf16.msra.mxu0 %v1627
    %5009 = vmatpush.bf16.msra.mxu0 %v1619
    %5010 = vmatpush.bf16.msra.mxu0 %v1611
    %5011 = vmatpush.bf16.msra.mxu0 %v1603
    %5012 = vmatmul.bf16.gmra.mxu0 %v4912
    %v5013 = vpop.f32.mrf.mxu0
    %v5014 = vadd.f32 %v5001, %v5013
    %v5015 = vpop.f32.mrf.mxu0
    %5016 = vdwg.mxu0
    %5017 = vmatpush.bf16.msra.mxu0 %v1596
    %5018 = vmatpush.bf16.msra.mxu0 %v1588
    %5019 = vmatpush.bf16.msra.mxu0 %v1580
    %5020 = vmatpush.bf16.msra.mxu0 %v1572
    %5021 = vmatpush.bf16.msra.mxu0 %v1564
    %5022 = vmatpush.bf16.msra.mxu0 %v1556
    %5023 = vmatpush.bf16.msra.mxu0 %v1548
    %5024 = vmatpush.bf16.msra.mxu0 %v1540
    %5025 = vmatmul.bf16.gmra.mxu0 %v4911
    %v5026 = vpop.f32.mrf.mxu0
    %v5027 = vadd.f32 0.0, %v5026
    %v5028 = vpop.f32.mrf.mxu0
    %5029 = vdwg.mxu0
    %5030 = vmatpush.bf16.msra.mxu0 %v1660
    %5031 = vmatpush.bf16.msra.mxu0 %v1652
    %5032 = vmatpush.bf16.msra.mxu0 %v1644
    %5033 = vmatpush.bf16.msra.mxu0 %v1636
    %5034 = vmatpush.bf16.msra.mxu0 %v1628
    %5035 = vmatpush.bf16.msra.mxu0 %v1620
    %5036 = vmatpush.bf16.msra.mxu0 %v1612
    %5037 = vmatpush.bf16.msra.mxu0 %v1604
    %5038 = vmatmul.bf16.gmra.mxu0 %v4912
    %v5039 = vpop.f32.mrf.mxu0
    %v5040 = vadd.f32 %v5027, %v5039
    %v5041 = vpop.f32.mrf.mxu0
    %5042 = vdwg.mxu0
    %5043 = vmatpush.bf16.msra.mxu0 %v1597
    %5044 = vmatpush.bf16.msra.mxu0 %v1589
    %5045 = vmatpush.bf16.msra.mxu0 %v1581
    %5046 = vmatpush.bf16.msra.mxu0 %v1573
    %5047 = vmatpush.bf16.msra.mxu0 %v1565
    %5048 = vmatpush.bf16.msra.mxu0 %v1557
    %5049 = vmatpush.bf16.msra.mxu0 %v1549
    %5050 = vmatpush.bf16.msra.mxu0 %v1541
    %5051 = vmatmul.bf16.gmra.mxu0 %v4911
    %v5052 = vpop.f32.mrf.mxu0
    %v5053 = vadd.f32 0.0, %v5052
    %v5054 = vpop.f32.mrf.mxu0
    %5055 = vdwg.mxu0
    %5056 = vmatpush.bf16.msra.mxu0 %v1661
    %5057 = vmatpush.bf16.msra.mxu0 %v1653
    %5058 = vmatpush.bf16.msra.mxu0 %v1645
    %5059 = vmatpush.bf16.msra.mxu0 %v1637
    %5060 = vmatpush.bf16.msra.mxu0 %v1629
    %5061 = vmatpush.bf16.msra.mxu0 %v1621
    %5062 = vmatpush.bf16.msra.mxu0 %v1613
    %5063 = vmatpush.bf16.msra.mxu0 %v1605
    %5064 = vmatmul.bf16.gmra.mxu0 %v4912
    %v5065 = vpop.f32.mrf.mxu0
    %v5066 = vadd.f32 %v5053, %v5065
    %v5067 = vpop.f32.mrf.mxu0
    %5068 = vdwg.mxu0
    %5069 = vmatpush.bf16.msra.mxu0 %v1598
    %5070 = vmatpush.bf16.msra.mxu0 %v1590
    %5071 = vmatpush.bf16.msra.mxu0 %v1582
    %5072 = vmatpush.bf16.msra.mxu0 %v1574
    %5073 = vmatpush.bf16.msra.mxu0 %v1566
    %5074 = vmatpush.bf16.msra.mxu0 %v1558
    %5075 = vmatpush.bf16.msra.mxu0 %v1550
    %5076 = vmatpush.bf16.msra.mxu0 %v1542
    %5077 = vmatmul.bf16.gmra.mxu0 %v4911
    %v5078 = vpop.f32.mrf.mxu0
    %v5079 = vadd.f32 0.0, %v5078
    %v5080 = vpop.f32.mrf.mxu0
    %5081 = vdwg.mxu0
    %5082 = vmatpush.bf16.msra.mxu0 %v1662
    %5083 = vmatpush.bf16.msra.mxu0 %v1654
    %5084 = vmatpush.bf16.msra.mxu0 %v1646
    %5085 = vmatpush.bf16.msra.mxu0 %v1638
    %5086 = vmatpush.bf16.msra.mxu0 %v1630
    %5087 = vmatpush.bf16.msra.mxu0 %v1622
    %5088 = vmatpush.bf16.msra.mxu0 %v1614
    %5089 = vmatpush.bf16.msra.mxu0 %v1606
    %5090 = vmatmul.bf16.gmra.mxu0 %v4912
    %v5091 = vpop.f32.mrf.mxu0
    %v5092 = vadd.f32 %v5079, %v5091
    %v5093 = vpop.f32.mrf.mxu0
    %5094 = vdwg.mxu0
    %5095 = vmatpush.bf16.msra.mxu0 %v1599
    %5096 = vmatpush.bf16.msra.mxu0 %v1591
    %5097 = vmatpush.bf16.msra.mxu0 %v1583
    %5098 = vmatpush.bf16.msra.mxu0 %v1575
    %5099 = vmatpush.bf16.msra.mxu0 %v1567
    %5100 = vmatpush.bf16.msra.mxu0 %v1559
    %5101 = vmatpush.bf16.msra.mxu0 %v1551
    %5102 = vmatpush.bf16.msra.mxu0 %v1543
    %5103 = vmatmul.bf16.gmra.mxu0 %v4911
    %v5104 = vpop.f32.mrf.mxu0
    %v5105 = vadd.f32 0.0, %v5104
    %v5106 = vpop.f32.mrf.mxu0
    %5107 = vdwg.mxu0
    %5108 = vmatpush.bf16.msra.mxu0 %v1663
    %5109 = vmatpush.bf16.msra.mxu0 %v1655
    %5110 = vmatpush.bf16.msra.mxu0 %v1647
    %5111 = vmatpush.bf16.msra.mxu0 %v1639
    %5112 = vmatpush.bf16.msra.mxu0 %v1631
    %5113 = vmatpush.bf16.msra.mxu0 %v1623
    %5114 = vmatpush.bf16.msra.mxu0 %v1615
    %5115 = vmatpush.bf16.msra.mxu0 %v1607
    %5116 = vmatmul.bf16.gmra.mxu0 %v4912
    %v5117 = vpop.f32.mrf.mxu0
    %v5118 = vadd.f32 %v5105, %v5117
    %v5119 = vpop.f32.mrf.mxu0
    %5120 = vdwg.mxu0
    %v5121 = vadd.f32 %v544, %v4936
    %v5122 = vadd.f32 %v573, %v4962
    %v5123 = vadd.f32 %v602, %v4988
    %v5124 = vadd.f32 %v631, %v5014
    %v5125 = vadd.f32 %v660, %v5040
    %v5126 = vadd.f32 %v689, %v5066
    %v5127 = vadd.f32 %v718, %v5092
    %v5128 = vadd.f32 %v747, %v5118
    %v5129 = vxor.u32 %v5121, 2147483648
    %v5130 = vxor.u32 %v5122, 2147483648
    %v5131 = vmul.f32 %v5129, 1.442695
    %v5132 = vpow.pop %v5131
    %v5133 = vmul.f32 %v5130, 1.442695
    %v5134 = vpow.pop %v5133
    %v5135 = vadd.f32 %v5132, 1.0
    %v5136 = vadd.f32 %v5134, 1.0
    %v5137 = vrcp.pop %v5135
    %v5138 = vmul.f32 %v5135, %v5137
    %v5139 = vsub.f32 1.0, %v5138
    %v5140 = vmul.f32 %v5137, %v5139
    %v5141 = vadd.f32 %v5137, %v5140
    %vm5142 = vweird.f32 %v5135
    %vm5143 = vweird.f32 %v5137
    %vm5144 = vmor %vm5142, %vm5143
    %v5145 = vsel %vm5144, %v5137, %v5141
    %v5146 = vand.u32 2147483647, %v5135
    %vm5147 = vcmp.eq.f32.partialorder %v5146, 8.507059e+37
    %v5148 = vand.u32 %v5135, 2147483648
    %v5149 = vor.u32 1.1754944e-38, %v5148
    %v5150 = vsel %vm5147, %v5149, %v5145
    %v5151 = vmul.f32 1.0, %v5150
    %v5152 = vrcp.pop %v5136
    %v5153 = vmul.f32 %v5136, %v5152
    %v5154 = vsub.f32 1.0, %v5153
    %v5155 = vmul.f32 %v5152, %v5154
    %v5156 = vadd.f32 %v5152, %v5155
    %vm5157 = vweird.f32 %v5136
    %vm5158 = vweird.f32 %v5152
    %vm5159 = vmor %vm5157, %vm5158
    %v5160 = vsel %vm5159, %v5152, %v5156
    %v5161 = vand.u32 2147483647, %v5136
    %vm5162 = vcmp.eq.f32.partialorder %v5161, 8.507059e+37
    %v5163 = vand.u32 %v5136, 2147483648
    %v5164 = vor.u32 1.1754944e-38, %v5163
    %v5165 = vsel %vm5162, %v5164, %v5160
    %v5166 = vmul.f32 1.0, %v5165
    %v5167 = vxor.u32 %v5123, 2147483648
    %v5168 = vxor.u32 %v5124, 2147483648
    %v5169 = vmul.f32 %v5167, 1.442695
    %v5170 = vpow.pop %v5169
    %v5171 = vmul.f32 %v5168, 1.442695
    %v5172 = vpow.pop %v5171
    %v5173 = vadd.f32 %v5170, 1.0
    %v5174 = vadd.f32 %v5172, 1.0
    %v5175 = vrcp.pop %v5173
    %v5176 = vmul.f32 %v5173, %v5175
    %v5177 = vsub.f32 1.0, %v5176
    %v5178 = vmul.f32 %v5175, %v5177
    %v5179 = vadd.f32 %v5175, %v5178
    %vm5180 = vweird.f32 %v5173
    %vm5181 = vweird.f32 %v5175
    %vm5182 = vmor %vm5180, %vm5181
    %v5183 = vsel %vm5182, %v5175, %v5179
    %v5184 = vand.u32 2147483647, %v5173
    %vm5185 = vcmp.eq.f32.partialorder %v5184, 8.507059e+37
    %v5186 = vand.u32 %v5173, 2147483648
    %v5187 = vor.u32 1.1754944e-38, %v5186
    %v5188 = vsel %vm5185, %v5187, %v5183
    %v5189 = vmul.f32 1.0, %v5188
    %v5190 = vrcp.pop %v5174
    %v5191 = vmul.f32 %v5174, %v5190
    %v5192 = vsub.f32 1.0, %v5191
    %v5193 = vmul.f32 %v5190, %v5192
    %v5194 = vadd.f32 %v5190, %v5193
    %vm5195 = vweird.f32 %v5174
    %vm5196 = vweird.f32 %v5190
    %vm5197 = vmor %vm5195, %vm5196
    %v5198 = vsel %vm5197, %v5190, %v5194
    %v5199 = vand.u32 2147483647, %v5174
    %vm5200 = vcmp.eq.f32.partialorder %v5199, 8.507059e+37
    %v5201 = vand.u32 %v5174, 2147483648
    %v5202 = vor.u32 1.1754944e-38, %v5201
    %v5203 = vsel %vm5200, %v5202, %v5198
    %v5204 = vmul.f32 1.0, %v5203
    %v5205 = vtanh.pop %v5125
    %v5206 = vtanh.pop %v5126
    %v5207 = vxor.u32 %v5127, 2147483648
    %v5208 = vxor.u32 %v5128, 2147483648
    %v5209 = vmul.f32 %v5207, 1.442695
    %v5210 = vpow.pop %v5209
    %v5211 = vmul.f32 %v5208, 1.442695
    %v5212 = vpow.pop %v5211
    %v5213 = vadd.f32 %v5210, 1.0
    %v5214 = vadd.f32 %v5212, 1.0
    %v5215 = vrcp.pop %v5213
    %v5216 = vmul.f32 %v5213, %v5215
    %v5217 = vsub.f32 1.0, %v5216
    %v5218 = vmul.f32 %v5215, %v5217
    %v5219 = vadd.f32 %v5215, %v5218
    %vm5220 = vweird.f32 %v5213
    %vm5221 = vweird.f32 %v5215
    %vm5222 = vmor %vm5220, %vm5221
    %v5223 = vsel %vm5222, %v5215, %v5219
    %v5224 = vand.u32 2147483647, %v5213
    %vm5225 = vcmp.eq.f32.partialorder %v5224, 8.507059e+37
    %v5226 = vand.u32 %v5213, 2147483648
    %v5227 = vor.u32 1.1754944e-38, %v5226
    %v5228 = vsel %vm5225, %v5227, %v5223
    %v5229 = vmul.f32 1.0, %v5228
    %v5230 = vrcp.pop %v5214
    %v5231 = vmul.f32 %v5214, %v5230
    %v5232 = vsub.f32 1.0, %v5231
    %v5233 = vmul.f32 %v5230, %v5232
    %v5234 = vadd.f32 %v5230, %v5233
    %vm5235 = vweird.f32 %v5214
    %vm5236 = vweird.f32 %v5230
    %vm5237 = vmor %vm5235, %vm5236
    %v5238 = vsel %vm5237, %v5230, %v5234
    %v5239 = vand.u32 2147483647, %v5214
    %vm5240 = vcmp.eq.f32.partialorder %v5239, 8.507059e+37
    %v5241 = vand.u32 %v5214, 2147483648
    %v5242 = vor.u32 1.1754944e-38, %v5241
    %v5243 = vsel %vm5240, %v5242, %v5238
    %v5244 = vmul.f32 1.0, %v5243
    %v5245 = vmul.f32 %v5189, %v4899
    %v5246 = vmul.f32 %v5204, %v4900
    %v5247 = vmul.f32 %v5151, %v5205
    %v5248 = vmul.f32 %v5166, %v5206
    %v5249 = vadd.f32 %v5245, %v5247
    %v5250 = vadd.f32 %v5246, %v5248
    %v5251 = vtanh.pop %v5249
    %v5252 = vtanh.pop %v5250
    %v5253 = vmul.f32 %v5229, %v5251
    %v5254 = vmul.f32 %v5244, %v5252
    %v5255 = vpack.c.bf16 %v5254, %v5253
    %v5256 = vpack.c.bf16 %v4902, %v4901
    %v5258 = vunpack.c.l.b16 %v5255
    %v5259 = vunpack.c.h.b16 %v5255
    %v5260 = vpack.c.b16 %v5258, %v5258
    %v5261 = vpack.c.b16 %v5259, %v5259
    %v5265 = vunpack.c.l.b16 %v5256
    %v5266 = vunpack.c.h.b16 %v5256
    %v5267 = vpack.c.b16 %v5265, %v5265
    %v5268 = vpack.c.b16 %v5266, %v5266
    %5271 = vmatpush.bf16.msra.mxu0 %v2983
    %5272 = vmatpush.bf16.msra.mxu0 %v2975
    %5273 = vmatpush.bf16.msra.mxu0 %v2967
    %5274 = vmatpush.bf16.msra.mxu0 %v2959
    %5275 = vmatpush.bf16.msra.mxu0 %v2951
    %5276 = vmatpush.bf16.msra.mxu0 %v2943
    %5277 = vmatpush.bf16.msra.mxu0 %v2935
    %5278 = vmatpush.bf16.msra.mxu0 %v2927
    %5279 = vmatmul.bf16.gmra.mxu0 %v5260
    %v5280 = vpop.f32.mrf.mxu0
    %v5281 = vadd.f32 %v2143, %v5280
    %v5282 = vpop.f32.mrf.mxu0
    %5283 = vdwg.mxu0
    %5284 = vmatpush.bf16.msra.mxu0 %v3047
    %5285 = vmatpush.bf16.msra.mxu0 %v3039
    %5286 = vmatpush.bf16.msra.mxu0 %v3031
    %5287 = vmatpush.bf16.msra.mxu0 %v3023
    %5288 = vmatpush.bf16.msra.mxu0 %v3015
    %5289 = vmatpush.bf16.msra.mxu0 %v3007
    %5290 = vmatpush.bf16.msra.mxu0 %v2999
    %5291 = vmatpush.bf16.msra.mxu0 %v2991
    %5292 = vmatmul.bf16.gmra.mxu0 %v5261
    %v5293 = vpop.f32.mrf.mxu0
    %v5294 = vadd.f32 %v5281, %v5293
    %v5295 = vpop.f32.mrf.mxu0
    %5296 = vdwg.mxu0
    %5297 = vmatpush.bf16.msra.mxu0 %v3111
    %5298 = vmatpush.bf16.msra.mxu0 %v3103
    %5299 = vmatpush.bf16.msra.mxu0 %v3095
    %5300 = vmatpush.bf16.msra.mxu0 %v3087
    %5301 = vmatpush.bf16.msra.mxu0 %v3079
    %5302 = vmatpush.bf16.msra.mxu0 %v3071
    %5303 = vmatpush.bf16.msra.mxu0 %v3063
    %5304 = vmatpush.bf16.msra.mxu0 %v3055
    %5305 = vmatmul.bf16.gmra.mxu0 %v5267
    %v5306 = vpop.f32.mrf.mxu0
    %v5307 = vadd.f32 %v5294, %v5306
    %v5308 = vpop.f32.mrf.mxu0
    %5309 = vdwg.mxu0
    %5310 = vmatpush.bf16.msra.mxu0 %v3175
    %5311 = vmatpush.bf16.msra.mxu0 %v3167
    %5312 = vmatpush.bf16.msra.mxu0 %v3159
    %5313 = vmatpush.bf16.msra.mxu0 %v3151
    %5314 = vmatpush.bf16.msra.mxu0 %v3143
    %5315 = vmatpush.bf16.msra.mxu0 %v3135
    %5316 = vmatpush.bf16.msra.mxu0 %v3127
    %5317 = vmatpush.bf16.msra.mxu0 %v3119
    %5318 = vmatmul.bf16.gmra.mxu0 %v5268
    %v5319 = vpop.f32.mrf.mxu0
    %v5320 = vadd.f32 %v5307, %v5319
    %v5321 = vpop.f32.mrf.mxu0
    %5322 = vdwg.mxu0
    %5323 = vmatpush.bf16.msra.mxu0 %v2984
    %5324 = vmatpush.bf16.msra.mxu0 %v2976
    %5325 = vmatpush.bf16.msra.mxu0 %v2968
    %5326 = vmatpush.bf16.msra.mxu0 %v2960
    %5327 = vmatpush.bf16.msra.mxu0 %v2952
    %5328 = vmatpush.bf16.msra.mxu0 %v2944
    %5329 = vmatpush.bf16.msra.mxu0 %v2936
    %5330 = vmatpush.bf16.msra.mxu0 %v2928
    %5331 = vmatmul.bf16.gmra.mxu0 %v5260
    %v5332 = vpop.f32.mrf.mxu0
    %v5333 = vadd.f32 %v2144, %v5332
    %v5334 = vpop.f32.mrf.mxu0
    %5335 = vdwg.mxu0
    %5336 = vmatpush.bf16.msra.mxu0 %v3048
    %5337 = vmatpush.bf16.msra.mxu0 %v3040
    %5338 = vmatpush.bf16.msra.mxu0 %v3032
    %5339 = vmatpush.bf16.msra.mxu0 %v3024
    %5340 = vmatpush.bf16.msra.mxu0 %v3016
    %5341 = vmatpush.bf16.msra.mxu0 %v3008
    %5342 = vmatpush.bf16.msra.mxu0 %v3000
    %5343 = vmatpush.bf16.msra.mxu0 %v2992
    %5344 = vmatmul.bf16.gmra.mxu0 %v5261
    %v5345 = vpop.f32.mrf.mxu0
    %v5346 = vadd.f32 %v5333, %v5345
    %v5347 = vpop.f32.mrf.mxu0
    %5348 = vdwg.mxu0
    %5349 = vmatpush.bf16.msra.mxu0 %v3112
    %5350 = vmatpush.bf16.msra.mxu0 %v3104
    %5351 = vmatpush.bf16.msra.mxu0 %v3096
    %5352 = vmatpush.bf16.msra.mxu0 %v3088
    %5353 = vmatpush.bf16.msra.mxu0 %v3080
    %5354 = vmatpush.bf16.msra.mxu0 %v3072
    %5355 = vmatpush.bf16.msra.mxu0 %v3064
    %5356 = vmatpush.bf16.msra.mxu0 %v3056
    %5357 = vmatmul.bf16.gmra.mxu0 %v5267
    %v5358 = vpop.f32.mrf.mxu0
    %v5359 = vadd.f32 %v5346, %v5358
    %v5360 = vpop.f32.mrf.mxu0
    %5361 = vdwg.mxu0
    %5362 = vmatpush.bf16.msra.mxu0 %v3176
    %5363 = vmatpush.bf16.msra.mxu0 %v3168
    %5364 = vmatpush.bf16.msra.mxu0 %v3160
    %5365 = vmatpush.bf16.msra.mxu0 %v3152
    %5366 = vmatpush.bf16.msra.mxu0 %v3144
    %5367 = vmatpush.bf16.msra.mxu0 %v3136
    %5368 = vmatpush.bf16.msra.mxu0 %v3128
    %5369 = vmatpush.bf16.msra.mxu0 %v3120
    %5370 = vmatmul.bf16.gmra.mxu0 %v5268
    %v5371 = vpop.f32.mrf.mxu0
    %v5372 = vadd.f32 %v5359, %v5371
    %v5373 = vpop.f32.mrf.mxu0
    %5374 = vdwg.mxu0
    %5375 = vmatpush.bf16.msra.mxu0 %v2985
    %5376 = vmatpush.bf16.msra.mxu0 %v2977
    %5377 = vmatpush.bf16.msra.mxu0 %v2969
    %5378 = vmatpush.bf16.msra.mxu0 %v2961
    %5379 = vmatpush.bf16.msra.mxu0 %v2953
    %5380 = vmatpush.bf16.msra.mxu0 %v2945
    %5381 = vmatpush.bf16.msra.mxu0 %v2937
    %5382 = vmatpush.bf16.msra.mxu0 %v2929
    %5383 = vmatmul.bf16.gmra.mxu0 %v5260
    %v5384 = vpop.f32.mrf.mxu0
    %v5385 = vadd.f32 %v2145, %v5384
    %v5386 = vpop.f32.mrf.mxu0
    %5387 = vdwg.mxu0
    %5388 = vmatpush.bf16.msra.mxu0 %v3049
    %5389 = vmatpush.bf16.msra.mxu0 %v3041
    %5390 = vmatpush.bf16.msra.mxu0 %v3033
    %5391 = vmatpush.bf16.msra.mxu0 %v3025
    %5392 = vmatpush.bf16.msra.mxu0 %v3017
    %5393 = vmatpush.bf16.msra.mxu0 %v3009
    %5394 = vmatpush.bf16.msra.mxu0 %v3001
    %5395 = vmatpush.bf16.msra.mxu0 %v2993
    %5396 = vmatmul.bf16.gmra.mxu0 %v5261
    %v5397 = vpop.f32.mrf.mxu0
    %v5398 = vadd.f32 %v5385, %v5397
    %v5399 = vpop.f32.mrf.mxu0
    %5400 = vdwg.mxu0
    %5401 = vmatpush.bf16.msra.mxu0 %v3113
    %5402 = vmatpush.bf16.msra.mxu0 %v3105
    %5403 = vmatpush.bf16.msra.mxu0 %v3097
    %5404 = vmatpush.bf16.msra.mxu0 %v3089
    %5405 = vmatpush.bf16.msra.mxu0 %v3081
    %5406 = vmatpush.bf16.msra.mxu0 %v3073
    %5407 = vmatpush.bf16.msra.mxu0 %v3065
    %5408 = vmatpush.bf16.msra.mxu0 %v3057
    %5409 = vmatmul.bf16.gmra.mxu0 %v5267
    %v5410 = vpop.f32.mrf.mxu0
    %v5411 = vadd.f32 %v5398, %v5410
    %v5412 = vpop.f32.mrf.mxu0
    %5413 = vdwg.mxu0
    %5414 = vmatpush.bf16.msra.mxu0 %v3177
    %5415 = vmatpush.bf16.msra.mxu0 %v3169
    %5416 = vmatpush.bf16.msra.mxu0 %v3161
    %5417 = vmatpush.bf16.msra.mxu0 %v3153
    %5418 = vmatpush.bf16.msra.mxu0 %v3145
    %5419 = vmatpush.bf16.msra.mxu0 %v3137
    %5420 = vmatpush.bf16.msra.mxu0 %v3129
    %5421 = vmatpush.bf16.msra.mxu0 %v3121
    %5422 = vmatmul.bf16.gmra.mxu0 %v5268
    %v5423 = vpop.f32.mrf.mxu0
    %v5424 = vadd.f32 %v5411, %v5423
    %v5425 = vpop.f32.mrf.mxu0
    %5426 = vdwg.mxu0
    %5427 = vmatpush.bf16.msra.mxu0 %v2986
    %5428 = vmatpush.bf16.msra.mxu0 %v2978
    %5429 = vmatpush.bf16.msra.mxu0 %v2970
    %5430 = vmatpush.bf16.msra.mxu0 %v2962
    %5431 = vmatpush.bf16.msra.mxu0 %v2954
    %5432 = vmatpush.bf16.msra.mxu0 %v2946
    %5433 = vmatpush.bf16.msra.mxu0 %v2938
    %5434 = vmatpush.bf16.msra.mxu0 %v2930
    %5435 = vmatmul.bf16.gmra.mxu0 %v5260
    %v5436 = vpop.f32.mrf.mxu0
    %v5437 = vadd.f32 %v2146, %v5436
    %v5438 = vpop.f32.mrf.mxu0
    %5439 = vdwg.mxu0
    %5440 = vmatpush.bf16.msra.mxu0 %v3050
    %5441 = vmatpush.bf16.msra.mxu0 %v3042
    %5442 = vmatpush.bf16.msra.mxu0 %v3034
    %5443 = vmatpush.bf16.msra.mxu0 %v3026
    %5444 = vmatpush.bf16.msra.mxu0 %v3018
    %5445 = vmatpush.bf16.msra.mxu0 %v3010
    %5446 = vmatpush.bf16.msra.mxu0 %v3002
    %5447 = vmatpush.bf16.msra.mxu0 %v2994
    %5448 = vmatmul.bf16.gmra.mxu0 %v5261
    %v5449 = vpop.f32.mrf.mxu0
    %v5450 = vadd.f32 %v5437, %v5449
    %v5451 = vpop.f32.mrf.mxu0
    %5452 = vdwg.mxu0
    %5453 = vmatpush.bf16.msra.mxu0 %v3114
    %5454 = vmatpush.bf16.msra.mxu0 %v3106
    %5455 = vmatpush.bf16.msra.mxu0 %v3098
    %5456 = vmatpush.bf16.msra.mxu0 %v3090
    %5457 = vmatpush.bf16.msra.mxu0 %v3082
    %5458 = vmatpush.bf16.msra.mxu0 %v3074
    %5459 = vmatpush.bf16.msra.mxu0 %v3066
    %5460 = vmatpush.bf16.msra.mxu0 %v3058
    %5461 = vmatmul.bf16.gmra.mxu0 %v5267
    %v5462 = vpop.f32.mrf.mxu0
    %v5463 = vadd.f32 %v5450, %v5462
    %v5464 = vpop.f32.mrf.mxu0
    %5465 = vdwg.mxu0
    %5466 = vmatpush.bf16.msra.mxu0 %v3178
    %5467 = vmatpush.bf16.msra.mxu0 %v3170
    %5468 = vmatpush.bf16.msra.mxu0 %v3162
    %5469 = vmatpush.bf16.msra.mxu0 %v3154
    %5470 = vmatpush.bf16.msra.mxu0 %v3146
    %5471 = vmatpush.bf16.msra.mxu0 %v3138
    %5472 = vmatpush.bf16.msra.mxu0 %v3130
    %5473 = vmatpush.bf16.msra.mxu0 %v3122
    %5474 = vmatmul.bf16.gmra.mxu0 %v5268
    %v5475 = vpop.f32.mrf.mxu0
    %v5476 = vadd.f32 %v5463, %v5475
    %v5477 = vpop.f32.mrf.mxu0
    %5478 = vdwg.mxu0
    %5479 = vmatpush.bf16.msra.mxu0 %v2987
    %5480 = vmatpush.bf16.msra.mxu0 %v2979
    %5481 = vmatpush.bf16.msra.mxu0 %v2971
    %5482 = vmatpush.bf16.msra.mxu0 %v2963
    %5483 = vmatpush.bf16.msra.mxu0 %v2955
    %5484 = vmatpush.bf16.msra.mxu0 %v2947
    %5485 = vmatpush.bf16.msra.mxu0 %v2939
    %5486 = vmatpush.bf16.msra.mxu0 %v2931
    %5487 = vmatmul.bf16.gmra.mxu0 %v5260
    %v5488 = vpop.f32.mrf.mxu0
    %v5489 = vadd.f32 %v2147, %v5488
    %v5490 = vpop.f32.mrf.mxu0
    %5491 = vdwg.mxu0
    %5492 = vmatpush.bf16.msra.mxu0 %v3051
    %5493 = vmatpush.bf16.msra.mxu0 %v3043
    %5494 = vmatpush.bf16.msra.mxu0 %v3035
    %5495 = vmatpush.bf16.msra.mxu0 %v3027
    %5496 = vmatpush.bf16.msra.mxu0 %v3019
    %5497 = vmatpush.bf16.msra.mxu0 %v3011
    %5498 = vmatpush.bf16.msra.mxu0 %v3003
    %5499 = vmatpush.bf16.msra.mxu0 %v2995
    %5500 = vmatmul.bf16.gmra.mxu0 %v5261
    %v5501 = vpop.f32.mrf.mxu0
    %v5502 = vadd.f32 %v5489, %v5501
    %v5503 = vpop.f32.mrf.mxu0
    %5504 = vdwg.mxu0
    %5505 = vmatpush.bf16.msra.mxu0 %v3115
    %5506 = vmatpush.bf16.msra.mxu0 %v3107
    %5507 = vmatpush.bf16.msra.mxu0 %v3099
    %5508 = vmatpush.bf16.msra.mxu0 %v3091
    %5509 = vmatpush.bf16.msra.mxu0 %v3083
    %5510 = vmatpush.bf16.msra.mxu0 %v3075
    %5511 = vmatpush.bf16.msra.mxu0 %v3067
    %5512 = vmatpush.bf16.msra.mxu0 %v3059
    %5513 = vmatmul.bf16.gmra.mxu0 %v5267
    %v5514 = vpop.f32.mrf.mxu0
    %v5515 = vadd.f32 %v5502, %v5514
    %v5516 = vpop.f32.mrf.mxu0
    %5517 = vdwg.mxu0
    %5518 = vmatpush.bf16.msra.mxu0 %v3179
    %5519 = vmatpush.bf16.msra.mxu0 %v3171
    %5520 = vmatpush.bf16.msra.mxu0 %v3163
    %5521 = vmatpush.bf16.msra.mxu0 %v3155
    %5522 = vmatpush.bf16.msra.mxu0 %v3147
    %5523 = vmatpush.bf16.msra.mxu0 %v3139
    %5524 = vmatpush.bf16.msra.mxu0 %v3131
    %5525 = vmatpush.bf16.msra.mxu0 %v3123
    %5526 = vmatmul.bf16.gmra.mxu0 %v5268
    %v5527 = vpop.f32.mrf.mxu0
    %v5528 = vadd.f32 %v5515, %v5527
    %v5529 = vpop.f32.mrf.mxu0
    %5530 = vdwg.mxu0
    %5531 = vmatpush.bf16.msra.mxu0 %v2988
    %5532 = vmatpush.bf16.msra.mxu0 %v2980
    %5533 = vmatpush.bf16.msra.mxu0 %v2972
    %5534 = vmatpush.bf16.msra.mxu0 %v2964
    %5535 = vmatpush.bf16.msra.mxu0 %v2956
    %5536 = vmatpush.bf16.msra.mxu0 %v2948
    %5537 = vmatpush.bf16.msra.mxu0 %v2940
    %5538 = vmatpush.bf16.msra.mxu0 %v2932
    %5539 = vmatmul.bf16.gmra.mxu0 %v5260
    %v5540 = vpop.f32.mrf.mxu0
    %v5541 = vadd.f32 %v2148, %v5540
    %v5542 = vpop.f32.mrf.mxu0
    %5543 = vdwg.mxu0
    %5544 = vmatpush.bf16.msra.mxu0 %v3052
    %5545 = vmatpush.bf16.msra.mxu0 %v3044
    %5546 = vmatpush.bf16.msra.mxu0 %v3036
    %5547 = vmatpush.bf16.msra.mxu0 %v3028
    %5548 = vmatpush.bf16.msra.mxu0 %v3020
    %5549 = vmatpush.bf16.msra.mxu0 %v3012
    %5550 = vmatpush.bf16.msra.mxu0 %v3004
    %5551 = vmatpush.bf16.msra.mxu0 %v2996
    %5552 = vmatmul.bf16.gmra.mxu0 %v5261
    %v5553 = vpop.f32.mrf.mxu0
    %v5554 = vadd.f32 %v5541, %v5553
    %v5555 = vpop.f32.mrf.mxu0
    %5556 = vdwg.mxu0
    %5557 = vmatpush.bf16.msra.mxu0 %v3116
    %5558 = vmatpush.bf16.msra.mxu0 %v3108
    %5559 = vmatpush.bf16.msra.mxu0 %v3100
    %5560 = vmatpush.bf16.msra.mxu0 %v3092
    %5561 = vmatpush.bf16.msra.mxu0 %v3084
    %5562 = vmatpush.bf16.msra.mxu0 %v3076
    %5563 = vmatpush.bf16.msra.mxu0 %v3068
    %5564 = vmatpush.bf16.msra.mxu0 %v3060
    %5565 = vmatmul.bf16.gmra.mxu0 %v5267
    %v5566 = vpop.f32.mrf.mxu0
    %v5567 = vadd.f32 %v5554, %v5566
    %v5568 = vpop.f32.mrf.mxu0
    %5569 = vdwg.mxu0
    %5570 = vmatpush.bf16.msra.mxu0 %v3180
    %5571 = vmatpush.bf16.msra.mxu0 %v3172
    %5572 = vmatpush.bf16.msra.mxu0 %v3164
    %5573 = vmatpush.bf16.msra.mxu0 %v3156
    %5574 = vmatpush.bf16.msra.mxu0 %v3148
    %5575 = vmatpush.bf16.msra.mxu0 %v3140
    %5576 = vmatpush.bf16.msra.mxu0 %v3132
    %5577 = vmatpush.bf16.msra.mxu0 %v3124
    %5578 = vmatmul.bf16.gmra.mxu0 %v5268
    %v5579 = vpop.f32.mrf.mxu0
    %v5580 = vadd.f32 %v5567, %v5579
    %v5581 = vpop.f32.mrf.mxu0
    %5582 = vdwg.mxu0
    %5583 = vmatpush.bf16.msra.mxu0 %v2989
    %5584 = vmatpush.bf16.msra.mxu0 %v2981
    %5585 = vmatpush.bf16.msra.mxu0 %v2973
    %5586 = vmatpush.bf16.msra.mxu0 %v2965
    %5587 = vmatpush.bf16.msra.mxu0 %v2957
    %5588 = vmatpush.bf16.msra.mxu0 %v2949
    %5589 = vmatpush.bf16.msra.mxu0 %v2941
    %5590 = vmatpush.bf16.msra.mxu0 %v2933
    %5591 = vmatmul.bf16.gmra.mxu0 %v5260
    %v5592 = vpop.f32.mrf.mxu0
    %v5593 = vadd.f32 %v2149, %v5592
    %v5594 = vpop.f32.mrf.mxu0
    %5595 = vdwg.mxu0
    %5596 = vmatpush.bf16.msra.mxu0 %v3053
    %5597 = vmatpush.bf16.msra.mxu0 %v3045
    %5598 = vmatpush.bf16.msra.mxu0 %v3037
    %5599 = vmatpush.bf16.msra.mxu0 %v3029
    %5600 = vmatpush.bf16.msra.mxu0 %v3021
    %5601 = vmatpush.bf16.msra.mxu0 %v3013
    %5602 = vmatpush.bf16.msra.mxu0 %v3005
    %5603 = vmatpush.bf16.msra.mxu0 %v2997
    %5604 = vmatmul.bf16.gmra.mxu0 %v5261
    %v5605 = vpop.f32.mrf.mxu0
    %v5606 = vadd.f32 %v5593, %v5605
    %v5607 = vpop.f32.mrf.mxu0
    %5608 = vdwg.mxu0
    %5609 = vmatpush.bf16.msra.mxu0 %v3117
    %5610 = vmatpush.bf16.msra.mxu0 %v3109
    %5611 = vmatpush.bf16.msra.mxu0 %v3101
    %5612 = vmatpush.bf16.msra.mxu0 %v3093
    %5613 = vmatpush.bf16.msra.mxu0 %v3085
    %5614 = vmatpush.bf16.msra.mxu0 %v3077
    %5615 = vmatpush.bf16.msra.mxu0 %v3069
    %5616 = vmatpush.bf16.msra.mxu0 %v3061
    %5617 = vmatmul.bf16.gmra.mxu0 %v5267
    %v5618 = vpop.f32.mrf.mxu0
    %v5619 = vadd.f32 %v5606, %v5618
    %v5620 = vpop.f32.mrf.mxu0
    %5621 = vdwg.mxu0
    %5622 = vmatpush.bf16.msra.mxu0 %v3181
    %5623 = vmatpush.bf16.msra.mxu0 %v3173
    %5624 = vmatpush.bf16.msra.mxu0 %v3165
    %5625 = vmatpush.bf16.msra.mxu0 %v3157
    %5626 = vmatpush.bf16.msra.mxu0 %v3149
    %5627 = vmatpush.bf16.msra.mxu0 %v3141
    %5628 = vmatpush.bf16.msra.mxu0 %v3133
    %5629 = vmatpush.bf16.msra.mxu0 %v3125
    %5630 = vmatmul.bf16.gmra.mxu0 %v5268
    %v5631 = vpop.f32.mrf.mxu0
    %v5632 = vadd.f32 %v5619, %v5631
    %v5633 = vpop.f32.mrf.mxu0
    %5634 = vdwg.mxu0
    %5635 = vmatpush.bf16.msra.mxu0 %v2990
    %5636 = vmatpush.bf16.msra.mxu0 %v2982
    %5637 = vmatpush.bf16.msra.mxu0 %v2974
    %5638 = vmatpush.bf16.msra.mxu0 %v2966
    %5639 = vmatpush.bf16.msra.mxu0 %v2958
    %5640 = vmatpush.bf16.msra.mxu0 %v2950
    %5641 = vmatpush.bf16.msra.mxu0 %v2942
    %5642 = vmatpush.bf16.msra.mxu0 %v2934
    %5643 = vmatmul.bf16.gmra.mxu0 %v5260
    %v5644 = vpop.f32.mrf.mxu0
    %v5645 = vadd.f32 %v2150, %v5644
    %v5646 = vpop.f32.mrf.mxu0
    %5647 = vdwg.mxu0
    %5648 = vmatpush.bf16.msra.mxu0 %v3054
    %5649 = vmatpush.bf16.msra.mxu0 %v3046
    %5650 = vmatpush.bf16.msra.mxu0 %v3038
    %5651 = vmatpush.bf16.msra.mxu0 %v3030
    %5652 = vmatpush.bf16.msra.mxu0 %v3022
    %5653 = vmatpush.bf16.msra.mxu0 %v3014
    %5654 = vmatpush.bf16.msra.mxu0 %v3006
    %5655 = vmatpush.bf16.msra.mxu0 %v2998
    %5656 = vmatmul.bf16.gmra.mxu0 %v5261
    %v5657 = vpop.f32.mrf.mxu0
    %v5658 = vadd.f32 %v5645, %v5657
    %v5659 = vpop.f32.mrf.mxu0
    %5660 = vdwg.mxu0
    %5661 = vmatpush.bf16.msra.mxu0 %v3118
    %5662 = vmatpush.bf16.msra.mxu0 %v3110
    %5663 = vmatpush.bf16.msra.mxu0 %v3102
    %5664 = vmatpush.bf16.msra.mxu0 %v3094
    %5665 = vmatpush.bf16.msra.mxu0 %v3086
    %5666 = vmatpush.bf16.msra.mxu0 %v3078
    %5667 = vmatpush.bf16.msra.mxu0 %v3070
    %5668 = vmatpush.bf16.msra.mxu0 %v3062
    %5669 = vmatmul.bf16.gmra.mxu0 %v5267
    %v5670 = vpop.f32.mrf.mxu0
    %v5671 = vadd.f32 %v5658, %v5670
    %v5672 = vpop.f32.mrf.mxu0
    %5673 = vdwg.mxu0
    %5674 = vmatpush.bf16.msra.mxu0 %v3182
    %5675 = vmatpush.bf16.msra.mxu0 %v3174
    %5676 = vmatpush.bf16.msra.mxu0 %v3166
    %5677 = vmatpush.bf16.msra.mxu0 %v3158
    %5678 = vmatpush.bf16.msra.mxu0 %v3150
    %5679 = vmatpush.bf16.msra.mxu0 %v3142
    %5680 = vmatpush.bf16.msra.mxu0 %v3134
    %5681 = vmatpush.bf16.msra.mxu0 %v3126
    %5682 = vmatmul.bf16.gmra.mxu0 %v5268
    %v5683 = vpop.f32.mrf.mxu0
    %v5684 = vadd.f32 %v5671, %v5683
    %v5685 = vpop.f32.mrf.mxu0
    %5686 = vdwg.mxu0
    %v5687 = vxor.u32 %v5320, 2147483648
    %v5688 = vxor.u32 %v5372, 2147483648
    %v5689 = vmul.f32 %v5687, 1.442695
    %v5690 = vpow.pop %v5689
    %v5691 = vmul.f32 %v5688, 1.442695
    %v5692 = vpow.pop %v5691
    %v5693 = vadd.f32 %v5690, 1.0
    %v5694 = vadd.f32 %v5692, 1.0
    %v5695 = vrcp.pop %v5693
    %v5696 = vmul.f32 %v5693, %v5695
    %v5697 = vsub.f32 1.0, %v5696
    %v5698 = vmul.f32 %v5695, %v5697
    %v5699 = vadd.f32 %v5695, %v5698
    %vm5700 = vweird.f32 %v5693
    %vm5701 = vweird.f32 %v5695
    %vm5702 = vmor %vm5700, %vm5701
    %v5703 = vsel %vm5702, %v5695, %v5699
    %v5704 = vand.u32 2147483647, %v5693
    %vm5705 = vcmp.eq.f32.partialorder %v5704, 8.507059e+37
    %v5706 = vand.u32 %v5693, 2147483648
    %v5707 = vor.u32 1.1754944e-38, %v5706
    %v5708 = vsel %vm5705, %v5707, %v5703
    %v5709 = vmul.f32 1.0, %v5708
    %v5710 = vrcp.pop %v5694
    %v5711 = vmul.f32 %v5694, %v5710
    %v5712 = vsub.f32 1.0, %v5711
    %v5713 = vmul.f32 %v5710, %v5712
    %v5714 = vadd.f32 %v5710, %v5713
    %vm5715 = vweird.f32 %v5694
    %vm5716 = vweird.f32 %v5710
    %vm5717 = vmor %vm5715, %vm5716
    %v5718 = vsel %vm5717, %v5710, %v5714
    %v5719 = vand.u32 2147483647, %v5694
    %vm5720 = vcmp.eq.f32.partialorder %v5719, 8.507059e+37
    %v5721 = vand.u32 %v5694, 2147483648
    %v5722 = vor.u32 1.1754944e-38, %v5721
    %v5723 = vsel %vm5720, %v5722, %v5718
    %v5724 = vmul.f32 1.0, %v5723
    %v5725 = vxor.u32 %v5424, 2147483648
    %v5726 = vxor.u32 %v5476, 2147483648
    %v5727 = vmul.f32 %v5725, 1.442695
    %v5728 = vpow.pop %v5727
    %v5729 = vmul.f32 %v5726, 1.442695
    %v5730 = vpow.pop %v5729
    %v5731 = vadd.f32 %v5728, 1.0
    %v5732 = vadd.f32 %v5730, 1.0
    %v5733 = vrcp.pop %v5731
    %v5734 = vmul.f32 %v5731, %v5733
    %v5735 = vsub.f32 1.0, %v5734
    %v5736 = vmul.f32 %v5733, %v5735
    %v5737 = vadd.f32 %v5733, %v5736
    %vm5738 = vweird.f32 %v5731
    %vm5739 = vweird.f32 %v5733
    %vm5740 = vmor %vm5738, %vm5739
    %v5741 = vsel %vm5740, %v5733, %v5737
    %v5742 = vand.u32 2147483647, %v5731
    %vm5743 = vcmp.eq.f32.partialorder %v5742, 8.507059e+37
    %v5744 = vand.u32 %v5731, 2147483648
    %v5745 = vor.u32 1.1754944e-38, %v5744
    %v5746 = vsel %vm5743, %v5745, %v5741
    %v5747 = vmul.f32 1.0, %v5746
    %v5748 = vrcp.pop %v5732
    %v5749 = vmul.f32 %v5732, %v5748
    %v5750 = vsub.f32 1.0, %v5749
    %v5751 = vmul.f32 %v5748, %v5750
    %v5752 = vadd.f32 %v5748, %v5751
    %vm5753 = vweird.f32 %v5732
    %vm5754 = vweird.f32 %v5748
    %vm5755 = vmor %vm5753, %vm5754
    %v5756 = vsel %vm5755, %v5748, %v5752
    %v5757 = vand.u32 2147483647, %v5732
    %vm5758 = vcmp.eq.f32.partialorder %v5757, 8.507059e+37
    %v5759 = vand.u32 %v5732, 2147483648
    %v5760 = vor.u32 1.1754944e-38, %v5759
    %v5761 = vsel %vm5758, %v5760, %v5756
    %v5762 = vmul.f32 1.0, %v5761
    %v5763 = vtanh.pop %v5528
    %v5764 = vtanh.pop %v5580
    %v5765 = vxor.u32 %v5632, 2147483648
    %v5766 = vxor.u32 %v5684, 2147483648
    %v5767 = vmul.f32 %v5765, 1.442695
    %v5768 = vpow.pop %v5767
    %v5769 = vmul.f32 %v5766, 1.442695
    %v5770 = vpow.pop %v5769
    %v5771 = vadd.f32 %v5768, 1.0
    %v5772 = vadd.f32 %v5770, 1.0
    %v5773 = vrcp.pop %v5771
    %v5774 = vmul.f32 %v5771, %v5773
    %v5775 = vsub.f32 1.0, %v5774
    %v5776 = vmul.f32 %v5773, %v5775
    %v5777 = vadd.f32 %v5773, %v5776
    %vm5778 = vweird.f32 %v5771
    %vm5779 = vweird.f32 %v5773
    %vm5780 = vmor %vm5778, %vm5779
    %v5781 = vsel %vm5780, %v5773, %v5777
    %v5782 = vand.u32 2147483647, %v5771
    %vm5783 = vcmp.eq.f32.partialorder %v5782, 8.507059e+37
    %v5784 = vand.u32 %v5771, 2147483648
    %v5785 = vor.u32 1.1754944e-38, %v5784
    %v5786 = vsel %vm5783, %v5785, %v5781
    %v5787 = vmul.f32 1.0, %v5786
    %v5788 = vrcp.pop %v5772
    %v5789 = vmul.f32 %v5772, %v5788
    %v5790 = vsub.f32 1.0, %v5789
    %v5791 = vmul.f32 %v5788, %v5790
    %v5792 = vadd.f32 %v5788, %v5791
    %vm5793 = vweird.f32 %v5772
    %vm5794 = vweird.f32 %v5788
    %vm5795 = vmor %vm5793, %vm5794
    %v5796 = vsel %vm5795, %v5788, %v5792
    %v5797 = vand.u32 2147483647, %v5772
    %vm5798 = vcmp.eq.f32.partialorder %v5797, 8.507059e+37
    %v5799 = vand.u32 %v5772, 2147483648
    %v5800 = vor.u32 1.1754944e-38, %v5799
    %v5801 = vsel %vm5798, %v5800, %v5796
    %v5802 = vmul.f32 1.0, %v5801
    %v5803 = vmul.f32 %v5747, %v4903
    %v5804 = vmul.f32 %v5762, %v4904
    %v5805 = vmul.f32 %v5709, %v5763
    %v5806 = vmul.f32 %v5724, %v5764
    %v5807 = vadd.f32 %v5803, %v5805
    %v5808 = vadd.f32 %v5804, %v5806
    %v5809 = vtanh.pop %v5807
    %v5810 = vtanh.pop %v5808
    %v5811 = vmul.f32 %v5787, %v5809
    %v5812 = vmul.f32 %v5802, %v5810
    %v5813 = vsel %vm4910, %v5253, %v4897
    %v5814 = vsel %vm4910, %v5254, %v4898
    %v5815 = vsel %vm4910, %v5249, %v4899
    %v5816 = vsel %vm4910, %v5250, %v4900
    %v5817 = vsel %vm4910, %v5811, %v4901
    %v5818 = vsel %vm4910, %v5812, %v4902
    %v5819 = vsel %vm4910, %v5807, %v4903
    %v5820 = vsel %vm4910, %v5808, %v4904
    %vm5821 = vcmp.gt.s32.totalorder %v94, 3
    %v5822 = vsel %vm5821, 1, 0
    %5823 = vset.pattern.permute.xlu0 0
    %5824 = vperm.xlu0 %5823, %v5822
    %v5825 = vpop.permute.xlu0 %5824
    %vm5826 = vcmp.eq.s32.totalorder %v5825, 1
    %v5827 = vpack.c.bf16 %v5813, %v5813
    %v5828 = vpack.c.bf16 %v5814, %v5814
    %5829 = vmatpush.bf16.msra.mxu0 %v1592
    %5830 = vmatpush.bf16.msra.mxu0 %v1584
    %5831 = vmatpush.bf16.msra.mxu0 %v1576
    %5832 = vmatpush.bf16.msra.mxu0 %v1568
    %5833 = vmatpush.bf16.msra.mxu0 %v1560
    %5834 = vmatpush.bf16.msra.mxu0 %v1552
    %5835 = vmatpush.bf16.msra.mxu0 %v1544
    %5836 = vmatpush.bf16.msra.mxu0 %v1536
    %5837 = vmatmul.bf16.gmra.mxu0 %v5827
    %v5838 = vpop.f32.mrf.mxu0
    %v5839 = vadd.f32 0.0, %v5838
    %v5840 = vpop.f32.mrf.mxu0
    %5841 = vdwg.mxu0
    %5842 = vmatpush.bf16.msra.mxu0 %v1656
    %5843 = vmatpush.bf16.msra.mxu0 %v1648
    %5844 = vmatpush.bf16.msra.mxu0 %v1640
    %5845 = vmatpush.bf16.msra.mxu0 %v1632
    %5846 = vmatpush.bf16.msra.mxu0 %v1624
    %5847 = vmatpush.bf16.msra.mxu0 %v1616
    %5848 = vmatpush.bf16.msra.mxu0 %v1608
    %5849 = vmatpush.bf16.msra.mxu0 %v1600
    %5850 = vmatmul.bf16.gmra.mxu0 %v5828
    %v5851 = vpop.f32.mrf.mxu0
    %v5852 = vadd.f32 %v5839, %v5851
    %v5853 = vpop.f32.mrf.mxu0
    %5854 = vdwg.mxu0
    %5855 = vmatpush.bf16.msra.mxu0 %v1593
    %5856 = vmatpush.bf16.msra.mxu0 %v1585
    %5857 = vmatpush.bf16.msra.mxu0 %v1577
    %5858 = vmatpush.bf16.msra.mxu0 %v1569
    %5859 = vmatpush.bf16.msra.mxu0 %v1561
    %5860 = vmatpush.bf16.msra.mxu0 %v1553
    %5861 = vmatpush.bf16.msra.mxu0 %v1545
    %5862 = vmatpush.bf16.msra.mxu0 %v1537
    %5863 = vmatmul.bf16.gmra.mxu0 %v5827
    %v5864 = vpop.f32.mrf.mxu0
    %v5865 = vadd.f32 0.0, %v5864
    %v5866 = vpop.f32.mrf.mxu0
    %5867 = vdwg.mxu0
    %5868 = vmatpush.bf16.msra.mxu0 %v1657
    %5869 = vmatpush.bf16.msra.mxu0 %v1649
    %5870 = vmatpush.bf16.msra.mxu0 %v1641
    %5871 = vmatpush.bf16.msra.mxu0 %v1633
    %5872 = vmatpush.bf16.msra.mxu0 %v1625
    %5873 = vmatpush.bf16.msra.mxu0 %v1617
    %5874 = vmatpush.bf16.msra.mxu0 %v1609
    %5875 = vmatpush.bf16.msra.mxu0 %v1601
    %5876 = vmatmul.bf16.gmra.mxu0 %v5828
    %v5877 = vpop.f32.mrf.mxu0
    %v5878 = vadd.f32 %v5865, %v5877
    %v5879 = vpop.f32.mrf.mxu0
    %5880 = vdwg.mxu0
    %5881 = vmatpush.bf16.msra.mxu0 %v1594
    %5882 = vmatpush.bf16.msra.mxu0 %v1586
    %5883 = vmatpush.bf16.msra.mxu0 %v1578
    %5884 = vmatpush.bf16.msra.mxu0 %v1570
    %5885 = vmatpush.bf16.msra.mxu0 %v1562
    %5886 = vmatpush.bf16.msra.mxu0 %v1554
    %5887 = vmatpush.bf16.msra.mxu0 %v1546
    %5888 = vmatpush.bf16.msra.mxu0 %v1538
    %5889 = vmatmul.bf16.gmra.mxu0 %v5827
    %v5890 = vpop.f32.mrf.mxu0
    %v5891 = vadd.f32 0.0, %v5890
    %v5892 = vpop.f32.mrf.mxu0
    %5893 = vdwg.mxu0
    %5894 = vmatpush.bf16.msra.mxu0 %v1658
    %5895 = vmatpush.bf16.msra.mxu0 %v1650
    %5896 = vmatpush.bf16.msra.mxu0 %v1642
    %5897 = vmatpush.bf16.msra.mxu0 %v1634
    %5898 = vmatpush.bf16.msra.mxu0 %v1626
    %5899 = vmatpush.bf16.msra.mxu0 %v1618
    %5900 = vmatpush.bf16.msra.mxu0 %v1610
    %5901 = vmatpush.bf16.msra.mxu0 %v1602
    %5902 = vmatmul.bf16.gmra.mxu0 %v5828
    %v5903 = vpop.f32.mrf.mxu0
    %v5904 = vadd.f32 %v5891, %v5903
    %v5905 = vpop.f32.mrf.mxu0
    %5906 = vdwg.mxu0
    %5907 = vmatpush.bf16.msra.mxu0 %v1595
    %5908 = vmatpush.bf16.msra.mxu0 %v1587
    %5909 = vmatpush.bf16.msra.mxu0 %v1579
    %5910 = vmatpush.bf16.msra.mxu0 %v1571
    %5911 = vmatpush.bf16.msra.mxu0 %v1563
    %5912 = vmatpush.bf16.msra.mxu0 %v1555
    %5913 = vmatpush.bf16.msra.mxu0 %v1547
    %5914 = vmatpush.bf16.msra.mxu0 %v1539
    %5915 = vmatmul.bf16.gmra.mxu0 %v5827
    %v5916 = vpop.f32.mrf.mxu0
    %v5917 = vadd.f32 0.0, %v5916
    %v5918 = vpop.f32.mrf.mxu0
    %5919 = vdwg.mxu0
    %5920 = vmatpush.bf16.msra.mxu0 %v1659
    %5921 = vmatpush.bf16.msra.mxu0 %v1651
    %5922 = vmatpush.bf16.msra.mxu0 %v1643
    %5923 = vmatpush.bf16.msra.mxu0 %v1635
    %5924 = vmatpush.bf16.msra.mxu0 %v1627
    %5925 = vmatpush.bf16.msra.mxu0 %v1619
    %5926 = vmatpush.bf16.msra.mxu0 %v1611
    %5927 = vmatpush.bf16.msra.mxu0 %v1603
    %5928 = vmatmul.bf16.gmra.mxu0 %v5828
    %v5929 = vpop.f32.mrf.mxu0
    %v5930 = vadd.f32 %v5917, %v5929
    %v5931 = vpop.f32.mrf.mxu0
    %5932 = vdwg.mxu0
    %5933 = vmatpush.bf16.msra.mxu0 %v1596
    %5934 = vmatpush.bf16.msra.mxu0 %v1588
    %5935 = vmatpush.bf16.msra.mxu0 %v1580
    %5936 = vmatpush.bf16.msra.mxu0 %v1572
    %5937 = vmatpush.bf16.msra.mxu0 %v1564
    %5938 = vmatpush.bf16.msra.mxu0 %v1556
    %5939 = vmatpush.bf16.msra.mxu0 %v1548
    %5940 = vmatpush.bf16.msra.mxu0 %v1540
    %5941 = vmatmul.bf16.gmra.mxu0 %v5827
    %v5942 = vpop.f32.mrf.mxu0
    %v5943 = vadd.f32 0.0, %v5942
    %v5944 = vpop.f32.mrf.mxu0
    %5945 = vdwg.mxu0
    %5946 = vmatpush.bf16.msra.mxu0 %v1660
    %5947 = vmatpush.bf16.msra.mxu0 %v1652
    %5948 = vmatpush.bf16.msra.mxu0 %v1644
    %5949 = vmatpush.bf16.msra.mxu0 %v1636
    %5950 = vmatpush.bf16.msra.mxu0 %v1628
    %5951 = vmatpush.bf16.msra.mxu0 %v1620
    %5952 = vmatpush.bf16.msra.mxu0 %v1612
    %5953 = vmatpush.bf16.msra.mxu0 %v1604
    %5954 = vmatmul.bf16.gmra.mxu0 %v5828
    %v5955 = vpop.f32.mrf.mxu0
    %v5956 = vadd.f32 %v5943, %v5955
    %v5957 = vpop.f32.mrf.mxu0
    %5958 = vdwg.mxu0
    %5959 = vmatpush.bf16.msra.mxu0 %v1597
    %5960 = vmatpush.bf16.msra.mxu0 %v1589
    %5961 = vmatpush.bf16.msra.mxu0 %v1581
    %5962 = vmatpush.bf16.msra.mxu0 %v1573
    %5963 = vmatpush.bf16.msra.mxu0 %v1565
    %5964 = vmatpush.bf16.msra.mxu0 %v1557
    %5965 = vmatpush.bf16.msra.mxu0 %v1549
    %5966 = vmatpush.bf16.msra.mxu0 %v1541
    %5967 = vmatmul.bf16.gmra.mxu0 %v5827
    %v5968 = vpop.f32.mrf.mxu0
    %v5969 = vadd.f32 0.0, %v5968
    %v5970 = vpop.f32.mrf.mxu0
    %5971 = vdwg.mxu0
    %5972 = vmatpush.bf16.msra.mxu0 %v1661
    %5973 = vmatpush.bf16.msra.mxu0 %v1653
    %5974 = vmatpush.bf16.msra.mxu0 %v1645
    %5975 = vmatpush.bf16.msra.mxu0 %v1637
    %5976 = vmatpush.bf16.msra.mxu0 %v1629
    %5977 = vmatpush.bf16.msra.mxu0 %v1621
    %5978 = vmatpush.bf16.msra.mxu0 %v1613
    %5979 = vmatpush.bf16.msra.mxu0 %v1605
    %5980 = vmatmul.bf16.gmra.mxu0 %v5828
    %v5981 = vpop.f32.mrf.mxu0
    %v5982 = vadd.f32 %v5969, %v5981
    %v5983 = vpop.f32.mrf.mxu0
    %5984 = vdwg.mxu0
    %5985 = vmatpush.bf16.msra.mxu0 %v1598
    %5986 = vmatpush.bf16.msra.mxu0 %v1590
    %5987 = vmatpush.bf16.msra.mxu0 %v1582
    %5988 = vmatpush.bf16.msra.mxu0 %v1574
    %5989 = vmatpush.bf16.msra.mxu0 %v1566
    %5990 = vmatpush.bf16.msra.mxu0 %v1558
    %5991 = vmatpush.bf16.msra.mxu0 %v1550
    %5992 = vmatpush.bf16.msra.mxu0 %v1542
    %5993 = vmatmul.bf16.gmra.mxu0 %v5827
    %v5994 = vpop.f32.mrf.mxu0
    %v5995 = vadd.f32 0.0, %v5994
    %v5996 = vpop.f32.mrf.mxu0
    %5997 = vdwg.mxu0
    %5998 = vmatpush.bf16.msra.mxu0 %v1662
    %5999 = vmatpush.bf16.msra.mxu0 %v1654
    %6000 = vmatpush.bf16.msra.mxu0 %v1646
    %6001 = vmatpush.bf16.msra.mxu0 %v1638
    %6002 = vmatpush.bf16.msra.mxu0 %v1630
    %6003 = vmatpush.bf16.msra.mxu0 %v1622
    %6004 = vmatpush.bf16.msra.mxu0 %v1614
    %6005 = vmatpush.bf16.msra.mxu0 %v1606
    %6006 = vmatmul.bf16.gmra.mxu0 %v5828
    %v6007 = vpop.f32.mrf.mxu0
    %v6008 = vadd.f32 %v5995, %v6007
    %v6009 = vpop.f32.mrf.mxu0
    %6010 = vdwg.mxu0
    %6011 = vmatpush.bf16.msra.mxu0 %v1599
    %6012 = vmatpush.bf16.msra.mxu0 %v1591
    %6013 = vmatpush.bf16.msra.mxu0 %v1583
    %6014 = vmatpush.bf16.msra.mxu0 %v1575
    %6015 = vmatpush.bf16.msra.mxu0 %v1567
    %6016 = vmatpush.bf16.msra.mxu0 %v1559
    %6017 = vmatpush.bf16.msra.mxu0 %v1551
    %6018 = vmatpush.bf16.msra.mxu0 %v1543
    %6019 = vmatmul.bf16.gmra.mxu0 %v5827
    %v6020 = vpop.f32.mrf.mxu0
    %v6021 = vadd.f32 0.0, %v6020
    %v6022 = vpop.f32.mrf.mxu0
    %6023 = vdwg.mxu0
    %6024 = vmatpush.bf16.msra.mxu0 %v1663
    %6025 = vmatpush.bf16.msra.mxu0 %v1655
    %6026 = vmatpush.bf16.msra.mxu0 %v1647
    %6027 = vmatpush.bf16.msra.mxu0 %v1639
    %6028 = vmatpush.bf16.msra.mxu0 %v1631
    %6029 = vmatpush.bf16.msra.mxu0 %v1623
    %6030 = vmatpush.bf16.msra.mxu0 %v1615
    %6031 = vmatpush.bf16.msra.mxu0 %v1607
    %6032 = vmatmul.bf16.gmra.mxu0 %v5828
    %v6033 = vpop.f32.mrf.mxu0
    %v6034 = vadd.f32 %v6021, %v6033
    %v6035 = vpop.f32.mrf.mxu0
    %6036 = vdwg.mxu0
    %v6037 = vadd.f32 %v546, %v5852
    %v6038 = vadd.f32 %v575, %v5878
    %v6039 = vadd.f32 %v604, %v5904
    %v6040 = vadd.f32 %v633, %v5930
    %v6041 = vadd.f32 %v662, %v5956
    %v6042 = vadd.f32 %v691, %v5982
    %v6043 = vadd.f32 %v720, %v6008
    %v6044 = vadd.f32 %v749, %v6034
    %v6045 = vxor.u32 %v6037, 2147483648
    %v6046 = vxor.u32 %v6038, 2147483648
    %v6047 = vmul.f32 %v6045, 1.442695
    %v6048 = vpow.pop %v6047
    %v6049 = vmul.f32 %v6046, 1.442695
    %v6050 = vpow.pop %v6049
    %v6051 = vadd.f32 %v6048, 1.0
    %v6052 = vadd.f32 %v6050, 1.0
    %v6053 = vrcp.pop %v6051
    %v6054 = vmul.f32 %v6051, %v6053
    %v6055 = vsub.f32 1.0, %v6054
    %v6056 = vmul.f32 %v6053, %v6055
    %v6057 = vadd.f32 %v6053, %v6056
    %vm6058 = vweird.f32 %v6051
    %vm6059 = vweird.f32 %v6053
    %vm6060 = vmor %vm6058, %vm6059
    %v6061 = vsel %vm6060, %v6053, %v6057
    %v6062 = vand.u32 2147483647, %v6051
    %vm6063 = vcmp.eq.f32.partialorder %v6062, 8.507059e+37
    %v6064 = vand.u32 %v6051, 2147483648
    %v6065 = vor.u32 1.1754944e-38, %v6064
    %v6066 = vsel %vm6063, %v6065, %v6061
    %v6067 = vmul.f32 1.0, %v6066
    %v6068 = vrcp.pop %v6052
    %v6069 = vmul.f32 %v6052, %v6068
    %v6070 = vsub.f32 1.0, %v6069
    %v6071 = vmul.f32 %v6068, %v6070
    %v6072 = vadd.f32 %v6068, %v6071
    %vm6073 = vweird.f32 %v6052
    %vm6074 = vweird.f32 %v6068
    %vm6075 = vmor %vm6073, %vm6074
    %v6076 = vsel %vm6075, %v6068, %v6072
    %v6077 = vand.u32 2147483647, %v6052
    %vm6078 = vcmp.eq.f32.partialorder %v6077, 8.507059e+37
    %v6079 = vand.u32 %v6052, 2147483648
    %v6080 = vor.u32 1.1754944e-38, %v6079
    %v6081 = vsel %vm6078, %v6080, %v6076
    %v6082 = vmul.f32 1.0, %v6081
    %v6083 = vxor.u32 %v6039, 2147483648
    %v6084 = vxor.u32 %v6040, 2147483648
    %v6085 = vmul.f32 %v6083, 1.442695
    %v6086 = vpow.pop %v6085
    %v6087 = vmul.f32 %v6084, 1.442695
    %v6088 = vpow.pop %v6087
    %v6089 = vadd.f32 %v6086, 1.0
    %v6090 = vadd.f32 %v6088, 1.0
    %v6091 = vrcp.pop %v6089
    %v6092 = vmul.f32 %v6089, %v6091
    %v6093 = vsub.f32 1.0, %v6092
    %v6094 = vmul.f32 %v6091, %v6093
    %v6095 = vadd.f32 %v6091, %v6094
    %vm6096 = vweird.f32 %v6089
    %vm6097 = vweird.f32 %v6091
    %vm6098 = vmor %vm6096, %vm6097
    %v6099 = vsel %vm6098, %v6091, %v6095
    %v6100 = vand.u32 2147483647, %v6089
    %vm6101 = vcmp.eq.f32.partialorder %v6100, 8.507059e+37
    %v6102 = vand.u32 %v6089, 2147483648
    %v6103 = vor.u32 1.1754944e-38, %v6102
    %v6104 = vsel %vm6101, %v6103, %v6099
    %v6105 = vmul.f32 1.0, %v6104
    %v6106 = vrcp.pop %v6090
    %v6107 = vmul.f32 %v6090, %v6106
    %v6108 = vsub.f32 1.0, %v6107
    %v6109 = vmul.f32 %v6106, %v6108
    %v6110 = vadd.f32 %v6106, %v6109
    %vm6111 = vweird.f32 %v6090
    %vm6112 = vweird.f32 %v6106
    %vm6113 = vmor %vm6111, %vm6112
    %v6114 = vsel %vm6113, %v6106, %v6110
    %v6115 = vand.u32 2147483647, %v6090
    %vm6116 = vcmp.eq.f32.partialorder %v6115, 8.507059e+37
    %v6117 = vand.u32 %v6090, 2147483648
    %v6118 = vor.u32 1.1754944e-38, %v6117
    %v6119 = vsel %vm6116, %v6118, %v6114
    %v6120 = vmul.f32 1.0, %v6119
    %v6121 = vtanh.pop %v6041
    %v6122 = vtanh.pop %v6042
    %v6123 = vxor.u32 %v6043, 2147483648
    %v6124 = vxor.u32 %v6044, 2147483648
    %v6125 = vmul.f32 %v6123, 1.442695
    %v6126 = vpow.pop %v6125
    %v6127 = vmul.f32 %v6124, 1.442695
    %v6128 = vpow.pop %v6127
    %v6129 = vadd.f32 %v6126, 1.0
    %v6130 = vadd.f32 %v6128, 1.0
    %v6131 = vrcp.pop %v6129
    %v6132 = vmul.f32 %v6129, %v6131
    %v6133 = vsub.f32 1.0, %v6132
    %v6134 = vmul.f32 %v6131, %v6133
    %v6135 = vadd.f32 %v6131, %v6134
    %vm6136 = vweird.f32 %v6129
    %vm6137 = vweird.f32 %v6131
    %vm6138 = vmor %vm6136, %vm6137
    %v6139 = vsel %vm6138, %v6131, %v6135
    %v6140 = vand.u32 2147483647, %v6129
    %vm6141 = vcmp.eq.f32.partialorder %v6140, 8.507059e+37
    %v6142 = vand.u32 %v6129, 2147483648
    %v6143 = vor.u32 1.1754944e-38, %v6142
    %v6144 = vsel %vm6141, %v6143, %v6139
    %v6145 = vmul.f32 1.0, %v6144
    %v6146 = vrcp.pop %v6130
    %v6147 = vmul.f32 %v6130, %v6146
    %v6148 = vsub.f32 1.0, %v6147
    %v6149 = vmul.f32 %v6146, %v6148
    %v6150 = vadd.f32 %v6146, %v6149
    %vm6151 = vweird.f32 %v6130
    %vm6152 = vweird.f32 %v6146
    %vm6153 = vmor %vm6151, %vm6152
    %v6154 = vsel %vm6153, %v6146, %v6150
    %v6155 = vand.u32 2147483647, %v6130
    %vm6156 = vcmp.eq.f32.partialorder %v6155, 8.507059e+37
    %v6157 = vand.u32 %v6130, 2147483648
    %v6158 = vor.u32 1.1754944e-38, %v6157
    %v6159 = vsel %vm6156, %v6158, %v6154
    %v6160 = vmul.f32 1.0, %v6159
    %v6161 = vmul.f32 %v6105, %v5815
    %v6162 = vmul.f32 %v6120, %v5816
    %v6163 = vmul.f32 %v6067, %v6121
    %v6164 = vmul.f32 %v6082, %v6122
    %v6165 = vadd.f32 %v6161, %v6163
    %v6166 = vadd.f32 %v6162, %v6164
    %v6167 = vtanh.pop %v6165
    %v6168 = vtanh.pop %v6166
    %v6169 = vmul.f32 %v6145, %v6167
    %v6170 = vmul.f32 %v6160, %v6168
    %v6171 = vpack.c.bf16 %v6170, %v6169
    %v6172 = vpack.c.bf16 %v5818, %v5817
    %v6174 = vunpack.c.l.b16 %v6171
    %v6175 = vunpack.c.h.b16 %v6171
    %v6176 = vpack.c.b16 %v6174, %v6174
    %v6177 = vpack.c.b16 %v6175, %v6175
    %v6181 = vunpack.c.l.b16 %v6172
    %v6182 = vunpack.c.h.b16 %v6172
    %v6183 = vpack.c.b16 %v6181, %v6181
    %v6184 = vpack.c.b16 %v6182, %v6182
    %6187 = vmatpush.bf16.msra.mxu0 %v2983
    %6188 = vmatpush.bf16.msra.mxu0 %v2975
    %6189 = vmatpush.bf16.msra.mxu0 %v2967
    %6190 = vmatpush.bf16.msra.mxu0 %v2959
    %6191 = vmatpush.bf16.msra.mxu0 %v2951
    %6192 = vmatpush.bf16.msra.mxu0 %v2943
    %6193 = vmatpush.bf16.msra.mxu0 %v2935
    %6194 = vmatpush.bf16.msra.mxu0 %v2927
    %6195 = vmatmul.bf16.gmra.mxu0 %v6176
    %v6196 = vpop.f32.mrf.mxu0
    %v6197 = vadd.f32 %v2143, %v6196
    %v6198 = vpop.f32.mrf.mxu0
    %6199 = vdwg.mxu0
    %6200 = vmatpush.bf16.msra.mxu0 %v3047
    %6201 = vmatpush.bf16.msra.mxu0 %v3039
    %6202 = vmatpush.bf16.msra.mxu0 %v3031
    %6203 = vmatpush.bf16.msra.mxu0 %v3023
    %6204 = vmatpush.bf16.msra.mxu0 %v3015
    %6205 = vmatpush.bf16.msra.mxu0 %v3007
    %6206 = vmatpush.bf16.msra.mxu0 %v2999
    %6207 = vmatpush.bf16.msra.mxu0 %v2991
    %6208 = vmatmul.bf16.gmra.mxu0 %v6177
    %v6209 = vpop.f32.mrf.mxu0
    %v6210 = vadd.f32 %v6197, %v6209
    %v6211 = vpop.f32.mrf.mxu0
    %6212 = vdwg.mxu0
    %6213 = vmatpush.bf16.msra.mxu0 %v3111
    %6214 = vmatpush.bf16.msra.mxu0 %v3103
    %6215 = vmatpush.bf16.msra.mxu0 %v3095
    %6216 = vmatpush.bf16.msra.mxu0 %v3087
    %6217 = vmatpush.bf16.msra.mxu0 %v3079
    %6218 = vmatpush.bf16.msra.mxu0 %v3071
    %6219 = vmatpush.bf16.msra.mxu0 %v3063
    %6220 = vmatpush.bf16.msra.mxu0 %v3055
    %6221 = vmatmul.bf16.gmra.mxu0 %v6183
    %v6222 = vpop.f32.mrf.mxu0
    %v6223 = vadd.f32 %v6210, %v6222
    %v6224 = vpop.f32.mrf.mxu0
    %6225 = vdwg.mxu0
    %6226 = vmatpush.bf16.msra.mxu0 %v3175
    %6227 = vmatpush.bf16.msra.mxu0 %v3167
    %6228 = vmatpush.bf16.msra.mxu0 %v3159
    %6229 = vmatpush.bf16.msra.mxu0 %v3151
    %6230 = vmatpush.bf16.msra.mxu0 %v3143
    %6231 = vmatpush.bf16.msra.mxu0 %v3135
    %6232 = vmatpush.bf16.msra.mxu0 %v3127
    %6233 = vmatpush.bf16.msra.mxu0 %v3119
    %6234 = vmatmul.bf16.gmra.mxu0 %v6184
    %v6235 = vpop.f32.mrf.mxu0
    %v6236 = vadd.f32 %v6223, %v6235
    %v6237 = vpop.f32.mrf.mxu0
    %6238 = vdwg.mxu0
    %6239 = vmatpush.bf16.msra.mxu0 %v2984
    %6240 = vmatpush.bf16.msra.mxu0 %v2976
    %6241 = vmatpush.bf16.msra.mxu0 %v2968
    %6242 = vmatpush.bf16.msra.mxu0 %v2960
    %6243 = vmatpush.bf16.msra.mxu0 %v2952
    %6244 = vmatpush.bf16.msra.mxu0 %v2944
    %6245 = vmatpush.bf16.msra.mxu0 %v2936
    %6246 = vmatpush.bf16.msra.mxu0 %v2928
    %6247 = vmatmul.bf16.gmra.mxu0 %v6176
    %v6248 = vpop.f32.mrf.mxu0
    %v6249 = vadd.f32 %v2144, %v6248
    %v6250 = vpop.f32.mrf.mxu0
    %6251 = vdwg.mxu0
    %6252 = vmatpush.bf16.msra.mxu0 %v3048
    %6253 = vmatpush.bf16.msra.mxu0 %v3040
    %6254 = vmatpush.bf16.msra.mxu0 %v3032
    %6255 = vmatpush.bf16.msra.mxu0 %v3024
    %6256 = vmatpush.bf16.msra.mxu0 %v3016
    %6257 = vmatpush.bf16.msra.mxu0 %v3008
    %6258 = vmatpush.bf16.msra.mxu0 %v3000
    %6259 = vmatpush.bf16.msra.mxu0 %v2992
    %6260 = vmatmul.bf16.gmra.mxu0 %v6177
    %v6261 = vpop.f32.mrf.mxu0
    %v6262 = vadd.f32 %v6249, %v6261
    %v6263 = vpop.f32.mrf.mxu0
    %6264 = vdwg.mxu0
    %6265 = vmatpush.bf16.msra.mxu0 %v3112
    %6266 = vmatpush.bf16.msra.mxu0 %v3104
    %6267 = vmatpush.bf16.msra.mxu0 %v3096
    %6268 = vmatpush.bf16.msra.mxu0 %v3088
    %6269 = vmatpush.bf16.msra.mxu0 %v3080
    %6270 = vmatpush.bf16.msra.mxu0 %v3072
    %6271 = vmatpush.bf16.msra.mxu0 %v3064
    %6272 = vmatpush.bf16.msra.mxu0 %v3056
    %6273 = vmatmul.bf16.gmra.mxu0 %v6183
    %v6274 = vpop.f32.mrf.mxu0
    %v6275 = vadd.f32 %v6262, %v6274
    %v6276 = vpop.f32.mrf.mxu0
    %6277 = vdwg.mxu0
    %6278 = vmatpush.bf16.msra.mxu0 %v3176
    %6279 = vmatpush.bf16.msra.mxu0 %v3168
    %6280 = vmatpush.bf16.msra.mxu0 %v3160
    %6281 = vmatpush.bf16.msra.mxu0 %v3152
    %6282 = vmatpush.bf16.msra.mxu0 %v3144
    %6283 = vmatpush.bf16.msra.mxu0 %v3136
    %6284 = vmatpush.bf16.msra.mxu0 %v3128
    %6285 = vmatpush.bf16.msra.mxu0 %v3120
    %6286 = vmatmul.bf16.gmra.mxu0 %v6184
    %v6287 = vpop.f32.mrf.mxu0
    %v6288 = vadd.f32 %v6275, %v6287
    %v6289 = vpop.f32.mrf.mxu0
    %6290 = vdwg.mxu0
    %6291 = vmatpush.bf16.msra.mxu0 %v2985
    %6292 = vmatpush.bf16.msra.mxu0 %v2977
    %6293 = vmatpush.bf16.msra.mxu0 %v2969
    %6294 = vmatpush.bf16.msra.mxu0 %v2961
    %6295 = vmatpush.bf16.msra.mxu0 %v2953
    %6296 = vmatpush.bf16.msra.mxu0 %v2945
    %6297 = vmatpush.bf16.msra.mxu0 %v2937
    %6298 = vmatpush.bf16.msra.mxu0 %v2929
    %6299 = vmatmul.bf16.gmra.mxu0 %v6176
    %v6300 = vpop.f32.mrf.mxu0
    %v6301 = vadd.f32 %v2145, %v6300
    %v6302 = vpop.f32.mrf.mxu0
    %6303 = vdwg.mxu0
    %6304 = vmatpush.bf16.msra.mxu0 %v3049
    %6305 = vmatpush.bf16.msra.mxu0 %v3041
    %6306 = vmatpush.bf16.msra.mxu0 %v3033
    %6307 = vmatpush.bf16.msra.mxu0 %v3025
    %6308 = vmatpush.bf16.msra.mxu0 %v3017
    %6309 = vmatpush.bf16.msra.mxu0 %v3009
    %6310 = vmatpush.bf16.msra.mxu0 %v3001
    %6311 = vmatpush.bf16.msra.mxu0 %v2993
    %6312 = vmatmul.bf16.gmra.mxu0 %v6177
    %v6313 = vpop.f32.mrf.mxu0
    %v6314 = vadd.f32 %v6301, %v6313
    %v6315 = vpop.f32.mrf.mxu0
    %6316 = vdwg.mxu0
    %6317 = vmatpush.bf16.msra.mxu0 %v3113
    %6318 = vmatpush.bf16.msra.mxu0 %v3105
    %6319 = vmatpush.bf16.msra.mxu0 %v3097
    %6320 = vmatpush.bf16.msra.mxu0 %v3089
    %6321 = vmatpush.bf16.msra.mxu0 %v3081
    %6322 = vmatpush.bf16.msra.mxu0 %v3073
    %6323 = vmatpush.bf16.msra.mxu0 %v3065
    %6324 = vmatpush.bf16.msra.mxu0 %v3057
    %6325 = vmatmul.bf16.gmra.mxu0 %v6183
    %v6326 = vpop.f32.mrf.mxu0
    %v6327 = vadd.f32 %v6314, %v6326
    %v6328 = vpop.f32.mrf.mxu0
    %6329 = vdwg.mxu0
    %6330 = vmatpush.bf16.msra.mxu0 %v3177
    %6331 = vmatpush.bf16.msra.mxu0 %v3169
    %6332 = vmatpush.bf16.msra.mxu0 %v3161
    %6333 = vmatpush.bf16.msra.mxu0 %v3153
    %6334 = vmatpush.bf16.msra.mxu0 %v3145
    %6335 = vmatpush.bf16.msra.mxu0 %v3137
    %6336 = vmatpush.bf16.msra.mxu0 %v3129
    %6337 = vmatpush.bf16.msra.mxu0 %v3121
    %6338 = vmatmul.bf16.gmra.mxu0 %v6184
    %v6339 = vpop.f32.mrf.mxu0
    %v6340 = vadd.f32 %v6327, %v6339
    %v6341 = vpop.f32.mrf.mxu0
    %6342 = vdwg.mxu0
    %6343 = vmatpush.bf16.msra.mxu0 %v2986
    %6344 = vmatpush.bf16.msra.mxu0 %v2978
    %6345 = vmatpush.bf16.msra.mxu0 %v2970
    %6346 = vmatpush.bf16.msra.mxu0 %v2962
    %6347 = vmatpush.bf16.msra.mxu0 %v2954
    %6348 = vmatpush.bf16.msra.mxu0 %v2946
    %6349 = vmatpush.bf16.msra.mxu0 %v2938
    %6350 = vmatpush.bf16.msra.mxu0 %v2930
    %6351 = vmatmul.bf16.gmra.mxu0 %v6176
    %v6352 = vpop.f32.mrf.mxu0
    %v6353 = vadd.f32 %v2146, %v6352
    %v6354 = vpop.f32.mrf.mxu0
    %6355 = vdwg.mxu0
    %6356 = vmatpush.bf16.msra.mxu0 %v3050
    %6357 = vmatpush.bf16.msra.mxu0 %v3042
    %6358 = vmatpush.bf16.msra.mxu0 %v3034
    %6359 = vmatpush.bf16.msra.mxu0 %v3026
    %6360 = vmatpush.bf16.msra.mxu0 %v3018
    %6361 = vmatpush.bf16.msra.mxu0 %v3010
    %6362 = vmatpush.bf16.msra.mxu0 %v3002
    %6363 = vmatpush.bf16.msra.mxu0 %v2994
    %6364 = vmatmul.bf16.gmra.mxu0 %v6177
    %v6365 = vpop.f32.mrf.mxu0
    %v6366 = vadd.f32 %v6353, %v6365
    %v6367 = vpop.f32.mrf.mxu0
    %6368 = vdwg.mxu0
    %6369 = vmatpush.bf16.msra.mxu0 %v3114
    %6370 = vmatpush.bf16.msra.mxu0 %v3106
    %6371 = vmatpush.bf16.msra.mxu0 %v3098
    %6372 = vmatpush.bf16.msra.mxu0 %v3090
    %6373 = vmatpush.bf16.msra.mxu0 %v3082
    %6374 = vmatpush.bf16.msra.mxu0 %v3074
    %6375 = vmatpush.bf16.msra.mxu0 %v3066
    %6376 = vmatpush.bf16.msra.mxu0 %v3058
    %6377 = vmatmul.bf16.gmra.mxu0 %v6183
    %v6378 = vpop.f32.mrf.mxu0
    %v6379 = vadd.f32 %v6366, %v6378
    %v6380 = vpop.f32.mrf.mxu0
    %6381 = vdwg.mxu0
    %6382 = vmatpush.bf16.msra.mxu0 %v3178
    %6383 = vmatpush.bf16.msra.mxu0 %v3170
    %6384 = vmatpush.bf16.msra.mxu0 %v3162
    %6385 = vmatpush.bf16.msra.mxu0 %v3154
    %6386 = vmatpush.bf16.msra.mxu0 %v3146
    %6387 = vmatpush.bf16.msra.mxu0 %v3138
    %6388 = vmatpush.bf16.msra.mxu0 %v3130
    %6389 = vmatpush.bf16.msra.mxu0 %v3122
    %6390 = vmatmul.bf16.gmra.mxu0 %v6184
    %v6391 = vpop.f32.mrf.mxu0
    %v6392 = vadd.f32 %v6379, %v6391
    %v6393 = vpop.f32.mrf.mxu0
    %6394 = vdwg.mxu0
    %6395 = vmatpush.bf16.msra.mxu0 %v2987
    %6396 = vmatpush.bf16.msra.mxu0 %v2979
    %6397 = vmatpush.bf16.msra.mxu0 %v2971
    %6398 = vmatpush.bf16.msra.mxu0 %v2963
    %6399 = vmatpush.bf16.msra.mxu0 %v2955
    %6400 = vmatpush.bf16.msra.mxu0 %v2947
    %6401 = vmatpush.bf16.msra.mxu0 %v2939
    %6402 = vmatpush.bf16.msra.mxu0 %v2931
    %6403 = vmatmul.bf16.gmra.mxu0 %v6176
    %v6404 = vpop.f32.mrf.mxu0
    %v6405 = vadd.f32 %v2147, %v6404
    %v6406 = vpop.f32.mrf.mxu0
    %6407 = vdwg.mxu0
    %6408 = vmatpush.bf16.msra.mxu0 %v3051
    %6409 = vmatpush.bf16.msra.mxu0 %v3043
    %6410 = vmatpush.bf16.msra.mxu0 %v3035
    %6411 = vmatpush.bf16.msra.mxu0 %v3027
    %6412 = vmatpush.bf16.msra.mxu0 %v3019
    %6413 = vmatpush.bf16.msra.mxu0 %v3011
    %6414 = vmatpush.bf16.msra.mxu0 %v3003
    %6415 = vmatpush.bf16.msra.mxu0 %v2995
    %6416 = vmatmul.bf16.gmra.mxu0 %v6177
    %v6417 = vpop.f32.mrf.mxu0
    %v6418 = vadd.f32 %v6405, %v6417
    %v6419 = vpop.f32.mrf.mxu0
    %6420 = vdwg.mxu0
    %6421 = vmatpush.bf16.msra.mxu0 %v3115
    %6422 = vmatpush.bf16.msra.mxu0 %v3107
    %6423 = vmatpush.bf16.msra.mxu0 %v3099
    %6424 = vmatpush.bf16.msra.mxu0 %v3091
    %6425 = vmatpush.bf16.msra.mxu0 %v3083
    %6426 = vmatpush.bf16.msra.mxu0 %v3075
    %6427 = vmatpush.bf16.msra.mxu0 %v3067
    %6428 = vmatpush.bf16.msra.mxu0 %v3059
    %6429 = vmatmul.bf16.gmra.mxu0 %v6183
    %v6430 = vpop.f32.mrf.mxu0
    %v6431 = vadd.f32 %v6418, %v6430
    %v6432 = vpop.f32.mrf.mxu0
    %6433 = vdwg.mxu0
    %6434 = vmatpush.bf16.msra.mxu0 %v3179
    %6435 = vmatpush.bf16.msra.mxu0 %v3171
    %6436 = vmatpush.bf16.msra.mxu0 %v3163
    %6437 = vmatpush.bf16.msra.mxu0 %v3155
    %6438 = vmatpush.bf16.msra.mxu0 %v3147
    %6439 = vmatpush.bf16.msra.mxu0 %v3139
    %6440 = vmatpush.bf16.msra.mxu0 %v3131
    %6441 = vmatpush.bf16.msra.mxu0 %v3123
    %6442 = vmatmul.bf16.gmra.mxu0 %v6184
    %v6443 = vpop.f32.mrf.mxu0
    %v6444 = vadd.f32 %v6431, %v6443
    %v6445 = vpop.f32.mrf.mxu0
    %6446 = vdwg.mxu0
    %6447 = vmatpush.bf16.msra.mxu0 %v2988
    %6448 = vmatpush.bf16.msra.mxu0 %v2980
    %6449 = vmatpush.bf16.msra.mxu0 %v2972
    %6450 = vmatpush.bf16.msra.mxu0 %v2964
    %6451 = vmatpush.bf16.msra.mxu0 %v2956
    %6452 = vmatpush.bf16.msra.mxu0 %v2948
    %6453 = vmatpush.bf16.msra.mxu0 %v2940
    %6454 = vmatpush.bf16.msra.mxu0 %v2932
    %6455 = vmatmul.bf16.gmra.mxu0 %v6176
    %v6456 = vpop.f32.mrf.mxu0
    %v6457 = vadd.f32 %v2148, %v6456
    %v6458 = vpop.f32.mrf.mxu0
    %6459 = vdwg.mxu0
    %6460 = vmatpush.bf16.msra.mxu0 %v3052
    %6461 = vmatpush.bf16.msra.mxu0 %v3044
    %6462 = vmatpush.bf16.msra.mxu0 %v3036
    %6463 = vmatpush.bf16.msra.mxu0 %v3028
    %6464 = vmatpush.bf16.msra.mxu0 %v3020
    %6465 = vmatpush.bf16.msra.mxu0 %v3012
    %6466 = vmatpush.bf16.msra.mxu0 %v3004
    %6467 = vmatpush.bf16.msra.mxu0 %v2996
    %6468 = vmatmul.bf16.gmra.mxu0 %v6177
    %v6469 = vpop.f32.mrf.mxu0
    %v6470 = vadd.f32 %v6457, %v6469
    %v6471 = vpop.f32.mrf.mxu0
    %6472 = vdwg.mxu0
    %6473 = vmatpush.bf16.msra.mxu0 %v3116
    %6474 = vmatpush.bf16.msra.mxu0 %v3108
    %6475 = vmatpush.bf16.msra.mxu0 %v3100
    %6476 = vmatpush.bf16.msra.mxu0 %v3092
    %6477 = vmatpush.bf16.msra.mxu0 %v3084
    %6478 = vmatpush.bf16.msra.mxu0 %v3076
    %6479 = vmatpush.bf16.msra.mxu0 %v3068
    %6480 = vmatpush.bf16.msra.mxu0 %v3060
    %6481 = vmatmul.bf16.gmra.mxu0 %v6183
    %v6482 = vpop.f32.mrf.mxu0
    %v6483 = vadd.f32 %v6470, %v6482
    %v6484 = vpop.f32.mrf.mxu0
    %6485 = vdwg.mxu0
    %6486 = vmatpush.bf16.msra.mxu0 %v3180
    %6487 = vmatpush.bf16.msra.mxu0 %v3172
    %6488 = vmatpush.bf16.msra.mxu0 %v3164
    %6489 = vmatpush.bf16.msra.mxu0 %v3156
    %6490 = vmatpush.bf16.msra.mxu0 %v3148
    %6491 = vmatpush.bf16.msra.mxu0 %v3140
    %6492 = vmatpush.bf16.msra.mxu0 %v3132
    %6493 = vmatpush.bf16.msra.mxu0 %v3124
    %6494 = vmatmul.bf16.gmra.mxu0 %v6184
    %v6495 = vpop.f32.mrf.mxu0
    %v6496 = vadd.f32 %v6483, %v6495
    %v6497 = vpop.f32.mrf.mxu0
    %6498 = vdwg.mxu0
    %6499 = vmatpush.bf16.msra.mxu0 %v2989
    %6500 = vmatpush.bf16.msra.mxu0 %v2981
    %6501 = vmatpush.bf16.msra.mxu0 %v2973
    %6502 = vmatpush.bf16.msra.mxu0 %v2965
    %6503 = vmatpush.bf16.msra.mxu0 %v2957
    %6504 = vmatpush.bf16.msra.mxu0 %v2949
    %6505 = vmatpush.bf16.msra.mxu0 %v2941
    %6506 = vmatpush.bf16.msra.mxu0 %v2933
    %6507 = vmatmul.bf16.gmra.mxu0 %v6176
    %v6508 = vpop.f32.mrf.mxu0
    %v6509 = vadd.f32 %v2149, %v6508
    %v6510 = vpop.f32.mrf.mxu0
    %6511 = vdwg.mxu0
    %6512 = vmatpush.bf16.msra.mxu0 %v3053
    %6513 = vmatpush.bf16.msra.mxu0 %v3045
    %6514 = vmatpush.bf16.msra.mxu0 %v3037
    %6515 = vmatpush.bf16.msra.mxu0 %v3029
    %6516 = vmatpush.bf16.msra.mxu0 %v3021
    %6517 = vmatpush.bf16.msra.mxu0 %v3013
    %6518 = vmatpush.bf16.msra.mxu0 %v3005
    %6519 = vmatpush.bf16.msra.mxu0 %v2997
    %6520 = vmatmul.bf16.gmra.mxu0 %v6177
    %v6521 = vpop.f32.mrf.mxu0
    %v6522 = vadd.f32 %v6509, %v6521
    %v6523 = vpop.f32.mrf.mxu0
    %6524 = vdwg.mxu0
    %6525 = vmatpush.bf16.msra.mxu0 %v3117
    %6526 = vmatpush.bf16.msra.mxu0 %v3109
    %6527 = vmatpush.bf16.msra.mxu0 %v3101
    %6528 = vmatpush.bf16.msra.mxu0 %v3093
    %6529 = vmatpush.bf16.msra.mxu0 %v3085
    %6530 = vmatpush.bf16.msra.mxu0 %v3077
    %6531 = vmatpush.bf16.msra.mxu0 %v3069
    %6532 = vmatpush.bf16.msra.mxu0 %v3061
    %6533 = vmatmul.bf16.gmra.mxu0 %v6183
    %v6534 = vpop.f32.mrf.mxu0
    %v6535 = vadd.f32 %v6522, %v6534
    %v6536 = vpop.f32.mrf.mxu0
    %6537 = vdwg.mxu0
    %6538 = vmatpush.bf16.msra.mxu0 %v3181
    %6539 = vmatpush.bf16.msra.mxu0 %v3173
    %6540 = vmatpush.bf16.msra.mxu0 %v3165
    %6541 = vmatpush.bf16.msra.mxu0 %v3157
    %6542 = vmatpush.bf16.msra.mxu0 %v3149
    %6543 = vmatpush.bf16.msra.mxu0 %v3141
    %6544 = vmatpush.bf16.msra.mxu0 %v3133
    %6545 = vmatpush.bf16.msra.mxu0 %v3125
    %6546 = vmatmul.bf16.gmra.mxu0 %v6184
    %v6547 = vpop.f32.mrf.mxu0
    %v6548 = vadd.f32 %v6535, %v6547
    %v6549 = vpop.f32.mrf.mxu0
    %6550 = vdwg.mxu0
    %6551 = vmatpush.bf16.msra.mxu0 %v2990
    %6552 = vmatpush.bf16.msra.mxu0 %v2982
    %6553 = vmatpush.bf16.msra.mxu0 %v2974
    %6554 = vmatpush.bf16.msra.mxu0 %v2966
    %6555 = vmatpush.bf16.msra.mxu0 %v2958
    %6556 = vmatpush.bf16.msra.mxu0 %v2950
    %6557 = vmatpush.bf16.msra.mxu0 %v2942
    %6558 = vmatpush.bf16.msra.mxu0 %v2934
    %6559 = vmatmul.bf16.gmra.mxu0 %v6176
    %v6560 = vpop.f32.mrf.mxu0
    %v6561 = vadd.f32 %v2150, %v6560
    %v6562 = vpop.f32.mrf.mxu0
    %6563 = vdwg.mxu0
    %6564 = vmatpush.bf16.msra.mxu0 %v3054
    %6565 = vmatpush.bf16.msra.mxu0 %v3046
    %6566 = vmatpush.bf16.msra.mxu0 %v3038
    %6567 = vmatpush.bf16.msra.mxu0 %v3030
    %6568 = vmatpush.bf16.msra.mxu0 %v3022
    %6569 = vmatpush.bf16.msra.mxu0 %v3014
    %6570 = vmatpush.bf16.msra.mxu0 %v3006
    %6571 = vmatpush.bf16.msra.mxu0 %v2998
    %6572 = vmatmul.bf16.gmra.mxu0 %v6177
    %v6573 = vpop.f32.mrf.mxu0
    %v6574 = vadd.f32 %v6561, %v6573
    %v6575 = vpop.f32.mrf.mxu0
    %6576 = vdwg.mxu0
    %6577 = vmatpush.bf16.msra.mxu0 %v3118
    %6578 = vmatpush.bf16.msra.mxu0 %v3110
    %6579 = vmatpush.bf16.msra.mxu0 %v3102
    %6580 = vmatpush.bf16.msra.mxu0 %v3094
    %6581 = vmatpush.bf16.msra.mxu0 %v3086
    %6582 = vmatpush.bf16.msra.mxu0 %v3078
    %6583 = vmatpush.bf16.msra.mxu0 %v3070
    %6584 = vmatpush.bf16.msra.mxu0 %v3062
    %6585 = vmatmul.bf16.gmra.mxu0 %v6183
    %v6586 = vpop.f32.mrf.mxu0
    %v6587 = vadd.f32 %v6574, %v6586
    %v6588 = vpop.f32.mrf.mxu0
    %6589 = vdwg.mxu0
    %6590 = vmatpush.bf16.msra.mxu0 %v3182
    %6591 = vmatpush.bf16.msra.mxu0 %v3174
    %6592 = vmatpush.bf16.msra.mxu0 %v3166
    %6593 = vmatpush.bf16.msra.mxu0 %v3158
    %6594 = vmatpush.bf16.msra.mxu0 %v3150
    %6595 = vmatpush.bf16.msra.mxu0 %v3142
    %6596 = vmatpush.bf16.msra.mxu0 %v3134
    %6597 = vmatpush.bf16.msra.mxu0 %v3126
    %6598 = vmatmul.bf16.gmra.mxu0 %v6184
    %v6599 = vpop.f32.mrf.mxu0
    %v6600 = vadd.f32 %v6587, %v6599
    %v6601 = vpop.f32.mrf.mxu0
    %6602 = vdwg.mxu0
    %v6603 = vxor.u32 %v6236, 2147483648
    %v6604 = vxor.u32 %v6288, 2147483648
    %v6605 = vmul.f32 %v6603, 1.442695
    %v6606 = vpow.pop %v6605
    %v6607 = vmul.f32 %v6604, 1.442695
    %v6608 = vpow.pop %v6607
    %v6609 = vadd.f32 %v6606, 1.0
    %v6610 = vadd.f32 %v6608, 1.0
    %v6611 = vrcp.pop %v6609
    %v6612 = vmul.f32 %v6609, %v6611
    %v6613 = vsub.f32 1.0, %v6612
    %v6614 = vmul.f32 %v6611, %v6613
    %v6615 = vadd.f32 %v6611, %v6614
    %vm6616 = vweird.f32 %v6609
    %vm6617 = vweird.f32 %v6611
    %vm6618 = vmor %vm6616, %vm6617
    %v6619 = vsel %vm6618, %v6611, %v6615
    %v6620 = vand.u32 2147483647, %v6609
    %vm6621 = vcmp.eq.f32.partialorder %v6620, 8.507059e+37
    %v6622 = vand.u32 %v6609, 2147483648
    %v6623 = vor.u32 1.1754944e-38, %v6622
    %v6624 = vsel %vm6621, %v6623, %v6619
    %v6625 = vmul.f32 1.0, %v6624
    %v6626 = vrcp.pop %v6610
    %v6627 = vmul.f32 %v6610, %v6626
    %v6628 = vsub.f32 1.0, %v6627
    %v6629 = vmul.f32 %v6626, %v6628
    %v6630 = vadd.f32 %v6626, %v6629
    %vm6631 = vweird.f32 %v6610
    %vm6632 = vweird.f32 %v6626
    %vm6633 = vmor %vm6631, %vm6632
    %v6634 = vsel %vm6633, %v6626, %v6630
    %v6635 = vand.u32 2147483647, %v6610
    %vm6636 = vcmp.eq.f32.partialorder %v6635, 8.507059e+37
    %v6637 = vand.u32 %v6610, 2147483648
    %v6638 = vor.u32 1.1754944e-38, %v6637
    %v6639 = vsel %vm6636, %v6638, %v6634
    %v6640 = vmul.f32 1.0, %v6639
    %v6641 = vxor.u32 %v6340, 2147483648
    %v6642 = vxor.u32 %v6392, 2147483648
    %v6643 = vmul.f32 %v6641, 1.442695
    %v6644 = vpow.pop %v6643
    %v6645 = vmul.f32 %v6642, 1.442695
    %v6646 = vpow.pop %v6645
    %v6647 = vadd.f32 %v6644, 1.0
    %v6648 = vadd.f32 %v6646, 1.0
    %v6649 = vrcp.pop %v6647
    %v6650 = vmul.f32 %v6647, %v6649
    %v6651 = vsub.f32 1.0, %v6650
    %v6652 = vmul.f32 %v6649, %v6651
    %v6653 = vadd.f32 %v6649, %v6652
    %vm6654 = vweird.f32 %v6647
    %vm6655 = vweird.f32 %v6649
    %vm6656 = vmor %vm6654, %vm6655
    %v6657 = vsel %vm6656, %v6649, %v6653
    %v6658 = vand.u32 2147483647, %v6647
    %vm6659 = vcmp.eq.f32.partialorder %v6658, 8.507059e+37
    %v6660 = vand.u32 %v6647, 2147483648
    %v6661 = vor.u32 1.1754944e-38, %v6660
    %v6662 = vsel %vm6659, %v6661, %v6657
    %v6663 = vmul.f32 1.0, %v6662
    %v6664 = vrcp.pop %v6648
    %v6665 = vmul.f32 %v6648, %v6664
    %v6666 = vsub.f32 1.0, %v6665
    %v6667 = vmul.f32 %v6664, %v6666
    %v6668 = vadd.f32 %v6664, %v6667
    %vm6669 = vweird.f32 %v6648
    %vm6670 = vweird.f32 %v6664
    %vm6671 = vmor %vm6669, %vm6670
    %v6672 = vsel %vm6671, %v6664, %v6668
    %v6673 = vand.u32 2147483647, %v6648
    %vm6674 = vcmp.eq.f32.partialorder %v6673, 8.507059e+37
    %v6675 = vand.u32 %v6648, 2147483648
    %v6676 = vor.u32 1.1754944e-38, %v6675
    %v6677 = vsel %vm6674, %v6676, %v6672
    %v6678 = vmul.f32 1.0, %v6677
    %v6679 = vtanh.pop %v6444
    %v6680 = vtanh.pop %v6496
    %v6681 = vxor.u32 %v6548, 2147483648
    %v6682 = vxor.u32 %v6600, 2147483648
    %v6683 = vmul.f32 %v6681, 1.442695
    %v6684 = vpow.pop %v6683
    %v6685 = vmul.f32 %v6682, 1.442695
    %v6686 = vpow.pop %v6685
    %v6687 = vadd.f32 %v6684, 1.0
    %v6688 = vadd.f32 %v6686, 1.0
    %v6689 = vrcp.pop %v6687
    %v6690 = vmul.f32 %v6687, %v6689
    %v6691 = vsub.f32 1.0, %v6690
    %v6692 = vmul.f32 %v6689, %v6691
    %v6693 = vadd.f32 %v6689, %v6692
    %vm6694 = vweird.f32 %v6687
    %vm6695 = vweird.f32 %v6689
    %vm6696 = vmor %vm6694, %vm6695
    %v6697 = vsel %vm6696, %v6689, %v6693
    %v6698 = vand.u32 2147483647, %v6687
    %vm6699 = vcmp.eq.f32.partialorder %v6698, 8.507059e+37
    %v6700 = vand.u32 %v6687, 2147483648
    %v6701 = vor.u32 1.1754944e-38, %v6700
    %v6702 = vsel %vm6699, %v6701, %v6697
    %v6703 = vmul.f32 1.0, %v6702
    %v6704 = vrcp.pop %v6688
    %v6705 = vmul.f32 %v6688, %v6704
    %v6706 = vsub.f32 1.0, %v6705
    %v6707 = vmul.f32 %v6704, %v6706
    %v6708 = vadd.f32 %v6704, %v6707
    %vm6709 = vweird.f32 %v6688
    %vm6710 = vweird.f32 %v6704
    %vm6711 = vmor %vm6709, %vm6710
    %v6712 = vsel %vm6711, %v6704, %v6708
    %v6713 = vand.u32 2147483647, %v6688
    %vm6714 = vcmp.eq.f32.partialorder %v6713, 8.507059e+37
    %v6715 = vand.u32 %v6688, 2147483648
    %v6716 = vor.u32 1.1754944e-38, %v6715
    %v6717 = vsel %vm6714, %v6716, %v6712
    %v6718 = vmul.f32 1.0, %v6717
    %v6719 = vmul.f32 %v6663, %v5819
    %v6720 = vmul.f32 %v6678, %v5820
    %v6721 = vmul.f32 %v6625, %v6679
    %v6722 = vmul.f32 %v6640, %v6680
    %v6723 = vadd.f32 %v6719, %v6721
    %v6724 = vadd.f32 %v6720, %v6722
    %v6725 = vtanh.pop %v6723
    %v6726 = vtanh.pop %v6724
    %v6727 = vmul.f32 %v6703, %v6725
    %v6728 = vmul.f32 %v6718, %v6726
    %v6729 = vsel %vm5826, %v6169, %v5813
    %v6730 = vsel %vm5826, %v6170, %v5814
    %v6731 = vsel %vm5826, %v6165, %v5815
    %v6732 = vsel %vm5826, %v6166, %v5816
    %v6733 = vsel %vm5826, %v6727, %v5817
    %v6734 = vsel %vm5826, %v6728, %v5818
    %v6735 = vsel %vm5826, %v6723, %v5819
    %v6736 = vsel %vm5826, %v6724, %v5820
    %vm6737 = vcmp.gt.s32.totalorder %v94, 4
    %v6738 = vsel %vm6737, 1, 0
    %6739 = vset.pattern.permute.xlu0 0
    %6740 = vperm.xlu0 %6739, %v6738
    %v6741 = vpop.permute.xlu0 %6740
    %vm6742 = vcmp.eq.s32.totalorder %v6741, 1
    %v6743 = vpack.c.bf16 %v6729, %v6729
    %v6744 = vpack.c.bf16 %v6730, %v6730
    %6745 = vmatpush.bf16.msra.mxu0 %v1592
    %6746 = vmatpush.bf16.msra.mxu0 %v1584
    %6747 = vmatpush.bf16.msra.mxu0 %v1576
    %6748 = vmatpush.bf16.msra.mxu0 %v1568
    %6749 = vmatpush.bf16.msra.mxu0 %v1560
    %6750 = vmatpush.bf16.msra.mxu0 %v1552
    %6751 = vmatpush.bf16.msra.mxu0 %v1544
    %6752 = vmatpush.bf16.msra.mxu0 %v1536
    %6753 = vmatmul.bf16.gmra.mxu0 %v6743
    %v6754 = vpop.f32.mrf.mxu0
    %v6755 = vadd.f32 0.0, %v6754
    %v6756 = vpop.f32.mrf.mxu0
    %6757 = vdwg.mxu0
    %6758 = vmatpush.bf16.msra.mxu0 %v1656
    %6759 = vmatpush.bf16.msra.mxu0 %v1648
    %6760 = vmatpush.bf16.msra.mxu0 %v1640
    %6761 = vmatpush.bf16.msra.mxu0 %v1632
    %6762 = vmatpush.bf16.msra.mxu0 %v1624
    %6763 = vmatpush.bf16.msra.mxu0 %v1616
    %6764 = vmatpush.bf16.msra.mxu0 %v1608
    %6765 = vmatpush.bf16.msra.mxu0 %v1600
    %6766 = vmatmul.bf16.gmra.mxu0 %v6744
    %v6767 = vpop.f32.mrf.mxu0
    %v6768 = vadd.f32 %v6755, %v6767
    %v6769 = vpop.f32.mrf.mxu0
    %6770 = vdwg.mxu0
    %6771 = vmatpush.bf16.msra.mxu0 %v1593
    %6772 = vmatpush.bf16.msra.mxu0 %v1585
    %6773 = vmatpush.bf16.msra.mxu0 %v1577
    %6774 = vmatpush.bf16.msra.mxu0 %v1569
    %6775 = vmatpush.bf16.msra.mxu0 %v1561
    %6776 = vmatpush.bf16.msra.mxu0 %v1553
    %6777 = vmatpush.bf16.msra.mxu0 %v1545
    %6778 = vmatpush.bf16.msra.mxu0 %v1537
    %6779 = vmatmul.bf16.gmra.mxu0 %v6743
    %v6780 = vpop.f32.mrf.mxu0
    %v6781 = vadd.f32 0.0, %v6780
    %v6782 = vpop.f32.mrf.mxu0
    %6783 = vdwg.mxu0
    %6784 = vmatpush.bf16.msra.mxu0 %v1657
    %6785 = vmatpush.bf16.msra.mxu0 %v1649
    %6786 = vmatpush.bf16.msra.mxu0 %v1641
    %6787 = vmatpush.bf16.msra.mxu0 %v1633
    %6788 = vmatpush.bf16.msra.mxu0 %v1625
    %6789 = vmatpush.bf16.msra.mxu0 %v1617
    %6790 = vmatpush.bf16.msra.mxu0 %v1609
    %6791 = vmatpush.bf16.msra.mxu0 %v1601
    %6792 = vmatmul.bf16.gmra.mxu0 %v6744
    %v6793 = vpop.f32.mrf.mxu0
    %v6794 = vadd.f32 %v6781, %v6793
    %v6795 = vpop.f32.mrf.mxu0
    %6796 = vdwg.mxu0
    %6797 = vmatpush.bf16.msra.mxu0 %v1594
    %6798 = vmatpush.bf16.msra.mxu0 %v1586
    %6799 = vmatpush.bf16.msra.mxu0 %v1578
    %6800 = vmatpush.bf16.msra.mxu0 %v1570
    %6801 = vmatpush.bf16.msra.mxu0 %v1562
    %6802 = vmatpush.bf16.msra.mxu0 %v1554
    %6803 = vmatpush.bf16.msra.mxu0 %v1546
    %6804 = vmatpush.bf16.msra.mxu0 %v1538
    %6805 = vmatmul.bf16.gmra.mxu0 %v6743
    %v6806 = vpop.f32.mrf.mxu0
    %v6807 = vadd.f32 0.0, %v6806
    %v6808 = vpop.f32.mrf.mxu0
    %6809 = vdwg.mxu0
    %6810 = vmatpush.bf16.msra.mxu0 %v1658
    %6811 = vmatpush.bf16.msra.mxu0 %v1650
    %6812 = vmatpush.bf16.msra.mxu0 %v1642
    %6813 = vmatpush.bf16.msra.mxu0 %v1634
    %6814 = vmatpush.bf16.msra.mxu0 %v1626
    %6815 = vmatpush.bf16.msra.mxu0 %v1618
    %6816 = vmatpush.bf16.msra.mxu0 %v1610
    %6817 = vmatpush.bf16.msra.mxu0 %v1602
    %6818 = vmatmul.bf16.gmra.mxu0 %v6744
    %v6819 = vpop.f32.mrf.mxu0
    %v6820 = vadd.f32 %v6807, %v6819
    %v6821 = vpop.f32.mrf.mxu0
    %6822 = vdwg.mxu0
    %6823 = vmatpush.bf16.msra.mxu0 %v1595
    %6824 = vmatpush.bf16.msra.mxu0 %v1587
    %6825 = vmatpush.bf16.msra.mxu0 %v1579
    %6826 = vmatpush.bf16.msra.mxu0 %v1571
    %6827 = vmatpush.bf16.msra.mxu0 %v1563
    %6828 = vmatpush.bf16.msra.mxu0 %v1555
    %6829 = vmatpush.bf16.msra.mxu0 %v1547
    %6830 = vmatpush.bf16.msra.mxu0 %v1539
    %6831 = vmatmul.bf16.gmra.mxu0 %v6743
    %v6832 = vpop.f32.mrf.mxu0
    %v6833 = vadd.f32 0.0, %v6832
    %v6834 = vpop.f32.mrf.mxu0
    %6835 = vdwg.mxu0
    %6836 = vmatpush.bf16.msra.mxu0 %v1659
    %6837 = vmatpush.bf16.msra.mxu0 %v1651
    %6838 = vmatpush.bf16.msra.mxu0 %v1643
    %6839 = vmatpush.bf16.msra.mxu0 %v1635
    %6840 = vmatpush.bf16.msra.mxu0 %v1627
    %6841 = vmatpush.bf16.msra.mxu0 %v1619
    %6842 = vmatpush.bf16.msra.mxu0 %v1611
    %6843 = vmatpush.bf16.msra.mxu0 %v1603
    %6844 = vmatmul.bf16.gmra.mxu0 %v6744
    %v6845 = vpop.f32.mrf.mxu0
    %v6846 = vadd.f32 %v6833, %v6845
    %v6847 = vpop.f32.mrf.mxu0
    %6848 = vdwg.mxu0
    %6849 = vmatpush.bf16.msra.mxu0 %v1596
    %6850 = vmatpush.bf16.msra.mxu0 %v1588
    %6851 = vmatpush.bf16.msra.mxu0 %v1580
    %6852 = vmatpush.bf16.msra.mxu0 %v1572
    %6853 = vmatpush.bf16.msra.mxu0 %v1564
    %6854 = vmatpush.bf16.msra.mxu0 %v1556
    %6855 = vmatpush.bf16.msra.mxu0 %v1548
    %6856 = vmatpush.bf16.msra.mxu0 %v1540
    %6857 = vmatmul.bf16.gmra.mxu0 %v6743
    %v6858 = vpop.f32.mrf.mxu0
    %v6859 = vadd.f32 0.0, %v6858
    %v6860 = vpop.f32.mrf.mxu0
    %6861 = vdwg.mxu0
    %6862 = vmatpush.bf16.msra.mxu0 %v1660
    %6863 = vmatpush.bf16.msra.mxu0 %v1652
    %6864 = vmatpush.bf16.msra.mxu0 %v1644
    %6865 = vmatpush.bf16.msra.mxu0 %v1636
    %6866 = vmatpush.bf16.msra.mxu0 %v1628
    %6867 = vmatpush.bf16.msra.mxu0 %v1620
    %6868 = vmatpush.bf16.msra.mxu0 %v1612
    %6869 = vmatpush.bf16.msra.mxu0 %v1604
    %6870 = vmatmul.bf16.gmra.mxu0 %v6744
    %v6871 = vpop.f32.mrf.mxu0
    %v6872 = vadd.f32 %v6859, %v6871
    %v6873 = vpop.f32.mrf.mxu0
    %6874 = vdwg.mxu0
    %6875 = vmatpush.bf16.msra.mxu0 %v1597
    %6876 = vmatpush.bf16.msra.mxu0 %v1589
    %6877 = vmatpush.bf16.msra.mxu0 %v1581
    %6878 = vmatpush.bf16.msra.mxu0 %v1573
    %6879 = vmatpush.bf16.msra.mxu0 %v1565
    %6880 = vmatpush.bf16.msra.mxu0 %v1557
    %6881 = vmatpush.bf16.msra.mxu0 %v1549
    %6882 = vmatpush.bf16.msra.mxu0 %v1541
    %6883 = vmatmul.bf16.gmra.mxu0 %v6743
    %v6884 = vpop.f32.mrf.mxu0
    %v6885 = vadd.f32 0.0, %v6884
    %v6886 = vpop.f32.mrf.mxu0
    %6887 = vdwg.mxu0
    %6888 = vmatpush.bf16.msra.mxu0 %v1661
    %6889 = vmatpush.bf16.msra.mxu0 %v1653
    %6890 = vmatpush.bf16.msra.mxu0 %v1645
    %6891 = vmatpush.bf16.msra.mxu0 %v1637
    %6892 = vmatpush.bf16.msra.mxu0 %v1629
    %6893 = vmatpush.bf16.msra.mxu0 %v1621
    %6894 = vmatpush.bf16.msra.mxu0 %v1613
    %6895 = vmatpush.bf16.msra.mxu0 %v1605
    %6896 = vmatmul.bf16.gmra.mxu0 %v6744
    %v6897 = vpop.f32.mrf.mxu0
    %v6898 = vadd.f32 %v6885, %v6897
    %v6899 = vpop.f32.mrf.mxu0
    %6900 = vdwg.mxu0
    %6901 = vmatpush.bf16.msra.mxu0 %v1598
    %6902 = vmatpush.bf16.msra.mxu0 %v1590
    %6903 = vmatpush.bf16.msra.mxu0 %v1582
    %6904 = vmatpush.bf16.msra.mxu0 %v1574
    %6905 = vmatpush.bf16.msra.mxu0 %v1566
    %6906 = vmatpush.bf16.msra.mxu0 %v1558
    %6907 = vmatpush.bf16.msra.mxu0 %v1550
    %6908 = vmatpush.bf16.msra.mxu0 %v1542
    %6909 = vmatmul.bf16.gmra.mxu0 %v6743
    %v6910 = vpop.f32.mrf.mxu0
    %v6911 = vadd.f32 0.0, %v6910
    %v6912 = vpop.f32.mrf.mxu0
    %6913 = vdwg.mxu0
    %6914 = vmatpush.bf16.msra.mxu0 %v1662
    %6915 = vmatpush.bf16.msra.mxu0 %v1654
    %6916 = vmatpush.bf16.msra.mxu0 %v1646
    %6917 = vmatpush.bf16.msra.mxu0 %v1638
    %6918 = vmatpush.bf16.msra.mxu0 %v1630
    %6919 = vmatpush.bf16.msra.mxu0 %v1622
    %6920 = vmatpush.bf16.msra.mxu0 %v1614
    %6921 = vmatpush.bf16.msra.mxu0 %v1606
    %6922 = vmatmul.bf16.gmra.mxu0 %v6744
    %v6923 = vpop.f32.mrf.mxu0
    %v6924 = vadd.f32 %v6911, %v6923
    %v6925 = vpop.f32.mrf.mxu0
    %6926 = vdwg.mxu0
    %6927 = vmatpush.bf16.msra.mxu0 %v1599
    %6928 = vmatpush.bf16.msra.mxu0 %v1591
    %6929 = vmatpush.bf16.msra.mxu0 %v1583
    %6930 = vmatpush.bf16.msra.mxu0 %v1575
    %6931 = vmatpush.bf16.msra.mxu0 %v1567
    %6932 = vmatpush.bf16.msra.mxu0 %v1559
    %6933 = vmatpush.bf16.msra.mxu0 %v1551
    %6934 = vmatpush.bf16.msra.mxu0 %v1543
    %6935 = vmatmul.bf16.gmra.mxu0 %v6743
    %v6936 = vpop.f32.mrf.mxu0
    %v6937 = vadd.f32 0.0, %v6936
    %v6938 = vpop.f32.mrf.mxu0
    %6939 = vdwg.mxu0
    %6940 = vmatpush.bf16.msra.mxu0 %v1663
    %6941 = vmatpush.bf16.msra.mxu0 %v1655
    %6942 = vmatpush.bf16.msra.mxu0 %v1647
    %6943 = vmatpush.bf16.msra.mxu0 %v1639
    %6944 = vmatpush.bf16.msra.mxu0 %v1631
    %6945 = vmatpush.bf16.msra.mxu0 %v1623
    %6946 = vmatpush.bf16.msra.mxu0 %v1615
    %6947 = vmatpush.bf16.msra.mxu0 %v1607
    %6948 = vmatmul.bf16.gmra.mxu0 %v6744
    %v6949 = vpop.f32.mrf.mxu0
    %v6950 = vadd.f32 %v6937, %v6949
    %v6951 = vpop.f32.mrf.mxu0
    %6952 = vdwg.mxu0
    %v6953 = vadd.f32 %v549, %v6768
    %v6954 = vadd.f32 %v578, %v6794
    %v6955 = vadd.f32 %v607, %v6820
    %v6956 = vadd.f32 %v636, %v6846
    %v6957 = vadd.f32 %v665, %v6872
    %v6958 = vadd.f32 %v694, %v6898
    %v6959 = vadd.f32 %v723, %v6924
    %v6960 = vadd.f32 %v752, %v6950
    %v6961 = vxor.u32 %v6953, 2147483648
    %v6962 = vxor.u32 %v6954, 2147483648
    %v6963 = vmul.f32 %v6961, 1.442695
    %v6964 = vpow.pop %v6963
    %v6965 = vmul.f32 %v6962, 1.442695
    %v6966 = vpow.pop %v6965
    %v6967 = vadd.f32 %v6964, 1.0
    %v6968 = vadd.f32 %v6966, 1.0
    %v6969 = vrcp.pop %v6967
    %v6970 = vmul.f32 %v6967, %v6969
    %v6971 = vsub.f32 1.0, %v6970
    %v6972 = vmul.f32 %v6969, %v6971
    %v6973 = vadd.f32 %v6969, %v6972
    %vm6974 = vweird.f32 %v6967
    %vm6975 = vweird.f32 %v6969
    %vm6976 = vmor %vm6974, %vm6975
    %v6977 = vsel %vm6976, %v6969, %v6973
    %v6978 = vand.u32 2147483647, %v6967
    %vm6979 = vcmp.eq.f32.partialorder %v6978, 8.507059e+37
    %v6980 = vand.u32 %v6967, 2147483648
    %v6981 = vor.u32 1.1754944e-38, %v6980
    %v6982 = vsel %vm6979, %v6981, %v6977
    %v6983 = vmul.f32 1.0, %v6982
    %v6984 = vrcp.pop %v6968
    %v6985 = vmul.f32 %v6968, %v6984
    %v6986 = vsub.f32 1.0, %v6985
    %v6987 = vmul.f32 %v6984, %v6986
    %v6988 = vadd.f32 %v6984, %v6987
    %vm6989 = vweird.f32 %v6968
    %vm6990 = vweird.f32 %v6984
    %vm6991 = vmor %vm6989, %vm6990
    %v6992 = vsel %vm6991, %v6984, %v6988
    %v6993 = vand.u32 2147483647, %v6968
    %vm6994 = vcmp.eq.f32.partialorder %v6993, 8.507059e+37
    %v6995 = vand.u32 %v6968, 2147483648
    %v6996 = vor.u32 1.1754944e-38, %v6995
    %v6997 = vsel %vm6994, %v6996, %v6992
    %v6998 = vmul.f32 1.0, %v6997
    %v6999 = vxor.u32 %v6955, 2147483648
    %v7000 = vxor.u32 %v6956, 2147483648
    %v7001 = vmul.f32 %v6999, 1.442695
    %v7002 = vpow.pop %v7001
    %v7003 = vmul.f32 %v7000, 1.442695
    %v7004 = vpow.pop %v7003
    %v7005 = vadd.f32 %v7002, 1.0
    %v7006 = vadd.f32 %v7004, 1.0
    %v7007 = vrcp.pop %v7005
    %v7008 = vmul.f32 %v7005, %v7007
    %v7009 = vsub.f32 1.0, %v7008
    %v7010 = vmul.f32 %v7007, %v7009
    %v7011 = vadd.f32 %v7007, %v7010
    %vm7012 = vweird.f32 %v7005
    %vm7013 = vweird.f32 %v7007
    %vm7014 = vmor %vm7012, %vm7013
    %v7015 = vsel %vm7014, %v7007, %v7011
    %v7016 = vand.u32 2147483647, %v7005
    %vm7017 = vcmp.eq.f32.partialorder %v7016, 8.507059e+37
    %v7018 = vand.u32 %v7005, 2147483648
    %v7019 = vor.u32 1.1754944e-38, %v7018
    %v7020 = vsel %vm7017, %v7019, %v7015
    %v7021 = vmul.f32 1.0, %v7020
    %v7022 = vrcp.pop %v7006
    %v7023 = vmul.f32 %v7006, %v7022
    %v7024 = vsub.f32 1.0, %v7023
    %v7025 = vmul.f32 %v7022, %v7024
    %v7026 = vadd.f32 %v7022, %v7025
    %vm7027 = vweird.f32 %v7006
    %vm7028 = vweird.f32 %v7022
    %vm7029 = vmor %vm7027, %vm7028
    %v7030 = vsel %vm7029, %v7022, %v7026
    %v7031 = vand.u32 2147483647, %v7006
    %vm7032 = vcmp.eq.f32.partialorder %v7031, 8.507059e+37
    %v7033 = vand.u32 %v7006, 2147483648
    %v7034 = vor.u32 1.1754944e-38, %v7033
    %v7035 = vsel %vm7032, %v7034, %v7030
    %v7036 = vmul.f32 1.0, %v7035
    %v7037 = vtanh.pop %v6957
    %v7038 = vtanh.pop %v6958
    %v7039 = vxor.u32 %v6959, 2147483648
    %v7040 = vxor.u32 %v6960, 2147483648
    %v7041 = vmul.f32 %v7039, 1.442695
    %v7042 = vpow.pop %v7041
    %v7043 = vmul.f32 %v7040, 1.442695
    %v7044 = vpow.pop %v7043
    %v7045 = vadd.f32 %v7042, 1.0
    %v7046 = vadd.f32 %v7044, 1.0
    %v7047 = vrcp.pop %v7045
    %v7048 = vmul.f32 %v7045, %v7047
    %v7049 = vsub.f32 1.0, %v7048
    %v7050 = vmul.f32 %v7047, %v7049
    %v7051 = vadd.f32 %v7047, %v7050
    %vm7052 = vweird.f32 %v7045
    %vm7053 = vweird.f32 %v7047
    %vm7054 = vmor %vm7052, %vm7053
    %v7055 = vsel %vm7054, %v7047, %v7051
    %v7056 = vand.u32 2147483647, %v7045
    %vm7057 = vcmp.eq.f32.partialorder %v7056, 8.507059e+37
    %v7058 = vand.u32 %v7045, 2147483648
    %v7059 = vor.u32 1.1754944e-38, %v7058
    %v7060 = vsel %vm7057, %v7059, %v7055
    %v7061 = vmul.f32 1.0, %v7060
    %v7062 = vrcp.pop %v7046
    %v7063 = vmul.f32 %v7046, %v7062
    %v7064 = vsub.f32 1.0, %v7063
    %v7065 = vmul.f32 %v7062, %v7064
    %v7066 = vadd.f32 %v7062, %v7065
    %vm7067 = vweird.f32 %v7046
    %vm7068 = vweird.f32 %v7062
    %vm7069 = vmor %vm7067, %vm7068
    %v7070 = vsel %vm7069, %v7062, %v7066
    %v7071 = vand.u32 2147483647, %v7046
    %vm7072 = vcmp.eq.f32.partialorder %v7071, 8.507059e+37
    %v7073 = vand.u32 %v7046, 2147483648
    %v7074 = vor.u32 1.1754944e-38, %v7073
    %v7075 = vsel %vm7072, %v7074, %v7070
    %v7076 = vmul.f32 1.0, %v7075
    %v7077 = vmul.f32 %v7021, %v6731
    %v7078 = vmul.f32 %v7036, %v6732
    %v7079 = vmul.f32 %v6983, %v7037
    %v7080 = vmul.f32 %v6998, %v7038
    %v7081 = vadd.f32 %v7077, %v7079
    %v7082 = vadd.f32 %v7078, %v7080
    %v7083 = vtanh.pop %v7081
    %v7084 = vtanh.pop %v7082
    %v7085 = vmul.f32 %v7061, %v7083
    %v7086 = vmul.f32 %v7076, %v7084
    %v7087 = vpack.c.bf16 %v7086, %v7085
    %v7088 = vpack.c.bf16 %v6734, %v6733
    %v7090 = vunpack.c.l.b16 %v7087
    %v7091 = vunpack.c.h.b16 %v7087
    %v7092 = vpack.c.b16 %v7090, %v7090
    %v7093 = vpack.c.b16 %v7091, %v7091
    %v7097 = vunpack.c.l.b16 %v7088
    %v7098 = vunpack.c.h.b16 %v7088
    %v7099 = vpack.c.b16 %v7097, %v7097
    %v7100 = vpack.c.b16 %v7098, %v7098
    %7103 = vmatpush.bf16.msra.mxu0 %v2983
    %7104 = vmatpush.bf16.msra.mxu0 %v2975
    %7105 = vmatpush.bf16.msra.mxu0 %v2967
    %7106 = vmatpush.bf16.msra.mxu0 %v2959
    %7107 = vmatpush.bf16.msra.mxu0 %v2951
    %7108 = vmatpush.bf16.msra.mxu0 %v2943
    %7109 = vmatpush.bf16.msra.mxu0 %v2935
    %7110 = vmatpush.bf16.msra.mxu0 %v2927
    %7111 = vmatmul.bf16.gmra.mxu0 %v7092
    %v7112 = vpop.f32.mrf.mxu0
    %v7113 = vadd.f32 %v2143, %v7112
    %v7114 = vpop.f32.mrf.mxu0
    %7115 = vdwg.mxu0
    %7116 = vmatpush.bf16.msra.mxu0 %v3047
    %7117 = vmatpush.bf16.msra.mxu0 %v3039
    %7118 = vmatpush.bf16.msra.mxu0 %v3031
    %7119 = vmatpush.bf16.msra.mxu0 %v3023
    %7120 = vmatpush.bf16.msra.mxu0 %v3015
    %7121 = vmatpush.bf16.msra.mxu0 %v3007
    %7122 = vmatpush.bf16.msra.mxu0 %v2999
    %7123 = vmatpush.bf16.msra.mxu0 %v2991
    %7124 = vmatmul.bf16.gmra.mxu0 %v7093
    %v7125 = vpop.f32.mrf.mxu0
    %v7126 = vadd.f32 %v7113, %v7125
    %v7127 = vpop.f32.mrf.mxu0
    %7128 = vdwg.mxu0
    %7129 = vmatpush.bf16.msra.mxu0 %v3111
    %7130 = vmatpush.bf16.msra.mxu0 %v3103
    %7131 = vmatpush.bf16.msra.mxu0 %v3095
    %7132 = vmatpush.bf16.msra.mxu0 %v3087
    %7133 = vmatpush.bf16.msra.mxu0 %v3079
    %7134 = vmatpush.bf16.msra.mxu0 %v3071
    %7135 = vmatpush.bf16.msra.mxu0 %v3063
    %7136 = vmatpush.bf16.msra.mxu0 %v3055
    %7137 = vmatmul.bf16.gmra.mxu0 %v7099
    %v7138 = vpop.f32.mrf.mxu0
    %v7139 = vadd.f32 %v7126, %v7138
    %v7140 = vpop.f32.mrf.mxu0
    %7141 = vdwg.mxu0
    %7142 = vmatpush.bf16.msra.mxu0 %v3175
    %7143 = vmatpush.bf16.msra.mxu0 %v3167
    %7144 = vmatpush.bf16.msra.mxu0 %v3159
    %7145 = vmatpush.bf16.msra.mxu0 %v3151
    %7146 = vmatpush.bf16.msra.mxu0 %v3143
    %7147 = vmatpush.bf16.msra.mxu0 %v3135
    %7148 = vmatpush.bf16.msra.mxu0 %v3127
    %7149 = vmatpush.bf16.msra.mxu0 %v3119
    %7150 = vmatmul.bf16.gmra.mxu0 %v7100
    %v7151 = vpop.f32.mrf.mxu0
    %v7152 = vadd.f32 %v7139, %v7151
    %v7153 = vpop.f32.mrf.mxu0
    %7154 = vdwg.mxu0
    %7155 = vmatpush.bf16.msra.mxu0 %v2984
    %7156 = vmatpush.bf16.msra.mxu0 %v2976
    %7157 = vmatpush.bf16.msra.mxu0 %v2968
    %7158 = vmatpush.bf16.msra.mxu0 %v2960
    %7159 = vmatpush.bf16.msra.mxu0 %v2952
    %7160 = vmatpush.bf16.msra.mxu0 %v2944
    %7161 = vmatpush.bf16.msra.mxu0 %v2936
    %7162 = vmatpush.bf16.msra.mxu0 %v2928
    %7163 = vmatmul.bf16.gmra.mxu0 %v7092
    %v7164 = vpop.f32.mrf.mxu0
    %v7165 = vadd.f32 %v2144, %v7164
    %v7166 = vpop.f32.mrf.mxu0
    %7167 = vdwg.mxu0
    %7168 = vmatpush.bf16.msra.mxu0 %v3048
    %7169 = vmatpush.bf16.msra.mxu0 %v3040
    %7170 = vmatpush.bf16.msra.mxu0 %v3032
    %7171 = vmatpush.bf16.msra.mxu0 %v3024
    %7172 = vmatpush.bf16.msra.mxu0 %v3016
    %7173 = vmatpush.bf16.msra.mxu0 %v3008
    %7174 = vmatpush.bf16.msra.mxu0 %v3000
    %7175 = vmatpush.bf16.msra.mxu0 %v2992
    %7176 = vmatmul.bf16.gmra.mxu0 %v7093
    %v7177 = vpop.f32.mrf.mxu0
    %v7178 = vadd.f32 %v7165, %v7177
    %v7179 = vpop.f32.mrf.mxu0
    %7180 = vdwg.mxu0
    %7181 = vmatpush.bf16.msra.mxu0 %v3112
    %7182 = vmatpush.bf16.msra.mxu0 %v3104
    %7183 = vmatpush.bf16.msra.mxu0 %v3096
    %7184 = vmatpush.bf16.msra.mxu0 %v3088
    %7185 = vmatpush.bf16.msra.mxu0 %v3080
    %7186 = vmatpush.bf16.msra.mxu0 %v3072
    %7187 = vmatpush.bf16.msra.mxu0 %v3064
    %7188 = vmatpush.bf16.msra.mxu0 %v3056
    %7189 = vmatmul.bf16.gmra.mxu0 %v7099
    %v7190 = vpop.f32.mrf.mxu0
    %v7191 = vadd.f32 %v7178, %v7190
    %v7192 = vpop.f32.mrf.mxu0
    %7193 = vdwg.mxu0
    %7194 = vmatpush.bf16.msra.mxu0 %v3176
    %7195 = vmatpush.bf16.msra.mxu0 %v3168
    %7196 = vmatpush.bf16.msra.mxu0 %v3160
    %7197 = vmatpush.bf16.msra.mxu0 %v3152
    %7198 = vmatpush.bf16.msra.mxu0 %v3144
    %7199 = vmatpush.bf16.msra.mxu0 %v3136
    %7200 = vmatpush.bf16.msra.mxu0 %v3128
    %7201 = vmatpush.bf16.msra.mxu0 %v3120
    %7202 = vmatmul.bf16.gmra.mxu0 %v7100
    %v7203 = vpop.f32.mrf.mxu0
    %v7204 = vadd.f32 %v7191, %v7203
    %v7205 = vpop.f32.mrf.mxu0
    %7206 = vdwg.mxu0
    %7207 = vmatpush.bf16.msra.mxu0 %v2985
    %7208 = vmatpush.bf16.msra.mxu0 %v2977
    %7209 = vmatpush.bf16.msra.mxu0 %v2969
    %7210 = vmatpush.bf16.msra.mxu0 %v2961
    %7211 = vmatpush.bf16.msra.mxu0 %v2953
    %7212 = vmatpush.bf16.msra.mxu0 %v2945
    %7213 = vmatpush.bf16.msra.mxu0 %v2937
    %7214 = vmatpush.bf16.msra.mxu0 %v2929
    %7215 = vmatmul.bf16.gmra.mxu0 %v7092
    %v7216 = vpop.f32.mrf.mxu0
    %v7217 = vadd.f32 %v2145, %v7216
    %v7218 = vpop.f32.mrf.mxu0
    %7219 = vdwg.mxu0
    %7220 = vmatpush.bf16.msra.mxu0 %v3049
    %7221 = vmatpush.bf16.msra.mxu0 %v3041
    %7222 = vmatpush.bf16.msra.mxu0 %v3033
    %7223 = vmatpush.bf16.msra.mxu0 %v3025
    %7224 = vmatpush.bf16.msra.mxu0 %v3017
    %7225 = vmatpush.bf16.msra.mxu0 %v3009
    %7226 = vmatpush.bf16.msra.mxu0 %v3001
    %7227 = vmatpush.bf16.msra.mxu0 %v2993
    %7228 = vmatmul.bf16.gmra.mxu0 %v7093
    %v7229 = vpop.f32.mrf.mxu0
    %v7230 = vadd.f32 %v7217, %v7229
    %v7231 = vpop.f32.mrf.mxu0
    %7232 = vdwg.mxu0
    %7233 = vmatpush.bf16.msra.mxu0 %v3113
    %7234 = vmatpush.bf16.msra.mxu0 %v3105
    %7235 = vmatpush.bf16.msra.mxu0 %v3097
    %7236 = vmatpush.bf16.msra.mxu0 %v3089
    %7237 = vmatpush.bf16.msra.mxu0 %v3081
    %7238 = vmatpush.bf16.msra.mxu0 %v3073
    %7239 = vmatpush.bf16.msra.mxu0 %v3065
    %7240 = vmatpush.bf16.msra.mxu0 %v3057
    %7241 = vmatmul.bf16.gmra.mxu0 %v7099
    %v7242 = vpop.f32.mrf.mxu0
    %v7243 = vadd.f32 %v7230, %v7242
    %v7244 = vpop.f32.mrf.mxu0
    %7245 = vdwg.mxu0
    %7246 = vmatpush.bf16.msra.mxu0 %v3177
    %7247 = vmatpush.bf16.msra.mxu0 %v3169
    %7248 = vmatpush.bf16.msra.mxu0 %v3161
    %7249 = vmatpush.bf16.msra.mxu0 %v3153
    %7250 = vmatpush.bf16.msra.mxu0 %v3145
    %7251 = vmatpush.bf16.msra.mxu0 %v3137
    %7252 = vmatpush.bf16.msra.mxu0 %v3129
    %7253 = vmatpush.bf16.msra.mxu0 %v3121
    %7254 = vmatmul.bf16.gmra.mxu0 %v7100
    %v7255 = vpop.f32.mrf.mxu0
    %v7256 = vadd.f32 %v7243, %v7255
    %v7257 = vpop.f32.mrf.mxu0
    %7258 = vdwg.mxu0
    %7259 = vmatpush.bf16.msra.mxu0 %v2986
    %7260 = vmatpush.bf16.msra.mxu0 %v2978
    %7261 = vmatpush.bf16.msra.mxu0 %v2970
    %7262 = vmatpush.bf16.msra.mxu0 %v2962
    %7263 = vmatpush.bf16.msra.mxu0 %v2954
    %7264 = vmatpush.bf16.msra.mxu0 %v2946
    %7265 = vmatpush.bf16.msra.mxu0 %v2938
    %7266 = vmatpush.bf16.msra.mxu0 %v2930
    %7267 = vmatmul.bf16.gmra.mxu0 %v7092
    %v7268 = vpop.f32.mrf.mxu0
    %v7269 = vadd.f32 %v2146, %v7268
    %v7270 = vpop.f32.mrf.mxu0
    %7271 = vdwg.mxu0
    %7272 = vmatpush.bf16.msra.mxu0 %v3050
    %7273 = vmatpush.bf16.msra.mxu0 %v3042
    %7274 = vmatpush.bf16.msra.mxu0 %v3034
    %7275 = vmatpush.bf16.msra.mxu0 %v3026
    %7276 = vmatpush.bf16.msra.mxu0 %v3018
    %7277 = vmatpush.bf16.msra.mxu0 %v3010
    %7278 = vmatpush.bf16.msra.mxu0 %v3002
    %7279 = vmatpush.bf16.msra.mxu0 %v2994
    %7280 = vmatmul.bf16.gmra.mxu0 %v7093
    %v7281 = vpop.f32.mrf.mxu0
    %v7282 = vadd.f32 %v7269, %v7281
    %v7283 = vpop.f32.mrf.mxu0
    %7284 = vdwg.mxu0
    %7285 = vmatpush.bf16.msra.mxu0 %v3114
    %7286 = vmatpush.bf16.msra.mxu0 %v3106
    %7287 = vmatpush.bf16.msra.mxu0 %v3098
    %7288 = vmatpush.bf16.msra.mxu0 %v3090
    %7289 = vmatpush.bf16.msra.mxu0 %v3082
    %7290 = vmatpush.bf16.msra.mxu0 %v3074
    %7291 = vmatpush.bf16.msra.mxu0 %v3066
    %7292 = vmatpush.bf16.msra.mxu0 %v3058
    %7293 = vmatmul.bf16.gmra.mxu0 %v7099
    %v7294 = vpop.f32.mrf.mxu0
    %v7295 = vadd.f32 %v7282, %v7294
    %v7296 = vpop.f32.mrf.mxu0
    %7297 = vdwg.mxu0
    %7298 = vmatpush.bf16.msra.mxu0 %v3178
    %7299 = vmatpush.bf16.msra.mxu0 %v3170
    %7300 = vmatpush.bf16.msra.mxu0 %v3162
    %7301 = vmatpush.bf16.msra.mxu0 %v3154
    %7302 = vmatpush.bf16.msra.mxu0 %v3146
    %7303 = vmatpush.bf16.msra.mxu0 %v3138
    %7304 = vmatpush.bf16.msra.mxu0 %v3130
    %7305 = vmatpush.bf16.msra.mxu0 %v3122
    %7306 = vmatmul.bf16.gmra.mxu0 %v7100
    %v7307 = vpop.f32.mrf.mxu0
    %v7308 = vadd.f32 %v7295, %v7307
    %v7309 = vpop.f32.mrf.mxu0
    %7310 = vdwg.mxu0
    %7311 = vmatpush.bf16.msra.mxu0 %v2987
    %7312 = vmatpush.bf16.msra.mxu0 %v2979
    %7313 = vmatpush.bf16.msra.mxu0 %v2971
    %7314 = vmatpush.bf16.msra.mxu0 %v2963
    %7315 = vmatpush.bf16.msra.mxu0 %v2955
    %7316 = vmatpush.bf16.msra.mxu0 %v2947
    %7317 = vmatpush.bf16.msra.mxu0 %v2939
    %7318 = vmatpush.bf16.msra.mxu0 %v2931
    %7319 = vmatmul.bf16.gmra.mxu0 %v7092
    %v7320 = vpop.f32.mrf.mxu0
    %v7321 = vadd.f32 %v2147, %v7320
    %v7322 = vpop.f32.mrf.mxu0
    %7323 = vdwg.mxu0
    %7324 = vmatpush.bf16.msra.mxu0 %v3051
    %7325 = vmatpush.bf16.msra.mxu0 %v3043
    %7326 = vmatpush.bf16.msra.mxu0 %v3035
    %7327 = vmatpush.bf16.msra.mxu0 %v3027
    %7328 = vmatpush.bf16.msra.mxu0 %v3019
    %7329 = vmatpush.bf16.msra.mxu0 %v3011
    %7330 = vmatpush.bf16.msra.mxu0 %v3003
    %7331 = vmatpush.bf16.msra.mxu0 %v2995
    %7332 = vmatmul.bf16.gmra.mxu0 %v7093
    %v7333 = vpop.f32.mrf.mxu0
    %v7334 = vadd.f32 %v7321, %v7333
    %v7335 = vpop.f32.mrf.mxu0
    %7336 = vdwg.mxu0
    %7337 = vmatpush.bf16.msra.mxu0 %v3115
    %7338 = vmatpush.bf16.msra.mxu0 %v3107
    %7339 = vmatpush.bf16.msra.mxu0 %v3099
    %7340 = vmatpush.bf16.msra.mxu0 %v3091
    %7341 = vmatpush.bf16.msra.mxu0 %v3083
    %7342 = vmatpush.bf16.msra.mxu0 %v3075
    %7343 = vmatpush.bf16.msra.mxu0 %v3067
    %7344 = vmatpush.bf16.msra.mxu0 %v3059
    %7345 = vmatmul.bf16.gmra.mxu0 %v7099
    %v7346 = vpop.f32.mrf.mxu0
    %v7347 = vadd.f32 %v7334, %v7346
    %v7348 = vpop.f32.mrf.mxu0
    %7349 = vdwg.mxu0
    %7350 = vmatpush.bf16.msra.mxu0 %v3179
    %7351 = vmatpush.bf16.msra.mxu0 %v3171
    %7352 = vmatpush.bf16.msra.mxu0 %v3163
    %7353 = vmatpush.bf16.msra.mxu0 %v3155
    %7354 = vmatpush.bf16.msra.mxu0 %v3147
    %7355 = vmatpush.bf16.msra.mxu0 %v3139
    %7356 = vmatpush.bf16.msra.mxu0 %v3131
    %7357 = vmatpush.bf16.msra.mxu0 %v3123
    %7358 = vmatmul.bf16.gmra.mxu0 %v7100
    %v7359 = vpop.f32.mrf.mxu0
    %v7360 = vadd.f32 %v7347, %v7359
    %v7361 = vpop.f32.mrf.mxu0
    %7362 = vdwg.mxu0
    %7363 = vmatpush.bf16.msra.mxu0 %v2988
    %7364 = vmatpush.bf16.msra.mxu0 %v2980
    %7365 = vmatpush.bf16.msra.mxu0 %v2972
    %7366 = vmatpush.bf16.msra.mxu0 %v2964
    %7367 = vmatpush.bf16.msra.mxu0 %v2956
    %7368 = vmatpush.bf16.msra.mxu0 %v2948
    %7369 = vmatpush.bf16.msra.mxu0 %v2940
    %7370 = vmatpush.bf16.msra.mxu0 %v2932
    %7371 = vmatmul.bf16.gmra.mxu0 %v7092
    %v7372 = vpop.f32.mrf.mxu0
    %v7373 = vadd.f32 %v2148, %v7372
    %v7374 = vpop.f32.mrf.mxu0
    %7375 = vdwg.mxu0
    %7376 = vmatpush.bf16.msra.mxu0 %v3052
    %7377 = vmatpush.bf16.msra.mxu0 %v3044
    %7378 = vmatpush.bf16.msra.mxu0 %v3036
    %7379 = vmatpush.bf16.msra.mxu0 %v3028
    %7380 = vmatpush.bf16.msra.mxu0 %v3020
    %7381 = vmatpush.bf16.msra.mxu0 %v3012
    %7382 = vmatpush.bf16.msra.mxu0 %v3004
    %7383 = vmatpush.bf16.msra.mxu0 %v2996
    %7384 = vmatmul.bf16.gmra.mxu0 %v7093
    %v7385 = vpop.f32.mrf.mxu0
    %v7386 = vadd.f32 %v7373, %v7385
    %v7387 = vpop.f32.mrf.mxu0
    %7388 = vdwg.mxu0
    %7389 = vmatpush.bf16.msra.mxu0 %v3116
    %7390 = vmatpush.bf16.msra.mxu0 %v3108
    %7391 = vmatpush.bf16.msra.mxu0 %v3100
    %7392 = vmatpush.bf16.msra.mxu0 %v3092
    %7393 = vmatpush.bf16.msra.mxu0 %v3084
    %7394 = vmatpush.bf16.msra.mxu0 %v3076
    %7395 = vmatpush.bf16.msra.mxu0 %v3068
    %7396 = vmatpush.bf16.msra.mxu0 %v3060
    %7397 = vmatmul.bf16.gmra.mxu0 %v7099
    %v7398 = vpop.f32.mrf.mxu0
    %v7399 = vadd.f32 %v7386, %v7398
    %v7400 = vpop.f32.mrf.mxu0
    %7401 = vdwg.mxu0
    %7402 = vmatpush.bf16.msra.mxu0 %v3180
    %7403 = vmatpush.bf16.msra.mxu0 %v3172
    %7404 = vmatpush.bf16.msra.mxu0 %v3164
    %7405 = vmatpush.bf16.msra.mxu0 %v3156
    %7406 = vmatpush.bf16.msra.mxu0 %v3148
    %7407 = vmatpush.bf16.msra.mxu0 %v3140
    %7408 = vmatpush.bf16.msra.mxu0 %v3132
    %7409 = vmatpush.bf16.msra.mxu0 %v3124
    %7410 = vmatmul.bf16.gmra.mxu0 %v7100
    %v7411 = vpop.f32.mrf.mxu0
    %v7412 = vadd.f32 %v7399, %v7411
    %v7413 = vpop.f32.mrf.mxu0
    %7414 = vdwg.mxu0
    %7415 = vmatpush.bf16.msra.mxu0 %v2989
    %7416 = vmatpush.bf16.msra.mxu0 %v2981
    %7417 = vmatpush.bf16.msra.mxu0 %v2973
    %7418 = vmatpush.bf16.msra.mxu0 %v2965
    %7419 = vmatpush.bf16.msra.mxu0 %v2957
    %7420 = vmatpush.bf16.msra.mxu0 %v2949
    %7421 = vmatpush.bf16.msra.mxu0 %v2941
    %7422 = vmatpush.bf16.msra.mxu0 %v2933
    %7423 = vmatmul.bf16.gmra.mxu0 %v7092
    %v7424 = vpop.f32.mrf.mxu0
    %v7425 = vadd.f32 %v2149, %v7424
    %v7426 = vpop.f32.mrf.mxu0
    %7427 = vdwg.mxu0
    %7428 = vmatpush.bf16.msra.mxu0 %v3053
    %7429 = vmatpush.bf16.msra.mxu0 %v3045
    %7430 = vmatpush.bf16.msra.mxu0 %v3037
    %7431 = vmatpush.bf16.msra.mxu0 %v3029
    %7432 = vmatpush.bf16.msra.mxu0 %v3021
    %7433 = vmatpush.bf16.msra.mxu0 %v3013
    %7434 = vmatpush.bf16.msra.mxu0 %v3005
    %7435 = vmatpush.bf16.msra.mxu0 %v2997
    %7436 = vmatmul.bf16.gmra.mxu0 %v7093
    %v7437 = vpop.f32.mrf.mxu0
    %v7438 = vadd.f32 %v7425, %v7437
    %v7439 = vpop.f32.mrf.mxu0
    %7440 = vdwg.mxu0
    %7441 = vmatpush.bf16.msra.mxu0 %v3117
    %7442 = vmatpush.bf16.msra.mxu0 %v3109
    %7443 = vmatpush.bf16.msra.mxu0 %v3101
    %7444 = vmatpush.bf16.msra.mxu0 %v3093
    %7445 = vmatpush.bf16.msra.mxu0 %v3085
    %7446 = vmatpush.bf16.msra.mxu0 %v3077
    %7447 = vmatpush.bf16.msra.mxu0 %v3069
    %7448 = vmatpush.bf16.msra.mxu0 %v3061
    %7449 = vmatmul.bf16.gmra.mxu0 %v7099
    %v7450 = vpop.f32.mrf.mxu0
    %v7451 = vadd.f32 %v7438, %v7450
    %v7452 = vpop.f32.mrf.mxu0
    %7453 = vdwg.mxu0
    %7454 = vmatpush.bf16.msra.mxu0 %v3181
    %7455 = vmatpush.bf16.msra.mxu0 %v3173
    %7456 = vmatpush.bf16.msra.mxu0 %v3165
    %7457 = vmatpush.bf16.msra.mxu0 %v3157
    %7458 = vmatpush.bf16.msra.mxu0 %v3149
    %7459 = vmatpush.bf16.msra.mxu0 %v3141
    %7460 = vmatpush.bf16.msra.mxu0 %v3133
    %7461 = vmatpush.bf16.msra.mxu0 %v3125
    %7462 = vmatmul.bf16.gmra.mxu0 %v7100
    %v7463 = vpop.f32.mrf.mxu0
    %v7464 = vadd.f32 %v7451, %v7463
    %v7465 = vpop.f32.mrf.mxu0
    %7466 = vdwg.mxu0
    %7467 = vmatpush.bf16.msra.mxu0 %v2990
    %7468 = vmatpush.bf16.msra.mxu0 %v2982
    %7469 = vmatpush.bf16.msra.mxu0 %v2974
    %7470 = vmatpush.bf16.msra.mxu0 %v2966
    %7471 = vmatpush.bf16.msra.mxu0 %v2958
    %7472 = vmatpush.bf16.msra.mxu0 %v2950
    %7473 = vmatpush.bf16.msra.mxu0 %v2942
    %7474 = vmatpush.bf16.msra.mxu0 %v2934
    %7475 = vmatmul.bf16.gmra.mxu0 %v7092
    %v7476 = vpop.f32.mrf.mxu0
    %v7477 = vadd.f32 %v2150, %v7476
    %v7478 = vpop.f32.mrf.mxu0
    %7479 = vdwg.mxu0
    %7480 = vmatpush.bf16.msra.mxu0 %v3054
    %7481 = vmatpush.bf16.msra.mxu0 %v3046
    %7482 = vmatpush.bf16.msra.mxu0 %v3038
    %7483 = vmatpush.bf16.msra.mxu0 %v3030
    %7484 = vmatpush.bf16.msra.mxu0 %v3022
    %7485 = vmatpush.bf16.msra.mxu0 %v3014
    %7486 = vmatpush.bf16.msra.mxu0 %v3006
    %7487 = vmatpush.bf16.msra.mxu0 %v2998
    %7488 = vmatmul.bf16.gmra.mxu0 %v7093
    %v7489 = vpop.f32.mrf.mxu0
    %v7490 = vadd.f32 %v7477, %v7489
    %v7491 = vpop.f32.mrf.mxu0
    %7492 = vdwg.mxu0
    %7493 = vmatpush.bf16.msra.mxu0 %v3118
    %7494 = vmatpush.bf16.msra.mxu0 %v3110
    %7495 = vmatpush.bf16.msra.mxu0 %v3102
    %7496 = vmatpush.bf16.msra.mxu0 %v3094
    %7497 = vmatpush.bf16.msra.mxu0 %v3086
    %7498 = vmatpush.bf16.msra.mxu0 %v3078
    %7499 = vmatpush.bf16.msra.mxu0 %v3070
    %7500 = vmatpush.bf16.msra.mxu0 %v3062
    %7501 = vmatmul.bf16.gmra.mxu0 %v7099
    %v7502 = vpop.f32.mrf.mxu0
    %v7503 = vadd.f32 %v7490, %v7502
    %v7504 = vpop.f32.mrf.mxu0
    %7505 = vdwg.mxu0
    %7506 = vmatpush.bf16.msra.mxu0 %v3182
    %7507 = vmatpush.bf16.msra.mxu0 %v3174
    %7508 = vmatpush.bf16.msra.mxu0 %v3166
    %7509 = vmatpush.bf16.msra.mxu0 %v3158
    %7510 = vmatpush.bf16.msra.mxu0 %v3150
    %7511 = vmatpush.bf16.msra.mxu0 %v3142
    %7512 = vmatpush.bf16.msra.mxu0 %v3134
    %7513 = vmatpush.bf16.msra.mxu0 %v3126
    %7514 = vmatmul.bf16.gmra.mxu0 %v7100
    %v7515 = vpop.f32.mrf.mxu0
    %v7516 = vadd.f32 %v7503, %v7515
    %v7517 = vpop.f32.mrf.mxu0
    %7518 = vdwg.mxu0
    %v7519 = vxor.u32 %v7152, 2147483648
    %v7520 = vxor.u32 %v7204, 2147483648
    %v7521 = vmul.f32 %v7519, 1.442695
    %v7522 = vpow.pop %v7521
    %v7523 = vmul.f32 %v7520, 1.442695
    %v7524 = vpow.pop %v7523
    %v7525 = vadd.f32 %v7522, 1.0
    %v7526 = vadd.f32 %v7524, 1.0
    %v7527 = vrcp.pop %v7525
    %v7528 = vmul.f32 %v7525, %v7527
    %v7529 = vsub.f32 1.0, %v7528
    %v7530 = vmul.f32 %v7527, %v7529
    %v7531 = vadd.f32 %v7527, %v7530
    %vm7532 = vweird.f32 %v7525
    %vm7533 = vweird.f32 %v7527
    %vm7534 = vmor %vm7532, %vm7533
    %v7535 = vsel %vm7534, %v7527, %v7531
    %v7536 = vand.u32 2147483647, %v7525
    %vm7537 = vcmp.eq.f32.partialorder %v7536, 8.507059e+37
    %v7538 = vand.u32 %v7525, 2147483648
    %v7539 = vor.u32 1.1754944e-38, %v7538
    %v7540 = vsel %vm7537, %v7539, %v7535
    %v7541 = vmul.f32 1.0, %v7540
    %v7542 = vrcp.pop %v7526
    %v7543 = vmul.f32 %v7526, %v7542
    %v7544 = vsub.f32 1.0, %v7543
    %v7545 = vmul.f32 %v7542, %v7544
    %v7546 = vadd.f32 %v7542, %v7545
    %vm7547 = vweird.f32 %v7526
    %vm7548 = vweird.f32 %v7542
    %vm7549 = vmor %vm7547, %vm7548
    %v7550 = vsel %vm7549, %v7542, %v7546
    %v7551 = vand.u32 2147483647, %v7526
    %vm7552 = vcmp.eq.f32.partialorder %v7551, 8.507059e+37
    %v7553 = vand.u32 %v7526, 2147483648
    %v7554 = vor.u32 1.1754944e-38, %v7553
    %v7555 = vsel %vm7552, %v7554, %v7550
    %v7556 = vmul.f32 1.0, %v7555
    %v7557 = vxor.u32 %v7256, 2147483648
    %v7558 = vxor.u32 %v7308, 2147483648
    %v7559 = vmul.f32 %v7557, 1.442695
    %v7560 = vpow.pop %v7559
    %v7561 = vmul.f32 %v7558, 1.442695
    %v7562 = vpow.pop %v7561
    %v7563 = vadd.f32 %v7560, 1.0
    %v7564 = vadd.f32 %v7562, 1.0
    %v7565 = vrcp.pop %v7563
    %v7566 = vmul.f32 %v7563, %v7565
    %v7567 = vsub.f32 1.0, %v7566
    %v7568 = vmul.f32 %v7565, %v7567
    %v7569 = vadd.f32 %v7565, %v7568
    %vm7570 = vweird.f32 %v7563
    %vm7571 = vweird.f32 %v7565
    %vm7572 = vmor %vm7570, %vm7571
    %v7573 = vsel %vm7572, %v7565, %v7569
    %v7574 = vand.u32 2147483647, %v7563
    %vm7575 = vcmp.eq.f32.partialorder %v7574, 8.507059e+37
    %v7576 = vand.u32 %v7563, 2147483648
    %v7577 = vor.u32 1.1754944e-38, %v7576
    %v7578 = vsel %vm7575, %v7577, %v7573
    %v7579 = vmul.f32 1.0, %v7578
    %v7580 = vrcp.pop %v7564
    %v7581 = vmul.f32 %v7564, %v7580
    %v7582 = vsub.f32 1.0, %v7581
    %v7583 = vmul.f32 %v7580, %v7582
    %v7584 = vadd.f32 %v7580, %v7583
    %vm7585 = vweird.f32 %v7564
    %vm7586 = vweird.f32 %v7580
    %vm7587 = vmor %vm7585, %vm7586
    %v7588 = vsel %vm7587, %v7580, %v7584
    %v7589 = vand.u32 2147483647, %v7564
    %vm7590 = vcmp.eq.f32.partialorder %v7589, 8.507059e+37
    %v7591 = vand.u32 %v7564, 2147483648
    %v7592 = vor.u32 1.1754944e-38, %v7591
    %v7593 = vsel %vm7590, %v7592, %v7588
    %v7594 = vmul.f32 1.0, %v7593
    %v7595 = vtanh.pop %v7360
    %v7596 = vtanh.pop %v7412
    %v7597 = vxor.u32 %v7464, 2147483648
    %v7598 = vxor.u32 %v7516, 2147483648
    %v7599 = vmul.f32 %v7597, 1.442695
    %v7600 = vpow.pop %v7599
    %v7601 = vmul.f32 %v7598, 1.442695
    %v7602 = vpow.pop %v7601
    %v7603 = vadd.f32 %v7600, 1.0
    %v7604 = vadd.f32 %v7602, 1.0
    %v7605 = vrcp.pop %v7603
    %v7606 = vmul.f32 %v7603, %v7605
    %v7607 = vsub.f32 1.0, %v7606
    %v7608 = vmul.f32 %v7605, %v7607
    %v7609 = vadd.f32 %v7605, %v7608
    %vm7610 = vweird.f32 %v7603
    %vm7611 = vweird.f32 %v7605
    %vm7612 = vmor %vm7610, %vm7611
    %v7613 = vsel %vm7612, %v7605, %v7609
    %v7614 = vand.u32 2147483647, %v7603
    %vm7615 = vcmp.eq.f32.partialorder %v7614, 8.507059e+37
    %v7616 = vand.u32 %v7603, 2147483648
    %v7617 = vor.u32 1.1754944e-38, %v7616
    %v7618 = vsel %vm7615, %v7617, %v7613
    %v7619 = vmul.f32 1.0, %v7618
    %v7620 = vrcp.pop %v7604
    %v7621 = vmul.f32 %v7604, %v7620
    %v7622 = vsub.f32 1.0, %v7621
    %v7623 = vmul.f32 %v7620, %v7622
    %v7624 = vadd.f32 %v7620, %v7623
    %vm7625 = vweird.f32 %v7604
    %vm7626 = vweird.f32 %v7620
    %vm7627 = vmor %vm7625, %vm7626
    %v7628 = vsel %vm7627, %v7620, %v7624
    %v7629 = vand.u32 2147483647, %v7604
    %vm7630 = vcmp.eq.f32.partialorder %v7629, 8.507059e+37
    %v7631 = vand.u32 %v7604, 2147483648
    %v7632 = vor.u32 1.1754944e-38, %v7631
    %v7633 = vsel %vm7630, %v7632, %v7628
    %v7634 = vmul.f32 1.0, %v7633
    %v7635 = vmul.f32 %v7579, %v6735
    %v7636 = vmul.f32 %v7594, %v6736
    %v7637 = vmul.f32 %v7541, %v7595
    %v7638 = vmul.f32 %v7556, %v7596
    %v7639 = vadd.f32 %v7635, %v7637
    %v7640 = vadd.f32 %v7636, %v7638
    %v7641 = vtanh.pop %v7639
    %v7642 = vtanh.pop %v7640
    %v7643 = vmul.f32 %v7619, %v7641
    %v7644 = vmul.f32 %v7634, %v7642
    %v7645 = vsel %vm6742, %v7085, %v6729
    %v7646 = vsel %vm6742, %v7086, %v6730
    %v7647 = vsel %vm6742, %v7081, %v6731
    %v7648 = vsel %vm6742, %v7082, %v6732
    %v7649 = vsel %vm6742, %v7643, %v6733
    %v7650 = vsel %vm6742, %v7644, %v6734
    %v7651 = vsel %vm6742, %v7639, %v6735
    %v7652 = vsel %vm6742, %v7640, %v6736
    %vm7653 = vcmp.gt.s32.totalorder %v94, 5
    %v7654 = vsel %vm7653, 1, 0
    %7655 = vset.pattern.permute.xlu0 0
    %7656 = vperm.xlu0 %7655, %v7654
    %v7657 = vpop.permute.xlu0 %7656
    %vm7658 = vcmp.eq.s32.totalorder %v7657, 1
    %v7659 = vpack.c.bf16 %v7645, %v7645
    %v7660 = vpack.c.bf16 %v7646, %v7646
    %7661 = vmatpush.bf16.msra.mxu0 %v1592
    %7662 = vmatpush.bf16.msra.mxu0 %v1584
    %7663 = vmatpush.bf16.msra.mxu0 %v1576
    %7664 = vmatpush.bf16.msra.mxu0 %v1568
    %7665 = vmatpush.bf16.msra.mxu0 %v1560
    %7666 = vmatpush.bf16.msra.mxu0 %v1552
    %7667 = vmatpush.bf16.msra.mxu0 %v1544
    %7668 = vmatpush.bf16.msra.mxu0 %v1536
    %7669 = vmatmul.bf16.gmra.mxu0 %v7659
    %v7670 = vpop.f32.mrf.mxu0
    %v7671 = vadd.f32 0.0, %v7670
    %v7672 = vpop.f32.mrf.mxu0
    %7673 = vdwg.mxu0
    %7674 = vmatpush.bf16.msra.mxu0 %v1656
    %7675 = vmatpush.bf16.msra.mxu0 %v1648
    %7676 = vmatpush.bf16.msra.mxu0 %v1640
    %7677 = vmatpush.bf16.msra.mxu0 %v1632
    %7678 = vmatpush.bf16.msra.mxu0 %v1624
    %7679 = vmatpush.bf16.msra.mxu0 %v1616
    %7680 = vmatpush.bf16.msra.mxu0 %v1608
    %7681 = vmatpush.bf16.msra.mxu0 %v1600
    %7682 = vmatmul.bf16.gmra.mxu0 %v7660
    %v7683 = vpop.f32.mrf.mxu0
    %v7684 = vadd.f32 %v7671, %v7683
    %v7685 = vpop.f32.mrf.mxu0
    %7686 = vdwg.mxu0
    %7687 = vmatpush.bf16.msra.mxu0 %v1593
    %7688 = vmatpush.bf16.msra.mxu0 %v1585
    %7689 = vmatpush.bf16.msra.mxu0 %v1577
    %7690 = vmatpush.bf16.msra.mxu0 %v1569
    %7691 = vmatpush.bf16.msra.mxu0 %v1561
    %7692 = vmatpush.bf16.msra.mxu0 %v1553
    %7693 = vmatpush.bf16.msra.mxu0 %v1545
    %7694 = vmatpush.bf16.msra.mxu0 %v1537
    %7695 = vmatmul.bf16.gmra.mxu0 %v7659
    %v7696 = vpop.f32.mrf.mxu0
    %v7697 = vadd.f32 0.0, %v7696
    %v7698 = vpop.f32.mrf.mxu0
    %7699 = vdwg.mxu0
    %7700 = vmatpush.bf16.msra.mxu0 %v1657
    %7701 = vmatpush.bf16.msra.mxu0 %v1649
    %7702 = vmatpush.bf16.msra.mxu0 %v1641
    %7703 = vmatpush.bf16.msra.mxu0 %v1633
    %7704 = vmatpush.bf16.msra.mxu0 %v1625
    %7705 = vmatpush.bf16.msra.mxu0 %v1617
    %7706 = vmatpush.bf16.msra.mxu0 %v1609
    %7707 = vmatpush.bf16.msra.mxu0 %v1601
    %7708 = vmatmul.bf16.gmra.mxu0 %v7660
    %v7709 = vpop.f32.mrf.mxu0
    %v7710 = vadd.f32 %v7697, %v7709
    %v7711 = vpop.f32.mrf.mxu0
    %7712 = vdwg.mxu0
    %7713 = vmatpush.bf16.msra.mxu0 %v1594
    %7714 = vmatpush.bf16.msra.mxu0 %v1586
    %7715 = vmatpush.bf16.msra.mxu0 %v1578
    %7716 = vmatpush.bf16.msra.mxu0 %v1570
    %7717 = vmatpush.bf16.msra.mxu0 %v1562
    %7718 = vmatpush.bf16.msra.mxu0 %v1554
    %7719 = vmatpush.bf16.msra.mxu0 %v1546
    %7720 = vmatpush.bf16.msra.mxu0 %v1538
    %7721 = vmatmul.bf16.gmra.mxu0 %v7659
    %v7722 = vpop.f32.mrf.mxu0
    %v7723 = vadd.f32 0.0, %v7722
    %v7724 = vpop.f32.mrf.mxu0
    %7725 = vdwg.mxu0
    %7726 = vmatpush.bf16.msra.mxu0 %v1658
    %7727 = vmatpush.bf16.msra.mxu0 %v1650
    %7728 = vmatpush.bf16.msra.mxu0 %v1642
    %7729 = vmatpush.bf16.msra.mxu0 %v1634
    %7730 = vmatpush.bf16.msra.mxu0 %v1626
    %7731 = vmatpush.bf16.msra.mxu0 %v1618
    %7732 = vmatpush.bf16.msra.mxu0 %v1610
    %7733 = vmatpush.bf16.msra.mxu0 %v1602
    %7734 = vmatmul.bf16.gmra.mxu0 %v7660
    %v7735 = vpop.f32.mrf.mxu0
    %v7736 = vadd.f32 %v7723, %v7735
    %v7737 = vpop.f32.mrf.mxu0
    %7738 = vdwg.mxu0
    %7739 = vmatpush.bf16.msra.mxu0 %v1595
    %7740 = vmatpush.bf16.msra.mxu0 %v1587
    %7741 = vmatpush.bf16.msra.mxu0 %v1579
    %7742 = vmatpush.bf16.msra.mxu0 %v1571
    %7743 = vmatpush.bf16.msra.mxu0 %v1563
    %7744 = vmatpush.bf16.msra.mxu0 %v1555
    %7745 = vmatpush.bf16.msra.mxu0 %v1547
    %7746 = vmatpush.bf16.msra.mxu0 %v1539
    %7747 = vmatmul.bf16.gmra.mxu0 %v7659
    %v7748 = vpop.f32.mrf.mxu0
    %v7749 = vadd.f32 0.0, %v7748
    %v7750 = vpop.f32.mrf.mxu0
    %7751 = vdwg.mxu0
    %7752 = vmatpush.bf16.msra.mxu0 %v1659
    %7753 = vmatpush.bf16.msra.mxu0 %v1651
    %7754 = vmatpush.bf16.msra.mxu0 %v1643
    %7755 = vmatpush.bf16.msra.mxu0 %v1635
    %7756 = vmatpush.bf16.msra.mxu0 %v1627
    %7757 = vmatpush.bf16.msra.mxu0 %v1619
    %7758 = vmatpush.bf16.msra.mxu0 %v1611
    %7759 = vmatpush.bf16.msra.mxu0 %v1603
    %7760 = vmatmul.bf16.gmra.mxu0 %v7660
    %v7761 = vpop.f32.mrf.mxu0
    %v7762 = vadd.f32 %v7749, %v7761
    %v7763 = vpop.f32.mrf.mxu0
    %7764 = vdwg.mxu0
    %7765 = vmatpush.bf16.msra.mxu0 %v1596
    %7766 = vmatpush.bf16.msra.mxu0 %v1588
    %7767 = vmatpush.bf16.msra.mxu0 %v1580
    %7768 = vmatpush.bf16.msra.mxu0 %v1572
    %7769 = vmatpush.bf16.msra.mxu0 %v1564
    %7770 = vmatpush.bf16.msra.mxu0 %v1556
    %7771 = vmatpush.bf16.msra.mxu0 %v1548
    %7772 = vmatpush.bf16.msra.mxu0 %v1540
    %7773 = vmatmul.bf16.gmra.mxu0 %v7659
    %v7774 = vpop.f32.mrf.mxu0
    %v7775 = vadd.f32 0.0, %v7774
    %v7776 = vpop.f32.mrf.mxu0
    %7777 = vdwg.mxu0
    %7778 = vmatpush.bf16.msra.mxu0 %v1660
    %7779 = vmatpush.bf16.msra.mxu0 %v1652
    %7780 = vmatpush.bf16.msra.mxu0 %v1644
    %7781 = vmatpush.bf16.msra.mxu0 %v1636
    %7782 = vmatpush.bf16.msra.mxu0 %v1628
    %7783 = vmatpush.bf16.msra.mxu0 %v1620
    %7784 = vmatpush.bf16.msra.mxu0 %v1612
    %7785 = vmatpush.bf16.msra.mxu0 %v1604
    %7786 = vmatmul.bf16.gmra.mxu0 %v7660
    %v7787 = vpop.f32.mrf.mxu0
    %v7788 = vadd.f32 %v7775, %v7787
    %v7789 = vpop.f32.mrf.mxu0
    %7790 = vdwg.mxu0
    %7791 = vmatpush.bf16.msra.mxu0 %v1597
    %7792 = vmatpush.bf16.msra.mxu0 %v1589
    %7793 = vmatpush.bf16.msra.mxu0 %v1581
    %7794 = vmatpush.bf16.msra.mxu0 %v1573
    %7795 = vmatpush.bf16.msra.mxu0 %v1565
    %7796 = vmatpush.bf16.msra.mxu0 %v1557
    %7797 = vmatpush.bf16.msra.mxu0 %v1549
    %7798 = vmatpush.bf16.msra.mxu0 %v1541
    %7799 = vmatmul.bf16.gmra.mxu0 %v7659
    %v7800 = vpop.f32.mrf.mxu0
    %v7801 = vadd.f32 0.0, %v7800
    %v7802 = vpop.f32.mrf.mxu0
    %7803 = vdwg.mxu0
    %7804 = vmatpush.bf16.msra.mxu0 %v1661
    %7805 = vmatpush.bf16.msra.mxu0 %v1653
    %7806 = vmatpush.bf16.msra.mxu0 %v1645
    %7807 = vmatpush.bf16.msra.mxu0 %v1637
    %7808 = vmatpush.bf16.msra.mxu0 %v1629
    %7809 = vmatpush.bf16.msra.mxu0 %v1621
    %7810 = vmatpush.bf16.msra.mxu0 %v1613
    %7811 = vmatpush.bf16.msra.mxu0 %v1605
    %7812 = vmatmul.bf16.gmra.mxu0 %v7660
    %v7813 = vpop.f32.mrf.mxu0
    %v7814 = vadd.f32 %v7801, %v7813
    %v7815 = vpop.f32.mrf.mxu0
    %7816 = vdwg.mxu0
    %7817 = vmatpush.bf16.msra.mxu0 %v1598
    %7818 = vmatpush.bf16.msra.mxu0 %v1590
    %7819 = vmatpush.bf16.msra.mxu0 %v1582
    %7820 = vmatpush.bf16.msra.mxu0 %v1574
    %7821 = vmatpush.bf16.msra.mxu0 %v1566
    %7822 = vmatpush.bf16.msra.mxu0 %v1558
    %7823 = vmatpush.bf16.msra.mxu0 %v1550
    %7824 = vmatpush.bf16.msra.mxu0 %v1542
    %7825 = vmatmul.bf16.gmra.mxu0 %v7659
    %v7826 = vpop.f32.mrf.mxu0
    %v7827 = vadd.f32 0.0, %v7826
    %v7828 = vpop.f32.mrf.mxu0
    %7829 = vdwg.mxu0
    %7830 = vmatpush.bf16.msra.mxu0 %v1662
    %7831 = vmatpush.bf16.msra.mxu0 %v1654
    %7832 = vmatpush.bf16.msra.mxu0 %v1646
    %7833 = vmatpush.bf16.msra.mxu0 %v1638
    %7834 = vmatpush.bf16.msra.mxu0 %v1630
    %7835 = vmatpush.bf16.msra.mxu0 %v1622
    %7836 = vmatpush.bf16.msra.mxu0 %v1614
    %7837 = vmatpush.bf16.msra.mxu0 %v1606
    %7838 = vmatmul.bf16.gmra.mxu0 %v7660
    %v7839 = vpop.f32.mrf.mxu0
    %v7840 = vadd.f32 %v7827, %v7839
    %v7841 = vpop.f32.mrf.mxu0
    %7842 = vdwg.mxu0
    %7843 = vmatpush.bf16.msra.mxu0 %v1599
    %7844 = vmatpush.bf16.msra.mxu0 %v1591
    %7845 = vmatpush.bf16.msra.mxu0 %v1583
    %7846 = vmatpush.bf16.msra.mxu0 %v1575
    %7847 = vmatpush.bf16.msra.mxu0 %v1567
    %7848 = vmatpush.bf16.msra.mxu0 %v1559
    %7849 = vmatpush.bf16.msra.mxu0 %v1551
    %7850 = vmatpush.bf16.msra.mxu0 %v1543
    %7851 = vmatmul.bf16.gmra.mxu0 %v7659
    %v7852 = vpop.f32.mrf.mxu0
    %v7853 = vadd.f32 0.0, %v7852
    %v7854 = vpop.f32.mrf.mxu0
    %7855 = vdwg.mxu0
    %7856 = vmatpush.bf16.msra.mxu0 %v1663
    %7857 = vmatpush.bf16.msra.mxu0 %v1655
    %7858 = vmatpush.bf16.msra.mxu0 %v1647
    %7859 = vmatpush.bf16.msra.mxu0 %v1639
    %7860 = vmatpush.bf16.msra.mxu0 %v1631
    %7861 = vmatpush.bf16.msra.mxu0 %v1623
    %7862 = vmatpush.bf16.msra.mxu0 %v1615
    %7863 = vmatpush.bf16.msra.mxu0 %v1607
    %7864 = vmatmul.bf16.gmra.mxu0 %v7660
    %v7865 = vpop.f32.mrf.mxu0
    %v7866 = vadd.f32 %v7853, %v7865
    %v7867 = vpop.f32.mrf.mxu0
    %7868 = vdwg.mxu0
    %v7869 = vadd.f32 %v551, %v7684
    %v7870 = vadd.f32 %v580, %v7710
    %v7871 = vadd.f32 %v609, %v7736
    %v7872 = vadd.f32 %v638, %v7762
    %v7873 = vadd.f32 %v667, %v7788
    %v7874 = vadd.f32 %v696, %v7814
    %v7875 = vadd.f32 %v725, %v7840
    %v7876 = vadd.f32 %v754, %v7866
    %v7877 = vxor.u32 %v7869, 2147483648
    %v7878 = vxor.u32 %v7870, 2147483648
    %v7879 = vmul.f32 %v7877, 1.442695
    %v7880 = vpow.pop %v7879
    %v7881 = vmul.f32 %v7878, 1.442695
    %v7882 = vpow.pop %v7881
    %v7883 = vadd.f32 %v7880, 1.0
    %v7884 = vadd.f32 %v7882, 1.0
    %v7885 = vrcp.pop %v7883
    %v7886 = vmul.f32 %v7883, %v7885
    %v7887 = vsub.f32 1.0, %v7886
    %v7888 = vmul.f32 %v7885, %v7887
    %v7889 = vadd.f32 %v7885, %v7888
    %vm7890 = vweird.f32 %v7883
    %vm7891 = vweird.f32 %v7885
    %vm7892 = vmor %vm7890, %vm7891
    %v7893 = vsel %vm7892, %v7885, %v7889
    %v7894 = vand.u32 2147483647, %v7883
    %vm7895 = vcmp.eq.f32.partialorder %v7894, 8.507059e+37
    %v7896 = vand.u32 %v7883, 2147483648
    %v7897 = vor.u32 1.1754944e-38, %v7896
    %v7898 = vsel %vm7895, %v7897, %v7893
    %v7899 = vmul.f32 1.0, %v7898
    %v7900 = vrcp.pop %v7884
    %v7901 = vmul.f32 %v7884, %v7900
    %v7902 = vsub.f32 1.0, %v7901
    %v7903 = vmul.f32 %v7900, %v7902
    %v7904 = vadd.f32 %v7900, %v7903
    %vm7905 = vweird.f32 %v7884
    %vm7906 = vweird.f32 %v7900
    %vm7907 = vmor %vm7905, %vm7906
    %v7908 = vsel %vm7907, %v7900, %v7904
    %v7909 = vand.u32 2147483647, %v7884
    %vm7910 = vcmp.eq.f32.partialorder %v7909, 8.507059e+37
    %v7911 = vand.u32 %v7884, 2147483648
    %v7912 = vor.u32 1.1754944e-38, %v7911
    %v7913 = vsel %vm7910, %v7912, %v7908
    %v7914 = vmul.f32 1.0, %v7913
    %v7915 = vxor.u32 %v7871, 2147483648
    %v7916 = vxor.u32 %v7872, 2147483648
    %v7917 = vmul.f32 %v7915, 1.442695
    %v7918 = vpow.pop %v7917
    %v7919 = vmul.f32 %v7916, 1.442695
    %v7920 = vpow.pop %v7919
    %v7921 = vadd.f32 %v7918, 1.0
    %v7922 = vadd.f32 %v7920, 1.0
    %v7923 = vrcp.pop %v7921
    %v7924 = vmul.f32 %v7921, %v7923
    %v7925 = vsub.f32 1.0, %v7924
    %v7926 = vmul.f32 %v7923, %v7925
    %v7927 = vadd.f32 %v7923, %v7926
    %vm7928 = vweird.f32 %v7921
    %vm7929 = vweird.f32 %v7923
    %vm7930 = vmor %vm7928, %vm7929
    %v7931 = vsel %vm7930, %v7923, %v7927
    %v7932 = vand.u32 2147483647, %v7921
    %vm7933 = vcmp.eq.f32.partialorder %v7932, 8.507059e+37
    %v7934 = vand.u32 %v7921, 2147483648
    %v7935 = vor.u32 1.1754944e-38, %v7934
    %v7936 = vsel %vm7933, %v7935, %v7931
    %v7937 = vmul.f32 1.0, %v7936
    %v7938 = vrcp.pop %v7922
    %v7939 = vmul.f32 %v7922, %v7938
    %v7940 = vsub.f32 1.0, %v7939
    %v7941 = vmul.f32 %v7938, %v7940
    %v7942 = vadd.f32 %v7938, %v7941
    %vm7943 = vweird.f32 %v7922
    %vm7944 = vweird.f32 %v7938
    %vm7945 = vmor %vm7943, %vm7944
    %v7946 = vsel %vm7945, %v7938, %v7942
    %v7947 = vand.u32 2147483647, %v7922
    %vm7948 = vcmp.eq.f32.partialorder %v7947, 8.507059e+37
    %v7949 = vand.u32 %v7922, 2147483648
    %v7950 = vor.u32 1.1754944e-38, %v7949
    %v7951 = vsel %vm7948, %v7950, %v7946
    %v7952 = vmul.f32 1.0, %v7951
    %v7953 = vtanh.pop %v7873
    %v7954 = vtanh.pop %v7874
    %v7955 = vxor.u32 %v7875, 2147483648
    %v7956 = vxor.u32 %v7876, 2147483648
    %v7957 = vmul.f32 %v7955, 1.442695
    %v7958 = vpow.pop %v7957
    %v7959 = vmul.f32 %v7956, 1.442695
    %v7960 = vpow.pop %v7959
    %v7961 = vadd.f32 %v7958, 1.0
    %v7962 = vadd.f32 %v7960, 1.0
    %v7963 = vrcp.pop %v7961
    %v7964 = vmul.f32 %v7961, %v7963
    %v7965 = vsub.f32 1.0, %v7964
    %v7966 = vmul.f32 %v7963, %v7965
    %v7967 = vadd.f32 %v7963, %v7966
    %vm7968 = vweird.f32 %v7961
    %vm7969 = vweird.f32 %v7963
    %vm7970 = vmor %vm7968, %vm7969
    %v7971 = vsel %vm7970, %v7963, %v7967
    %v7972 = vand.u32 2147483647, %v7961
    %vm7973 = vcmp.eq.f32.partialorder %v7972, 8.507059e+37
    %v7974 = vand.u32 %v7961, 2147483648
    %v7975 = vor.u32 1.1754944e-38, %v7974
    %v7976 = vsel %vm7973, %v7975, %v7971
    %v7977 = vmul.f32 1.0, %v7976
    %v7978 = vrcp.pop %v7962
    %v7979 = vmul.f32 %v7962, %v7978
    %v7980 = vsub.f32 1.0, %v7979
    %v7981 = vmul.f32 %v7978, %v7980
    %v7982 = vadd.f32 %v7978, %v7981
    %vm7983 = vweird.f32 %v7962
    %vm7984 = vweird.f32 %v7978
    %vm7985 = vmor %vm7983, %vm7984
    %v7986 = vsel %vm7985, %v7978, %v7982
    %v7987 = vand.u32 2147483647, %v7962
    %vm7988 = vcmp.eq.f32.partialorder %v7987, 8.507059e+37
    %v7989 = vand.u32 %v7962, 2147483648
    %v7990 = vor.u32 1.1754944e-38, %v7989
    %v7991 = vsel %vm7988, %v7990, %v7986
    %v7992 = vmul.f32 1.0, %v7991
    %v7993 = vmul.f32 %v7937, %v7647
    %v7994 = vmul.f32 %v7952, %v7648
    %v7995 = vmul.f32 %v7899, %v7953
    %v7996 = vmul.f32 %v7914, %v7954
    %v7997 = vadd.f32 %v7993, %v7995
    %v7998 = vadd.f32 %v7994, %v7996
    %v7999 = vtanh.pop %v7997
    %v8000 = vtanh.pop %v7998
    %v8001 = vmul.f32 %v7977, %v7999
    %v8002 = vmul.f32 %v7992, %v8000
    %v8003 = vpack.c.bf16 %v8002, %v8001
    %v8004 = vpack.c.bf16 %v7650, %v7649
    %v8006 = vunpack.c.l.b16 %v8003
    %v8007 = vunpack.c.h.b16 %v8003
    %v8008 = vpack.c.b16 %v8006, %v8006
    %v8009 = vpack.c.b16 %v8007, %v8007
    %v8013 = vunpack.c.l.b16 %v8004
    %v8014 = vunpack.c.h.b16 %v8004
    %v8015 = vpack.c.b16 %v8013, %v8013
    %v8016 = vpack.c.b16 %v8014, %v8014
    %8019 = vmatpush.bf16.msra.mxu0 %v2983
    %8020 = vmatpush.bf16.msra.mxu0 %v2975
    %8021 = vmatpush.bf16.msra.mxu0 %v2967
    %8022 = vmatpush.bf16.msra.mxu0 %v2959
    %8023 = vmatpush.bf16.msra.mxu0 %v2951
    %8024 = vmatpush.bf16.msra.mxu0 %v2943
    %8025 = vmatpush.bf16.msra.mxu0 %v2935
    %8026 = vmatpush.bf16.msra.mxu0 %v2927
    %8027 = vmatmul.bf16.gmra.mxu0 %v8008
    %v8028 = vpop.f32.mrf.mxu0
    %v8029 = vadd.f32 %v2143, %v8028
    %v8030 = vpop.f32.mrf.mxu0
    %8031 = vdwg.mxu0
    %8032 = vmatpush.bf16.msra.mxu0 %v3047
    %8033 = vmatpush.bf16.msra.mxu0 %v3039
    %8034 = vmatpush.bf16.msra.mxu0 %v3031
    %8035 = vmatpush.bf16.msra.mxu0 %v3023
    %8036 = vmatpush.bf16.msra.mxu0 %v3015
    %8037 = vmatpush.bf16.msra.mxu0 %v3007
    %8038 = vmatpush.bf16.msra.mxu0 %v2999
    %8039 = vmatpush.bf16.msra.mxu0 %v2991
    %8040 = vmatmul.bf16.gmra.mxu0 %v8009
    %v8041 = vpop.f32.mrf.mxu0
    %v8042 = vadd.f32 %v8029, %v8041
    %v8043 = vpop.f32.mrf.mxu0
    %8044 = vdwg.mxu0
    %8045 = vmatpush.bf16.msra.mxu0 %v3111
    %8046 = vmatpush.bf16.msra.mxu0 %v3103
    %8047 = vmatpush.bf16.msra.mxu0 %v3095
    %8048 = vmatpush.bf16.msra.mxu0 %v3087
    %8049 = vmatpush.bf16.msra.mxu0 %v3079
    %8050 = vmatpush.bf16.msra.mxu0 %v3071
    %8051 = vmatpush.bf16.msra.mxu0 %v3063
    %8052 = vmatpush.bf16.msra.mxu0 %v3055
    %8053 = vmatmul.bf16.gmra.mxu0 %v8015
    %v8054 = vpop.f32.mrf.mxu0
    %v8055 = vadd.f32 %v8042, %v8054
    %v8056 = vpop.f32.mrf.mxu0
    %8057 = vdwg.mxu0
    %8058 = vmatpush.bf16.msra.mxu0 %v3175
    %8059 = vmatpush.bf16.msra.mxu0 %v3167
    %8060 = vmatpush.bf16.msra.mxu0 %v3159
    %8061 = vmatpush.bf16.msra.mxu0 %v3151
    %8062 = vmatpush.bf16.msra.mxu0 %v3143
    %8063 = vmatpush.bf16.msra.mxu0 %v3135
    %8064 = vmatpush.bf16.msra.mxu0 %v3127
    %8065 = vmatpush.bf16.msra.mxu0 %v3119
    %8066 = vmatmul.bf16.gmra.mxu0 %v8016
    %v8067 = vpop.f32.mrf.mxu0
    %v8068 = vadd.f32 %v8055, %v8067
    %v8069 = vpop.f32.mrf.mxu0
    %8070 = vdwg.mxu0
    %8071 = vmatpush.bf16.msra.mxu0 %v2984
    %8072 = vmatpush.bf16.msra.mxu0 %v2976
    %8073 = vmatpush.bf16.msra.mxu0 %v2968
    %8074 = vmatpush.bf16.msra.mxu0 %v2960
    %8075 = vmatpush.bf16.msra.mxu0 %v2952
    %8076 = vmatpush.bf16.msra.mxu0 %v2944
    %8077 = vmatpush.bf16.msra.mxu0 %v2936
    %8078 = vmatpush.bf16.msra.mxu0 %v2928
    %8079 = vmatmul.bf16.gmra.mxu0 %v8008
    %v8080 = vpop.f32.mrf.mxu0
    %v8081 = vadd.f32 %v2144, %v8080
    %v8082 = vpop.f32.mrf.mxu0
    %8083 = vdwg.mxu0
    %8084 = vmatpush.bf16.msra.mxu0 %v3048
    %8085 = vmatpush.bf16.msra.mxu0 %v3040
    %8086 = vmatpush.bf16.msra.mxu0 %v3032
    %8087 = vmatpush.bf16.msra.mxu0 %v3024
    %8088 = vmatpush.bf16.msra.mxu0 %v3016
    %8089 = vmatpush.bf16.msra.mxu0 %v3008
    %8090 = vmatpush.bf16.msra.mxu0 %v3000
    %8091 = vmatpush.bf16.msra.mxu0 %v2992
    %8092 = vmatmul.bf16.gmra.mxu0 %v8009
    %v8093 = vpop.f32.mrf.mxu0
    %v8094 = vadd.f32 %v8081, %v8093
    %v8095 = vpop.f32.mrf.mxu0
    %8096 = vdwg.mxu0
    %8097 = vmatpush.bf16.msra.mxu0 %v3112
    %8098 = vmatpush.bf16.msra.mxu0 %v3104
    %8099 = vmatpush.bf16.msra.mxu0 %v3096
    %8100 = vmatpush.bf16.msra.mxu0 %v3088
    %8101 = vmatpush.bf16.msra.mxu0 %v3080
    %8102 = vmatpush.bf16.msra.mxu0 %v3072
    %8103 = vmatpush.bf16.msra.mxu0 %v3064
    %8104 = vmatpush.bf16.msra.mxu0 %v3056
    %8105 = vmatmul.bf16.gmra.mxu0 %v8015
    %v8106 = vpop.f32.mrf.mxu0
    %v8107 = vadd.f32 %v8094, %v8106
    %v8108 = vpop.f32.mrf.mxu0
    %8109 = vdwg.mxu0
    %8110 = vmatpush.bf16.msra.mxu0 %v3176
    %8111 = vmatpush.bf16.msra.mxu0 %v3168
    %8112 = vmatpush.bf16.msra.mxu0 %v3160
    %8113 = vmatpush.bf16.msra.mxu0 %v3152
    %8114 = vmatpush.bf16.msra.mxu0 %v3144
    %8115 = vmatpush.bf16.msra.mxu0 %v3136
    %8116 = vmatpush.bf16.msra.mxu0 %v3128
    %8117 = vmatpush.bf16.msra.mxu0 %v3120
    %8118 = vmatmul.bf16.gmra.mxu0 %v8016
    %v8119 = vpop.f32.mrf.mxu0
    %v8120 = vadd.f32 %v8107, %v8119
    %v8121 = vpop.f32.mrf.mxu0
    %8122 = vdwg.mxu0
    %8123 = vmatpush.bf16.msra.mxu0 %v2985
    %8124 = vmatpush.bf16.msra.mxu0 %v2977
    %8125 = vmatpush.bf16.msra.mxu0 %v2969
    %8126 = vmatpush.bf16.msra.mxu0 %v2961
    %8127 = vmatpush.bf16.msra.mxu0 %v2953
    %8128 = vmatpush.bf16.msra.mxu0 %v2945
    %8129 = vmatpush.bf16.msra.mxu0 %v2937
    %8130 = vmatpush.bf16.msra.mxu0 %v2929
    %8131 = vmatmul.bf16.gmra.mxu0 %v8008
    %v8132 = vpop.f32.mrf.mxu0
    %v8133 = vadd.f32 %v2145, %v8132
    %v8134 = vpop.f32.mrf.mxu0
    %8135 = vdwg.mxu0
    %8136 = vmatpush.bf16.msra.mxu0 %v3049
    %8137 = vmatpush.bf16.msra.mxu0 %v3041
    %8138 = vmatpush.bf16.msra.mxu0 %v3033
    %8139 = vmatpush.bf16.msra.mxu0 %v3025
    %8140 = vmatpush.bf16.msra.mxu0 %v3017
    %8141 = vmatpush.bf16.msra.mxu0 %v3009
    %8142 = vmatpush.bf16.msra.mxu0 %v3001
    %8143 = vmatpush.bf16.msra.mxu0 %v2993
    %8144 = vmatmul.bf16.gmra.mxu0 %v8009
    %v8145 = vpop.f32.mrf.mxu0
    %v8146 = vadd.f32 %v8133, %v8145
    %v8147 = vpop.f32.mrf.mxu0
    %8148 = vdwg.mxu0
    %8149 = vmatpush.bf16.msra.mxu0 %v3113
    %8150 = vmatpush.bf16.msra.mxu0 %v3105
    %8151 = vmatpush.bf16.msra.mxu0 %v3097
    %8152 = vmatpush.bf16.msra.mxu0 %v3089
    %8153 = vmatpush.bf16.msra.mxu0 %v3081
    %8154 = vmatpush.bf16.msra.mxu0 %v3073
    %8155 = vmatpush.bf16.msra.mxu0 %v3065
    %8156 = vmatpush.bf16.msra.mxu0 %v3057
    %8157 = vmatmul.bf16.gmra.mxu0 %v8015
    %v8158 = vpop.f32.mrf.mxu0
    %v8159 = vadd.f32 %v8146, %v8158
    %v8160 = vpop.f32.mrf.mxu0
    %8161 = vdwg.mxu0
    %8162 = vmatpush.bf16.msra.mxu0 %v3177
    %8163 = vmatpush.bf16.msra.mxu0 %v3169
    %8164 = vmatpush.bf16.msra.mxu0 %v3161
    %8165 = vmatpush.bf16.msra.mxu0 %v3153
    %8166 = vmatpush.bf16.msra.mxu0 %v3145
    %8167 = vmatpush.bf16.msra.mxu0 %v3137
    %8168 = vmatpush.bf16.msra.mxu0 %v3129
    %8169 = vmatpush.bf16.msra.mxu0 %v3121
    %8170 = vmatmul.bf16.gmra.mxu0 %v8016
    %v8171 = vpop.f32.mrf.mxu0
    %v8172 = vadd.f32 %v8159, %v8171
    %v8173 = vpop.f32.mrf.mxu0
    %8174 = vdwg.mxu0
    %8175 = vmatpush.bf16.msra.mxu0 %v2986
    %8176 = vmatpush.bf16.msra.mxu0 %v2978
    %8177 = vmatpush.bf16.msra.mxu0 %v2970
    %8178 = vmatpush.bf16.msra.mxu0 %v2962
    %8179 = vmatpush.bf16.msra.mxu0 %v2954
    %8180 = vmatpush.bf16.msra.mxu0 %v2946
    %8181 = vmatpush.bf16.msra.mxu0 %v2938
    %8182 = vmatpush.bf16.msra.mxu0 %v2930
    %8183 = vmatmul.bf16.gmra.mxu0 %v8008
    %v8184 = vpop.f32.mrf.mxu0
    %v8185 = vadd.f32 %v2146, %v8184
    %v8186 = vpop.f32.mrf.mxu0
    %8187 = vdwg.mxu0
    %8188 = vmatpush.bf16.msra.mxu0 %v3050
    %8189 = vmatpush.bf16.msra.mxu0 %v3042
    %8190 = vmatpush.bf16.msra.mxu0 %v3034
    %8191 = vmatpush.bf16.msra.mxu0 %v3026
    %8192 = vmatpush.bf16.msra.mxu0 %v3018
    %8193 = vmatpush.bf16.msra.mxu0 %v3010
    %8194 = vmatpush.bf16.msra.mxu0 %v3002
    %8195 = vmatpush.bf16.msra.mxu0 %v2994
    %8196 = vmatmul.bf16.gmra.mxu0 %v8009
    %v8197 = vpop.f32.mrf.mxu0
    %v8198 = vadd.f32 %v8185, %v8197
    %v8199 = vpop.f32.mrf.mxu0
    %8200 = vdwg.mxu0
    %8201 = vmatpush.bf16.msra.mxu0 %v3114
    %8202 = vmatpush.bf16.msra.mxu0 %v3106
    %8203 = vmatpush.bf16.msra.mxu0 %v3098
    %8204 = vmatpush.bf16.msra.mxu0 %v3090
    %8205 = vmatpush.bf16.msra.mxu0 %v3082
    %8206 = vmatpush.bf16.msra.mxu0 %v3074
    %8207 = vmatpush.bf16.msra.mxu0 %v3066
    %8208 = vmatpush.bf16.msra.mxu0 %v3058
    %8209 = vmatmul.bf16.gmra.mxu0 %v8015
    %v8210 = vpop.f32.mrf.mxu0
    %v8211 = vadd.f32 %v8198, %v8210
    %v8212 = vpop.f32.mrf.mxu0
    %8213 = vdwg.mxu0
    %8214 = vmatpush.bf16.msra.mxu0 %v3178
    %8215 = vmatpush.bf16.msra.mxu0 %v3170
    %8216 = vmatpush.bf16.msra.mxu0 %v3162
    %8217 = vmatpush.bf16.msra.mxu0 %v3154
    %8218 = vmatpush.bf16.msra.mxu0 %v3146
    %8219 = vmatpush.bf16.msra.mxu0 %v3138
    %8220 = vmatpush.bf16.msra.mxu0 %v3130
    %8221 = vmatpush.bf16.msra.mxu0 %v3122
    %8222 = vmatmul.bf16.gmra.mxu0 %v8016
    %v8223 = vpop.f32.mrf.mxu0
    %v8224 = vadd.f32 %v8211, %v8223
    %v8225 = vpop.f32.mrf.mxu0
    %8226 = vdwg.mxu0
    %8227 = vmatpush.bf16.msra.mxu0 %v2987
    %8228 = vmatpush.bf16.msra.mxu0 %v2979
    %8229 = vmatpush.bf16.msra.mxu0 %v2971
    %8230 = vmatpush.bf16.msra.mxu0 %v2963
    %8231 = vmatpush.bf16.msra.mxu0 %v2955
    %8232 = vmatpush.bf16.msra.mxu0 %v2947
    %8233 = vmatpush.bf16.msra.mxu0 %v2939
    %8234 = vmatpush.bf16.msra.mxu0 %v2931
    %8235 = vmatmul.bf16.gmra.mxu0 %v8008
    %v8236 = vpop.f32.mrf.mxu0
    %v8237 = vadd.f32 %v2147, %v8236
    %v8238 = vpop.f32.mrf.mxu0
    %8239 = vdwg.mxu0
    %8240 = vmatpush.bf16.msra.mxu0 %v3051
    %8241 = vmatpush.bf16.msra.mxu0 %v3043
    %8242 = vmatpush.bf16.msra.mxu0 %v3035
    %8243 = vmatpush.bf16.msra.mxu0 %v3027
    %8244 = vmatpush.bf16.msra.mxu0 %v3019
    %8245 = vmatpush.bf16.msra.mxu0 %v3011
    %8246 = vmatpush.bf16.msra.mxu0 %v3003
    %8247 = vmatpush.bf16.msra.mxu0 %v2995
    %8248 = vmatmul.bf16.gmra.mxu0 %v8009
    %v8249 = vpop.f32.mrf.mxu0
    %v8250 = vadd.f32 %v8237, %v8249
    %v8251 = vpop.f32.mrf.mxu0
    %8252 = vdwg.mxu0
    %8253 = vmatpush.bf16.msra.mxu0 %v3115
    %8254 = vmatpush.bf16.msra.mxu0 %v3107
    %8255 = vmatpush.bf16.msra.mxu0 %v3099
    %8256 = vmatpush.bf16.msra.mxu0 %v3091
    %8257 = vmatpush.bf16.msra.mxu0 %v3083
    %8258 = vmatpush.bf16.msra.mxu0 %v3075
    %8259 = vmatpush.bf16.msra.mxu0 %v3067
    %8260 = vmatpush.bf16.msra.mxu0 %v3059
    %8261 = vmatmul.bf16.gmra.mxu0 %v8015
    %v8262 = vpop.f32.mrf.mxu0
    %v8263 = vadd.f32 %v8250, %v8262
    %v8264 = vpop.f32.mrf.mxu0
    %8265 = vdwg.mxu0
    %8266 = vmatpush.bf16.msra.mxu0 %v3179
    %8267 = vmatpush.bf16.msra.mxu0 %v3171
    %8268 = vmatpush.bf16.msra.mxu0 %v3163
    %8269 = vmatpush.bf16.msra.mxu0 %v3155
    %8270 = vmatpush.bf16.msra.mxu0 %v3147
    %8271 = vmatpush.bf16.msra.mxu0 %v3139
    %8272 = vmatpush.bf16.msra.mxu0 %v3131
    %8273 = vmatpush.bf16.msra.mxu0 %v3123
    %8274 = vmatmul.bf16.gmra.mxu0 %v8016
    %v8275 = vpop.f32.mrf.mxu0
    %v8276 = vadd.f32 %v8263, %v8275
    %v8277 = vpop.f32.mrf.mxu0
    %8278 = vdwg.mxu0
    %8279 = vmatpush.bf16.msra.mxu0 %v2988
    %8280 = vmatpush.bf16.msra.mxu0 %v2980
    %8281 = vmatpush.bf16.msra.mxu0 %v2972
    %8282 = vmatpush.bf16.msra.mxu0 %v2964
    %8283 = vmatpush.bf16.msra.mxu0 %v2956
    %8284 = vmatpush.bf16.msra.mxu0 %v2948
    %8285 = vmatpush.bf16.msra.mxu0 %v2940
    %8286 = vmatpush.bf16.msra.mxu0 %v2932
    %8287 = vmatmul.bf16.gmra.mxu0 %v8008
    %v8288 = vpop.f32.mrf.mxu0
    %v8289 = vadd.f32 %v2148, %v8288
    %v8290 = vpop.f32.mrf.mxu0
    %8291 = vdwg.mxu0
    %8292 = vmatpush.bf16.msra.mxu0 %v3052
    %8293 = vmatpush.bf16.msra.mxu0 %v3044
    %8294 = vmatpush.bf16.msra.mxu0 %v3036
    %8295 = vmatpush.bf16.msra.mxu0 %v3028
    %8296 = vmatpush.bf16.msra.mxu0 %v3020
    %8297 = vmatpush.bf16.msra.mxu0 %v3012
    %8298 = vmatpush.bf16.msra.mxu0 %v3004
    %8299 = vmatpush.bf16.msra.mxu0 %v2996
    %8300 = vmatmul.bf16.gmra.mxu0 %v8009
    %v8301 = vpop.f32.mrf.mxu0
    %v8302 = vadd.f32 %v8289, %v8301
    %v8303 = vpop.f32.mrf.mxu0
    %8304 = vdwg.mxu0
    %8305 = vmatpush.bf16.msra.mxu0 %v3116
    %8306 = vmatpush.bf16.msra.mxu0 %v3108
    %8307 = vmatpush.bf16.msra.mxu0 %v3100
    %8308 = vmatpush.bf16.msra.mxu0 %v3092
    %8309 = vmatpush.bf16.msra.mxu0 %v3084
    %8310 = vmatpush.bf16.msra.mxu0 %v3076
    %8311 = vmatpush.bf16.msra.mxu0 %v3068
    %8312 = vmatpush.bf16.msra.mxu0 %v3060
    %8313 = vmatmul.bf16.gmra.mxu0 %v8015
    %v8314 = vpop.f32.mrf.mxu0
    %v8315 = vadd.f32 %v8302, %v8314
    %v8316 = vpop.f32.mrf.mxu0
    %8317 = vdwg.mxu0
    %8318 = vmatpush.bf16.msra.mxu0 %v3180
    %8319 = vmatpush.bf16.msra.mxu0 %v3172
    %8320 = vmatpush.bf16.msra.mxu0 %v3164
    %8321 = vmatpush.bf16.msra.mxu0 %v3156
    %8322 = vmatpush.bf16.msra.mxu0 %v3148
    %8323 = vmatpush.bf16.msra.mxu0 %v3140
    %8324 = vmatpush.bf16.msra.mxu0 %v3132
    %8325 = vmatpush.bf16.msra.mxu0 %v3124
    %8326 = vmatmul.bf16.gmra.mxu0 %v8016
    %v8327 = vpop.f32.mrf.mxu0
    %v8328 = vadd.f32 %v8315, %v8327
    %v8329 = vpop.f32.mrf.mxu0
    %8330 = vdwg.mxu0
    %8331 = vmatpush.bf16.msra.mxu0 %v2989
    %8332 = vmatpush.bf16.msra.mxu0 %v2981
    %8333 = vmatpush.bf16.msra.mxu0 %v2973
    %8334 = vmatpush.bf16.msra.mxu0 %v2965
    %8335 = vmatpush.bf16.msra.mxu0 %v2957
    %8336 = vmatpush.bf16.msra.mxu0 %v2949
    %8337 = vmatpush.bf16.msra.mxu0 %v2941
    %8338 = vmatpush.bf16.msra.mxu0 %v2933
    %8339 = vmatmul.bf16.gmra.mxu0 %v8008
    %v8340 = vpop.f32.mrf.mxu0
    %v8341 = vadd.f32 %v2149, %v8340
    %v8342 = vpop.f32.mrf.mxu0
    %8343 = vdwg.mxu0
    %8344 = vmatpush.bf16.msra.mxu0 %v3053
    %8345 = vmatpush.bf16.msra.mxu0 %v3045
    %8346 = vmatpush.bf16.msra.mxu0 %v3037
    %8347 = vmatpush.bf16.msra.mxu0 %v3029
    %8348 = vmatpush.bf16.msra.mxu0 %v3021
    %8349 = vmatpush.bf16.msra.mxu0 %v3013
    %8350 = vmatpush.bf16.msra.mxu0 %v3005
    %8351 = vmatpush.bf16.msra.mxu0 %v2997
    %8352 = vmatmul.bf16.gmra.mxu0 %v8009
    %v8353 = vpop.f32.mrf.mxu0
    %v8354 = vadd.f32 %v8341, %v8353
    %v8355 = vpop.f32.mrf.mxu0
    %8356 = vdwg.mxu0
    %8357 = vmatpush.bf16.msra.mxu0 %v3117
    %8358 = vmatpush.bf16.msra.mxu0 %v3109
    %8359 = vmatpush.bf16.msra.mxu0 %v3101
    %8360 = vmatpush.bf16.msra.mxu0 %v3093
    %8361 = vmatpush.bf16.msra.mxu0 %v3085
    %8362 = vmatpush.bf16.msra.mxu0 %v3077
    %8363 = vmatpush.bf16.msra.mxu0 %v3069
    %8364 = vmatpush.bf16.msra.mxu0 %v3061
    %8365 = vmatmul.bf16.gmra.mxu0 %v8015
    %v8366 = vpop.f32.mrf.mxu0
    %v8367 = vadd.f32 %v8354, %v8366
    %v8368 = vpop.f32.mrf.mxu0
    %8369 = vdwg.mxu0
    %8370 = vmatpush.bf16.msra.mxu0 %v3181
    %8371 = vmatpush.bf16.msra.mxu0 %v3173
    %8372 = vmatpush.bf16.msra.mxu0 %v3165
    %8373 = vmatpush.bf16.msra.mxu0 %v3157
    %8374 = vmatpush.bf16.msra.mxu0 %v3149
    %8375 = vmatpush.bf16.msra.mxu0 %v3141
    %8376 = vmatpush.bf16.msra.mxu0 %v3133
    %8377 = vmatpush.bf16.msra.mxu0 %v3125
    %8378 = vmatmul.bf16.gmra.mxu0 %v8016
    %v8379 = vpop.f32.mrf.mxu0
    %v8380 = vadd.f32 %v8367, %v8379
    %v8381 = vpop.f32.mrf.mxu0
    %8382 = vdwg.mxu0
    %8383 = vmatpush.bf16.msra.mxu0 %v2990
    %8384 = vmatpush.bf16.msra.mxu0 %v2982
    %8385 = vmatpush.bf16.msra.mxu0 %v2974
    %8386 = vmatpush.bf16.msra.mxu0 %v2966
    %8387 = vmatpush.bf16.msra.mxu0 %v2958
    %8388 = vmatpush.bf16.msra.mxu0 %v2950
    %8389 = vmatpush.bf16.msra.mxu0 %v2942
    %8390 = vmatpush.bf16.msra.mxu0 %v2934
    %8391 = vmatmul.bf16.gmra.mxu0 %v8008
    %v8392 = vpop.f32.mrf.mxu0
    %v8393 = vadd.f32 %v2150, %v8392
    %v8394 = vpop.f32.mrf.mxu0
    %8395 = vdwg.mxu0
    %8396 = vmatpush.bf16.msra.mxu0 %v3054
    %8397 = vmatpush.bf16.msra.mxu0 %v3046
    %8398 = vmatpush.bf16.msra.mxu0 %v3038
    %8399 = vmatpush.bf16.msra.mxu0 %v3030
    %8400 = vmatpush.bf16.msra.mxu0 %v3022
    %8401 = vmatpush.bf16.msra.mxu0 %v3014
    %8402 = vmatpush.bf16.msra.mxu0 %v3006
    %8403 = vmatpush.bf16.msra.mxu0 %v2998
    %8404 = vmatmul.bf16.gmra.mxu0 %v8009
    %v8405 = vpop.f32.mrf.mxu0
    %v8406 = vadd.f32 %v8393, %v8405
    %v8407 = vpop.f32.mrf.mxu0
    %8408 = vdwg.mxu0
    %8409 = vmatpush.bf16.msra.mxu0 %v3118
    %8410 = vmatpush.bf16.msra.mxu0 %v3110
    %8411 = vmatpush.bf16.msra.mxu0 %v3102
    %8412 = vmatpush.bf16.msra.mxu0 %v3094
    %8413 = vmatpush.bf16.msra.mxu0 %v3086
    %8414 = vmatpush.bf16.msra.mxu0 %v3078
    %8415 = vmatpush.bf16.msra.mxu0 %v3070
    %8416 = vmatpush.bf16.msra.mxu0 %v3062
    %8417 = vmatmul.bf16.gmra.mxu0 %v8015
    %v8418 = vpop.f32.mrf.mxu0
    %v8419 = vadd.f32 %v8406, %v8418
    %v8420 = vpop.f32.mrf.mxu0
    %8421 = vdwg.mxu0
    %8422 = vmatpush.bf16.msra.mxu0 %v3182
    %8423 = vmatpush.bf16.msra.mxu0 %v3174
    %8424 = vmatpush.bf16.msra.mxu0 %v3166
    %8425 = vmatpush.bf16.msra.mxu0 %v3158
    %8426 = vmatpush.bf16.msra.mxu0 %v3150
    %8427 = vmatpush.bf16.msra.mxu0 %v3142
    %8428 = vmatpush.bf16.msra.mxu0 %v3134
    %8429 = vmatpush.bf16.msra.mxu0 %v3126
    %8430 = vmatmul.bf16.gmra.mxu0 %v8016
    %v8431 = vpop.f32.mrf.mxu0
    %v8432 = vadd.f32 %v8419, %v8431
    %v8433 = vpop.f32.mrf.mxu0
    %8434 = vdwg.mxu0
    %v8435 = vxor.u32 %v8068, 2147483648
    %v8436 = vxor.u32 %v8120, 2147483648
    %v8437 = vmul.f32 %v8435, 1.442695
    %v8438 = vpow.pop %v8437
    %v8439 = vmul.f32 %v8436, 1.442695
    %v8440 = vpow.pop %v8439
    %v8441 = vadd.f32 %v8438, 1.0
    %v8442 = vadd.f32 %v8440, 1.0
    %v8443 = vrcp.pop %v8441
    %v8444 = vmul.f32 %v8441, %v8443
    %v8445 = vsub.f32 1.0, %v8444
    %v8446 = vmul.f32 %v8443, %v8445
    %v8447 = vadd.f32 %v8443, %v8446
    %vm8448 = vweird.f32 %v8441
    %vm8449 = vweird.f32 %v8443
    %vm8450 = vmor %vm8448, %vm8449
    %v8451 = vsel %vm8450, %v8443, %v8447
    %v8452 = vand.u32 2147483647, %v8441
    %vm8453 = vcmp.eq.f32.partialorder %v8452, 8.507059e+37
    %v8454 = vand.u32 %v8441, 2147483648
    %v8455 = vor.u32 1.1754944e-38, %v8454
    %v8456 = vsel %vm8453, %v8455, %v8451
    %v8457 = vmul.f32 1.0, %v8456
    %v8458 = vrcp.pop %v8442
    %v8459 = vmul.f32 %v8442, %v8458
    %v8460 = vsub.f32 1.0, %v8459
    %v8461 = vmul.f32 %v8458, %v8460
    %v8462 = vadd.f32 %v8458, %v8461
    %vm8463 = vweird.f32 %v8442
    %vm8464 = vweird.f32 %v8458
    %vm8465 = vmor %vm8463, %vm8464
    %v8466 = vsel %vm8465, %v8458, %v8462
    %v8467 = vand.u32 2147483647, %v8442
    %vm8468 = vcmp.eq.f32.partialorder %v8467, 8.507059e+37
    %v8469 = vand.u32 %v8442, 2147483648
    %v8470 = vor.u32 1.1754944e-38, %v8469
    %v8471 = vsel %vm8468, %v8470, %v8466
    %v8472 = vmul.f32 1.0, %v8471
    %v8473 = vxor.u32 %v8172, 2147483648
    %v8474 = vxor.u32 %v8224, 2147483648
    %v8475 = vmul.f32 %v8473, 1.442695
    %v8476 = vpow.pop %v8475
    %v8477 = vmul.f32 %v8474, 1.442695
    %v8478 = vpow.pop %v8477
    %v8479 = vadd.f32 %v8476, 1.0
    %v8480 = vadd.f32 %v8478, 1.0
    %v8481 = vrcp.pop %v8479
    %v8482 = vmul.f32 %v8479, %v8481
    %v8483 = vsub.f32 1.0, %v8482
    %v8484 = vmul.f32 %v8481, %v8483
    %v8485 = vadd.f32 %v8481, %v8484
    %vm8486 = vweird.f32 %v8479
    %vm8487 = vweird.f32 %v8481
    %vm8488 = vmor %vm8486, %vm8487
    %v8489 = vsel %vm8488, %v8481, %v8485
    %v8490 = vand.u32 2147483647, %v8479
    %vm8491 = vcmp.eq.f32.partialorder %v8490, 8.507059e+37
    %v8492 = vand.u32 %v8479, 2147483648
    %v8493 = vor.u32 1.1754944e-38, %v8492
    %v8494 = vsel %vm8491, %v8493, %v8489
    %v8495 = vmul.f32 1.0, %v8494
    %v8496 = vrcp.pop %v8480
    %v8497 = vmul.f32 %v8480, %v8496
    %v8498 = vsub.f32 1.0, %v8497
    %v8499 = vmul.f32 %v8496, %v8498
    %v8500 = vadd.f32 %v8496, %v8499
    %vm8501 = vweird.f32 %v8480
    %vm8502 = vweird.f32 %v8496
    %vm8503 = vmor %vm8501, %vm8502
    %v8504 = vsel %vm8503, %v8496, %v8500
    %v8505 = vand.u32 2147483647, %v8480
    %vm8506 = vcmp.eq.f32.partialorder %v8505, 8.507059e+37
    %v8507 = vand.u32 %v8480, 2147483648
    %v8508 = vor.u32 1.1754944e-38, %v8507
    %v8509 = vsel %vm8506, %v8508, %v8504
    %v8510 = vmul.f32 1.0, %v8509
    %v8511 = vtanh.pop %v8276
    %v8512 = vtanh.pop %v8328
    %v8513 = vxor.u32 %v8380, 2147483648
    %v8514 = vxor.u32 %v8432, 2147483648
    %v8515 = vmul.f32 %v8513, 1.442695
    %v8516 = vpow.pop %v8515
    %v8517 = vmul.f32 %v8514, 1.442695
    %v8518 = vpow.pop %v8517
    %v8519 = vadd.f32 %v8516, 1.0
    %v8520 = vadd.f32 %v8518, 1.0
    %v8521 = vrcp.pop %v8519
    %v8522 = vmul.f32 %v8519, %v8521
    %v8523 = vsub.f32 1.0, %v8522
    %v8524 = vmul.f32 %v8521, %v8523
    %v8525 = vadd.f32 %v8521, %v8524
    %vm8526 = vweird.f32 %v8519
    %vm8527 = vweird.f32 %v8521
    %vm8528 = vmor %vm8526, %vm8527
    %v8529 = vsel %vm8528, %v8521, %v8525
    %v8530 = vand.u32 2147483647, %v8519
    %vm8531 = vcmp.eq.f32.partialorder %v8530, 8.507059e+37
    %v8532 = vand.u32 %v8519, 2147483648
    %v8533 = vor.u32 1.1754944e-38, %v8532
    %v8534 = vsel %vm8531, %v8533, %v8529
    %v8535 = vmul.f32 1.0, %v8534
    %v8536 = vrcp.pop %v8520
    %v8537 = vmul.f32 %v8520, %v8536
    %v8538 = vsub.f32 1.0, %v8537
    %v8539 = vmul.f32 %v8536, %v8538
    %v8540 = vadd.f32 %v8536, %v8539
    %vm8541 = vweird.f32 %v8520
    %vm8542 = vweird.f32 %v8536
    %vm8543 = vmor %vm8541, %vm8542
    %v8544 = vsel %vm8543, %v8536, %v8540
    %v8545 = vand.u32 2147483647, %v8520
    %vm8546 = vcmp.eq.f32.partialorder %v8545, 8.507059e+37
    %v8547 = vand.u32 %v8520, 2147483648
    %v8548 = vor.u32 1.1754944e-38, %v8547
    %v8549 = vsel %vm8546, %v8548, %v8544
    %v8550 = vmul.f32 1.0, %v8549
    %v8551 = vmul.f32 %v8495, %v7651
    %v8552 = vmul.f32 %v8510, %v7652
    %v8553 = vmul.f32 %v8457, %v8511
    %v8554 = vmul.f32 %v8472, %v8512
    %v8555 = vadd.f32 %v8551, %v8553
    %v8556 = vadd.f32 %v8552, %v8554
    %v8557 = vtanh.pop %v8555
    %v8558 = vtanh.pop %v8556
    %v8559 = vmul.f32 %v8535, %v8557
    %v8560 = vmul.f32 %v8550, %v8558
    %v8561 = vsel %vm7658, %v8001, %v7645
    %v8562 = vsel %vm7658, %v8002, %v7646
    %v8563 = vsel %vm7658, %v7997, %v7647
    %v8564 = vsel %vm7658, %v7998, %v7648
    %v8565 = vsel %vm7658, %v8559, %v7649
    %v8566 = vsel %vm7658, %v8560, %v7650
    %v8567 = vsel %vm7658, %v8555, %v7651
    %v8568 = vsel %vm7658, %v8556, %v7652
    %vm8569 = vcmp.gt.s32.totalorder %v94, 6
    %v8570 = vsel %vm8569, 1, 0
    %8571 = vset.pattern.permute.xlu0 0
    %8572 = vperm.xlu0 %8571, %v8570
    %v8573 = vpop.permute.xlu0 %8572
    %vm8574 = vcmp.eq.s32.totalorder %v8573, 1
    %v8575 = vpack.c.bf16 %v8561, %v8561
    %v8576 = vpack.c.bf16 %v8562, %v8562
    %8577 = vmatpush.bf16.msra.mxu0 %v1592
    %8578 = vmatpush.bf16.msra.mxu0 %v1584
    %8579 = vmatpush.bf16.msra.mxu0 %v1576
    %8580 = vmatpush.bf16.msra.mxu0 %v1568
    %8581 = vmatpush.bf16.msra.mxu0 %v1560
    %8582 = vmatpush.bf16.msra.mxu0 %v1552
    %8583 = vmatpush.bf16.msra.mxu0 %v1544
    %8584 = vmatpush.bf16.msra.mxu0 %v1536
    %8585 = vmatmul.bf16.gmra.mxu0 %v8575
    %v8586 = vpop.f32.mrf.mxu0
    %v8587 = vadd.f32 0.0, %v8586
    %v8588 = vpop.f32.mrf.mxu0
    %8589 = vdwg.mxu0
    %8590 = vmatpush.bf16.msra.mxu0 %v1656
    %8591 = vmatpush.bf16.msra.mxu0 %v1648
    %8592 = vmatpush.bf16.msra.mxu0 %v1640
    %8593 = vmatpush.bf16.msra.mxu0 %v1632
    %8594 = vmatpush.bf16.msra.mxu0 %v1624
    %8595 = vmatpush.bf16.msra.mxu0 %v1616
    %8596 = vmatpush.bf16.msra.mxu0 %v1608
    %8597 = vmatpush.bf16.msra.mxu0 %v1600
    %8598 = vmatmul.bf16.gmra.mxu0 %v8576
    %v8599 = vpop.f32.mrf.mxu0
    %v8600 = vadd.f32 %v8587, %v8599
    %v8601 = vpop.f32.mrf.mxu0
    %8602 = vdwg.mxu0
    %8603 = vmatpush.bf16.msra.mxu0 %v1593
    %8604 = vmatpush.bf16.msra.mxu0 %v1585
    %8605 = vmatpush.bf16.msra.mxu0 %v1577
    %8606 = vmatpush.bf16.msra.mxu0 %v1569
    %8607 = vmatpush.bf16.msra.mxu0 %v1561
    %8608 = vmatpush.bf16.msra.mxu0 %v1553
    %8609 = vmatpush.bf16.msra.mxu0 %v1545
    %8610 = vmatpush.bf16.msra.mxu0 %v1537
    %8611 = vmatmul.bf16.gmra.mxu0 %v8575
    %v8612 = vpop.f32.mrf.mxu0
    %v8613 = vadd.f32 0.0, %v8612
    %v8614 = vpop.f32.mrf.mxu0
    %8615 = vdwg.mxu0
    %8616 = vmatpush.bf16.msra.mxu0 %v1657
    %8617 = vmatpush.bf16.msra.mxu0 %v1649
    %8618 = vmatpush.bf16.msra.mxu0 %v1641
    %8619 = vmatpush.bf16.msra.mxu0 %v1633
    %8620 = vmatpush.bf16.msra.mxu0 %v1625
    %8621 = vmatpush.bf16.msra.mxu0 %v1617
    %8622 = vmatpush.bf16.msra.mxu0 %v1609
    %8623 = vmatpush.bf16.msra.mxu0 %v1601
    %8624 = vmatmul.bf16.gmra.mxu0 %v8576
    %v8625 = vpop.f32.mrf.mxu0
    %v8626 = vadd.f32 %v8613, %v8625
    %v8627 = vpop.f32.mrf.mxu0
    %8628 = vdwg.mxu0
    %8629 = vmatpush.bf16.msra.mxu0 %v1594
    %8630 = vmatpush.bf16.msra.mxu0 %v1586
    %8631 = vmatpush.bf16.msra.mxu0 %v1578
    %8632 = vmatpush.bf16.msra.mxu0 %v1570
    %8633 = vmatpush.bf16.msra.mxu0 %v1562
    %8634 = vmatpush.bf16.msra.mxu0 %v1554
    %8635 = vmatpush.bf16.msra.mxu0 %v1546
    %8636 = vmatpush.bf16.msra.mxu0 %v1538
    %8637 = vmatmul.bf16.gmra.mxu0 %v8575
    %v8638 = vpop.f32.mrf.mxu0
    %v8639 = vadd.f32 0.0, %v8638
    %v8640 = vpop.f32.mrf.mxu0
    %8641 = vdwg.mxu0
    %8642 = vmatpush.bf16.msra.mxu0 %v1658
    %8643 = vmatpush.bf16.msra.mxu0 %v1650
    %8644 = vmatpush.bf16.msra.mxu0 %v1642
    %8645 = vmatpush.bf16.msra.mxu0 %v1634
    %8646 = vmatpush.bf16.msra.mxu0 %v1626
    %8647 = vmatpush.bf16.msra.mxu0 %v1618
    %8648 = vmatpush.bf16.msra.mxu0 %v1610
    %8649 = vmatpush.bf16.msra.mxu0 %v1602
    %8650 = vmatmul.bf16.gmra.mxu0 %v8576
    %v8651 = vpop.f32.mrf.mxu0
    %v8652 = vadd.f32 %v8639, %v8651
    %v8653 = vpop.f32.mrf.mxu0
    %8654 = vdwg.mxu0
    %8655 = vmatpush.bf16.msra.mxu0 %v1595
    %8656 = vmatpush.bf16.msra.mxu0 %v1587
    %8657 = vmatpush.bf16.msra.mxu0 %v1579
    %8658 = vmatpush.bf16.msra.mxu0 %v1571
    %8659 = vmatpush.bf16.msra.mxu0 %v1563
    %8660 = vmatpush.bf16.msra.mxu0 %v1555
    %8661 = vmatpush.bf16.msra.mxu0 %v1547
    %8662 = vmatpush.bf16.msra.mxu0 %v1539
    %8663 = vmatmul.bf16.gmra.mxu0 %v8575
    %v8664 = vpop.f32.mrf.mxu0
    %v8665 = vadd.f32 0.0, %v8664
    %v8666 = vpop.f32.mrf.mxu0
    %8667 = vdwg.mxu0
    %8668 = vmatpush.bf16.msra.mxu0 %v1659
    %8669 = vmatpush.bf16.msra.mxu0 %v1651
    %8670 = vmatpush.bf16.msra.mxu0 %v1643
    %8671 = vmatpush.bf16.msra.mxu0 %v1635
    %8672 = vmatpush.bf16.msra.mxu0 %v1627
    %8673 = vmatpush.bf16.msra.mxu0 %v1619
    %8674 = vmatpush.bf16.msra.mxu0 %v1611
    %8675 = vmatpush.bf16.msra.mxu0 %v1603
    %8676 = vmatmul.bf16.gmra.mxu0 %v8576
    %v8677 = vpop.f32.mrf.mxu0
    %v8678 = vadd.f32 %v8665, %v8677
    %v8679 = vpop.f32.mrf.mxu0
    %8680 = vdwg.mxu0
    %8681 = vmatpush.bf16.msra.mxu0 %v1596
    %8682 = vmatpush.bf16.msra.mxu0 %v1588
    %8683 = vmatpush.bf16.msra.mxu0 %v1580
    %8684 = vmatpush.bf16.msra.mxu0 %v1572
    %8685 = vmatpush.bf16.msra.mxu0 %v1564
    %8686 = vmatpush.bf16.msra.mxu0 %v1556
    %8687 = vmatpush.bf16.msra.mxu0 %v1548
    %8688 = vmatpush.bf16.msra.mxu0 %v1540
    %8689 = vmatmul.bf16.gmra.mxu0 %v8575
    %v8690 = vpop.f32.mrf.mxu0
    %v8691 = vadd.f32 0.0, %v8690
    %v8692 = vpop.f32.mrf.mxu0
    %8693 = vdwg.mxu0
    %8694 = vmatpush.bf16.msra.mxu0 %v1660
    %8695 = vmatpush.bf16.msra.mxu0 %v1652
    %8696 = vmatpush.bf16.msra.mxu0 %v1644
    %8697 = vmatpush.bf16.msra.mxu0 %v1636
    %8698 = vmatpush.bf16.msra.mxu0 %v1628
    %8699 = vmatpush.bf16.msra.mxu0 %v1620
    %8700 = vmatpush.bf16.msra.mxu0 %v1612
    %8701 = vmatpush.bf16.msra.mxu0 %v1604
    %8702 = vmatmul.bf16.gmra.mxu0 %v8576
    %v8703 = vpop.f32.mrf.mxu0
    %v8704 = vadd.f32 %v8691, %v8703
    %v8705 = vpop.f32.mrf.mxu0
    %8706 = vdwg.mxu0
    %8707 = vmatpush.bf16.msra.mxu0 %v1597
    %8708 = vmatpush.bf16.msra.mxu0 %v1589
    %8709 = vmatpush.bf16.msra.mxu0 %v1581
    %8710 = vmatpush.bf16.msra.mxu0 %v1573
    %8711 = vmatpush.bf16.msra.mxu0 %v1565
    %8712 = vmatpush.bf16.msra.mxu0 %v1557
    %8713 = vmatpush.bf16.msra.mxu0 %v1549
    %8714 = vmatpush.bf16.msra.mxu0 %v1541
    %8715 = vmatmul.bf16.gmra.mxu0 %v8575
    %v8716 = vpop.f32.mrf.mxu0
    %v8717 = vadd.f32 0.0, %v8716
    %v8718 = vpop.f32.mrf.mxu0
    %8719 = vdwg.mxu0
    %8720 = vmatpush.bf16.msra.mxu0 %v1661
    %8721 = vmatpush.bf16.msra.mxu0 %v1653
    %8722 = vmatpush.bf16.msra.mxu0 %v1645
    %8723 = vmatpush.bf16.msra.mxu0 %v1637
    %8724 = vmatpush.bf16.msra.mxu0 %v1629
    %8725 = vmatpush.bf16.msra.mxu0 %v1621
    %8726 = vmatpush.bf16.msra.mxu0 %v1613
    %8727 = vmatpush.bf16.msra.mxu0 %v1605
    %8728 = vmatmul.bf16.gmra.mxu0 %v8576
    %v8729 = vpop.f32.mrf.mxu0
    %v8730 = vadd.f32 %v8717, %v8729
    %v8731 = vpop.f32.mrf.mxu0
    %8732 = vdwg.mxu0
    %8733 = vmatpush.bf16.msra.mxu0 %v1598
    %8734 = vmatpush.bf16.msra.mxu0 %v1590
    %8735 = vmatpush.bf16.msra.mxu0 %v1582
    %8736 = vmatpush.bf16.msra.mxu0 %v1574
    %8737 = vmatpush.bf16.msra.mxu0 %v1566
    %8738 = vmatpush.bf16.msra.mxu0 %v1558
    %8739 = vmatpush.bf16.msra.mxu0 %v1550
    %8740 = vmatpush.bf16.msra.mxu0 %v1542
    %8741 = vmatmul.bf16.gmra.mxu0 %v8575
    %v8742 = vpop.f32.mrf.mxu0
    %v8743 = vadd.f32 0.0, %v8742
    %v8744 = vpop.f32.mrf.mxu0
    %8745 = vdwg.mxu0
    %8746 = vmatpush.bf16.msra.mxu0 %v1662
    %8747 = vmatpush.bf16.msra.mxu0 %v1654
    %8748 = vmatpush.bf16.msra.mxu0 %v1646
    %8749 = vmatpush.bf16.msra.mxu0 %v1638
    %8750 = vmatpush.bf16.msra.mxu0 %v1630
    %8751 = vmatpush.bf16.msra.mxu0 %v1622
    %8752 = vmatpush.bf16.msra.mxu0 %v1614
    %8753 = vmatpush.bf16.msra.mxu0 %v1606
    %8754 = vmatmul.bf16.gmra.mxu0 %v8576
    %v8755 = vpop.f32.mrf.mxu0
    %v8756 = vadd.f32 %v8743, %v8755
    %v8757 = vpop.f32.mrf.mxu0
    %8758 = vdwg.mxu0
    %8759 = vmatpush.bf16.msra.mxu0 %v1599
    %8760 = vmatpush.bf16.msra.mxu0 %v1591
    %8761 = vmatpush.bf16.msra.mxu0 %v1583
    %8762 = vmatpush.bf16.msra.mxu0 %v1575
    %8763 = vmatpush.bf16.msra.mxu0 %v1567
    %8764 = vmatpush.bf16.msra.mxu0 %v1559
    %8765 = vmatpush.bf16.msra.mxu0 %v1551
    %8766 = vmatpush.bf16.msra.mxu0 %v1543
    %8767 = vmatmul.bf16.gmra.mxu0 %v8575
    %v8768 = vpop.f32.mrf.mxu0
    %v8769 = vadd.f32 0.0, %v8768
    %v8770 = vpop.f32.mrf.mxu0
    %8771 = vdwg.mxu0
    %8772 = vmatpush.bf16.msra.mxu0 %v1663
    %8773 = vmatpush.bf16.msra.mxu0 %v1655
    %8774 = vmatpush.bf16.msra.mxu0 %v1647
    %8775 = vmatpush.bf16.msra.mxu0 %v1639
    %8776 = vmatpush.bf16.msra.mxu0 %v1631
    %8777 = vmatpush.bf16.msra.mxu0 %v1623
    %8778 = vmatpush.bf16.msra.mxu0 %v1615
    %8779 = vmatpush.bf16.msra.mxu0 %v1607
    %8780 = vmatmul.bf16.gmra.mxu0 %v8576
    %v8781 = vpop.f32.mrf.mxu0
    %v8782 = vadd.f32 %v8769, %v8781
    %v8783 = vpop.f32.mrf.mxu0
    %8784 = vdwg.mxu0
    %v8785 = vadd.f32 %v554, %v8600
    %v8786 = vadd.f32 %v583, %v8626
    %v8787 = vadd.f32 %v612, %v8652
    %v8788 = vadd.f32 %v641, %v8678
    %v8789 = vadd.f32 %v670, %v8704
    %v8790 = vadd.f32 %v699, %v8730
    %v8791 = vadd.f32 %v728, %v8756
    %v8792 = vadd.f32 %v757, %v8782
    %v8793 = vxor.u32 %v8785, 2147483648
    %v8794 = vxor.u32 %v8786, 2147483648
    %v8795 = vmul.f32 %v8793, 1.442695
    %v8796 = vpow.pop %v8795
    %v8797 = vmul.f32 %v8794, 1.442695
    %v8798 = vpow.pop %v8797
    %v8799 = vadd.f32 %v8796, 1.0
    %v8800 = vadd.f32 %v8798, 1.0
    %v8801 = vrcp.pop %v8799
    %v8802 = vmul.f32 %v8799, %v8801
    %v8803 = vsub.f32 1.0, %v8802
    %v8804 = vmul.f32 %v8801, %v8803
    %v8805 = vadd.f32 %v8801, %v8804
    %vm8806 = vweird.f32 %v8799
    %vm8807 = vweird.f32 %v8801
    %vm8808 = vmor %vm8806, %vm8807
    %v8809 = vsel %vm8808, %v8801, %v8805
    %v8810 = vand.u32 2147483647, %v8799
    %vm8811 = vcmp.eq.f32.partialorder %v8810, 8.507059e+37
    %v8812 = vand.u32 %v8799, 2147483648
    %v8813 = vor.u32 1.1754944e-38, %v8812
    %v8814 = vsel %vm8811, %v8813, %v8809
    %v8815 = vmul.f32 1.0, %v8814
    %v8816 = vrcp.pop %v8800
    %v8817 = vmul.f32 %v8800, %v8816
    %v8818 = vsub.f32 1.0, %v8817
    %v8819 = vmul.f32 %v8816, %v8818
    %v8820 = vadd.f32 %v8816, %v8819
    %vm8821 = vweird.f32 %v8800
    %vm8822 = vweird.f32 %v8816
    %vm8823 = vmor %vm8821, %vm8822
    %v8824 = vsel %vm8823, %v8816, %v8820
    %v8825 = vand.u32 2147483647, %v8800
    %vm8826 = vcmp.eq.f32.partialorder %v8825, 8.507059e+37
    %v8827 = vand.u32 %v8800, 2147483648
    %v8828 = vor.u32 1.1754944e-38, %v8827
    %v8829 = vsel %vm8826, %v8828, %v8824
    %v8830 = vmul.f32 1.0, %v8829
    %v8831 = vxor.u32 %v8787, 2147483648
    %v8832 = vxor.u32 %v8788, 2147483648
    %v8833 = vmul.f32 %v8831, 1.442695
    %v8834 = vpow.pop %v8833
    %v8835 = vmul.f32 %v8832, 1.442695
    %v8836 = vpow.pop %v8835
    %v8837 = vadd.f32 %v8834, 1.0
    %v8838 = vadd.f32 %v8836, 1.0
    %v8839 = vrcp.pop %v8837
    %v8840 = vmul.f32 %v8837, %v8839
    %v8841 = vsub.f32 1.0, %v8840
    %v8842 = vmul.f32 %v8839, %v8841
    %v8843 = vadd.f32 %v8839, %v8842
    %vm8844 = vweird.f32 %v8837
    %vm8845 = vweird.f32 %v8839
    %vm8846 = vmor %vm8844, %vm8845
    %v8847 = vsel %vm8846, %v8839, %v8843
    %v8848 = vand.u32 2147483647, %v8837
    %vm8849 = vcmp.eq.f32.partialorder %v8848, 8.507059e+37
    %v8850 = vand.u32 %v8837, 2147483648
    %v8851 = vor.u32 1.1754944e-38, %v8850
    %v8852 = vsel %vm8849, %v8851, %v8847
    %v8853 = vmul.f32 1.0, %v8852
    %v8854 = vrcp.pop %v8838
    %v8855 = vmul.f32 %v8838, %v8854
    %v8856 = vsub.f32 1.0, %v8855
    %v8857 = vmul.f32 %v8854, %v8856
    %v8858 = vadd.f32 %v8854, %v8857
    %vm8859 = vweird.f32 %v8838
    %vm8860 = vweird.f32 %v8854
    %vm8861 = vmor %vm8859, %vm8860
    %v8862 = vsel %vm8861, %v8854, %v8858
    %v8863 = vand.u32 2147483647, %v8838
    %vm8864 = vcmp.eq.f32.partialorder %v8863, 8.507059e+37
    %v8865 = vand.u32 %v8838, 2147483648
    %v8866 = vor.u32 1.1754944e-38, %v8865
    %v8867 = vsel %vm8864, %v8866, %v8862
    %v8868 = vmul.f32 1.0, %v8867
    %v8869 = vtanh.pop %v8789
    %v8870 = vtanh.pop %v8790
    %v8871 = vxor.u32 %v8791, 2147483648
    %v8872 = vxor.u32 %v8792, 2147483648
    %v8873 = vmul.f32 %v8871, 1.442695
    %v8874 = vpow.pop %v8873
    %v8875 = vmul.f32 %v8872, 1.442695
    %v8876 = vpow.pop %v8875
    %v8877 = vadd.f32 %v8874, 1.0
    %v8878 = vadd.f32 %v8876, 1.0
    %v8879 = vrcp.pop %v8877
    %v8880 = vmul.f32 %v8877, %v8879
    %v8881 = vsub.f32 1.0, %v8880
    %v8882 = vmul.f32 %v8879, %v8881
    %v8883 = vadd.f32 %v8879, %v8882
    %vm8884 = vweird.f32 %v8877
    %vm8885 = vweird.f32 %v8879
    %vm8886 = vmor %vm8884, %vm8885
    %v8887 = vsel %vm8886, %v8879, %v8883
    %v8888 = vand.u32 2147483647, %v8877
    %vm8889 = vcmp.eq.f32.partialorder %v8888, 8.507059e+37
    %v8890 = vand.u32 %v8877, 2147483648
    %v8891 = vor.u32 1.1754944e-38, %v8890
    %v8892 = vsel %vm8889, %v8891, %v8887
    %v8893 = vmul.f32 1.0, %v8892
    %v8894 = vrcp.pop %v8878
    %v8895 = vmul.f32 %v8878, %v8894
    %v8896 = vsub.f32 1.0, %v8895
    %v8897 = vmul.f32 %v8894, %v8896
    %v8898 = vadd.f32 %v8894, %v8897
    %vm8899 = vweird.f32 %v8878
    %vm8900 = vweird.f32 %v8894
    %vm8901 = vmor %vm8899, %vm8900
    %v8902 = vsel %vm8901, %v8894, %v8898
    %v8903 = vand.u32 2147483647, %v8878
    %vm8904 = vcmp.eq.f32.partialorder %v8903, 8.507059e+37
    %v8905 = vand.u32 %v8878, 2147483648
    %v8906 = vor.u32 1.1754944e-38, %v8905
    %v8907 = vsel %vm8904, %v8906, %v8902
    %v8908 = vmul.f32 1.0, %v8907
    %v8909 = vmul.f32 %v8853, %v8563
    %v8910 = vmul.f32 %v8868, %v8564
    %v8911 = vmul.f32 %v8815, %v8869
    %v8912 = vmul.f32 %v8830, %v8870
    %v8913 = vadd.f32 %v8909, %v8911
    %v8914 = vadd.f32 %v8910, %v8912
    %v8915 = vtanh.pop %v8913
    %v8916 = vtanh.pop %v8914
    %v8917 = vmul.f32 %v8893, %v8915
    %v8918 = vmul.f32 %v8908, %v8916
    %v8919 = vpack.c.bf16 %v8918, %v8917
    %v8920 = vpack.c.bf16 %v8566, %v8565
    %v8922 = vunpack.c.l.b16 %v8919
    %v8923 = vunpack.c.h.b16 %v8919
    %v8924 = vpack.c.b16 %v8922, %v8922
    %v8925 = vpack.c.b16 %v8923, %v8923
    %v8929 = vunpack.c.l.b16 %v8920
    %v8930 = vunpack.c.h.b16 %v8920
    %v8931 = vpack.c.b16 %v8929, %v8929
    %v8932 = vpack.c.b16 %v8930, %v8930
    %8935 = vmatpush.bf16.msra.mxu0 %v2983
    %8936 = vmatpush.bf16.msra.mxu0 %v2975
    %8937 = vmatpush.bf16.msra.mxu0 %v2967
    %8938 = vmatpush.bf16.msra.mxu0 %v2959
    %8939 = vmatpush.bf16.msra.mxu0 %v2951
    %8940 = vmatpush.bf16.msra.mxu0 %v2943
    %8941 = vmatpush.bf16.msra.mxu0 %v2935
    %8942 = vmatpush.bf16.msra.mxu0 %v2927
    %8943 = vmatmul.bf16.gmra.mxu0 %v8924
    %v8944 = vpop.f32.mrf.mxu0
    %v8945 = vadd.f32 %v2143, %v8944
    %v8946 = vpop.f32.mrf.mxu0
    %8947 = vdwg.mxu0
    %8948 = vmatpush.bf16.msra.mxu0 %v3047
    %8949 = vmatpush.bf16.msra.mxu0 %v3039
    %8950 = vmatpush.bf16.msra.mxu0 %v3031
    %8951 = vmatpush.bf16.msra.mxu0 %v3023
    %8952 = vmatpush.bf16.msra.mxu0 %v3015
    %8953 = vmatpush.bf16.msra.mxu0 %v3007
    %8954 = vmatpush.bf16.msra.mxu0 %v2999
    %8955 = vmatpush.bf16.msra.mxu0 %v2991
    %8956 = vmatmul.bf16.gmra.mxu0 %v8925
    %v8957 = vpop.f32.mrf.mxu0
    %v8958 = vadd.f32 %v8945, %v8957
    %v8959 = vpop.f32.mrf.mxu0
    %8960 = vdwg.mxu0
    %8961 = vmatpush.bf16.msra.mxu0 %v3111
    %8962 = vmatpush.bf16.msra.mxu0 %v3103
    %8963 = vmatpush.bf16.msra.mxu0 %v3095
    %8964 = vmatpush.bf16.msra.mxu0 %v3087
    %8965 = vmatpush.bf16.msra.mxu0 %v3079
    %8966 = vmatpush.bf16.msra.mxu0 %v3071
    %8967 = vmatpush.bf16.msra.mxu0 %v3063
    %8968 = vmatpush.bf16.msra.mxu0 %v3055
    %8969 = vmatmul.bf16.gmra.mxu0 %v8931
    %v8970 = vpop.f32.mrf.mxu0
    %v8971 = vadd.f32 %v8958, %v8970
    %v8972 = vpop.f32.mrf.mxu0
    %8973 = vdwg.mxu0
    %8974 = vmatpush.bf16.msra.mxu0 %v3175
    %8975 = vmatpush.bf16.msra.mxu0 %v3167
    %8976 = vmatpush.bf16.msra.mxu0 %v3159
    %8977 = vmatpush.bf16.msra.mxu0 %v3151
    %8978 = vmatpush.bf16.msra.mxu0 %v3143
    %8979 = vmatpush.bf16.msra.mxu0 %v3135
    %8980 = vmatpush.bf16.msra.mxu0 %v3127
    %8981 = vmatpush.bf16.msra.mxu0 %v3119
    %8982 = vmatmul.bf16.gmra.mxu0 %v8932
    %v8983 = vpop.f32.mrf.mxu0
    %v8984 = vadd.f32 %v8971, %v8983
    %v8985 = vpop.f32.mrf.mxu0
    %8986 = vdwg.mxu0
    %8987 = vmatpush.bf16.msra.mxu0 %v2984
    %8988 = vmatpush.bf16.msra.mxu0 %v2976
    %8989 = vmatpush.bf16.msra.mxu0 %v2968
    %8990 = vmatpush.bf16.msra.mxu0 %v2960
    %8991 = vmatpush.bf16.msra.mxu0 %v2952
    %8992 = vmatpush.bf16.msra.mxu0 %v2944
    %8993 = vmatpush.bf16.msra.mxu0 %v2936
    %8994 = vmatpush.bf16.msra.mxu0 %v2928
    %8995 = vmatmul.bf16.gmra.mxu0 %v8924
    %v8996 = vpop.f32.mrf.mxu0
    %v8997 = vadd.f32 %v2144, %v8996
    %v8998 = vpop.f32.mrf.mxu0
    %8999 = vdwg.mxu0
    %9000 = vmatpush.bf16.msra.mxu0 %v3048
    %9001 = vmatpush.bf16.msra.mxu0 %v3040
    %9002 = vmatpush.bf16.msra.mxu0 %v3032
    %9003 = vmatpush.bf16.msra.mxu0 %v3024
    %9004 = vmatpush.bf16.msra.mxu0 %v3016
    %9005 = vmatpush.bf16.msra.mxu0 %v3008
    %9006 = vmatpush.bf16.msra.mxu0 %v3000
    %9007 = vmatpush.bf16.msra.mxu0 %v2992
    %9008 = vmatmul.bf16.gmra.mxu0 %v8925
    %v9009 = vpop.f32.mrf.mxu0
    %v9010 = vadd.f32 %v8997, %v9009
    %v9011 = vpop.f32.mrf.mxu0
    %9012 = vdwg.mxu0
    %9013 = vmatpush.bf16.msra.mxu0 %v3112
    %9014 = vmatpush.bf16.msra.mxu0 %v3104
    %9015 = vmatpush.bf16.msra.mxu0 %v3096
    %9016 = vmatpush.bf16.msra.mxu0 %v3088
    %9017 = vmatpush.bf16.msra.mxu0 %v3080
    %9018 = vmatpush.bf16.msra.mxu0 %v3072
    %9019 = vmatpush.bf16.msra.mxu0 %v3064
    %9020 = vmatpush.bf16.msra.mxu0 %v3056
    %9021 = vmatmul.bf16.gmra.mxu0 %v8931
    %v9022 = vpop.f32.mrf.mxu0
    %v9023 = vadd.f32 %v9010, %v9022
    %v9024 = vpop.f32.mrf.mxu0
    %9025 = vdwg.mxu0
    %9026 = vmatpush.bf16.msra.mxu0 %v3176
    %9027 = vmatpush.bf16.msra.mxu0 %v3168
    %9028 = vmatpush.bf16.msra.mxu0 %v3160
    %9029 = vmatpush.bf16.msra.mxu0 %v3152
    %9030 = vmatpush.bf16.msra.mxu0 %v3144
    %9031 = vmatpush.bf16.msra.mxu0 %v3136
    %9032 = vmatpush.bf16.msra.mxu0 %v3128
    %9033 = vmatpush.bf16.msra.mxu0 %v3120
    %9034 = vmatmul.bf16.gmra.mxu0 %v8932
    %v9035 = vpop.f32.mrf.mxu0
    %v9036 = vadd.f32 %v9023, %v9035
    %v9037 = vpop.f32.mrf.mxu0
    %9038 = vdwg.mxu0
    %9039 = vmatpush.bf16.msra.mxu0 %v2985
    %9040 = vmatpush.bf16.msra.mxu0 %v2977
    %9041 = vmatpush.bf16.msra.mxu0 %v2969
    %9042 = vmatpush.bf16.msra.mxu0 %v2961
    %9043 = vmatpush.bf16.msra.mxu0 %v2953
    %9044 = vmatpush.bf16.msra.mxu0 %v2945
    %9045 = vmatpush.bf16.msra.mxu0 %v2937
    %9046 = vmatpush.bf16.msra.mxu0 %v2929
    %9047 = vmatmul.bf16.gmra.mxu0 %v8924
    %v9048 = vpop.f32.mrf.mxu0
    %v9049 = vadd.f32 %v2145, %v9048
    %v9050 = vpop.f32.mrf.mxu0
    %9051 = vdwg.mxu0
    %9052 = vmatpush.bf16.msra.mxu0 %v3049
    %9053 = vmatpush.bf16.msra.mxu0 %v3041
    %9054 = vmatpush.bf16.msra.mxu0 %v3033
    %9055 = vmatpush.bf16.msra.mxu0 %v3025
    %9056 = vmatpush.bf16.msra.mxu0 %v3017
    %9057 = vmatpush.bf16.msra.mxu0 %v3009
    %9058 = vmatpush.bf16.msra.mxu0 %v3001
    %9059 = vmatpush.bf16.msra.mxu0 %v2993
    %9060 = vmatmul.bf16.gmra.mxu0 %v8925
    %v9061 = vpop.f32.mrf.mxu0
    %v9062 = vadd.f32 %v9049, %v9061
    %v9063 = vpop.f32.mrf.mxu0
    %9064 = vdwg.mxu0
    %9065 = vmatpush.bf16.msra.mxu0 %v3113
    %9066 = vmatpush.bf16.msra.mxu0 %v3105
    %9067 = vmatpush.bf16.msra.mxu0 %v3097
    %9068 = vmatpush.bf16.msra.mxu0 %v3089
    %9069 = vmatpush.bf16.msra.mxu0 %v3081
    %9070 = vmatpush.bf16.msra.mxu0 %v3073
    %9071 = vmatpush.bf16.msra.mxu0 %v3065
    %9072 = vmatpush.bf16.msra.mxu0 %v3057
    %9073 = vmatmul.bf16.gmra.mxu0 %v8931
    %v9074 = vpop.f32.mrf.mxu0
    %v9075 = vadd.f32 %v9062, %v9074
    %v9076 = vpop.f32.mrf.mxu0
    %9077 = vdwg.mxu0
    %9078 = vmatpush.bf16.msra.mxu0 %v3177
    %9079 = vmatpush.bf16.msra.mxu0 %v3169
    %9080 = vmatpush.bf16.msra.mxu0 %v3161
    %9081 = vmatpush.bf16.msra.mxu0 %v3153
    %9082 = vmatpush.bf16.msra.mxu0 %v3145
    %9083 = vmatpush.bf16.msra.mxu0 %v3137
    %9084 = vmatpush.bf16.msra.mxu0 %v3129
    %9085 = vmatpush.bf16.msra.mxu0 %v3121
    %9086 = vmatmul.bf16.gmra.mxu0 %v8932
    %v9087 = vpop.f32.mrf.mxu0
    %v9088 = vadd.f32 %v9075, %v9087
    %v9089 = vpop.f32.mrf.mxu0
    %9090 = vdwg.mxu0
    %9091 = vmatpush.bf16.msra.mxu0 %v2986
    %9092 = vmatpush.bf16.msra.mxu0 %v2978
    %9093 = vmatpush.bf16.msra.mxu0 %v2970
    %9094 = vmatpush.bf16.msra.mxu0 %v2962
    %9095 = vmatpush.bf16.msra.mxu0 %v2954
    %9096 = vmatpush.bf16.msra.mxu0 %v2946
    %9097 = vmatpush.bf16.msra.mxu0 %v2938
    %9098 = vmatpush.bf16.msra.mxu0 %v2930
    %9099 = vmatmul.bf16.gmra.mxu0 %v8924
    %v9100 = vpop.f32.mrf.mxu0
    %v9101 = vadd.f32 %v2146, %v9100
    %v9102 = vpop.f32.mrf.mxu0
    %9103 = vdwg.mxu0
    %9104 = vmatpush.bf16.msra.mxu0 %v3050
    %9105 = vmatpush.bf16.msra.mxu0 %v3042
    %9106 = vmatpush.bf16.msra.mxu0 %v3034
    %9107 = vmatpush.bf16.msra.mxu0 %v3026
    %9108 = vmatpush.bf16.msra.mxu0 %v3018
    %9109 = vmatpush.bf16.msra.mxu0 %v3010
    %9110 = vmatpush.bf16.msra.mxu0 %v3002
    %9111 = vmatpush.bf16.msra.mxu0 %v2994
    %9112 = vmatmul.bf16.gmra.mxu0 %v8925
    %v9113 = vpop.f32.mrf.mxu0
    %v9114 = vadd.f32 %v9101, %v9113
    %v9115 = vpop.f32.mrf.mxu0
    %9116 = vdwg.mxu0
    %9117 = vmatpush.bf16.msra.mxu0 %v3114
    %9118 = vmatpush.bf16.msra.mxu0 %v3106
    %9119 = vmatpush.bf16.msra.mxu0 %v3098
    %9120 = vmatpush.bf16.msra.mxu0 %v3090
    %9121 = vmatpush.bf16.msra.mxu0 %v3082
    %9122 = vmatpush.bf16.msra.mxu0 %v3074
    %9123 = vmatpush.bf16.msra.mxu0 %v3066
    %9124 = vmatpush.bf16.msra.mxu0 %v3058
    %9125 = vmatmul.bf16.gmra.mxu0 %v8931
    %v9126 = vpop.f32.mrf.mxu0
    %v9127 = vadd.f32 %v9114, %v9126
    %v9128 = vpop.f32.mrf.mxu0
    %9129 = vdwg.mxu0
    %9130 = vmatpush.bf16.msra.mxu0 %v3178
    %9131 = vmatpush.bf16.msra.mxu0 %v3170
    %9132 = vmatpush.bf16.msra.mxu0 %v3162
    %9133 = vmatpush.bf16.msra.mxu0 %v3154
    %9134 = vmatpush.bf16.msra.mxu0 %v3146
    %9135 = vmatpush.bf16.msra.mxu0 %v3138
    %9136 = vmatpush.bf16.msra.mxu0 %v3130
    %9137 = vmatpush.bf16.msra.mxu0 %v3122
    %9138 = vmatmul.bf16.gmra.mxu0 %v8932
    %v9139 = vpop.f32.mrf.mxu0
    %v9140 = vadd.f32 %v9127, %v9139
    %v9141 = vpop.f32.mrf.mxu0
    %9142 = vdwg.mxu0
    %9143 = vmatpush.bf16.msra.mxu0 %v2987
    %9144 = vmatpush.bf16.msra.mxu0 %v2979
    %9145 = vmatpush.bf16.msra.mxu0 %v2971
    %9146 = vmatpush.bf16.msra.mxu0 %v2963
    %9147 = vmatpush.bf16.msra.mxu0 %v2955
    %9148 = vmatpush.bf16.msra.mxu0 %v2947
    %9149 = vmatpush.bf16.msra.mxu0 %v2939
    %9150 = vmatpush.bf16.msra.mxu0 %v2931
    %9151 = vmatmul.bf16.gmra.mxu0 %v8924
    %v9152 = vpop.f32.mrf.mxu0
    %v9153 = vadd.f32 %v2147, %v9152
    %v9154 = vpop.f32.mrf.mxu0
    %9155 = vdwg.mxu0
    %9156 = vmatpush.bf16.msra.mxu0 %v3051
    %9157 = vmatpush.bf16.msra.mxu0 %v3043
    %9158 = vmatpush.bf16.msra.mxu0 %v3035
    %9159 = vmatpush.bf16.msra.mxu0 %v3027
    %9160 = vmatpush.bf16.msra.mxu0 %v3019
    %9161 = vmatpush.bf16.msra.mxu0 %v3011
    %9162 = vmatpush.bf16.msra.mxu0 %v3003
    %9163 = vmatpush.bf16.msra.mxu0 %v2995
    %9164 = vmatmul.bf16.gmra.mxu0 %v8925
    %v9165 = vpop.f32.mrf.mxu0
    %v9166 = vadd.f32 %v9153, %v9165
    %v9167 = vpop.f32.mrf.mxu0
    %9168 = vdwg.mxu0
    %9169 = vmatpush.bf16.msra.mxu0 %v3115
    %9170 = vmatpush.bf16.msra.mxu0 %v3107
    %9171 = vmatpush.bf16.msra.mxu0 %v3099
    %9172 = vmatpush.bf16.msra.mxu0 %v3091
    %9173 = vmatpush.bf16.msra.mxu0 %v3083
    %9174 = vmatpush.bf16.msra.mxu0 %v3075
    %9175 = vmatpush.bf16.msra.mxu0 %v3067
    %9176 = vmatpush.bf16.msra.mxu0 %v3059
    %9177 = vmatmul.bf16.gmra.mxu0 %v8931
    %v9178 = vpop.f32.mrf.mxu0
    %v9179 = vadd.f32 %v9166, %v9178
    %v9180 = vpop.f32.mrf.mxu0
    %9181 = vdwg.mxu0
    %9182 = vmatpush.bf16.msra.mxu0 %v3179
    %9183 = vmatpush.bf16.msra.mxu0 %v3171
    %9184 = vmatpush.bf16.msra.mxu0 %v3163
    %9185 = vmatpush.bf16.msra.mxu0 %v3155
    %9186 = vmatpush.bf16.msra.mxu0 %v3147
    %9187 = vmatpush.bf16.msra.mxu0 %v3139
    %9188 = vmatpush.bf16.msra.mxu0 %v3131
    %9189 = vmatpush.bf16.msra.mxu0 %v3123
    %9190 = vmatmul.bf16.gmra.mxu0 %v8932
    %v9191 = vpop.f32.mrf.mxu0
    %v9192 = vadd.f32 %v9179, %v9191
    %v9193 = vpop.f32.mrf.mxu0
    %9194 = vdwg.mxu0
    %9195 = vmatpush.bf16.msra.mxu0 %v2988
    %9196 = vmatpush.bf16.msra.mxu0 %v2980
    %9197 = vmatpush.bf16.msra.mxu0 %v2972
    %9198 = vmatpush.bf16.msra.mxu0 %v2964
    %9199 = vmatpush.bf16.msra.mxu0 %v2956
    %9200 = vmatpush.bf16.msra.mxu0 %v2948
    %9201 = vmatpush.bf16.msra.mxu0 %v2940
    %9202 = vmatpush.bf16.msra.mxu0 %v2932
    %9203 = vmatmul.bf16.gmra.mxu0 %v8924
    %v9204 = vpop.f32.mrf.mxu0
    %v9205 = vadd.f32 %v2148, %v9204
    %v9206 = vpop.f32.mrf.mxu0
    %9207 = vdwg.mxu0
    %9208 = vmatpush.bf16.msra.mxu0 %v3052
    %9209 = vmatpush.bf16.msra.mxu0 %v3044
    %9210 = vmatpush.bf16.msra.mxu0 %v3036
    %9211 = vmatpush.bf16.msra.mxu0 %v3028
    %9212 = vmatpush.bf16.msra.mxu0 %v3020
    %9213 = vmatpush.bf16.msra.mxu0 %v3012
    %9214 = vmatpush.bf16.msra.mxu0 %v3004
    %9215 = vmatpush.bf16.msra.mxu0 %v2996
    %9216 = vmatmul.bf16.gmra.mxu0 %v8925
    %v9217 = vpop.f32.mrf.mxu0
    %v9218 = vadd.f32 %v9205, %v9217
    %v9219 = vpop.f32.mrf.mxu0
    %9220 = vdwg.mxu0
    %9221 = vmatpush.bf16.msra.mxu0 %v3116
    %9222 = vmatpush.bf16.msra.mxu0 %v3108
    %9223 = vmatpush.bf16.msra.mxu0 %v3100
    %9224 = vmatpush.bf16.msra.mxu0 %v3092
    %9225 = vmatpush.bf16.msra.mxu0 %v3084
    %9226 = vmatpush.bf16.msra.mxu0 %v3076
    %9227 = vmatpush.bf16.msra.mxu0 %v3068
    %9228 = vmatpush.bf16.msra.mxu0 %v3060
    %9229 = vmatmul.bf16.gmra.mxu0 %v8931
    %v9230 = vpop.f32.mrf.mxu0
    %v9231 = vadd.f32 %v9218, %v9230
    %v9232 = vpop.f32.mrf.mxu0
    %9233 = vdwg.mxu0
    %9234 = vmatpush.bf16.msra.mxu0 %v3180
    %9235 = vmatpush.bf16.msra.mxu0 %v3172
    %9236 = vmatpush.bf16.msra.mxu0 %v3164
    %9237 = vmatpush.bf16.msra.mxu0 %v3156
    %9238 = vmatpush.bf16.msra.mxu0 %v3148
    %9239 = vmatpush.bf16.msra.mxu0 %v3140
    %9240 = vmatpush.bf16.msra.mxu0 %v3132
    %9241 = vmatpush.bf16.msra.mxu0 %v3124
    %9242 = vmatmul.bf16.gmra.mxu0 %v8932
    %v9243 = vpop.f32.mrf.mxu0
    %v9244 = vadd.f32 %v9231, %v9243
    %v9245 = vpop.f32.mrf.mxu0
    %9246 = vdwg.mxu0
    %9247 = vmatpush.bf16.msra.mxu0 %v2989
    %9248 = vmatpush.bf16.msra.mxu0 %v2981
    %9249 = vmatpush.bf16.msra.mxu0 %v2973
    %9250 = vmatpush.bf16.msra.mxu0 %v2965
    %9251 = vmatpush.bf16.msra.mxu0 %v2957
    %9252 = vmatpush.bf16.msra.mxu0 %v2949
    %9253 = vmatpush.bf16.msra.mxu0 %v2941
    %9254 = vmatpush.bf16.msra.mxu0 %v2933
    %9255 = vmatmul.bf16.gmra.mxu0 %v8924
    %v9256 = vpop.f32.mrf.mxu0
    %v9257 = vadd.f32 %v2149, %v9256
    %v9258 = vpop.f32.mrf.mxu0
    %9259 = vdwg.mxu0
    %9260 = vmatpush.bf16.msra.mxu0 %v3053
    %9261 = vmatpush.bf16.msra.mxu0 %v3045
    %9262 = vmatpush.bf16.msra.mxu0 %v3037
    %9263 = vmatpush.bf16.msra.mxu0 %v3029
    %9264 = vmatpush.bf16.msra.mxu0 %v3021
    %9265 = vmatpush.bf16.msra.mxu0 %v3013
    %9266 = vmatpush.bf16.msra.mxu0 %v3005
    %9267 = vmatpush.bf16.msra.mxu0 %v2997
    %9268 = vmatmul.bf16.gmra.mxu0 %v8925
    %v9269 = vpop.f32.mrf.mxu0
    %v9270 = vadd.f32 %v9257, %v9269
    %v9271 = vpop.f32.mrf.mxu0
    %9272 = vdwg.mxu0
    %9273 = vmatpush.bf16.msra.mxu0 %v3117
    %9274 = vmatpush.bf16.msra.mxu0 %v3109
    %9275 = vmatpush.bf16.msra.mxu0 %v3101
    %9276 = vmatpush.bf16.msra.mxu0 %v3093
    %9277 = vmatpush.bf16.msra.mxu0 %v3085
    %9278 = vmatpush.bf16.msra.mxu0 %v3077
    %9279 = vmatpush.bf16.msra.mxu0 %v3069
    %9280 = vmatpush.bf16.msra.mxu0 %v3061
    %9281 = vmatmul.bf16.gmra.mxu0 %v8931
    %v9282 = vpop.f32.mrf.mxu0
    %v9283 = vadd.f32 %v9270, %v9282
    %v9284 = vpop.f32.mrf.mxu0
    %9285 = vdwg.mxu0
    %9286 = vmatpush.bf16.msra.mxu0 %v3181
    %9287 = vmatpush.bf16.msra.mxu0 %v3173
    %9288 = vmatpush.bf16.msra.mxu0 %v3165
    %9289 = vmatpush.bf16.msra.mxu0 %v3157
    %9290 = vmatpush.bf16.msra.mxu0 %v3149
    %9291 = vmatpush.bf16.msra.mxu0 %v3141
    %9292 = vmatpush.bf16.msra.mxu0 %v3133
    %9293 = vmatpush.bf16.msra.mxu0 %v3125
    %9294 = vmatmul.bf16.gmra.mxu0 %v8932
    %v9295 = vpop.f32.mrf.mxu0
    %v9296 = vadd.f32 %v9283, %v9295
    %v9297 = vpop.f32.mrf.mxu0
    %9298 = vdwg.mxu0
    %9299 = vmatpush.bf16.msra.mxu0 %v2990
    %9300 = vmatpush.bf16.msra.mxu0 %v2982
    %9301 = vmatpush.bf16.msra.mxu0 %v2974
    %9302 = vmatpush.bf16.msra.mxu0 %v2966
    %9303 = vmatpush.bf16.msra.mxu0 %v2958
    %9304 = vmatpush.bf16.msra.mxu0 %v2950
    %9305 = vmatpush.bf16.msra.mxu0 %v2942
    %9306 = vmatpush.bf16.msra.mxu0 %v2934
    %9307 = vmatmul.bf16.gmra.mxu0 %v8924
    %v9308 = vpop.f32.mrf.mxu0
    %v9309 = vadd.f32 %v2150, %v9308
    %v9310 = vpop.f32.mrf.mxu0
    %9311 = vdwg.mxu0
    %9312 = vmatpush.bf16.msra.mxu0 %v3054
    %9313 = vmatpush.bf16.msra.mxu0 %v3046
    %9314 = vmatpush.bf16.msra.mxu0 %v3038
    %9315 = vmatpush.bf16.msra.mxu0 %v3030
    %9316 = vmatpush.bf16.msra.mxu0 %v3022
    %9317 = vmatpush.bf16.msra.mxu0 %v3014
    %9318 = vmatpush.bf16.msra.mxu0 %v3006
    %9319 = vmatpush.bf16.msra.mxu0 %v2998
    %9320 = vmatmul.bf16.gmra.mxu0 %v8925
    %v9321 = vpop.f32.mrf.mxu0
    %v9322 = vadd.f32 %v9309, %v9321
    %v9323 = vpop.f32.mrf.mxu0
    %9324 = vdwg.mxu0
    %9325 = vmatpush.bf16.msra.mxu0 %v3118
    %9326 = vmatpush.bf16.msra.mxu0 %v3110
    %9327 = vmatpush.bf16.msra.mxu0 %v3102
    %9328 = vmatpush.bf16.msra.mxu0 %v3094
    %9329 = vmatpush.bf16.msra.mxu0 %v3086
    %9330 = vmatpush.bf16.msra.mxu0 %v3078
    %9331 = vmatpush.bf16.msra.mxu0 %v3070
    %9332 = vmatpush.bf16.msra.mxu0 %v3062
    %9333 = vmatmul.bf16.gmra.mxu0 %v8931
    %v9334 = vpop.f32.mrf.mxu0
    %v9335 = vadd.f32 %v9322, %v9334
    %v9336 = vpop.f32.mrf.mxu0
    %9337 = vdwg.mxu0
    %9338 = vmatpush.bf16.msra.mxu0 %v3182
    %9339 = vmatpush.bf16.msra.mxu0 %v3174
    %9340 = vmatpush.bf16.msra.mxu0 %v3166
    %9341 = vmatpush.bf16.msra.mxu0 %v3158
    %9342 = vmatpush.bf16.msra.mxu0 %v3150
    %9343 = vmatpush.bf16.msra.mxu0 %v3142
    %9344 = vmatpush.bf16.msra.mxu0 %v3134
    %9345 = vmatpush.bf16.msra.mxu0 %v3126
    %9346 = vmatmul.bf16.gmra.mxu0 %v8932
    %v9347 = vpop.f32.mrf.mxu0
    %v9348 = vadd.f32 %v9335, %v9347
    %v9349 = vpop.f32.mrf.mxu0
    %9350 = vdwg.mxu0
    %v9351 = vxor.u32 %v8984, 2147483648
    %v9352 = vxor.u32 %v9036, 2147483648
    %v9353 = vmul.f32 %v9351, 1.442695
    %v9354 = vpow.pop %v9353
    %v9355 = vmul.f32 %v9352, 1.442695
    %v9356 = vpow.pop %v9355
    %v9357 = vadd.f32 %v9354, 1.0
    %v9358 = vadd.f32 %v9356, 1.0
    %v9359 = vrcp.pop %v9357
    %v9360 = vmul.f32 %v9357, %v9359
    %v9361 = vsub.f32 1.0, %v9360
    %v9362 = vmul.f32 %v9359, %v9361
    %v9363 = vadd.f32 %v9359, %v9362
    %vm9364 = vweird.f32 %v9357
    %vm9365 = vweird.f32 %v9359
    %vm9366 = vmor %vm9364, %vm9365
    %v9367 = vsel %vm9366, %v9359, %v9363
    %v9368 = vand.u32 2147483647, %v9357
    %vm9369 = vcmp.eq.f32.partialorder %v9368, 8.507059e+37
    %v9370 = vand.u32 %v9357, 2147483648
    %v9371 = vor.u32 1.1754944e-38, %v9370
    %v9372 = vsel %vm9369, %v9371, %v9367
    %v9373 = vmul.f32 1.0, %v9372
    %v9374 = vrcp.pop %v9358
    %v9375 = vmul.f32 %v9358, %v9374
    %v9376 = vsub.f32 1.0, %v9375
    %v9377 = vmul.f32 %v9374, %v9376
    %v9378 = vadd.f32 %v9374, %v9377
    %vm9379 = vweird.f32 %v9358
    %vm9380 = vweird.f32 %v9374
    %vm9381 = vmor %vm9379, %vm9380
    %v9382 = vsel %vm9381, %v9374, %v9378
    %v9383 = vand.u32 2147483647, %v9358
    %vm9384 = vcmp.eq.f32.partialorder %v9383, 8.507059e+37
    %v9385 = vand.u32 %v9358, 2147483648
    %v9386 = vor.u32 1.1754944e-38, %v9385
    %v9387 = vsel %vm9384, %v9386, %v9382
    %v9388 = vmul.f32 1.0, %v9387
    %v9389 = vxor.u32 %v9088, 2147483648
    %v9390 = vxor.u32 %v9140, 2147483648
    %v9391 = vmul.f32 %v9389, 1.442695
    %v9392 = vpow.pop %v9391
    %v9393 = vmul.f32 %v9390, 1.442695
    %v9394 = vpow.pop %v9393
    %v9395 = vadd.f32 %v9392, 1.0
    %v9396 = vadd.f32 %v9394, 1.0
    %v9397 = vrcp.pop %v9395
    %v9398 = vmul.f32 %v9395, %v9397
    %v9399 = vsub.f32 1.0, %v9398
    %v9400 = vmul.f32 %v9397, %v9399
    %v9401 = vadd.f32 %v9397, %v9400
    %vm9402 = vweird.f32 %v9395
    %vm9403 = vweird.f32 %v9397
    %vm9404 = vmor %vm9402, %vm9403
    %v9405 = vsel %vm9404, %v9397, %v9401
    %v9406 = vand.u32 2147483647, %v9395
    %vm9407 = vcmp.eq.f32.partialorder %v9406, 8.507059e+37
    %v9408 = vand.u32 %v9395, 2147483648
    %v9409 = vor.u32 1.1754944e-38, %v9408
    %v9410 = vsel %vm9407, %v9409, %v9405
    %v9411 = vmul.f32 1.0, %v9410
    %v9412 = vrcp.pop %v9396
    %v9413 = vmul.f32 %v9396, %v9412
    %v9414 = vsub.f32 1.0, %v9413
    %v9415 = vmul.f32 %v9412, %v9414
    %v9416 = vadd.f32 %v9412, %v9415
    %vm9417 = vweird.f32 %v9396
    %vm9418 = vweird.f32 %v9412
    %vm9419 = vmor %vm9417, %vm9418
    %v9420 = vsel %vm9419, %v9412, %v9416
    %v9421 = vand.u32 2147483647, %v9396
    %vm9422 = vcmp.eq.f32.partialorder %v9421, 8.507059e+37
    %v9423 = vand.u32 %v9396, 2147483648
    %v9424 = vor.u32 1.1754944e-38, %v9423
    %v9425 = vsel %vm9422, %v9424, %v9420
    %v9426 = vmul.f32 1.0, %v9425
    %v9427 = vtanh.pop %v9192
    %v9428 = vtanh.pop %v9244
    %v9429 = vxor.u32 %v9296, 2147483648
    %v9430 = vxor.u32 %v9348, 2147483648
    %v9431 = vmul.f32 %v9429, 1.442695
    %v9432 = vpow.pop %v9431
    %v9433 = vmul.f32 %v9430, 1.442695
    %v9434 = vpow.pop %v9433
    %v9435 = vadd.f32 %v9432, 1.0
    %v9436 = vadd.f32 %v9434, 1.0
    %v9437 = vrcp.pop %v9435
    %v9438 = vmul.f32 %v9435, %v9437
    %v9439 = vsub.f32 1.0, %v9438
    %v9440 = vmul.f32 %v9437, %v9439
    %v9441 = vadd.f32 %v9437, %v9440
    %vm9442 = vweird.f32 %v9435
    %vm9443 = vweird.f32 %v9437
    %vm9444 = vmor %vm9442, %vm9443
    %v9445 = vsel %vm9444, %v9437, %v9441
    %v9446 = vand.u32 2147483647, %v9435
    %vm9447 = vcmp.eq.f32.partialorder %v9446, 8.507059e+37
    %v9448 = vand.u32 %v9435, 2147483648
    %v9449 = vor.u32 1.1754944e-38, %v9448
    %v9450 = vsel %vm9447, %v9449, %v9445
    %v9451 = vmul.f32 1.0, %v9450
    %v9452 = vrcp.pop %v9436
    %v9453 = vmul.f32 %v9436, %v9452
    %v9454 = vsub.f32 1.0, %v9453
    %v9455 = vmul.f32 %v9452, %v9454
    %v9456 = vadd.f32 %v9452, %v9455
    %vm9457 = vweird.f32 %v9436
    %vm9458 = vweird.f32 %v9452
    %vm9459 = vmor %vm9457, %vm9458
    %v9460 = vsel %vm9459, %v9452, %v9456
    %v9461 = vand.u32 2147483647, %v9436
    %vm9462 = vcmp.eq.f32.partialorder %v9461, 8.507059e+37
    %v9463 = vand.u32 %v9436, 2147483648
    %v9464 = vor.u32 1.1754944e-38, %v9463
    %v9465 = vsel %vm9462, %v9464, %v9460
    %v9466 = vmul.f32 1.0, %v9465
    %v9467 = vmul.f32 %v9411, %v8567
    %v9468 = vmul.f32 %v9426, %v8568
    %v9469 = vmul.f32 %v9373, %v9427
    %v9470 = vmul.f32 %v9388, %v9428
    %v9471 = vadd.f32 %v9467, %v9469
    %v9472 = vadd.f32 %v9468, %v9470
    %v9473 = vtanh.pop %v9471
    %v9474 = vtanh.pop %v9472
    %v9475 = vmul.f32 %v9451, %v9473
    %v9476 = vmul.f32 %v9466, %v9474
    %v9477 = vsel %vm8574, %v8917, %v8561
    %v9478 = vsel %vm8574, %v8918, %v8562
    %v9479 = vsel %vm8574, %v8913, %v8563
    %v9480 = vsel %vm8574, %v8914, %v8564
    %v9481 = vsel %vm8574, %v9475, %v8565
    %v9482 = vsel %vm8574, %v9476, %v8566
    %v9483 = vsel %vm8574, %v9471, %v8567
    %v9484 = vsel %vm8574, %v9472, %v8568
    %vm9485 = vcmp.gt.s32.totalorder %v94, 7
    %v9486 = vsel %vm9485, 1, 0
    %9487 = vset.pattern.permute.xlu0 0
    %9488 = vperm.xlu0 %9487, %v9486
    %v9489 = vpop.permute.xlu0 %9488
    %vm9490 = vcmp.eq.s32.totalorder %v9489, 1
    %v9491 = vpack.c.bf16 %v9477, %v9477
    %v9492 = vpack.c.bf16 %v9478, %v9478
    %9493 = vmatpush.bf16.msra.mxu0 %v1592
    %9494 = vmatpush.bf16.msra.mxu0 %v1584
    %9495 = vmatpush.bf16.msra.mxu0 %v1576
    %9496 = vmatpush.bf16.msra.mxu0 %v1568
    %9497 = vmatpush.bf16.msra.mxu0 %v1560
    %9498 = vmatpush.bf16.msra.mxu0 %v1552
    %9499 = vmatpush.bf16.msra.mxu0 %v1544
    %9500 = vmatpush.bf16.msra.mxu0 %v1536
    %9501 = vmatmul.bf16.gmra.mxu0 %v9491
    %v9502 = vpop.f32.mrf.mxu0
    %v9503 = vadd.f32 0.0, %v9502
    %v9504 = vpop.f32.mrf.mxu0
    %9505 = vdwg.mxu0
    %9506 = vmatpush.bf16.msra.mxu0 %v1656
    %9507 = vmatpush.bf16.msra.mxu0 %v1648
    %9508 = vmatpush.bf16.msra.mxu0 %v1640
    %9509 = vmatpush.bf16.msra.mxu0 %v1632
    %9510 = vmatpush.bf16.msra.mxu0 %v1624
    %9511 = vmatpush.bf16.msra.mxu0 %v1616
    %9512 = vmatpush.bf16.msra.mxu0 %v1608
    %9513 = vmatpush.bf16.msra.mxu0 %v1600
    %9514 = vmatmul.bf16.gmra.mxu0 %v9492
    %v9515 = vpop.f32.mrf.mxu0
    %v9516 = vadd.f32 %v9503, %v9515
    %v9517 = vpop.f32.mrf.mxu0
    %9518 = vdwg.mxu0
    %9519 = vmatpush.bf16.msra.mxu0 %v1593
    %9520 = vmatpush.bf16.msra.mxu0 %v1585
    %9521 = vmatpush.bf16.msra.mxu0 %v1577
    %9522 = vmatpush.bf16.msra.mxu0 %v1569
    %9523 = vmatpush.bf16.msra.mxu0 %v1561
    %9524 = vmatpush.bf16.msra.mxu0 %v1553
    %9525 = vmatpush.bf16.msra.mxu0 %v1545
    %9526 = vmatpush.bf16.msra.mxu0 %v1537
    %9527 = vmatmul.bf16.gmra.mxu0 %v9491
    %v9528 = vpop.f32.mrf.mxu0
    %v9529 = vadd.f32 0.0, %v9528
    %v9530 = vpop.f32.mrf.mxu0
    %9531 = vdwg.mxu0
    %9532 = vmatpush.bf16.msra.mxu0 %v1657
    %9533 = vmatpush.bf16.msra.mxu0 %v1649
    %9534 = vmatpush.bf16.msra.mxu0 %v1641
    %9535 = vmatpush.bf16.msra.mxu0 %v1633
    %9536 = vmatpush.bf16.msra.mxu0 %v1625
    %9537 = vmatpush.bf16.msra.mxu0 %v1617
    %9538 = vmatpush.bf16.msra.mxu0 %v1609
    %9539 = vmatpush.bf16.msra.mxu0 %v1601
    %9540 = vmatmul.bf16.gmra.mxu0 %v9492
    %v9541 = vpop.f32.mrf.mxu0
    %v9542 = vadd.f32 %v9529, %v9541
    %v9543 = vpop.f32.mrf.mxu0
    %9544 = vdwg.mxu0
    %9545 = vmatpush.bf16.msra.mxu0 %v1594
    %9546 = vmatpush.bf16.msra.mxu0 %v1586
    %9547 = vmatpush.bf16.msra.mxu0 %v1578
    %9548 = vmatpush.bf16.msra.mxu0 %v1570
    %9549 = vmatpush.bf16.msra.mxu0 %v1562
    %9550 = vmatpush.bf16.msra.mxu0 %v1554
    %9551 = vmatpush.bf16.msra.mxu0 %v1546
    %9552 = vmatpush.bf16.msra.mxu0 %v1538
    %9553 = vmatmul.bf16.gmra.mxu0 %v9491
    %v9554 = vpop.f32.mrf.mxu0
    %v9555 = vadd.f32 0.0, %v9554
    %v9556 = vpop.f32.mrf.mxu0
    %9557 = vdwg.mxu0
    %9558 = vmatpush.bf16.msra.mxu0 %v1658
    %9559 = vmatpush.bf16.msra.mxu0 %v1650
    %9560 = vmatpush.bf16.msra.mxu0 %v1642
    %9561 = vmatpush.bf16.msra.mxu0 %v1634
    %9562 = vmatpush.bf16.msra.mxu0 %v1626
    %9563 = vmatpush.bf16.msra.mxu0 %v1618
    %9564 = vmatpush.bf16.msra.mxu0 %v1610
    %9565 = vmatpush.bf16.msra.mxu0 %v1602
    %9566 = vmatmul.bf16.gmra.mxu0 %v9492
    %v9567 = vpop.f32.mrf.mxu0
    %v9568 = vadd.f32 %v9555, %v9567
    %v9569 = vpop.f32.mrf.mxu0
    %9570 = vdwg.mxu0
    %9571 = vmatpush.bf16.msra.mxu0 %v1595
    %9572 = vmatpush.bf16.msra.mxu0 %v1587
    %9573 = vmatpush.bf16.msra.mxu0 %v1579
    %9574 = vmatpush.bf16.msra.mxu0 %v1571
    %9575 = vmatpush.bf16.msra.mxu0 %v1563
    %9576 = vmatpush.bf16.msra.mxu0 %v1555
    %9577 = vmatpush.bf16.msra.mxu0 %v1547
    %9578 = vmatpush.bf16.msra.mxu0 %v1539
    %9579 = vmatmul.bf16.gmra.mxu0 %v9491
    %v9580 = vpop.f32.mrf.mxu0
    %v9581 = vadd.f32 0.0, %v9580
    %v9582 = vpop.f32.mrf.mxu0
    %9583 = vdwg.mxu0
    %9584 = vmatpush.bf16.msra.mxu0 %v1659
    %9585 = vmatpush.bf16.msra.mxu0 %v1651
    %9586 = vmatpush.bf16.msra.mxu0 %v1643
    %9587 = vmatpush.bf16.msra.mxu0 %v1635
    %9588 = vmatpush.bf16.msra.mxu0 %v1627
    %9589 = vmatpush.bf16.msra.mxu0 %v1619
    %9590 = vmatpush.bf16.msra.mxu0 %v1611
    %9591 = vmatpush.bf16.msra.mxu0 %v1603
    %9592 = vmatmul.bf16.gmra.mxu0 %v9492
    %v9593 = vpop.f32.mrf.mxu0
    %v9594 = vadd.f32 %v9581, %v9593
    %v9595 = vpop.f32.mrf.mxu0
    %9596 = vdwg.mxu0
    %9597 = vmatpush.bf16.msra.mxu0 %v1596
    %9598 = vmatpush.bf16.msra.mxu0 %v1588
    %9599 = vmatpush.bf16.msra.mxu0 %v1580
    %9600 = vmatpush.bf16.msra.mxu0 %v1572
    %9601 = vmatpush.bf16.msra.mxu0 %v1564
    %9602 = vmatpush.bf16.msra.mxu0 %v1556
    %9603 = vmatpush.bf16.msra.mxu0 %v1548
    %9604 = vmatpush.bf16.msra.mxu0 %v1540
    %9605 = vmatmul.bf16.gmra.mxu0 %v9491
    %v9606 = vpop.f32.mrf.mxu0
    %v9607 = vadd.f32 0.0, %v9606
    %v9608 = vpop.f32.mrf.mxu0
    %9609 = vdwg.mxu0
    %9610 = vmatpush.bf16.msra.mxu0 %v1660
    %9611 = vmatpush.bf16.msra.mxu0 %v1652
    %9612 = vmatpush.bf16.msra.mxu0 %v1644
    %9613 = vmatpush.bf16.msra.mxu0 %v1636
    %9614 = vmatpush.bf16.msra.mxu0 %v1628
    %9615 = vmatpush.bf16.msra.mxu0 %v1620
    %9616 = vmatpush.bf16.msra.mxu0 %v1612
    %9617 = vmatpush.bf16.msra.mxu0 %v1604
    %9618 = vmatmul.bf16.gmra.mxu0 %v9492
    %v9619 = vpop.f32.mrf.mxu0
    %v9620 = vadd.f32 %v9607, %v9619
    %v9621 = vpop.f32.mrf.mxu0
    %9622 = vdwg.mxu0
    %9623 = vmatpush.bf16.msra.mxu0 %v1597
    %9624 = vmatpush.bf16.msra.mxu0 %v1589
    %9625 = vmatpush.bf16.msra.mxu0 %v1581
    %9626 = vmatpush.bf16.msra.mxu0 %v1573
    %9627 = vmatpush.bf16.msra.mxu0 %v1565
    %9628 = vmatpush.bf16.msra.mxu0 %v1557
    %9629 = vmatpush.bf16.msra.mxu0 %v1549
    %9630 = vmatpush.bf16.msra.mxu0 %v1541
    %9631 = vmatmul.bf16.gmra.mxu0 %v9491
    %v9632 = vpop.f32.mrf.mxu0
    %v9633 = vadd.f32 0.0, %v9632
    %v9634 = vpop.f32.mrf.mxu0
    %9635 = vdwg.mxu0
    %9636 = vmatpush.bf16.msra.mxu0 %v1661
    %9637 = vmatpush.bf16.msra.mxu0 %v1653
    %9638 = vmatpush.bf16.msra.mxu0 %v1645
    %9639 = vmatpush.bf16.msra.mxu0 %v1637
    %9640 = vmatpush.bf16.msra.mxu0 %v1629
    %9641 = vmatpush.bf16.msra.mxu0 %v1621
    %9642 = vmatpush.bf16.msra.mxu0 %v1613
    %9643 = vmatpush.bf16.msra.mxu0 %v1605
    %9644 = vmatmul.bf16.gmra.mxu0 %v9492
    %v9645 = vpop.f32.mrf.mxu0
    %v9646 = vadd.f32 %v9633, %v9645
    %v9647 = vpop.f32.mrf.mxu0
    %9648 = vdwg.mxu0
    %9649 = vmatpush.bf16.msra.mxu0 %v1598
    %9650 = vmatpush.bf16.msra.mxu0 %v1590
    %9651 = vmatpush.bf16.msra.mxu0 %v1582
    %9652 = vmatpush.bf16.msra.mxu0 %v1574
    %9653 = vmatpush.bf16.msra.mxu0 %v1566
    %9654 = vmatpush.bf16.msra.mxu0 %v1558
    %9655 = vmatpush.bf16.msra.mxu0 %v1550
    %9656 = vmatpush.bf16.msra.mxu0 %v1542
    %9657 = vmatmul.bf16.gmra.mxu0 %v9491
    %v9658 = vpop.f32.mrf.mxu0
    %v9659 = vadd.f32 0.0, %v9658
    %v9660 = vpop.f32.mrf.mxu0
    %9661 = vdwg.mxu0
    %9662 = vmatpush.bf16.msra.mxu0 %v1662
    %9663 = vmatpush.bf16.msra.mxu0 %v1654
    %9664 = vmatpush.bf16.msra.mxu0 %v1646
    %9665 = vmatpush.bf16.msra.mxu0 %v1638
    %9666 = vmatpush.bf16.msra.mxu0 %v1630
    %9667 = vmatpush.bf16.msra.mxu0 %v1622
    %9668 = vmatpush.bf16.msra.mxu0 %v1614
    %9669 = vmatpush.bf16.msra.mxu0 %v1606
    %9670 = vmatmul.bf16.gmra.mxu0 %v9492
    %v9671 = vpop.f32.mrf.mxu0
    %v9672 = vadd.f32 %v9659, %v9671
    %v9673 = vpop.f32.mrf.mxu0
    %9674 = vdwg.mxu0
    %9675 = vmatpush.bf16.msra.mxu0 %v1599
    %9676 = vmatpush.bf16.msra.mxu0 %v1591
    %9677 = vmatpush.bf16.msra.mxu0 %v1583
    %9678 = vmatpush.bf16.msra.mxu0 %v1575
    %9679 = vmatpush.bf16.msra.mxu0 %v1567
    %9680 = vmatpush.bf16.msra.mxu0 %v1559
    %9681 = vmatpush.bf16.msra.mxu0 %v1551
    %9682 = vmatpush.bf16.msra.mxu0 %v1543
    %9683 = vmatmul.bf16.gmra.mxu0 %v9491
    %v9684 = vpop.f32.mrf.mxu0
    %v9685 = vadd.f32 0.0, %v9684
    %v9686 = vpop.f32.mrf.mxu0
    %9687 = vdwg.mxu0
    %9688 = vmatpush.bf16.msra.mxu0 %v1663
    %9689 = vmatpush.bf16.msra.mxu0 %v1655
    %9690 = vmatpush.bf16.msra.mxu0 %v1647
    %9691 = vmatpush.bf16.msra.mxu0 %v1639
    %9692 = vmatpush.bf16.msra.mxu0 %v1631
    %9693 = vmatpush.bf16.msra.mxu0 %v1623
    %9694 = vmatpush.bf16.msra.mxu0 %v1615
    %9695 = vmatpush.bf16.msra.mxu0 %v1607
    %9696 = vmatmul.bf16.gmra.mxu0 %v9492
    %v9697 = vpop.f32.mrf.mxu0
    %v9698 = vadd.f32 %v9685, %v9697
    %v9699 = vpop.f32.mrf.mxu0
    %9700 = vdwg.mxu0
    %v9701 = vadd.f32 %v556, %v9516
    %v9702 = vadd.f32 %v585, %v9542
    %v9703 = vadd.f32 %v614, %v9568
    %v9704 = vadd.f32 %v643, %v9594
    %v9705 = vadd.f32 %v672, %v9620
    %v9706 = vadd.f32 %v701, %v9646
    %v9707 = vadd.f32 %v730, %v9672
    %v9708 = vadd.f32 %v759, %v9698
    %v9709 = vxor.u32 %v9701, 2147483648
    %v9710 = vxor.u32 %v9702, 2147483648
    %v9711 = vmul.f32 %v9709, 1.442695
    %v9712 = vpow.pop %v9711
    %v9713 = vmul.f32 %v9710, 1.442695
    %v9714 = vpow.pop %v9713
    %v9715 = vadd.f32 %v9712, 1.0
    %v9716 = vadd.f32 %v9714, 1.0
    %v9717 = vrcp.pop %v9715
    %v9718 = vmul.f32 %v9715, %v9717
    %v9719 = vsub.f32 1.0, %v9718
    %v9720 = vmul.f32 %v9717, %v9719
    %v9721 = vadd.f32 %v9717, %v9720
    %vm9722 = vweird.f32 %v9715
    %vm9723 = vweird.f32 %v9717
    %vm9724 = vmor %vm9722, %vm9723
    %v9725 = vsel %vm9724, %v9717, %v9721
    %v9726 = vand.u32 2147483647, %v9715
    %vm9727 = vcmp.eq.f32.partialorder %v9726, 8.507059e+37
    %v9728 = vand.u32 %v9715, 2147483648
    %v9729 = vor.u32 1.1754944e-38, %v9728
    %v9730 = vsel %vm9727, %v9729, %v9725
    %v9731 = vmul.f32 1.0, %v9730
    %v9732 = vrcp.pop %v9716
    %v9733 = vmul.f32 %v9716, %v9732
    %v9734 = vsub.f32 1.0, %v9733
    %v9735 = vmul.f32 %v9732, %v9734
    %v9736 = vadd.f32 %v9732, %v9735
    %vm9737 = vweird.f32 %v9716
    %vm9738 = vweird.f32 %v9732
    %vm9739 = vmor %vm9737, %vm9738
    %v9740 = vsel %vm9739, %v9732, %v9736
    %v9741 = vand.u32 2147483647, %v9716
    %vm9742 = vcmp.eq.f32.partialorder %v9741, 8.507059e+37
    %v9743 = vand.u32 %v9716, 2147483648
    %v9744 = vor.u32 1.1754944e-38, %v9743
    %v9745 = vsel %vm9742, %v9744, %v9740
    %v9746 = vmul.f32 1.0, %v9745
    %v9747 = vxor.u32 %v9703, 2147483648
    %v9748 = vxor.u32 %v9704, 2147483648
    %v9749 = vmul.f32 %v9747, 1.442695
    %v9750 = vpow.pop %v9749
    %v9751 = vmul.f32 %v9748, 1.442695
    %v9752 = vpow.pop %v9751
    %v9753 = vadd.f32 %v9750, 1.0
    %v9754 = vadd.f32 %v9752, 1.0
    %v9755 = vrcp.pop %v9753
    %v9756 = vmul.f32 %v9753, %v9755
    %v9757 = vsub.f32 1.0, %v9756
    %v9758 = vmul.f32 %v9755, %v9757
    %v9759 = vadd.f32 %v9755, %v9758
    %vm9760 = vweird.f32 %v9753
    %vm9761 = vweird.f32 %v9755
    %vm9762 = vmor %vm9760, %vm9761
    %v9763 = vsel %vm9762, %v9755, %v9759
    %v9764 = vand.u32 2147483647, %v9753
    %vm9765 = vcmp.eq.f32.partialorder %v9764, 8.507059e+37
    %v9766 = vand.u32 %v9753, 2147483648
    %v9767 = vor.u32 1.1754944e-38, %v9766
    %v9768 = vsel %vm9765, %v9767, %v9763
    %v9769 = vmul.f32 1.0, %v9768
    %v9770 = vrcp.pop %v9754
    %v9771 = vmul.f32 %v9754, %v9770
    %v9772 = vsub.f32 1.0, %v9771
    %v9773 = vmul.f32 %v9770, %v9772
    %v9774 = vadd.f32 %v9770, %v9773
    %vm9775 = vweird.f32 %v9754
    %vm9776 = vweird.f32 %v9770
    %vm9777 = vmor %vm9775, %vm9776
    %v9778 = vsel %vm9777, %v9770, %v9774
    %v9779 = vand.u32 2147483647, %v9754
    %vm9780 = vcmp.eq.f32.partialorder %v9779, 8.507059e+37
    %v9781 = vand.u32 %v9754, 2147483648
    %v9782 = vor.u32 1.1754944e-38, %v9781
    %v9783 = vsel %vm9780, %v9782, %v9778
    %v9784 = vmul.f32 1.0, %v9783
    %v9785 = vtanh.pop %v9705
    %v9786 = vtanh.pop %v9706
    %v9787 = vxor.u32 %v9707, 2147483648
    %v9788 = vxor.u32 %v9708, 2147483648
    %v9789 = vmul.f32 %v9787, 1.442695
    %v9790 = vpow.pop %v9789
    %v9791 = vmul.f32 %v9788, 1.442695
    %v9792 = vpow.pop %v9791
    %v9793 = vadd.f32 %v9790, 1.0
    %v9794 = vadd.f32 %v9792, 1.0
    %v9795 = vrcp.pop %v9793
    %v9796 = vmul.f32 %v9793, %v9795
    %v9797 = vsub.f32 1.0, %v9796
    %v9798 = vmul.f32 %v9795, %v9797
    %v9799 = vadd.f32 %v9795, %v9798
    %vm9800 = vweird.f32 %v9793
    %vm9801 = vweird.f32 %v9795
    %vm9802 = vmor %vm9800, %vm9801
    %v9803 = vsel %vm9802, %v9795, %v9799
    %v9804 = vand.u32 2147483647, %v9793
    %vm9805 = vcmp.eq.f32.partialorder %v9804, 8.507059e+37
    %v9806 = vand.u32 %v9793, 2147483648
    %v9807 = vor.u32 1.1754944e-38, %v9806
    %v9808 = vsel %vm9805, %v9807, %v9803
    %v9809 = vmul.f32 1.0, %v9808
    %v9810 = vrcp.pop %v9794
    %v9811 = vmul.f32 %v9794, %v9810
    %v9812 = vsub.f32 1.0, %v9811
    %v9813 = vmul.f32 %v9810, %v9812
    %v9814 = vadd.f32 %v9810, %v9813
    %vm9815 = vweird.f32 %v9794
    %vm9816 = vweird.f32 %v9810
    %vm9817 = vmor %vm9815, %vm9816
    %v9818 = vsel %vm9817, %v9810, %v9814
    %v9819 = vand.u32 2147483647, %v9794
    %vm9820 = vcmp.eq.f32.partialorder %v9819, 8.507059e+37
    %v9821 = vand.u32 %v9794, 2147483648
    %v9822 = vor.u32 1.1754944e-38, %v9821
    %v9823 = vsel %vm9820, %v9822, %v9818
    %v9824 = vmul.f32 1.0, %v9823
    %v9825 = vmul.f32 %v9769, %v9479
    %v9826 = vmul.f32 %v9784, %v9480
    %v9827 = vmul.f32 %v9731, %v9785
    %v9828 = vmul.f32 %v9746, %v9786
    %v9829 = vadd.f32 %v9825, %v9827
    %v9830 = vadd.f32 %v9826, %v9828
    %v9831 = vtanh.pop %v9829
    %v9832 = vtanh.pop %v9830
    %v9833 = vmul.f32 %v9809, %v9831
    %v9834 = vmul.f32 %v9824, %v9832
    %v9835 = vpack.c.bf16 %v9834, %v9833
    %v9836 = vpack.c.bf16 %v9482, %v9481
    %v9838 = vunpack.c.l.b16 %v9835
    %v9839 = vunpack.c.h.b16 %v9835
    %v9840 = vpack.c.b16 %v9838, %v9838
    %v9841 = vpack.c.b16 %v9839, %v9839
    %v9845 = vunpack.c.l.b16 %v9836
    %v9846 = vunpack.c.h.b16 %v9836
    %v9847 = vpack.c.b16 %v9845, %v9845
    %v9848 = vpack.c.b16 %v9846, %v9846
    %9851 = vmatpush.bf16.msra.mxu0 %v2983
    %9852 = vmatpush.bf16.msra.mxu0 %v2975
    %9853 = vmatpush.bf16.msra.mxu0 %v2967
    %9854 = vmatpush.bf16.msra.mxu0 %v2959
    %9855 = vmatpush.bf16.msra.mxu0 %v2951
    %9856 = vmatpush.bf16.msra.mxu0 %v2943
    %9857 = vmatpush.bf16.msra.mxu0 %v2935
    %9858 = vmatpush.bf16.msra.mxu0 %v2927
    %9859 = vmatmul.bf16.gmra.mxu0 %v9840
    %v9860 = vpop.f32.mrf.mxu0
    %v9861 = vadd.f32 %v2143, %v9860
    %v9862 = vpop.f32.mrf.mxu0
    %9863 = vdwg.mxu0
    %9864 = vmatpush.bf16.msra.mxu0 %v3047
    %9865 = vmatpush.bf16.msra.mxu0 %v3039
    %9866 = vmatpush.bf16.msra.mxu0 %v3031
    %9867 = vmatpush.bf16.msra.mxu0 %v3023
    %9868 = vmatpush.bf16.msra.mxu0 %v3015
    %9869 = vmatpush.bf16.msra.mxu0 %v3007
    %9870 = vmatpush.bf16.msra.mxu0 %v2999
    %9871 = vmatpush.bf16.msra.mxu0 %v2991
    %9872 = vmatmul.bf16.gmra.mxu0 %v9841
    %v9873 = vpop.f32.mrf.mxu0
    %v9874 = vadd.f32 %v9861, %v9873
    %v9875 = vpop.f32.mrf.mxu0
    %9876 = vdwg.mxu0
    %9877 = vmatpush.bf16.msra.mxu0 %v3111
    %9878 = vmatpush.bf16.msra.mxu0 %v3103
    %9879 = vmatpush.bf16.msra.mxu0 %v3095
    %9880 = vmatpush.bf16.msra.mxu0 %v3087
    %9881 = vmatpush.bf16.msra.mxu0 %v3079
    %9882 = vmatpush.bf16.msra.mxu0 %v3071
    %9883 = vmatpush.bf16.msra.mxu0 %v3063
    %9884 = vmatpush.bf16.msra.mxu0 %v3055
    %9885 = vmatmul.bf16.gmra.mxu0 %v9847
    %v9886 = vpop.f32.mrf.mxu0
    %v9887 = vadd.f32 %v9874, %v9886
    %v9888 = vpop.f32.mrf.mxu0
    %9889 = vdwg.mxu0
    %9890 = vmatpush.bf16.msra.mxu0 %v3175
    %9891 = vmatpush.bf16.msra.mxu0 %v3167
    %9892 = vmatpush.bf16.msra.mxu0 %v3159
    %9893 = vmatpush.bf16.msra.mxu0 %v3151
    %9894 = vmatpush.bf16.msra.mxu0 %v3143
    %9895 = vmatpush.bf16.msra.mxu0 %v3135
    %9896 = vmatpush.bf16.msra.mxu0 %v3127
    %9897 = vmatpush.bf16.msra.mxu0 %v3119
    %9898 = vmatmul.bf16.gmra.mxu0 %v9848
    %v9899 = vpop.f32.mrf.mxu0
    %v9900 = vadd.f32 %v9887, %v9899
    %v9901 = vpop.f32.mrf.mxu0
    %9902 = vdwg.mxu0
    %9903 = vmatpush.bf16.msra.mxu0 %v2984
    %9904 = vmatpush.bf16.msra.mxu0 %v2976
    %9905 = vmatpush.bf16.msra.mxu0 %v2968
    %9906 = vmatpush.bf16.msra.mxu0 %v2960
    %9907 = vmatpush.bf16.msra.mxu0 %v2952
    %9908 = vmatpush.bf16.msra.mxu0 %v2944
    %9909 = vmatpush.bf16.msra.mxu0 %v2936
    %9910 = vmatpush.bf16.msra.mxu0 %v2928
    %9911 = vmatmul.bf16.gmra.mxu0 %v9840
    %v9912 = vpop.f32.mrf.mxu0
    %v9913 = vadd.f32 %v2144, %v9912
    %v9914 = vpop.f32.mrf.mxu0
    %9915 = vdwg.mxu0
    %9916 = vmatpush.bf16.msra.mxu0 %v3048
    %9917 = vmatpush.bf16.msra.mxu0 %v3040
    %9918 = vmatpush.bf16.msra.mxu0 %v3032
    %9919 = vmatpush.bf16.msra.mxu0 %v3024
    %9920 = vmatpush.bf16.msra.mxu0 %v3016
    %9921 = vmatpush.bf16.msra.mxu0 %v3008
    %9922 = vmatpush.bf16.msra.mxu0 %v3000
    %9923 = vmatpush.bf16.msra.mxu0 %v2992
    %9924 = vmatmul.bf16.gmra.mxu0 %v9841
    %v9925 = vpop.f32.mrf.mxu0
    %v9926 = vadd.f32 %v9913, %v9925
    %v9927 = vpop.f32.mrf.mxu0
    %9928 = vdwg.mxu0
    %9929 = vmatpush.bf16.msra.mxu0 %v3112
    %9930 = vmatpush.bf16.msra.mxu0 %v3104
    %9931 = vmatpush.bf16.msra.mxu0 %v3096
    %9932 = vmatpush.bf16.msra.mxu0 %v3088
    %9933 = vmatpush.bf16.msra.mxu0 %v3080
    %9934 = vmatpush.bf16.msra.mxu0 %v3072
    %9935 = vmatpush.bf16.msra.mxu0 %v3064
    %9936 = vmatpush.bf16.msra.mxu0 %v3056
    %9937 = vmatmul.bf16.gmra.mxu0 %v9847
    %v9938 = vpop.f32.mrf.mxu0
    %v9939 = vadd.f32 %v9926, %v9938
    %v9940 = vpop.f32.mrf.mxu0
    %9941 = vdwg.mxu0
    %9942 = vmatpush.bf16.msra.mxu0 %v3176
    %9943 = vmatpush.bf16.msra.mxu0 %v3168
    %9944 = vmatpush.bf16.msra.mxu0 %v3160
    %9945 = vmatpush.bf16.msra.mxu0 %v3152
    %9946 = vmatpush.bf16.msra.mxu0 %v3144
    %9947 = vmatpush.bf16.msra.mxu0 %v3136
    %9948 = vmatpush.bf16.msra.mxu0 %v3128
    %9949 = vmatpush.bf16.msra.mxu0 %v3120
    %9950 = vmatmul.bf16.gmra.mxu0 %v9848
    %v9951 = vpop.f32.mrf.mxu0
    %v9952 = vadd.f32 %v9939, %v9951
    %v9953 = vpop.f32.mrf.mxu0
    %9954 = vdwg.mxu0
    %9955 = vmatpush.bf16.msra.mxu0 %v2985
    %9956 = vmatpush.bf16.msra.mxu0 %v2977
    %9957 = vmatpush.bf16.msra.mxu0 %v2969
    %9958 = vmatpush.bf16.msra.mxu0 %v2961
    %9959 = vmatpush.bf16.msra.mxu0 %v2953
    %9960 = vmatpush.bf16.msra.mxu0 %v2945
    %9961 = vmatpush.bf16.msra.mxu0 %v2937
    %9962 = vmatpush.bf16.msra.mxu0 %v2929
    %9963 = vmatmul.bf16.gmra.mxu0 %v9840
    %v9964 = vpop.f32.mrf.mxu0
    %v9965 = vadd.f32 %v2145, %v9964
    %v9966 = vpop.f32.mrf.mxu0
    %9967 = vdwg.mxu0
    %9968 = vmatpush.bf16.msra.mxu0 %v3049
    %9969 = vmatpush.bf16.msra.mxu0 %v3041
    %9970 = vmatpush.bf16.msra.mxu0 %v3033
    %9971 = vmatpush.bf16.msra.mxu0 %v3025
    %9972 = vmatpush.bf16.msra.mxu0 %v3017
    %9973 = vmatpush.bf16.msra.mxu0 %v3009
    %9974 = vmatpush.bf16.msra.mxu0 %v3001
    %9975 = vmatpush.bf16.msra.mxu0 %v2993
    %9976 = vmatmul.bf16.gmra.mxu0 %v9841
    %v9977 = vpop.f32.mrf.mxu0
    %v9978 = vadd.f32 %v9965, %v9977
    %v9979 = vpop.f32.mrf.mxu0
    %9980 = vdwg.mxu0
    %9981 = vmatpush.bf16.msra.mxu0 %v3113
    %9982 = vmatpush.bf16.msra.mxu0 %v3105
    %9983 = vmatpush.bf16.msra.mxu0 %v3097
    %9984 = vmatpush.bf16.msra.mxu0 %v3089
    %9985 = vmatpush.bf16.msra.mxu0 %v3081
    %9986 = vmatpush.bf16.msra.mxu0 %v3073
    %9987 = vmatpush.bf16.msra.mxu0 %v3065
    %9988 = vmatpush.bf16.msra.mxu0 %v3057
    %9989 = vmatmul.bf16.gmra.mxu0 %v9847
    %v9990 = vpop.f32.mrf.mxu0
    %v9991 = vadd.f32 %v9978, %v9990
    %v9992 = vpop.f32.mrf.mxu0
    %9993 = vdwg.mxu0
    %9994 = vmatpush.bf16.msra.mxu0 %v3177
    %9995 = vmatpush.bf16.msra.mxu0 %v3169
    %9996 = vmatpush.bf16.msra.mxu0 %v3161
    %9997 = vmatpush.bf16.msra.mxu0 %v3153
    %9998 = vmatpush.bf16.msra.mxu0 %v3145
    %9999 = vmatpush.bf16.msra.mxu0 %v3137
    %10000 = vmatpush.bf16.msra.mxu0 %v3129
    %10001 = vmatpush.bf16.msra.mxu0 %v3121
    %10002 = vmatmul.bf16.gmra.mxu0 %v9848
    %v10003 = vpop.f32.mrf.mxu0
    %v10004 = vadd.f32 %v9991, %v10003
    %v10005 = vpop.f32.mrf.mxu0
    %10006 = vdwg.mxu0
    %10007 = vmatpush.bf16.msra.mxu0 %v2986
    %10008 = vmatpush.bf16.msra.mxu0 %v2978
    %10009 = vmatpush.bf16.msra.mxu0 %v2970
    %10010 = vmatpush.bf16.msra.mxu0 %v2962
    %10011 = vmatpush.bf16.msra.mxu0 %v2954
    %10012 = vmatpush.bf16.msra.mxu0 %v2946
    %10013 = vmatpush.bf16.msra.mxu0 %v2938
    %10014 = vmatpush.bf16.msra.mxu0 %v2930
    %10015 = vmatmul.bf16.gmra.mxu0 %v9840
    %v10016 = vpop.f32.mrf.mxu0
    %v10017 = vadd.f32 %v2146, %v10016
    %v10018 = vpop.f32.mrf.mxu0
    %10019 = vdwg.mxu0
    %10020 = vmatpush.bf16.msra.mxu0 %v3050
    %10021 = vmatpush.bf16.msra.mxu0 %v3042
    %10022 = vmatpush.bf16.msra.mxu0 %v3034
    %10023 = vmatpush.bf16.msra.mxu0 %v3026
    %10024 = vmatpush.bf16.msra.mxu0 %v3018
    %10025 = vmatpush.bf16.msra.mxu0 %v3010
    %10026 = vmatpush.bf16.msra.mxu0 %v3002
    %10027 = vmatpush.bf16.msra.mxu0 %v2994
    %10028 = vmatmul.bf16.gmra.mxu0 %v9841
    %v10029 = vpop.f32.mrf.mxu0
    %v10030 = vadd.f32 %v10017, %v10029
    %v10031 = vpop.f32.mrf.mxu0
    %10032 = vdwg.mxu0
    %10033 = vmatpush.bf16.msra.mxu0 %v3114
    %10034 = vmatpush.bf16.msra.mxu0 %v3106
    %10035 = vmatpush.bf16.msra.mxu0 %v3098
    %10036 = vmatpush.bf16.msra.mxu0 %v3090
    %10037 = vmatpush.bf16.msra.mxu0 %v3082
    %10038 = vmatpush.bf16.msra.mxu0 %v3074
    %10039 = vmatpush.bf16.msra.mxu0 %v3066
    %10040 = vmatpush.bf16.msra.mxu0 %v3058
    %10041 = vmatmul.bf16.gmra.mxu0 %v9847
    %v10042 = vpop.f32.mrf.mxu0
    %v10043 = vadd.f32 %v10030, %v10042
    %v10044 = vpop.f32.mrf.mxu0
    %10045 = vdwg.mxu0
    %10046 = vmatpush.bf16.msra.mxu0 %v3178
    %10047 = vmatpush.bf16.msra.mxu0 %v3170
    %10048 = vmatpush.bf16.msra.mxu0 %v3162
    %10049 = vmatpush.bf16.msra.mxu0 %v3154
    %10050 = vmatpush.bf16.msra.mxu0 %v3146
    %10051 = vmatpush.bf16.msra.mxu0 %v3138
    %10052 = vmatpush.bf16.msra.mxu0 %v3130
    %10053 = vmatpush.bf16.msra.mxu0 %v3122
    %10054 = vmatmul.bf16.gmra.mxu0 %v9848
    %v10055 = vpop.f32.mrf.mxu0
    %v10056 = vadd.f32 %v10043, %v10055
    %v10057 = vpop.f32.mrf.mxu0
    %10058 = vdwg.mxu0
    %10059 = vmatpush.bf16.msra.mxu0 %v2987
    %10060 = vmatpush.bf16.msra.mxu0 %v2979
    %10061 = vmatpush.bf16.msra.mxu0 %v2971
    %10062 = vmatpush.bf16.msra.mxu0 %v2963
    %10063 = vmatpush.bf16.msra.mxu0 %v2955
    %10064 = vmatpush.bf16.msra.mxu0 %v2947
    %10065 = vmatpush.bf16.msra.mxu0 %v2939
    %10066 = vmatpush.bf16.msra.mxu0 %v2931
    %10067 = vmatmul.bf16.gmra.mxu0 %v9840
    %v10068 = vpop.f32.mrf.mxu0
    %v10069 = vadd.f32 %v2147, %v10068
    %v10070 = vpop.f32.mrf.mxu0
    %10071 = vdwg.mxu0
    %10072 = vmatpush.bf16.msra.mxu0 %v3051
    %10073 = vmatpush.bf16.msra.mxu0 %v3043
    %10074 = vmatpush.bf16.msra.mxu0 %v3035
    %10075 = vmatpush.bf16.msra.mxu0 %v3027
    %10076 = vmatpush.bf16.msra.mxu0 %v3019
    %10077 = vmatpush.bf16.msra.mxu0 %v3011
    %10078 = vmatpush.bf16.msra.mxu0 %v3003
    %10079 = vmatpush.bf16.msra.mxu0 %v2995
    %10080 = vmatmul.bf16.gmra.mxu0 %v9841
    %v10081 = vpop.f32.mrf.mxu0
    %v10082 = vadd.f32 %v10069, %v10081
    %v10083 = vpop.f32.mrf.mxu0
    %10084 = vdwg.mxu0
    %10085 = vmatpush.bf16.msra.mxu0 %v3115
    %10086 = vmatpush.bf16.msra.mxu0 %v3107
    %10087 = vmatpush.bf16.msra.mxu0 %v3099
    %10088 = vmatpush.bf16.msra.mxu0 %v3091
    %10089 = vmatpush.bf16.msra.mxu0 %v3083
    %10090 = vmatpush.bf16.msra.mxu0 %v3075
    %10091 = vmatpush.bf16.msra.mxu0 %v3067
    %10092 = vmatpush.bf16.msra.mxu0 %v3059
    %10093 = vmatmul.bf16.gmra.mxu0 %v9847
    %v10094 = vpop.f32.mrf.mxu0
    %v10095 = vadd.f32 %v10082, %v10094
    %v10096 = vpop.f32.mrf.mxu0
    %10097 = vdwg.mxu0
    %10098 = vmatpush.bf16.msra.mxu0 %v3179
    %10099 = vmatpush.bf16.msra.mxu0 %v3171
    %10100 = vmatpush.bf16.msra.mxu0 %v3163
    %10101 = vmatpush.bf16.msra.mxu0 %v3155
    %10102 = vmatpush.bf16.msra.mxu0 %v3147
    %10103 = vmatpush.bf16.msra.mxu0 %v3139
    %10104 = vmatpush.bf16.msra.mxu0 %v3131
    %10105 = vmatpush.bf16.msra.mxu0 %v3123
    %10106 = vmatmul.bf16.gmra.mxu0 %v9848
    %v10107 = vpop.f32.mrf.mxu0
    %v10108 = vadd.f32 %v10095, %v10107
    %v10109 = vpop.f32.mrf.mxu0
    %10110 = vdwg.mxu0
    %10111 = vmatpush.bf16.msra.mxu0 %v2988
    %10112 = vmatpush.bf16.msra.mxu0 %v2980
    %10113 = vmatpush.bf16.msra.mxu0 %v2972
    %10114 = vmatpush.bf16.msra.mxu0 %v2964
    %10115 = vmatpush.bf16.msra.mxu0 %v2956
    %10116 = vmatpush.bf16.msra.mxu0 %v2948
    %10117 = vmatpush.bf16.msra.mxu0 %v2940
    %10118 = vmatpush.bf16.msra.mxu0 %v2932
    %10119 = vmatmul.bf16.gmra.mxu0 %v9840
    %v10120 = vpop.f32.mrf.mxu0
    %v10121 = vadd.f32 %v2148, %v10120
    %v10122 = vpop.f32.mrf.mxu0
    %10123 = vdwg.mxu0
    %10124 = vmatpush.bf16.msra.mxu0 %v3052
    %10125 = vmatpush.bf16.msra.mxu0 %v3044
    %10126 = vmatpush.bf16.msra.mxu0 %v3036
    %10127 = vmatpush.bf16.msra.mxu0 %v3028
    %10128 = vmatpush.bf16.msra.mxu0 %v3020
    %10129 = vmatpush.bf16.msra.mxu0 %v3012
    %10130 = vmatpush.bf16.msra.mxu0 %v3004
    %10131 = vmatpush.bf16.msra.mxu0 %v2996
    %10132 = vmatmul.bf16.gmra.mxu0 %v9841
    %v10133 = vpop.f32.mrf.mxu0
    %v10134 = vadd.f32 %v10121, %v10133
    %v10135 = vpop.f32.mrf.mxu0
    %10136 = vdwg.mxu0
    %10137 = vmatpush.bf16.msra.mxu0 %v3116
    %10138 = vmatpush.bf16.msra.mxu0 %v3108
    %10139 = vmatpush.bf16.msra.mxu0 %v3100
    %10140 = vmatpush.bf16.msra.mxu0 %v3092
    %10141 = vmatpush.bf16.msra.mxu0 %v3084
    %10142 = vmatpush.bf16.msra.mxu0 %v3076
    %10143 = vmatpush.bf16.msra.mxu0 %v3068
    %10144 = vmatpush.bf16.msra.mxu0 %v3060
    %10145 = vmatmul.bf16.gmra.mxu0 %v9847
    %v10146 = vpop.f32.mrf.mxu0
    %v10147 = vadd.f32 %v10134, %v10146
    %v10148 = vpop.f32.mrf.mxu0
    %10149 = vdwg.mxu0
    %10150 = vmatpush.bf16.msra.mxu0 %v3180
    %10151 = vmatpush.bf16.msra.mxu0 %v3172
    %10152 = vmatpush.bf16.msra.mxu0 %v3164
    %10153 = vmatpush.bf16.msra.mxu0 %v3156
    %10154 = vmatpush.bf16.msra.mxu0 %v3148
    %10155 = vmatpush.bf16.msra.mxu0 %v3140
    %10156 = vmatpush.bf16.msra.mxu0 %v3132
    %10157 = vmatpush.bf16.msra.mxu0 %v3124
    %10158 = vmatmul.bf16.gmra.mxu0 %v9848
    %v10159 = vpop.f32.mrf.mxu0
    %v10160 = vadd.f32 %v10147, %v10159
    %v10161 = vpop.f32.mrf.mxu0
    %10162 = vdwg.mxu0
    %10163 = vmatpush.bf16.msra.mxu0 %v2989
    %10164 = vmatpush.bf16.msra.mxu0 %v2981
    %10165 = vmatpush.bf16.msra.mxu0 %v2973
    %10166 = vmatpush.bf16.msra.mxu0 %v2965
    %10167 = vmatpush.bf16.msra.mxu0 %v2957
    %10168 = vmatpush.bf16.msra.mxu0 %v2949
    %10169 = vmatpush.bf16.msra.mxu0 %v2941
    %10170 = vmatpush.bf16.msra.mxu0 %v2933
    %10171 = vmatmul.bf16.gmra.mxu0 %v9840
    %v10172 = vpop.f32.mrf.mxu0
    %v10173 = vadd.f32 %v2149, %v10172
    %v10174 = vpop.f32.mrf.mxu0
    %10175 = vdwg.mxu0
    %10176 = vmatpush.bf16.msra.mxu0 %v3053
    %10177 = vmatpush.bf16.msra.mxu0 %v3045
    %10178 = vmatpush.bf16.msra.mxu0 %v3037
    %10179 = vmatpush.bf16.msra.mxu0 %v3029
    %10180 = vmatpush.bf16.msra.mxu0 %v3021
    %10181 = vmatpush.bf16.msra.mxu0 %v3013
    %10182 = vmatpush.bf16.msra.mxu0 %v3005
    %10183 = vmatpush.bf16.msra.mxu0 %v2997
    %10184 = vmatmul.bf16.gmra.mxu0 %v9841
    %v10185 = vpop.f32.mrf.mxu0
    %v10186 = vadd.f32 %v10173, %v10185
    %v10187 = vpop.f32.mrf.mxu0
    %10188 = vdwg.mxu0
    %10189 = vmatpush.bf16.msra.mxu0 %v3117
    %10190 = vmatpush.bf16.msra.mxu0 %v3109
    %10191 = vmatpush.bf16.msra.mxu0 %v3101
    %10192 = vmatpush.bf16.msra.mxu0 %v3093
    %10193 = vmatpush.bf16.msra.mxu0 %v3085
    %10194 = vmatpush.bf16.msra.mxu0 %v3077
    %10195 = vmatpush.bf16.msra.mxu0 %v3069
    %10196 = vmatpush.bf16.msra.mxu0 %v3061
    %10197 = vmatmul.bf16.gmra.mxu0 %v9847
    %v10198 = vpop.f32.mrf.mxu0
    %v10199 = vadd.f32 %v10186, %v10198
    %v10200 = vpop.f32.mrf.mxu0
    %10201 = vdwg.mxu0
    %10202 = vmatpush.bf16.msra.mxu0 %v3181
    %10203 = vmatpush.bf16.msra.mxu0 %v3173
    %10204 = vmatpush.bf16.msra.mxu0 %v3165
    %10205 = vmatpush.bf16.msra.mxu0 %v3157
    %10206 = vmatpush.bf16.msra.mxu0 %v3149
    %10207 = vmatpush.bf16.msra.mxu0 %v3141
    %10208 = vmatpush.bf16.msra.mxu0 %v3133
    %10209 = vmatpush.bf16.msra.mxu0 %v3125
    %10210 = vmatmul.bf16.gmra.mxu0 %v9848
    %v10211 = vpop.f32.mrf.mxu0
    %v10212 = vadd.f32 %v10199, %v10211
    %v10213 = vpop.f32.mrf.mxu0
    %10214 = vdwg.mxu0
    %10215 = vmatpush.bf16.msra.mxu0 %v2990
    %10216 = vmatpush.bf16.msra.mxu0 %v2982
    %10217 = vmatpush.bf16.msra.mxu0 %v2974
    %10218 = vmatpush.bf16.msra.mxu0 %v2966
    %10219 = vmatpush.bf16.msra.mxu0 %v2958
    %10220 = vmatpush.bf16.msra.mxu0 %v2950
    %10221 = vmatpush.bf16.msra.mxu0 %v2942
    %10222 = vmatpush.bf16.msra.mxu0 %v2934
    %10223 = vmatmul.bf16.gmra.mxu0 %v9840
    %v10224 = vpop.f32.mrf.mxu0
    %v10225 = vadd.f32 %v2150, %v10224
    %v10226 = vpop.f32.mrf.mxu0
    %10227 = vdwg.mxu0
    %10228 = vmatpush.bf16.msra.mxu0 %v3054
    %10229 = vmatpush.bf16.msra.mxu0 %v3046
    %10230 = vmatpush.bf16.msra.mxu0 %v3038
    %10231 = vmatpush.bf16.msra.mxu0 %v3030
    %10232 = vmatpush.bf16.msra.mxu0 %v3022
    %10233 = vmatpush.bf16.msra.mxu0 %v3014
    %10234 = vmatpush.bf16.msra.mxu0 %v3006
    %10235 = vmatpush.bf16.msra.mxu0 %v2998
    %10236 = vmatmul.bf16.gmra.mxu0 %v9841
    %v10237 = vpop.f32.mrf.mxu0
    %v10238 = vadd.f32 %v10225, %v10237
    %v10239 = vpop.f32.mrf.mxu0
    %10240 = vdwg.mxu0
    %10241 = vmatpush.bf16.msra.mxu0 %v3118
    %10242 = vmatpush.bf16.msra.mxu0 %v3110
    %10243 = vmatpush.bf16.msra.mxu0 %v3102
    %10244 = vmatpush.bf16.msra.mxu0 %v3094
    %10245 = vmatpush.bf16.msra.mxu0 %v3086
    %10246 = vmatpush.bf16.msra.mxu0 %v3078
    %10247 = vmatpush.bf16.msra.mxu0 %v3070
    %10248 = vmatpush.bf16.msra.mxu0 %v3062
    %10249 = vmatmul.bf16.gmra.mxu0 %v9847
    %v10250 = vpop.f32.mrf.mxu0
    %v10251 = vadd.f32 %v10238, %v10250
    %v10252 = vpop.f32.mrf.mxu0
    %10253 = vdwg.mxu0
    %10254 = vmatpush.bf16.msra.mxu0 %v3182
    %10255 = vmatpush.bf16.msra.mxu0 %v3174
    %10256 = vmatpush.bf16.msra.mxu0 %v3166
    %10257 = vmatpush.bf16.msra.mxu0 %v3158
    %10258 = vmatpush.bf16.msra.mxu0 %v3150
    %10259 = vmatpush.bf16.msra.mxu0 %v3142
    %10260 = vmatpush.bf16.msra.mxu0 %v3134
    %10261 = vmatpush.bf16.msra.mxu0 %v3126
    %10262 = vmatmul.bf16.gmra.mxu0 %v9848
    %v10263 = vpop.f32.mrf.mxu0
    %v10264 = vadd.f32 %v10251, %v10263
    %v10265 = vpop.f32.mrf.mxu0
    %10266 = vdwg.mxu0
    %v10267 = vxor.u32 %v9900, 2147483648
    %v10268 = vxor.u32 %v9952, 2147483648
    %v10269 = vmul.f32 %v10267, 1.442695
    %v10270 = vpow.pop %v10269
    %v10271 = vmul.f32 %v10268, 1.442695
    %v10272 = vpow.pop %v10271
    %v10273 = vadd.f32 %v10270, 1.0
    %v10274 = vadd.f32 %v10272, 1.0
    %v10275 = vrcp.pop %v10273
    %v10276 = vmul.f32 %v10273, %v10275
    %v10277 = vsub.f32 1.0, %v10276
    %v10278 = vmul.f32 %v10275, %v10277
    %v10279 = vadd.f32 %v10275, %v10278
    %vm10280 = vweird.f32 %v10273
    %vm10281 = vweird.f32 %v10275
    %vm10282 = vmor %vm10280, %vm10281
    %v10283 = vsel %vm10282, %v10275, %v10279
    %v10284 = vand.u32 2147483647, %v10273
    %vm10285 = vcmp.eq.f32.partialorder %v10284, 8.507059e+37
    %v10286 = vand.u32 %v10273, 2147483648
    %v10287 = vor.u32 1.1754944e-38, %v10286
    %v10288 = vsel %vm10285, %v10287, %v10283
    %v10289 = vmul.f32 1.0, %v10288
    %v10290 = vrcp.pop %v10274
    %v10291 = vmul.f32 %v10274, %v10290
    %v10292 = vsub.f32 1.0, %v10291
    %v10293 = vmul.f32 %v10290, %v10292
    %v10294 = vadd.f32 %v10290, %v10293
    %vm10295 = vweird.f32 %v10274
    %vm10296 = vweird.f32 %v10290
    %vm10297 = vmor %vm10295, %vm10296
    %v10298 = vsel %vm10297, %v10290, %v10294
    %v10299 = vand.u32 2147483647, %v10274
    %vm10300 = vcmp.eq.f32.partialorder %v10299, 8.507059e+37
    %v10301 = vand.u32 %v10274, 2147483648
    %v10302 = vor.u32 1.1754944e-38, %v10301
    %v10303 = vsel %vm10300, %v10302, %v10298
    %v10304 = vmul.f32 1.0, %v10303
    %v10305 = vxor.u32 %v10004, 2147483648
    %v10306 = vxor.u32 %v10056, 2147483648
    %v10307 = vmul.f32 %v10305, 1.442695
    %v10308 = vpow.pop %v10307
    %v10309 = vmul.f32 %v10306, 1.442695
    %v10310 = vpow.pop %v10309
    %v10311 = vadd.f32 %v10308, 1.0
    %v10312 = vadd.f32 %v10310, 1.0
    %v10313 = vrcp.pop %v10311
    %v10314 = vmul.f32 %v10311, %v10313
    %v10315 = vsub.f32 1.0, %v10314
    %v10316 = vmul.f32 %v10313, %v10315
    %v10317 = vadd.f32 %v10313, %v10316
    %vm10318 = vweird.f32 %v10311
    %vm10319 = vweird.f32 %v10313
    %vm10320 = vmor %vm10318, %vm10319
    %v10321 = vsel %vm10320, %v10313, %v10317
    %v10322 = vand.u32 2147483647, %v10311
    %vm10323 = vcmp.eq.f32.partialorder %v10322, 8.507059e+37
    %v10324 = vand.u32 %v10311, 2147483648
    %v10325 = vor.u32 1.1754944e-38, %v10324
    %v10326 = vsel %vm10323, %v10325, %v10321
    %v10327 = vmul.f32 1.0, %v10326
    %v10328 = vrcp.pop %v10312
    %v10329 = vmul.f32 %v10312, %v10328
    %v10330 = vsub.f32 1.0, %v10329
    %v10331 = vmul.f32 %v10328, %v10330
    %v10332 = vadd.f32 %v10328, %v10331
    %vm10333 = vweird.f32 %v10312
    %vm10334 = vweird.f32 %v10328
    %vm10335 = vmor %vm10333, %vm10334
    %v10336 = vsel %vm10335, %v10328, %v10332
    %v10337 = vand.u32 2147483647, %v10312
    %vm10338 = vcmp.eq.f32.partialorder %v10337, 8.507059e+37
    %v10339 = vand.u32 %v10312, 2147483648
    %v10340 = vor.u32 1.1754944e-38, %v10339
    %v10341 = vsel %vm10338, %v10340, %v10336
    %v10342 = vmul.f32 1.0, %v10341
    %v10343 = vtanh.pop %v10108
    %v10344 = vtanh.pop %v10160
    %v10345 = vxor.u32 %v10212, 2147483648
    %v10346 = vxor.u32 %v10264, 2147483648
    %v10347 = vmul.f32 %v10345, 1.442695
    %v10348 = vpow.pop %v10347
    %v10349 = vmul.f32 %v10346, 1.442695
    %v10350 = vpow.pop %v10349
    %v10351 = vadd.f32 %v10348, 1.0
    %v10352 = vadd.f32 %v10350, 1.0
    %v10353 = vrcp.pop %v10351
    %v10354 = vmul.f32 %v10351, %v10353
    %v10355 = vsub.f32 1.0, %v10354
    %v10356 = vmul.f32 %v10353, %v10355
    %v10357 = vadd.f32 %v10353, %v10356
    %vm10358 = vweird.f32 %v10351
    %vm10359 = vweird.f32 %v10353
    %vm10360 = vmor %vm10358, %vm10359
    %v10361 = vsel %vm10360, %v10353, %v10357
    %v10362 = vand.u32 2147483647, %v10351
    %vm10363 = vcmp.eq.f32.partialorder %v10362, 8.507059e+37
    %v10364 = vand.u32 %v10351, 2147483648
    %v10365 = vor.u32 1.1754944e-38, %v10364
    %v10366 = vsel %vm10363, %v10365, %v10361
    %v10367 = vmul.f32 1.0, %v10366
    %v10368 = vrcp.pop %v10352
    %v10369 = vmul.f32 %v10352, %v10368
    %v10370 = vsub.f32 1.0, %v10369
    %v10371 = vmul.f32 %v10368, %v10370
    %v10372 = vadd.f32 %v10368, %v10371
    %vm10373 = vweird.f32 %v10352
    %vm10374 = vweird.f32 %v10368
    %vm10375 = vmor %vm10373, %vm10374
    %v10376 = vsel %vm10375, %v10368, %v10372
    %v10377 = vand.u32 2147483647, %v10352
    %vm10378 = vcmp.eq.f32.partialorder %v10377, 8.507059e+37
    %v10379 = vand.u32 %v10352, 2147483648
    %v10380 = vor.u32 1.1754944e-38, %v10379
    %v10381 = vsel %vm10378, %v10380, %v10376
    %v10382 = vmul.f32 1.0, %v10381
    %v10383 = vmul.f32 %v10327, %v9483
    %v10384 = vmul.f32 %v10342, %v9484
    %v10385 = vmul.f32 %v10289, %v10343
    %v10386 = vmul.f32 %v10304, %v10344
    %v10387 = vadd.f32 %v10383, %v10385
    %v10388 = vadd.f32 %v10384, %v10386
    %v10389 = vtanh.pop %v10387
    %v10390 = vtanh.pop %v10388
    %v10391 = vmul.f32 %v10367, %v10389
    %v10392 = vmul.f32 %v10382, %v10390
    %v10393 = vsel %vm9490, %v10391, %v9481
    %v10394 = vsel %vm9490, %v10392, %v9482
    %v10395 = vpack.c.bf16 %v10393, %v10393
    %v10396 = vpack.c.bf16 %v10394, %v10394
    %v10397 = vld [vmem:[%s7] sm:$0xf]
    %v10398 = vld [vmem:[%s7 + $0x4] sm:$0xf]
    %v10399 = vld [vmem:[%s7 + $0x8] sm:$0xf]
    %v10400 = vld [vmem:[%s7 + $0xc] sm:$0xf]
    %v10401 = vld [vmem:[%s7 + $0x10] sm:$0xf]
    %v10402 = vld [vmem:[%s7 + $0x14] sm:$0xf]
    %v10403 = vld [vmem:[%s7 + $0x18] sm:$0xf]
    %v10404 = vld [vmem:[%s7 + $0x1c] sm:$0xf]
    %v10405 = vld [vmem:[%s7 + $0x20] sm:$0xf]
    %v10406 = vld [vmem:[%s7 + $0x24] sm:$0xf]
    %v10407 = vld [vmem:[%s7 + $0x28] sm:$0xf]
    %v10408 = vld [vmem:[%s7 + $0x2c] sm:$0xf]
    %v10409 = vld [vmem:[%s7 + $0x30] sm:$0xf]
    %v10410 = vld [vmem:[%s7 + $0x34] sm:$0xf]
    %v10411 = vld [vmem:[%s7 + $0x38] sm:$0xf]
    %v10412 = vld [vmem:[%s7 + $0x3c] sm:$0xf]
    %v10413 = vld [vmem:[%s7 + $0x40] sm:$0xf]
    %v10414 = vld [vmem:[%s7 + $0x44] sm:$0xf]
    %v10415 = vld [vmem:[%s7 + $0x48] sm:$0xf]
    %v10416 = vld [vmem:[%s7 + $0x4c] sm:$0xf]
    %v10417 = vld [vmem:[%s7 + $0x50] sm:$0xf]
    %v10418 = vld [vmem:[%s7 + $0x54] sm:$0xf]
    %v10419 = vld [vmem:[%s7 + $0x58] sm:$0xf]
    %v10420 = vld [vmem:[%s7 + $0x5c] sm:$0xf]
    %v10421 = vld [vmem:[%s7 + $0x60] sm:$0xf]
    %v10422 = vld [vmem:[%s7 + $0x64] sm:$0xf]
    %v10423 = vld [vmem:[%s7 + $0x68] sm:$0xf]
    %v10424 = vld [vmem:[%s7 + $0x6c] sm:$0xf]
    %v10425 = vld [vmem:[%s7 + $0x70] sm:$0xf]
    %v10426 = vld [vmem:[%s7 + $0x74] sm:$0xf]
    %v10427 = vld [vmem:[%s7 + $0x78] sm:$0xf]
    %v10428 = vld [vmem:[%s7 + $0x7c] sm:$0xf]
    %v10429 = vld [vmem:[%s8] sm:$0x1]
    %v10431 = vperm.slane %v10429, 0
    %v10465 = vunpack.c.l.b16 %v10397
    %v10466 = vunpack.c.l.b16 %v10398
    %v10467 = vunpack.c.l.b16 %v10399
    %v10468 = vunpack.c.l.b16 %v10400
    %v10469 = vunpack.c.l.b16 %v10401
    %v10470 = vunpack.c.l.b16 %v10402
    %v10471 = vunpack.c.l.b16 %v10403
    %v10472 = vunpack.c.l.b16 %v10404
    %v10473 = vunpack.c.l.b16 %v10405
    %v10474 = vunpack.c.l.b16 %v10406
    %v10475 = vunpack.c.l.b16 %v10407
    %v10476 = vunpack.c.l.b16 %v10408
    %v10477 = vunpack.c.l.b16 %v10409
    %v10478 = vunpack.c.l.b16 %v10410
    %v10479 = vunpack.c.l.b16 %v10411
    %v10480 = vunpack.c.l.b16 %v10412
    %v10481 = vunpack.c.l.b16 %v10413
    %v10482 = vunpack.c.l.b16 %v10414
    %v10483 = vunpack.c.l.b16 %v10415
    %v10484 = vunpack.c.l.b16 %v10416
    %v10485 = vunpack.c.l.b16 %v10417
    %v10486 = vunpack.c.l.b16 %v10418
    %v10487 = vunpack.c.l.b16 %v10419
    %v10488 = vunpack.c.l.b16 %v10420
    %v10489 = vunpack.c.l.b16 %v10421
    %v10490 = vunpack.c.l.b16 %v10422
    %v10491 = vunpack.c.l.b16 %v10423
    %v10492 = vunpack.c.l.b16 %v10424
    %v10493 = vunpack.c.l.b16 %v10425
    %v10494 = vunpack.c.l.b16 %v10426
    %v10495 = vunpack.c.l.b16 %v10427
    %v10496 = vunpack.c.l.b16 %v10428
    %v10497 = vpack.c.b16 %v10466, %v10465
    %v10498 = vpack.c.b16 %v10468, %v10467
    %v10499 = vpack.c.b16 %v10470, %v10469
    %v10500 = vpack.c.b16 %v10472, %v10471
    %v10501 = vpack.c.b16 %v10474, %v10473
    %v10502 = vpack.c.b16 %v10476, %v10475
    %v10503 = vpack.c.b16 %v10478, %v10477
    %v10504 = vpack.c.b16 %v10480, %v10479
    %v10505 = vpack.c.b16 %v10482, %v10481
    %v10506 = vpack.c.b16 %v10484, %v10483
    %v10507 = vpack.c.b16 %v10486, %v10485
    %v10508 = vpack.c.b16 %v10488, %v10487
    %v10509 = vpack.c.b16 %v10490, %v10489
    %v10510 = vpack.c.b16 %v10492, %v10491
    %v10511 = vpack.c.b16 %v10494, %v10493
    %v10512 = vpack.c.b16 %v10496, %v10495
    %10529 = vmatpush.bf16.msra.mxu0 %v10504
    %10530 = vmatpush.bf16.msra.mxu0 %v10503
    %10531 = vmatpush.bf16.msra.mxu0 %v10502
    %10532 = vmatpush.bf16.msra.mxu0 %v10501
    %10533 = vmatpush.bf16.msra.mxu0 %v10500
    %10534 = vmatpush.bf16.msra.mxu0 %v10499
    %10535 = vmatpush.bf16.msra.mxu0 %v10498
    %10536 = vmatpush.bf16.msra.mxu0 %v10497
    %10537 = vmatmul.bf16.gmra.mxu0 %v10395
    %v10538 = vpop.f32.mrf.mxu0
    %v10539 = vadd.f32 %v10431, %v10538
    %v10540 = vpop.f32.mrf.mxu0
    %10541 = vdwg.mxu0
    %10542 = vmatpush.bf16.msra.mxu0 %v10512
    %10543 = vmatpush.bf16.msra.mxu0 %v10511
    %10544 = vmatpush.bf16.msra.mxu0 %v10510
    %10545 = vmatpush.bf16.msra.mxu0 %v10509
    %10546 = vmatpush.bf16.msra.mxu0 %v10508
    %10547 = vmatpush.bf16.msra.mxu0 %v10507
    %10548 = vmatpush.bf16.msra.mxu0 %v10506
    %10549 = vmatpush.bf16.msra.mxu0 %v10505
    %10550 = vmatmul.bf16.gmra.mxu0 %v10396
    %v10551 = vpop.f32.mrf.mxu0
    %v10552 = vadd.f32 %v10539, %v10551
    %v10553 = vpop.f32.mrf.mxu0
    %10554 = vdwg.mxu0
    %10555 = vst [vmem:[%s9] sm:$0xff] %v10552
    // Predicated region
    $region54: #{ensemble_forward.1} parent=1 // pred_check
      _
    $region55: #{ensemble_forward.1} parent=1 // pred_check_branch
      %10557 = sbr.rel (0) target = $region57
    $region56: #{ensemble_forward.1} parent=1 // pred_region
      _
    $region57: #{ensemble_forward.1} parent=1 // pred_fallthru
      _
    // Predicated region
    $region58: #{ensemble_forward.1} parent=1 // pred_check
      _
    $region59: #{ensemble_forward.1} parent=1 // pred_check_branch
      %10559 = sbr.rel (0) target = $region61
    $region60: #{ensemble_forward.1} parent=1 // pred_region
      _
    $region61: #{ensemble_forward.1} parent=1 // pred_fallthru
      _
    %10560 = vsyncpa [#allocation3], 1
    %10561 = vsyncpa [#allocation5], 1
    %10562 = vsyncpa [#allocation8], 1

</llo_original>
